<compile_context>
chip_gen: v6e
topology: v6e:2x2x1
jax: 0.10.0
libtpu: 0.0.40
codegen_flags: <defaults>
</compile_context>

<pallas_src>
import functools
import math

import jax
import jax.numpy as jnp
from jax.experimental import pallas as pl
from jax.experimental.pallas import tpu as pltpu


# ----------------------------------------------------------------------------
# Pallas kernels
# ----------------------------------------------------------------------------

def _mxu_dot(a, b):
    """bf16 x bf16 MXU matmul with float32 accumulation."""
    return jnp.dot(a.astype(jnp.bfloat16), b.astype(jnp.bfloat16),
                   preferred_element_type=jnp.float32)


def conv_bn_relu_kernel(p_ref, w_ref, b_ref, o_ref):
    """Fused conv (as im2col matmul) + folded BatchNorm + ReLU."""
    y = _mxu_dot(p_ref[...], w_ref[...]) + b_ref[...]
    o_ref[...] = jnp.maximum(y, 0.0).astype(o_ref.dtype)


def maxpool_kernel(win_ref, o_ref):
    """3x3 / stride-2 max-pool over pre-gathered windows (KK, rows, C)."""
    m = win_ref[0]
    for j in range(1, win_ref.shape[0]):          # static 9-step loop
        m = jnp.maximum(m, win_ref[j])
    o_ref[...] = m.astype(o_ref.dtype)


def block_tail_kernel(*refs, has_downsample, pool_rows):
    """Second half of a BasicBlock: conv2 + BN2 + shortcut (identity or
    1x1/stride-2 conv + BN) + ReLU, optionally fused with the final global
    average pool (fc = Identity, so that is the backbone output)."""
    if has_downsample:
        p_ref, w_ref, b_ref, rin_ref, wd_ref, bd_ref, o_ref = refs
        res = _mxu_dot(rin_ref[...], wd_ref[...]) + bd_ref[...]
    else:
        p_ref, w_ref, b_ref, res_ref, o_ref = refs
        res = res_ref[...].astype(jnp.float32)
    y = jnp.maximum(_mxu_dot(p_ref[...], w_ref[...]) + b_ref[...] + res, 0.0)
    if pool_rows is None:
        o_ref[...] = y.astype(o_ref.dtype)
    else:
        batch = y.shape[0] // pool_rows
        for i in range(batch):                    # tiny static loop (batch=2)
            seg = y[i * pool_rows:(i + 1) * pool_rows, :]
            o_ref[i:i + 1, :] = jnp.mean(seg, axis=0, keepdims=True).astype(
                o_ref.dtype)


# ----------------------------------------------------------------------------
# pallas_call wrappers (row-tiled 1-D grids, weights resident across tiles)
# ----------------------------------------------------------------------------

_PARALLEL = pltpu.CompilerParams(dimension_semantics=("parallel",))
_ACT_DTYPE = jnp.bfloat16


def conv_bn_relu(patches, w, shift, tm=512):
    m, k = patches.shape
    c = w.shape[1]
    tm = min(tm, m)
    assert m % tm == 0, (m, tm)
    return pl.pallas_call(
        conv_bn_relu_kernel,
        out_shape=jax.ShapeDtypeStruct((m, c), _ACT_DTYPE),
        grid=(m // tm,),
        in_specs=[pl.BlockSpec((tm, k), lambda i: (i, 0)),
                  pl.BlockSpec((k, c), lambda i: (0, 0)),
                  pl.BlockSpec((1, c), lambda i: (0, 0))],
        out_specs=pl.BlockSpec((tm, c), lambda i: (i, 0)),
        compiler_params=_PARALLEL,
    )(patches, w, shift)


def maxpool(windows, tm=512):
    kk, m, c = windows.shape
    tm = min(tm, m)
    assert m % tm == 0, (m, tm)
    return pl.pallas_call(
        maxpool_kernel,
        out_shape=jax.ShapeDtypeStruct((m, c), _ACT_DTYPE),
        grid=(m // tm,),
        in_specs=[pl.BlockSpec((kk, tm, c), lambda i: (0, i, 0))],
        out_specs=pl.BlockSpec((tm, c), lambda i: (i, 0)),
        compiler_params=_PARALLEL,
    )(windows)


def block_tail(patches, w, shift, residual=None, ds=None, pool_rows=None,
               tm=512):
    m, k = patches.shape
    c = w.shape[1]
    if pool_rows is not None:
        tm = m            # pooling reduces across rows -> keep a single block
    tm = min(tm, m)
    assert m % tm == 0, (m, tm)

    in_specs = [pl.BlockSpec((tm, k), lambda i: (i, 0)),
                pl.BlockSpec((k, c), lambda i: (0, 0)),
                pl.BlockSpec((1, c), lambda i: (0, 0))]
    args = [patches, w, shift]
    if ds is not None:
        rin, wd, bd = ds
        kd = rin.shape[1]
        in_specs += [pl.BlockSpec((tm, kd), lambda i: (i, 0)),
                     pl.BlockSpec((kd, c), lambda i: (0, 0)),
                     pl.BlockSpec((1, c), lambda i: (0, 0))]
        args += [rin, wd, bd]
    else:
        in_specs.append(pl.BlockSpec((tm, c), lambda i: (i, 0)))
        args.append(residual)

    if pool_rows is None:
        out_shape = jax.ShapeDtypeStruct((m, c), _ACT_DTYPE)
        out_spec = pl.BlockSpec((tm, c), lambda i: (i, 0))
    else:
        # Pooled features are the final backbone output -> keep them f32.
        out_shape = jax.ShapeDtypeStruct((m // pool_rows, c), jnp.float32)
        out_spec = pl.BlockSpec((m // pool_rows, c), lambda i: (0, 0))

    kernel = functools.partial(block_tail_kernel,
                               has_downsample=ds is not None,
                               pool_rows=pool_rows)
    return pl.pallas_call(
        kernel,
        out_shape=out_shape,
        grid=(m // tm,),
        in_specs=in_specs,
        out_specs=out_spec,
        compiler_params=_PARALLEL,
    )(*args)


# ----------------------------------------------------------------------------
# XLA glue: window extraction (im2col) - pure data movement between kernels
# ----------------------------------------------------------------------------

def _windows(x, kh, kw, stride, pad, pad_value=0.0):
    """x: (B, H, W, C) NHWC -> (kh*kw, B, Ho, Wo, C) shifted windows."""
    b, h, w, c = x.shape
    xp = jnp.pad(x, ((0, 0), (pad, pad), (pad, pad), (0, 0)),
                 constant_values=pad_value)
    ho = (h + 2 * pad - kh) // stride + 1
    wo = (w + 2 * pad - kw) // stride + 1
    cols = [xp[:, dh:dh + stride * ho:stride, dw:dw + stride * wo:stride, :]
            for dh in range(kh) for dw in range(kw)]
    return jnp.stack(cols, axis=0), ho, wo


def _im2col(x, kh, kw, stride, pad):
    """(B, H, W, C) -> patches (B*Ho*Wo, kh*kw*C); feature order (kh, kw, cin),
    i.e. PyTorch (cout, cin, kh, kw) -> (kh, kw, cin, cout) flattened."""
    p, ho, wo = _windows(x, kh, kw, stride, pad)
    kk, b, _, _, c = p.shape
    p = jnp.transpose(p, (1, 2, 3, 0, 4)).reshape(b * ho * wo, kk * c)
    return p, ho, wo


# ----------------------------------------------------------------------------
# Parameters (synthetic; eval-mode BatchNorm folded into conv weight + shift)
# ----------------------------------------------------------------------------

def _conv_bn(key, kh, kw, cin, cout):
    kw_, kg, kb, km, kv = jax.random.split(key, 5)
    std = math.sqrt(2.0 / (kh * kw * cin))
    return dict(
        w=std * jax.random.normal(kw_, (kh * kw * cin, cout), jnp.float32),
        gamma=0.5 + jax.random.uniform(kg, (cout,), jnp.float32),
        beta=0.1 * jax.random.normal(kb, (cout,), jnp.float32),
        mean=0.1 * jax.random.normal(km, (cout,), jnp.float32),
        var=0.5 + jax.random.uniform(kv, (cout,), jnp.float32),
    )


def _fold(p, eps=1e-5):
    """Fold eval-mode BN into the conv: y = relu(x @ w_folded + shift)."""
    scale = p['gamma'] * jax.lax.rsqrt(p['var'] + eps)
    shift = (p['beta'] - p['mean'] * scale).reshape(1, -1).astype(jnp.float32)
    w = (p['w'] * scale[None, :]).astype(jnp.bfloat16)     # bf16 MXU operands
    return (w, shift)


def init_params(key, cfg):
    keys = iter(jax.random.split(key, 64))
    params = {'stem': _fold(_conv_bn(next(keys), 7, 7, cfg['in_channels'],
                                     cfg['stem_channels']))}
    cin = cfg['stem_channels']
    stages = []
    for cout, nblocks, first_stride in cfg['stages']:
        blocks = []
        for bi in range(nblocks):
            stride = first_stride if bi == 0 else 1
            blk = {'conv1': _fold(_conv_bn(next(keys), 3, 3, cin, cout)),
                   'conv2': _fold(_conv_bn(next(keys), 3, 3, cout, cout))}
            if stride != 1 or cin != cout:
                blk['down'] = _fold(_conv_bn(next(keys), 1, 1, cin, cout))
            blocks.append(blk)
            cin = cout
        stages.append(blocks)
    params['stages'] = stages
    return params


# ----------------------------------------------------------------------------
# Forward pass
# ----------------------------------------------------------------------------

def resnet_backbone_forward(x_nchw, params, cfg):
    # NCHW -> NHWC + cast to bf16 once: all downstream gathers / kernel DMAs
    # move half the bytes, matmuls are bf16 on the MXU with f32 accumulation.
    x = jnp.transpose(x_nchw, (0, 2, 3, 1)).astype(_ACT_DTYPE)
    b = x.shape[0]

    # conv1 (7x7 / stride 2) + bn1 + relu  -- one fused kernel
    p, ho, wo = _im2col(x, 7, 7, 2, 3)
    x = conv_bn_relu(p, *params['stem']).reshape(b, ho, wo, -1)

    # maxpool 3x3 / stride 2 (windows gathered in glue, max reduced in-kernel)
    win, ho, wo = _windows(x, 3, 3, 2, 1,
                           pad_value=float(jnp.finfo(_ACT_DTYPE).min))
    kk = win.shape[0]
    x = maxpool(win.reshape(kk, b * ho * wo, -1)).reshape(b, ho, wo, -1)

    # residual stages (BasicBlocks)
    cin = cfg['stem_channels']
    stage_cfgs = cfg['stages']
    out = None
    for si, ((cout, nblocks, first_stride), stage_p) in enumerate(
            zip(stage_cfgs, params['stages'])):
        for bi in range(nblocks):
            blk = stage_p[bi]
            stride = first_stride if bi == 0 else 1
            last = (si == len(stage_cfgs) - 1) and (bi == nblocks - 1)
            inp = x

            # conv1 3x3 + bn + relu
            p1, ho, wo = _im2col(inp, 3, 3, stride, 1)
            h = conv_bn_relu(p1, *blk['conv1']).reshape(b, ho, wo, cout)

            # conv2 3x3 + bn + shortcut + relu (+ global avg-pool if last)
            p2, _, _ = _im2col(h, 3, 3, 1, 1)
            pool_rows = ho * wo if last else None
            if 'down' in blk:
                rin = inp[:, ::stride, ::stride, :].reshape(b * ho * wo, cin)
                y = block_tail(p2, *blk['conv2'], ds=(rin,) + blk['down'],
                               pool_rows=pool_rows)
            else:
                y = block_tail(p2, *blk['conv2'],
                               residual=inp.reshape(b * ho * wo, cout),
                               pool_rows=pool_rows)
            cin = cout
            if last:
                out = y               # (B, C) pooled features; fc = Identity
            else:
                x = y.reshape(b, ho, wo, cout)
    return out


if __name__ == "__main__":
    cfg = dict(
        in_channels=3,
        image=32,                              # scaled down from 224x224
        stem_channels=64,
        stages=((64, 2, 1), (128, 2, 2)),      # (channels, blocks, 1st stride)
    )
    key = jax.random.PRNGKey(0)
    kx, kp = jax.random.split(key)
    x = jax.random.normal(
        kx, (2, cfg['in_channels'], cfg['image'], cfg['image']), jnp.float32)
    params = init_params(kp, cfg)

    fwd = jax.jit(functools.partial(resnet_backbone_forward, cfg=cfg))
    feats = jax.block_until_ready(fwd(x, params))

    assert feats.shape == (2, cfg['stages'][-1][0]), feats.shape
    assert feats.dtype == jnp.float32
    assert bool(jnp.all(jnp.isfinite(feats)))
    print("KERNEL_OK")
</pallas_src>

<mosaic_0001>
module attributes {stable_mosaic.version = 11 : i64} {
  func.func @conv_bn_relu_kernel(%arg0: i32, %arg1: memref<512x147xbf16, #tpu.memory_space<vmem>>, %arg2: memref<147x64xbf16, #tpu.memory_space<vmem>>, %arg3: memref<1x64xf32, #tpu.memory_space<vmem>>, %arg4: memref<512x64xbf16, #tpu.memory_space<vmem>>) attributes {dimension_semantics = [#tpu.dimension_semantics<parallel>], iteration_bounds = array<i64: 1>, scalar_prefetch = 0 : i64, scratch_operands = 0 : i64, tpu.core_type = #tpu.core_type<tc>, window_params = [{transform_indices = @transform_0, window_bounds = array<i64: 512, 147>}, {pipeline_mode = #tpu.pipeline_mode<synchronous>, transform_indices = @transform_1, window_bounds = array<i64: 147, 64>}, {pipeline_mode = #tpu.pipeline_mode<synchronous>, transform_indices = @transform_2, window_bounds = array<i64: 1, 64>}, {transform_indices = @transform_3, window_bounds = array<i64: 512, 64>}]} {
    %c0 = arith.constant 0 : index
    %c0_0 = arith.constant 0 : index
    %0 = vector.load %arg1[%c0, %c0_0] : memref<512x147xbf16, #tpu.memory_space<vmem>>, vector<512x147xbf16>
    %c0_1 = arith.constant 0 : index
    %c0_2 = arith.constant 0 : index
    %1 = vector.load %arg2[%c0_1, %c0_2] : memref<147x64xbf16, #tpu.memory_space<vmem>>, vector<147x64xbf16>
    %cst = arith.constant dense<0.000000e+00> : vector<512x64xf32>
    %2 = tpu.matmul %0, %1, %cst {dimension_numbers = #tpu.dot_dimension_numbers<[1], [0], [0], [1], [0, 0, 1, 1], [], []>} : vector<512x147xbf16>, vector<147x64xbf16>, vector<512x64xf32> -> vector<512x64xf32>
    %c0_3 = arith.constant 0 : index
    %c0_4 = arith.constant 0 : index
    %3 = vector.load %arg3[%c0_3, %c0_4] : memref<1x64xf32, #tpu.memory_space<vmem>>, vector<1x64xf32>
    %4 = vector.broadcast %3 : vector<1x64xf32> to vector<512x64xf32>
    %5 = arith.addf %2, %4 : vector<512x64xf32>
    %cst_5 = arith.constant 0.000000e+00 : f32
    %6 = vector.broadcast %cst_5 : f32 to vector<512x64xf32>
    %7 = arith.maximumf %5, %6 : vector<512x64xf32>
    %8 = arith.truncf %7 : vector<512x64xf32> to vector<512x64xbf16>
    %c0_6 = arith.constant 0 : index
    %c0_7 = arith.constant 0 : index
    %9 = vector.load %arg4[%c0_6, %c0_7] : memref<512x64xbf16, #tpu.memory_space<vmem>>, vector<512x64xbf16>
    tpu.vector_store %arg4[%c0_6, %c0_7], %8 {strides = array<i32>} : memref<512x64xbf16, #tpu.memory_space<vmem>>, vector<512x64xbf16>,
    return
  }
  func.func @transform_0(%arg0: i32) -> (i32, i32) {
    %c0_i32 = arith.constant 0 : i32
    %c0_i32_0 = arith.constant 0 : i32
    return %arg0, %c0_i32 : i32, i32
  }
  func.func @transform_1(%arg0: i32) -> (i32, i32) {
    %c0_i32 = arith.constant 0 : i32
    %c0_i32_0 = arith.constant 0 : i32
    %c0_i32_1 = arith.constant 0 : i32
    return %c0_i32, %c0_i32_0 : i32, i32
  }
  func.func @transform_2(%arg0: i32) -> (i32, i32) {
    %c0_i32 = arith.constant 0 : i32
    %c0_i32_0 = arith.constant 0 : i32
    %c0_i32_1 = arith.constant 0 : i32
    return %c0_i32, %c0_i32_0 : i32, i32
  }
  func.func @transform_3(%arg0: i32) -> (i32, i32) {
    %c0_i32 = arith.constant 0 : i32
    %c0_i32_0 = arith.constant 0 : i32
    return %arg0, %c0_i32 : i32, i32
  }
}

module attributes {stable_mosaic.version = 11 : i64} {
  func.func @maxpool_kernel(%arg0: i32, %arg1: memref<9x128x64xbf16, #tpu.memory_space<vmem>>, %arg2: memref<128x64xbf16, #tpu.memory_space<vmem>>) attributes {dimension_semantics = [#tpu.dimension_semantics<parallel>], iteration_bounds = array<i64: 1>, scalar_prefetch = 0 : i64, scratch_operands = 0 : i64, tpu.core_type = #tpu.core_type<tc>, window_params = [{transform_indices = @transform_0, window_bounds = array<i64: 9, 128, 64>}, {transform_indices = @transform_1, window_bounds = array<i64: 128, 64>}]} {
    %c0 = arith.constant 0 : index
    %c0_0 = arith.constant 0 : index
    %c0_1 = arith.constant 0 : index
    %0 = vector.load %arg1[%c0, %c0_0, %c0_1] : memref<9x128x64xbf16, #tpu.memory_space<vmem>>, vector<1x128x64xbf16>
    %1 = vector.shape_cast %0 : vector<1x128x64xbf16> to vector<128x64xbf16>
    %c1 = arith.constant 1 : index
    %c0_2 = arith.constant 0 : index
    %c0_3 = arith.constant 0 : index
    %2 = vector.load %arg1[%c1, %c0_2, %c0_3] : memref<9x128x64xbf16, #tpu.memory_space<vmem>>, vector<1x128x64xbf16>
    %3 = vector.shape_cast %2 : vector<1x128x64xbf16> to vector<128x64xbf16>
    %4 = arith.maximumf %1, %3 : vector<128x64xbf16>
    %c2 = arith.constant 2 : index
    %c0_4 = arith.constant 0 : index
    %c0_5 = arith.constant 0 : index
    %5 = vector.load %arg1[%c2, %c0_4, %c0_5] : memref<9x128x64xbf16, #tpu.memory_space<vmem>>, vector<1x128x64xbf16>
    %6 = vector.shape_cast %5 : vector<1x128x64xbf16> to vector<128x64xbf16>
    %7 = arith.maximumf %4, %6 : vector<128x64xbf16>
    %c3 = arith.constant 3 : index
    %c0_6 = arith.constant 0 : index
    %c0_7 = arith.constant 0 : index
    %8 = vector.load %arg1[%c3, %c0_6, %c0_7] : memref<9x128x64xbf16, #tpu.memory_space<vmem>>, vector<1x128x64xbf16>
    %9 = vector.shape_cast %8 : vector<1x128x64xbf16> to vector<128x64xbf16>
    %10 = arith.maximumf %7, %9 : vector<128x64xbf16>
    %c4 = arith.constant 4 : index
    %c0_8 = arith.constant 0 : index
    %c0_9 = arith.constant 0 : index
    %11 = vector.load %arg1[%c4, %c0_8, %c0_9] : memref<9x128x64xbf16, #tpu.memory_space<vmem>>, vector<1x128x64xbf16>
    %12 = vector.shape_cast %11 : vector<1x128x64xbf16> to vector<128x64xbf16>
    %13 = arith.maximumf %10, %12 : vector<128x64xbf16>
    %c5 = arith.constant 5 : index
    %c0_10 = arith.constant 0 : index
    %c0_11 = arith.constant 0 : index
    %14 = vector.load %arg1[%c5, %c0_10, %c0_11] : memref<9x128x64xbf16, #tpu.memory_space<vmem>>, vector<1x128x64xbf16>
    %15 = vector.shape_cast %14 : vector<1x128x64xbf16> to vector<128x64xbf16>
    %16 = arith.maximumf %13, %15 : vector<128x64xbf16>
    %c6 = arith.constant 6 : index
    %c0_12 = arith.constant 0 : index
    %c0_13 = arith.constant 0 : index
    %17 = vector.load %arg1[%c6, %c0_12, %c0_13] : memref<9x128x64xbf16, #tpu.memory_space<vmem>>, vector<1x128x64xbf16>
    %18 = vector.shape_cast %17 : vector<1x128x64xbf16> to vector<128x64xbf16>
    %19 = arith.maximumf %16, %18 : vector<128x64xbf16>
    %c7 = arith.constant 7 : index
    %c0_14 = arith.constant 0 : index
    %c0_15 = arith.constant 0 : index
    %20 = vector.load %arg1[%c7, %c0_14, %c0_15] : memref<9x128x64xbf16, #tpu.memory_space<vmem>>, vector<1x128x64xbf16>
    %21 = vector.shape_cast %20 : vector<1x128x64xbf16> to vector<128x64xbf16>
    %22 = arith.maximumf %19, %21 : vector<128x64xbf16>
    %c8 = arith.constant 8 : index
    %c0_16 = arith.constant 0 : index
    %c0_17 = arith.constant 0 : index
    %23 = vector.load %arg1[%c8, %c0_16, %c0_17] : memref<9x128x64xbf16, #tpu.memory_space<vmem>>, vector<1x128x64xbf16>
    %24 = vector.shape_cast %23 : vector<1x128x64xbf16> to vector<128x64xbf16>
    %25 = arith.maximumf %22, %24 : vector<128x64xbf16>
    %c0_18 = arith.constant 0 : index
    %c0_19 = arith.constant 0 : index
    %26 = vector.load %arg2[%c0_18, %c0_19] : memref<128x64xbf16, #tpu.memory_space<vmem>>, vector<128x64xbf16>
    tpu.vector_store %arg2[%c0_18, %c0_19], %25 {strides = array<i32>} : memref<128x64xbf16, #tpu.memory_space<vmem>>, vector<128x64xbf16>,
    return
  }
  func.func @transform_0(%arg0: i32) -> (i32, i32, i32) {
    %c0_i32 = arith.constant 0 : i32
    %c0_i32_0 = arith.constant 0 : i32
    %c0_i32_1 = arith.constant 0 : i32
    return %c0_i32, %arg0, %c0_i32_0 : i32, i32, i32
  }
  func.func @transform_1(%arg0: i32) -> (i32, i32) {
    %c0_i32 = arith.constant 0 : i32
    %c0_i32_0 = arith.constant 0 : i32
    return %arg0, %c0_i32 : i32, i32
  }
}

module attributes {stable_mosaic.version = 11 : i64} {
  func.func @conv_bn_relu_kernel(%arg0: i32, %arg1: memref<128x576xbf16, #tpu.memory_space<vmem>>, %arg2: memref<576x64xbf16, #tpu.memory_space<vmem>>, %arg3: memref<1x64xf32, #tpu.memory_space<vmem>>, %arg4: memref<128x64xbf16, #tpu.memory_space<vmem>>) attributes {dimension_semantics = [#tpu.dimension_semantics<parallel>], iteration_bounds = array<i64: 1>, scalar_prefetch = 0 : i64, scratch_operands = 0 : i64, tpu.core_type = #tpu.core_type<tc>, window_params = [{transform_indices = @transform_0, window_bounds = array<i64: 128, 576>}, {pipeline_mode = #tpu.pipeline_mode<synchronous>, transform_indices = @transform_1, window_bounds = array<i64: 576, 64>}, {pipeline_mode = #tpu.pipeline_mode<synchronous>, transform_indices = @transform_2, window_bounds = array<i64: 1, 64>}, {transform_indices = @transform_3, window_bounds = array<i64: 128, 64>}]} {
    %c0 = arith.constant 0 : index
    %c0_0 = arith.constant 0 : index
    %0 = vector.load %arg1[%c0, %c0_0] : memref<128x576xbf16, #tpu.memory_space<vmem>>, vector<128x576xbf16>
    %c0_1 = arith.constant 0 : index
    %c0_2 = arith.constant 0 : index
    %1 = vector.load %arg2[%c0_1, %c0_2] : memref<576x64xbf16, #tpu.memory_space<vmem>>, vector<576x64xbf16>
    %cst = arith.constant dense<0.000000e+00> : vector<128x64xf32>
    %2 = tpu.matmul %0, %1, %cst {dimension_numbers = #tpu.dot_dimension_numbers<[1], [0], [0], [1], [0, 0, 1, 1], [], []>} : vector<128x576xbf16>, vector<576x64xbf16>, vector<128x64xf32> -> vector<128x64xf32>
    %c0_3 = arith.constant 0 : index
    %c0_4 = arith.constant 0 : index
    %3 = vector.load %arg3[%c0_3, %c0_4] : memref<1x64xf32, #tpu.memory_space<vmem>>, vector<1x64xf32>
    %4 = vector.broadcast %3 : vector<1x64xf32> to vector<128x64xf32>
    %5 = arith.addf %2, %4 : vector<128x64xf32>
    %cst_5 = arith.constant 0.000000e+00 : f32
    %6 = vector.broadcast %cst_5 : f32 to vector<128x64xf32>
    %7 = arith.maximumf %5, %6 : vector<128x64xf32>
    %8 = arith.truncf %7 : vector<128x64xf32> to vector<128x64xbf16>
    %c0_6 = arith.constant 0 : index
    %c0_7 = arith.constant 0 : index
    %9 = vector.load %arg4[%c0_6, %c0_7] : memref<128x64xbf16, #tpu.memory_space<vmem>>, vector<128x64xbf16>
    tpu.vector_store %arg4[%c0_6, %c0_7], %8 {strides = array<i32>} : memref<128x64xbf16, #tpu.memory_space<vmem>>, vector<128x64xbf16>,
    return
  }
  func.func @transform_0(%arg0: i32) -> (i32, i32) {
    %c0_i32 = arith.constant 0 : i32
    %c0_i32_0 = arith.constant 0 : i32
    return %arg0, %c0_i32 : i32, i32
  }
  func.func @transform_1(%arg0: i32) -> (i32, i32) {
    %c0_i32 = arith.constant 0 : i32
    %c0_i32_0 = arith.constant 0 : i32
    %c0_i32_1 = arith.constant 0 : i32
    return %c0_i32, %c0_i32_0 : i32, i32
  }
  func.func @transform_2(%arg0: i32) -> (i32, i32) {
    %c0_i32 = arith.constant 0 : i32
    %c0_i32_0 = arith.constant 0 : i32
    %c0_i32_1 = arith.constant 0 : i32
    return %c0_i32, %c0_i32_0 : i32, i32
  }
  func.func @transform_3(%arg0: i32) -> (i32, i32) {
    %c0_i32 = arith.constant 0 : i32
    %c0_i32_0 = arith.constant 0 : i32
    return %arg0, %c0_i32 : i32, i32
  }
}

module attributes {stable_mosaic.version = 11 : i64} {
  func.func @block_tail_kernel(%arg0: i32, %arg1: memref<128x576xbf16, #tpu.memory_space<vmem>>, %arg2: memref<576x64xbf16, #tpu.memory_space<vmem>>, %arg3: memref<1x64xf32, #tpu.memory_space<vmem>>, %arg4: memref<128x64xbf16, #tpu.memory_space<vmem>>, %arg5: memref<128x64xbf16, #tpu.memory_space<vmem>>) attributes {dimension_semantics = [#tpu.dimension_semantics<parallel>], iteration_bounds = array<i64: 1>, scalar_prefetch = 0 : i64, scratch_operands = 0 : i64, tpu.core_type = #tpu.core_type<tc>, window_params = [{transform_indices = @transform_0, window_bounds = array<i64: 128, 576>}, {pipeline_mode = #tpu.pipeline_mode<synchronous>, transform_indices = @transform_1, window_bounds = array<i64: 576, 64>}, {pipeline_mode = #tpu.pipeline_mode<synchronous>, transform_indices = @transform_2, window_bounds = array<i64: 1, 64>}, {transform_indices = @transform_3, window_bounds = array<i64: 128, 64>}, {transform_indices = @transform_4, window_bounds = array<i64: 128, 64>}]} {
    %c0 = arith.constant 0 : index
    %c0_0 = arith.constant 0 : index
    %0 = vector.load %arg4[%c0, %c0_0] : memref<128x64xbf16, #tpu.memory_space<vmem>>, vector<128x64xbf16>
    %1 = arith.extf %0 : vector<128x64xbf16> to vector<128x64xf32>
    %c0_1 = arith.constant 0 : index
    %c0_2 = arith.constant 0 : index
    %2 = vector.load %arg1[%c0_1, %c0_2] : memref<128x576xbf16, #tpu.memory_space<vmem>>, vector<128x576xbf16>
    %c0_3 = arith.constant 0 : index
    %c0_4 = arith.constant 0 : index
    %3 = vector.load %arg2[%c0_3, %c0_4] : memref<576x64xbf16, #tpu.memory_space<vmem>>, vector<576x64xbf16>
    %cst = arith.constant dense<0.000000e+00> : vector<128x64xf32>
    %4 = tpu.matmul %2, %3, %cst {dimension_numbers = #tpu.dot_dimension_numbers<[1], [0], [0], [1], [0, 0, 1, 1], [], []>} : vector<128x576xbf16>, vector<576x64xbf16>, vector<128x64xf32> -> vector<128x64xf32>
    %c0_5 = arith.constant 0 : index
    %c0_6 = arith.constant 0 : index
    %5 = vector.load %arg3[%c0_5, %c0_6] : memref<1x64xf32, #tpu.memory_space<vmem>>, vector<1x64xf32>
    %6 = vector.broadcast %5 : vector<1x64xf32> to vector<128x64xf32>
    %7 = arith.addf %4, %6 : vector<128x64xf32>
    %8 = arith.addf %7, %1 : vector<128x64xf32>
    %cst_7 = arith.constant 0.000000e+00 : f32
    %9 = vector.broadcast %cst_7 : f32 to vector<128x64xf32>
    %10 = arith.maximumf %8, %9 : vector<128x64xf32>
    %11 = arith.truncf %10 : vector<128x64xf32> to vector<128x64xbf16>
    %c0_8 = arith.constant 0 : index
    %c0_9 = arith.constant 0 : index
    %12 = vector.load %arg5[%c0_8, %c0_9] : memref<128x64xbf16, #tpu.memory_space<vmem>>, vector<128x64xbf16>
    tpu.vector_store %arg5[%c0_8, %c0_9], %11 {strides = array<i32>} : memref<128x64xbf16, #tpu.memory_space<vmem>>, vector<128x64xbf16>,
    return
  }
  func.func @transform_0(%arg0: i32) -> (i32, i32) {
    %c0_i32 = arith.constant 0 : i32
    %c0_i32_0 = arith.constant 0 : i32
    return %arg0, %c0_i32 : i32, i32
  }
  func.func @transform_1(%arg0: i32) -> (i32, i32) {
    %c0_i32 = arith.constant 0 : i32
    %c0_i32_0 = arith.constant 0 : i32
    %c0_i32_1 = arith.constant 0 : i32
    return %c0_i32, %c0_i32_0 : i32, i32
  }
  func.func @transform_2(%arg0: i32) -> (i32, i32) {
    %c0_i32 = arith.constant 0 : i32
    %c0_i32_0 = arith.constant 0 : i32
    %c0_i32_1 = arith.constant 0 : i32
    return %c0_i32, %c0_i32_0 : i32, i32
  }
  func.func @transform_3(%arg0: i32) -> (i32, i32) {
    %c0_i32 = arith.constant 0 : i32
    %c0_i32_0 = arith.constant 0 : i32
    return %arg0, %c0_i32 : i32, i32
  }
  func.func @transform_4(%arg0: i32) -> (i32, i32) {
    %c0_i32 = arith.constant 0 : i32
    %c0_i32_0 = arith.constant 0 : i32
    return %arg0, %c0_i32 : i32, i32
  }
}

module attributes {stable_mosaic.version = 11 : i64} {
  func.func @conv_bn_relu_kernel(%arg0: i32, %arg1: memref<32x576xbf16, #tpu.memory_space<vmem>>, %arg2: memref<576x128xbf16, #tpu.memory_space<vmem>>, %arg3: memref<1x128xf32, #tpu.memory_space<vmem>>, %arg4: memref<32x128xbf16, #tpu.memory_space<vmem>>) attributes {dimension_semantics = [#tpu.dimension_semantics<parallel>], iteration_bounds = array<i64: 1>, scalar_prefetch = 0 : i64, scratch_operands = 0 : i64, tpu.core_type = #tpu.core_type<tc>, window_params = [{transform_indices = @transform_0, window_bounds = array<i64: 32, 576>}, {pipeline_mode = #tpu.pipeline_mode<synchronous>, transform_indices = @transform_1, window_bounds = array<i64: 576, 128>}, {pipeline_mode = #tpu.pipeline_mode<synchronous>, transform_indices = @transform_2, window_bounds = array<i64: 1, 128>}, {transform_indices = @transform_3, window_bounds = array<i64: 32, 128>}]} {
    %c0 = arith.constant 0 : index
    %c0_0 = arith.constant 0 : index
    %0 = vector.load %arg1[%c0, %c0_0] : memref<32x576xbf16, #tpu.memory_space<vmem>>, vector<32x576xbf16>
    %c0_1 = arith.constant 0 : index
    %c0_2 = arith.constant 0 : index
    %1 = vector.load %arg2[%c0_1, %c0_2] : memref<576x128xbf16, #tpu.memory_space<vmem>>, vector<576x128xbf16>
    %cst = arith.constant dense<0.000000e+00> : vector<32x128xf32>
    %2 = tpu.matmul %0, %1, %cst {dimension_numbers = #tpu.dot_dimension_numbers<[1], [0], [0], [1], [0, 0, 1, 1], [], []>} : vector<32x576xbf16>, vector<576x128xbf16>, vector<32x128xf32> -> vector<32x128xf32>
    %c0_3 = arith.constant 0 : index
    %c0_4 = arith.constant 0 : index
    %3 = vector.load %arg3[%c0_3, %c0_4] : memref<1x128xf32, #tpu.memory_space<vmem>>, vector<1x128xf32>
    %4 = vector.broadcast %3 : vector<1x128xf32> to vector<32x128xf32>
    %5 = arith.addf %2, %4 : vector<32x128xf32>
    %cst_5 = arith.constant 0.000000e+00 : f32
    %6 = vector.broadcast %cst_5 : f32 to vector<32x128xf32>
    %7 = arith.maximumf %5, %6 : vector<32x128xf32>
    %8 = arith.truncf %7 : vector<32x128xf32> to vector<32x128xbf16>
    %c0_6 = arith.constant 0 : index
    %c0_7 = arith.constant 0 : index
    %9 = vector.load %arg4[%c0_6, %c0_7] : memref<32x128xbf16, #tpu.memory_space<vmem>>, vector<32x128xbf16>
    tpu.vector_store %arg4[%c0_6, %c0_7], %8 {strides = array<i32>} : memref<32x128xbf16, #tpu.memory_space<vmem>>, vector<32x128xbf16>,
    return
  }
  func.func @transform_0(%arg0: i32) -> (i32, i32) {
    %c0_i32 = arith.constant 0 : i32
    %c0_i32_0 = arith.constant 0 : i32
    return %arg0, %c0_i32 : i32, i32
  }
  func.func @transform_1(%arg0: i32) -> (i32, i32) {
    %c0_i32 = arith.constant 0 : i32
    %c0_i32_0 = arith.constant 0 : i32
    %c0_i32_1 = arith.constant 0 : i32
    return %c0_i32, %c0_i32_0 : i32, i32
  }
  func.func @transform_2(%arg0: i32) -> (i32, i32) {
    %c0_i32 = arith.constant 0 : i32
    %c0_i32_0 = arith.constant 0 : i32
    %c0_i32_1 = arith.constant 0 : i32
    return %c0_i32, %c0_i32_0 : i32, i32
  }
  func.func @transform_3(%arg0: i32) -> (i32, i32) {
    %c0_i32 = arith.constant 0 : i32
    %c0_i32_0 = arith.constant 0 : i32
    return %arg0, %c0_i32 : i32, i32
  }
}

module attributes {stable_mosaic.version = 11 : i64} {
  func.func @conv_bn_relu_kernel(%arg0: i32, %arg1: memref<32x1152xbf16, #tpu.memory_space<vmem>>, %arg2: memref<1152x128xbf16, #tpu.memory_space<vmem>>, %arg3: memref<1x128xf32, #tpu.memory_space<vmem>>, %arg4: memref<32x128xbf16, #tpu.memory_space<vmem>>) attributes {dimension_semantics = [#tpu.dimension_semantics<parallel>], iteration_bounds = array<i64: 1>, scalar_prefetch = 0 : i64, scratch_operands = 0 : i64, tpu.core_type = #tpu.core_type<tc>, window_params = [{transform_indices = @transform_0, window_bounds = array<i64: 32, 1152>}, {pipeline_mode = #tpu.pipeline_mode<synchronous>, transform_indices = @transform_1, window_bounds = array<i64: 1152, 128>}, {pipeline_mode = #tpu.pipeline_mode<synchronous>, transform_indices = @transform_2, window_bounds = array<i64: 1, 128>}, {transform_indices = @transform_3, window_bounds = array<i64: 32, 128>}]} {
    %c0 = arith.constant 0 : index
    %c0_0 = arith.constant 0 : index
    %0 = vector.load %arg1[%c0, %c0_0] : memref<32x1152xbf16, #tpu.memory_space<vmem>>, vector<32x1152xbf16>
    %c0_1 = arith.constant 0 : index
    %c0_2 = arith.constant 0 : index
    %1 = vector.load %arg2[%c0_1, %c0_2] : memref<1152x128xbf16, #tpu.memory_space<vmem>>, vector<1152x128xbf16>
    %cst = arith.constant dense<0.000000e+00> : vector<32x128xf32>
    %2 = tpu.matmul %0, %1, %cst {dimension_numbers = #tpu.dot_dimension_numbers<[1], [0], [0], [1], [0, 0, 1, 1], [], []>} : vector<32x1152xbf16>, vector<1152x128xbf16>, vector<32x128xf32> -> vector<32x128xf32>
    %c0_3 = arith.constant 0 : index
    %c0_4 = arith.constant 0 : index
    %3 = vector.load %arg3[%c0_3, %c0_4] : memref<1x128xf32, #tpu.memory_space<vmem>>, vector<1x128xf32>
    %4 = vector.broadcast %3 : vector<1x128xf32> to vector<32x128xf32>
    %5 = arith.addf %2, %4 : vector<32x128xf32>
    %cst_5 = arith.constant 0.000000e+00 : f32
    %6 = vector.broadcast %cst_5 : f32 to vector<32x128xf32>
    %7 = arith.maximumf %5, %6 : vector<32x128xf32>
    %8 = arith.truncf %7 : vector<32x128xf32> to vector<32x128xbf16>
    %c0_6 = arith.constant 0 : index
    %c0_7 = arith.constant 0 : index
    %9 = vector.load %arg4[%c0_6, %c0_7] : memref<32x128xbf16, #tpu.memory_space<vmem>>, vector<32x128xbf16>
    tpu.vector_store %arg4[%c0_6, %c0_7], %8 {strides = array<i32>} : memref<32x128xbf16, #tpu.memory_space<vmem>>, vector<32x128xbf16>,
    return
  }
  func.func @transform_0(%arg0: i32) -> (i32, i32) {
    %c0_i32 = arith.constant 0 : i32
    %c0_i32_0 = arith.constant 0 : i32
    return %arg0, %c0_i32 : i32, i32
  }
  func.func @transform_1(%arg0: i32) -> (i32, i32) {
    %c0_i32 = arith.constant 0 : i32
    %c0_i32_0 = arith.constant 0 : i32
    %c0_i32_1 = arith.constant 0 : i32
    return %c0_i32, %c0_i32_0 : i32, i32
  }
  func.func @transform_2(%arg0: i32) -> (i32, i32) {
    %c0_i32 = arith.constant 0 : i32
    %c0_i32_0 = arith.constant 0 : i32
    %c0_i32_1 = arith.constant 0 : i32
    return %c0_i32, %c0_i32_0 : i32, i32
  }
  func.func @transform_3(%arg0: i32) -> (i32, i32) {
    %c0_i32 = arith.constant 0 : i32
    %c0_i32_0 = arith.constant 0 : i32
    return %arg0, %c0_i32 : i32, i32
  }
}

module attributes {stable_mosaic.version = 11 : i64} {
  func.func @block_tail_kernel(%arg0: i32, %arg1: memref<32x1152xbf16, #tpu.memory_space<vmem>>, %arg2: memref<1152x128xbf16, #tpu.memory_space<vmem>>, %arg3: memref<1x128xf32, #tpu.memory_space<vmem>>, %arg4: memref<32x64xbf16, #tpu.memory_space<vmem>>, %arg5: memref<64x128xbf16, #tpu.memory_space<vmem>>, %arg6: memref<1x128xf32, #tpu.memory_space<vmem>>, %arg7: memref<32x128xbf16, #tpu.memory_space<vmem>>) attributes {dimension_semantics = [#tpu.dimension_semantics<parallel>], iteration_bounds = array<i64: 1>, scalar_prefetch = 0 : i64, scratch_operands = 0 : i64, tpu.core_type = #tpu.core_type<tc>, window_params = [{transform_indices = @transform_0, window_bounds = array<i64: 32, 1152>}, {pipeline_mode = #tpu.pipeline_mode<synchronous>, transform_indices = @transform_1, window_bounds = array<i64: 1152, 128>}, {pipeline_mode = #tpu.pipeline_mode<synchronous>, transform_indices = @transform_2, window_bounds = array<i64: 1, 128>}, {transform_indices = @transform_3, window_bounds = array<i64: 32, 64>}, {pipeline_mode = #tpu.pipeline_mode<synchronous>, transform_indices = @transform_4, window_bounds = array<i64: 64, 128>}, {pipeline_mode = #tpu.pipeline_mode<synchronous>, transform_indices = @transform_5, window_bounds = array<i64: 1, 128>}, {transform_indices = @transform_6, window_bounds = array<i64: 32, 128>}]} {
    %c0 = arith.constant 0 : index
    %c0_0 = arith.constant 0 : index
    %0 = vector.load %arg4[%c0, %c0_0] : memref<32x64xbf16, #tpu.memory_space<vmem>>, vector<32x64xbf16>
    %c0_1 = arith.constant 0 : index
    %c0_2 = arith.constant 0 : index
    %1 = vector.load %arg5[%c0_1, %c0_2] : memref<64x128xbf16, #tpu.memory_space<vmem>>, vector<64x128xbf16>
    %cst = arith.constant dense<0.000000e+00> : vector<32x128xf32>
    %2 = tpu.matmul %0, %1, %cst {dimension_numbers = #tpu.dot_dimension_numbers<[1], [0], [0], [1], [0, 0, 1, 1], [], []>} : vector<32x64xbf16>, vector<64x128xbf16>, vector<32x128xf32> -> vector<32x128xf32>
    %c0_3 = arith.constant 0 : index
    %c0_4 = arith.constant 0 : index
    %3 = vector.load %arg6[%c0_3, %c0_4] : memref<1x128xf32, #tpu.memory_space<vmem>>, vector<1x128xf32>
    %4 = vector.broadcast %3 : vector<1x128xf32> to vector<32x128xf32>
    %5 = arith.addf %2, %4 : vector<32x128xf32>
    %c0_5 = arith.constant 0 : index
    %c0_6 = arith.constant 0 : index
    %6 = vector.load %arg1[%c0_5, %c0_6] : memref<32x1152xbf16, #tpu.memory_space<vmem>>, vector<32x1152xbf16>
    %c0_7 = arith.constant 0 : index
    %c0_8 = arith.constant 0 : index
    %7 = vector.load %arg2[%c0_7, %c0_8] : memref<1152x128xbf16, #tpu.memory_space<vmem>>, vector<1152x128xbf16>
    %cst_9 = arith.constant dense<0.000000e+00> : vector<32x128xf32>
    %8 = tpu.matmul %6, %7, %cst_9 {dimension_numbers = #tpu.dot_dimension_numbers<[1], [0], [0], [1], [0, 0, 1, 1], [], []>} : vector<32x1152xbf16>, vector<1152x128xbf16>, vector<32x128xf32> -> vector<32x128xf32>
    %c0_10 = arith.constant 0 : index
    %c0_11 = arith.constant 0 : index
    %9 = vector.load %arg3[%c0_10, %c0_11] : memref<1x128xf32, #tpu.memory_space<vmem>>, vector<1x128xf32>
    %10 = vector.broadcast %9 : vector<1x128xf32> to vector<32x128xf32>
    %11 = arith.addf %8, %10 : vector<32x128xf32>
    %12 = arith.addf %11, %5 : vector<32x128xf32>
    %cst_12 = arith.constant 0.000000e+00 : f32
    %13 = vector.broadcast %cst_12 : f32 to vector<32x128xf32>
    %14 = arith.maximumf %12, %13 : vector<32x128xf32>
    %15 = arith.truncf %14 : vector<32x128xf32> to vector<32x128xbf16>
    %c0_13 = arith.constant 0 : index
    %c0_14 = arith.constant 0 : index
    %16 = vector.load %arg7[%c0_13, %c0_14] : memref<32x128xbf16, #tpu.memory_space<vmem>>, vector<32x128xbf16>
    tpu.vector_store %arg7[%c0_13, %c0_14], %15 {strides = array<i32>} : memref<32x128xbf16, #tpu.memory_space<vmem>>, vector<32x128xbf16>,
    return
  }
  func.func @transform_0(%arg0: i32) -> (i32, i32) {
    %c0_i32 = arith.constant 0 : i32
    %c0_i32_0 = arith.constant 0 : i32
    return %arg0, %c0_i32 : i32, i32
  }
  func.func @transform_1(%arg0: i32) -> (i32, i32) {
    %c0_i32 = arith.constant 0 : i32
    %c0_i32_0 = arith.constant 0 : i32
    %c0_i32_1 = arith.constant 0 : i32
    return %c0_i32, %c0_i32_0 : i32, i32
  }
  func.func @transform_2(%arg0: i32) -> (i32, i32) {
    %c0_i32 = arith.constant 0 : i32
    %c0_i32_0 = arith.constant 0 : i32
    %c0_i32_1 = arith.constant 0 : i32
    return %c0_i32, %c0_i32_0 : i32, i32
  }
  func.func @transform_3(%arg0: i32) -> (i32, i32) {
    %c0_i32 = arith.constant 0 : i32
    %c0_i32_0 = arith.constant 0 : i32
    return %arg0, %c0_i32 : i32, i32
  }
  func.func @transform_4(%arg0: i32) -> (i32, i32) {
    %c0_i32 = arith.constant 0 : i32
    %c0_i32_0 = arith.constant 0 : i32
    %c0_i32_1 = arith.constant 0 : i32
    return %c0_i32, %c0_i32_0 : i32, i32
  }
  func.func @transform_5(%arg0: i32) -> (i32, i32) {
    %c0_i32 = arith.constant 0 : i32
    %c0_i32_0 = arith.constant 0 : i32
    %c0_i32_1 = arith.constant 0 : i32
    return %c0_i32, %c0_i32_0 : i32, i32
  }
  func.func @transform_6(%arg0: i32) -> (i32, i32) {
    %c0_i32 = arith.constant 0 : i32
    %c0_i32_0 = arith.constant 0 : i32
    return %arg0, %c0_i32 : i32, i32
  }
}

module attributes {stable_mosaic.version = 11 : i64} {
  func.func @block_tail_kernel(%arg0: i32, %arg1: memref<32x1152xbf16, #tpu.memory_space<vmem>>, %arg2: memref<1152x128xbf16, #tpu.memory_space<vmem>>, %arg3: memref<1x128xf32, #tpu.memory_space<vmem>>, %arg4: memref<32x128xbf16, #tpu.memory_space<vmem>>, %arg5: memref<2x128xf32, #tpu.memory_space<vmem>>) attributes {dimension_semantics = [#tpu.dimension_semantics<parallel>], iteration_bounds = array<i64: 1>, scalar_prefetch = 0 : i64, scratch_operands = 0 : i64, tpu.core_type = #tpu.core_type<tc>, window_params = [{transform_indices = @transform_0, window_bounds = array<i64: 32, 1152>}, {pipeline_mode = #tpu.pipeline_mode<synchronous>, transform_indices = @transform_1, window_bounds = array<i64: 1152, 128>}, {pipeline_mode = #tpu.pipeline_mode<synchronous>, transform_indices = @transform_2, window_bounds = array<i64: 1, 128>}, {transform_indices = @transform_3, window_bounds = array<i64: 32, 128>}, {pipeline_mode = #tpu.pipeline_mode<synchronous>, transform_indices = @transform_4, window_bounds = array<i64: 2, 128>}]} {
    %c0 = arith.constant 0 : index
    %c0_0 = arith.constant 0 : index
    %0 = vector.load %arg4[%c0, %c0_0] : memref<32x128xbf16, #tpu.memory_space<vmem>>, vector<32x128xbf16>
    %1 = arith.extf %0 : vector<32x128xbf16> to vector<32x128xf32>
    %c0_1 = arith.constant 0 : index
    %c0_2 = arith.constant 0 : index
    %2 = vector.load %arg1[%c0_1, %c0_2] : memref<32x1152xbf16, #tpu.memory_space<vmem>>, vector<32x1152xbf16>
    %c0_3 = arith.constant 0 : index
    %c0_4 = arith.constant 0 : index
    %3 = vector.load %arg2[%c0_3, %c0_4] : memref<1152x128xbf16, #tpu.memory_space<vmem>>, vector<1152x128xbf16>
    %cst = arith.constant dense<0.000000e+00> : vector<32x128xf32>
    %4 = tpu.matmul %2, %3, %cst {dimension_numbers = #tpu.dot_dimension_numbers<[1], [0], [0], [1], [0, 0, 1, 1], [], []>} : vector<32x1152xbf16>, vector<1152x128xbf16>, vector<32x128xf32> -> vector<32x128xf32>
    %c0_5 = arith.constant 0 : index
    %c0_6 = arith.constant 0 : index
    %5 = vector.load %arg3[%c0_5, %c0_6] : memref<1x128xf32, #tpu.memory_space<vmem>>, vector<1x128xf32>
    %6 = vector.broadcast %5 : vector<1x128xf32> to vector<32x128xf32>
    %7 = arith.addf %4, %6 : vector<32x128xf32>
    %8 = arith.addf %7, %1 : vector<32x128xf32>
    %cst_7 = arith.constant 0.000000e+00 : f32
    %9 = vector.broadcast %cst_7 : f32 to vector<32x128xf32>
    %10 = arith.maximumf %8, %9 : vector<32x128xf32>
    %11 = vector.extract_strided_slice %10 {offsets = [0, 0], sizes = [16, 128], strides = [1, 1]} : vector<32x128xf32> to vector<16x128xf32>
    %cst_8 = arith.constant dense<0.000000e+00> : vector<128xf32>
    %12 = vector.multi_reduction <add>, %11, %cst_8 [0] : vector<16x128xf32> to vector<128xf32>
    %13 = vector.shape_cast %12 : vector<128xf32> to vector<1x128xf32>
    %cst_9 = arith.constant 1.600000e+01 : f32
    %14 = vector.broadcast %cst_9 : f32 to vector<1x128xf32>
    %15 = arith.divf %13, %14 : vector<1x128xf32>
    %c0_10 = arith.constant 0 : index
    %c0_11 = arith.constant 0 : index
    %16 = vector.load %arg5[%c0_10, %c0_11] : memref<2x128xf32, #tpu.memory_space<vmem>>, vector<1x128xf32>
    tpu.vector_store %arg5[%c0_10, %c0_11], %15 {strides = array<i32>} : memref<2x128xf32, #tpu.memory_space<vmem>>, vector<1x128xf32>,
    %17 = vector.extract_strided_slice %10 {offsets = [16, 0], sizes = [16, 128], strides = [1, 1]} : vector<32x128xf32> to vector<16x128xf32>
    %cst_12 = arith.constant dense<0.000000e+00> : vector<128xf32>
    %18 = vector.multi_reduction <add>, %17, %cst_12 [0] : vector<16x128xf32> to vector<128xf32>
    %19 = vector.shape_cast %18 : vector<128xf32> to vector<1x128xf32>
    %cst_13 = arith.constant 1.600000e+01 : f32
    %20 = vector.broadcast %cst_13 : f32 to vector<1x128xf32>
    %21 = arith.divf %19, %20 : vector<1x128xf32>
    %c1 = arith.constant 1 : index
    %c0_14 = arith.constant 0 : index
    %22 = vector.load %arg5[%c1, %c0_14] : memref<2x128xf32, #tpu.memory_space<vmem>>, vector<1x128xf32>
    tpu.vector_store %arg5[%c1, %c0_14], %21 {strides = array<i32>} : memref<2x128xf32, #tpu.memory_space<vmem>>, vector<1x128xf32>,
    return
  }
  func.func @transform_0(%arg0: i32) -> (i32, i32) {
    %c0_i32 = arith.constant 0 : i32
    %c0_i32_0 = arith.constant 0 : i32
    return %arg0, %c0_i32 : i32, i32
  }
  func.func @transform_1(%arg0: i32) -> (i32, i32) {
    %c0_i32 = arith.constant 0 : i32
    %c0_i32_0 = arith.constant 0 : i32
    %c0_i32_1 = arith.constant 0 : i32
    return %c0_i32, %c0_i32_0 : i32, i32
  }
  func.func @transform_2(%arg0: i32) -> (i32, i32) {
    %c0_i32 = arith.constant 0 : i32
    %c0_i32_0 = arith.constant 0 : i32
    %c0_i32_1 = arith.constant 0 : i32
    return %c0_i32, %c0_i32_0 : i32, i32
  }
  func.func @transform_3(%arg0: i32) -> (i32, i32) {
    %c0_i32 = arith.constant 0 : i32
    %c0_i32_0 = arith.constant 0 : i32
    return %arg0, %c0_i32 : i32, i32
  }
  func.func @transform_4(%arg0: i32) -> (i32, i32) {
    %c0_i32 = arith.constant 0 : i32
    %c0_i32_0 = arith.constant 0 : i32
    %c0_i32_1 = arith.constant 0 : i32
    return %c0_i32, %c0_i32_0 : i32, i32
  }
}

</mosaic_0001>

<llo_original>
// kernel: resnet_backbone_forward.10
$region0: #{resnet_backbone_forward.10}
  #allocation0 [shape = 'u32[]', space=smem, size = 0x4, offset = 0x4, fixed_abs, tag = 'smem constant byte address 0x4 - core index']
  #allocation1 [shape = 'u32[144,128]{1,0:T(1,128)}', space=vmem, size = 0x12000, scoped, tag = 'internal scratch']
  %s0 = inlined_call_operand.vmem [shape: bf16[512,147], index: 0, kind: input, shape index: {}]
  %s1 = inlined_call_operand.vmem [shape: bf16[147,64], index: 1, kind: input, shape index: {}]
  %s2 = inlined_call_operand.vmem [shape: f32[1,64], index: 2, kind: input, shape index: {}]
  %s3 = inlined_call_operand.vmem [shape: bf16[512,64], index: 3, kind: output, shape index: {}]
  %s4 = sld [smem:[#allocation0]]
  $region22: #{resnet_backbone_forward.10} parent=0
    _
  %s6 = ssub.s32 1, %s4
  %s7 = scalar_select 0, %s6, %s4
  // Predicated region
  $region2: #{resnet_backbone_forward.10} parent=0 // pred_check
    _
  $region3: #{resnet_backbone_forward.10} parent=0 // pred_check_branch
    %9 = sbr.rel (0) target = $region5
  $region4: #{resnet_backbone_forward.10} parent=0 // pred_region
    _
  $region5: #{resnet_backbone_forward.10} parent=0 // pred_fallthru
    _
  // Predicated region
  $region6: #{resnet_backbone_forward.10} parent=0 // pred_check
    _
  $region7: #{resnet_backbone_forward.10} parent=0 // pred_check_branch
    %11 = sbr.rel (0) target = $region9
  $region8: #{resnet_backbone_forward.10} parent=0 // pred_region
    _
  $region9: #{resnet_backbone_forward.10} parent=0 // pred_fallthru
    _
  // Predicated region
  $region10: #{resnet_backbone_forward.10} parent=0 // pred_check
    _
  $region11: #{resnet_backbone_forward.10} parent=0 // pred_check_branch
    %13 = sbr.rel (0) target = $region13
  $region12: #{resnet_backbone_forward.10} parent=0 // pred_region
    _
  $region13: #{resnet_backbone_forward.10} parent=0 // pred_fallthru
    _
  %v15 = vld [vmem:[%s0] sm:$0xff]
  %v16 = vld [vmem:[%s0 + $0x8] sm:$0xff]
  %v17 = vld [vmem:[%s0 + $0x10] sm:$0xff]
  %v18 = vld [vmem:[%s0 + $0x18] sm:$0xff]
  %v19 = vld [vmem:[%s0 + $0x20] sm:$0xff]
  %v20 = vld [vmem:[%s0 + $0x28] sm:$0xff]
  %v21 = vld [vmem:[%s0 + $0x30] sm:$0xff]
  %v22 = vld [vmem:[%s0 + $0x38] sm:$0xff]
  %v23 = vld [vmem:[%s0 + $0x40] sm:$0xff]
  %v24 = vld [vmem:[%s0 + $0x48] sm:$0xff]
  %v25 = vld [vmem:[%s0 + $0x50] sm:$0xff]
  %v26 = vld [vmem:[%s0 + $0x58] sm:$0xff]
  %v27 = vld [vmem:[%s0 + $0x60] sm:$0xff]
  %v28 = vld [vmem:[%s0 + $0x68] sm:$0xff]
  %v29 = vld [vmem:[%s0 + $0x70] sm:$0xff]
  %v30 = vld [vmem:[%s0 + $0x78] sm:$0xff]
  %v31 = vld [vmem:[%s0 + $0x80] sm:$0xff]
  %v32 = vld [vmem:[%s0 + $0x88] sm:$0xff]
  %v33 = vld [vmem:[%s0 + $0x90] sm:$0xff]
  %v34 = vld [vmem:[%s0 + $0x98] sm:$0xff]
  %v35 = vld [vmem:[%s0 + $0xa0] sm:$0xff]
  %v36 = vld [vmem:[%s0 + $0xa8] sm:$0xff]
  %v37 = vld [vmem:[%s0 + $0xb0] sm:$0xff]
  %v38 = vld [vmem:[%s0 + $0xb8] sm:$0xff]
  %v39 = vld [vmem:[%s0 + $0xc0] sm:$0xff]
  %v40 = vld [vmem:[%s0 + $0xc8] sm:$0xff]
  %v41 = vld [vmem:[%s0 + $0xd0] sm:$0xff]
  %v42 = vld [vmem:[%s0 + $0xd8] sm:$0xff]
  %v43 = vld [vmem:[%s0 + $0xe0] sm:$0xff]
  %v44 = vld [vmem:[%s0 + $0xe8] sm:$0xff]
  %v45 = vld [vmem:[%s0 + $0xf0] sm:$0xff]
  %v46 = vld [vmem:[%s0 + $0xf8] sm:$0xff]
  %v47 = vld [vmem:[%s0 + $0x100] sm:$0xff]
  %v48 = vld [vmem:[%s0 + $0x108] sm:$0xff]
  %v49 = vld [vmem:[%s0 + $0x110] sm:$0xff]
  %v50 = vld [vmem:[%s0 + $0x118] sm:$0xff]
  %v51 = vld [vmem:[%s0 + $0x120] sm:$0xff]
  %v52 = vld [vmem:[%s0 + $0x128] sm:$0xff]
  %v53 = vld [vmem:[%s0 + $0x130] sm:$0xff]
  %v54 = vld [vmem:[%s0 + $0x138] sm:$0xff]
  %v55 = vld [vmem:[%s0 + $0x140] sm:$0xff]
  %v56 = vld [vmem:[%s0 + $0x148] sm:$0xff]
  %v57 = vld [vmem:[%s0 + $0x150] sm:$0xff]
  %v58 = vld [vmem:[%s0 + $0x158] sm:$0xff]
  %v59 = vld [vmem:[%s0 + $0x160] sm:$0xff]
  %v60 = vld [vmem:[%s0 + $0x168] sm:$0xff]
  %v61 = vld [vmem:[%s0 + $0x170] sm:$0xff]
  %v62 = vld [vmem:[%s0 + $0x178] sm:$0xff]
  %v63 = vld [vmem:[%s0 + $0x180] sm:$0xff]
  %v64 = vld [vmem:[%s0 + $0x188] sm:$0xff]
  %v65 = vld [vmem:[%s0 + $0x190] sm:$0xff]
  %v66 = vld [vmem:[%s0 + $0x198] sm:$0xff]
  %v67 = vld [vmem:[%s0 + $0x1a0] sm:$0xff]
  %v68 = vld [vmem:[%s0 + $0x1a8] sm:$0xff]
  %v69 = vld [vmem:[%s0 + $0x1b0] sm:$0xff]
  %v70 = vld [vmem:[%s0 + $0x1b8] sm:$0xff]
  %v71 = vld [vmem:[%s0 + $0x1c0] sm:$0xff]
  %v72 = vld [vmem:[%s0 + $0x1c8] sm:$0xff]
  %v73 = vld [vmem:[%s0 + $0x1d0] sm:$0xff]
  %v74 = vld [vmem:[%s0 + $0x1d8] sm:$0xff]
  %v75 = vld [vmem:[%s0 + $0x1e0] sm:$0xff]
  %v76 = vld [vmem:[%s0 + $0x1e8] sm:$0xff]
  %v77 = vld [vmem:[%s0 + $0x1f0] sm:$0xff]
  %v78 = vld [vmem:[%s0 + $0x1f8] sm:$0xff]
  %v79 = vld [vmem:[%s1] sm:$0xf]
  %v80 = vld [vmem:[%s1 + $0x4] sm:$0xf]
  %v81 = vld [vmem:[%s1 + $0x8] sm:$0xf]
  %v82 = vld [vmem:[%s1 + $0xc] sm:$0xf]
  %v83 = vld [vmem:[%s1 + $0x10] sm:$0xf]
  %v84 = vld [vmem:[%s1 + $0x14] sm:$0xf]
  %v85 = vld [vmem:[%s1 + $0x18] sm:$0xf]
  %v86 = vld [vmem:[%s1 + $0x1c] sm:$0xf]
  %v87 = vld [vmem:[%s1 + $0x20] sm:$0xf]
  %v88 = vld [vmem:[%s1 + $0x24] sm:$0xf]
  %v89 = vld [vmem:[%s1 + $0x28] sm:$0xf]
  %v90 = vld [vmem:[%s1 + $0x2c] sm:$0xf]
  %v91 = vld [vmem:[%s1 + $0x30] sm:$0xf]
  %v92 = vld [vmem:[%s1 + $0x34] sm:$0xf]
  %v93 = vld [vmem:[%s1 + $0x38] sm:$0xf]
  %v94 = vld [vmem:[%s1 + $0x3c] sm:$0xf]
  %v95 = vld [vmem:[%s1 + $0x40] sm:$0xf]
  %v96 = vld [vmem:[%s1 + $0x44] sm:$0xf]
  %v97 = vld [vmem:[%s1 + $0x48] sm:$0x3]
  %v98 = vld [vmem:[%s2] sm:$0x1]
  %v100 = vlaneseq
  %v101 = vshrl.u32 %v100, 7
  %v102 = vsub.s32 0, %v101
  %v103 = vrot.slane %v98, %v102
  %v169 = vunpack.c.l.b16 %v15
  %v170 = vunpack.c.h.b16 %v15
  %v171 = vunpack.c.l.b16 %v16
  %v172 = vunpack.c.h.b16 %v16
  %v173 = vunpack.c.l.b16 %v17
  %v174 = vunpack.c.h.b16 %v17
  %v175 = vunpack.c.l.b16 %v18
  %v176 = vunpack.c.h.b16 %v18
  %v177 = vunpack.c.l.b16 %v19
  %v178 = vunpack.c.h.b16 %v19
  %v179 = vunpack.c.l.b16 %v20
  %v180 = vunpack.c.h.b16 %v20
  %v181 = vunpack.c.l.b16 %v21
  %v182 = vunpack.c.h.b16 %v21
  %v183 = vunpack.c.l.b16 %v22
  %v184 = vunpack.c.h.b16 %v22
  %v185 = vunpack.c.l.b16 %v23
  %v186 = vunpack.c.h.b16 %v23
  %v187 = vunpack.c.l.b16 %v24
  %v188 = vunpack.c.h.b16 %v24
  %v189 = vunpack.c.l.b16 %v25
  %v190 = vunpack.c.h.b16 %v25
  %v191 = vunpack.c.l.b16 %v26
  %v192 = vunpack.c.h.b16 %v26
  %v193 = vunpack.c.l.b16 %v27
  %v194 = vunpack.c.h.b16 %v27
  %v195 = vunpack.c.l.b16 %v28
  %v196 = vunpack.c.h.b16 %v28
  %v197 = vunpack.c.l.b16 %v29
  %v198 = vunpack.c.h.b16 %v29
  %v199 = vunpack.c.l.b16 %v30
  %v200 = vunpack.c.h.b16 %v30
  %v201 = vunpack.c.l.b16 %v31
  %v202 = vunpack.c.h.b16 %v31
  %v203 = vunpack.c.l.b16 %v32
  %v204 = vunpack.c.h.b16 %v32
  %v205 = vunpack.c.l.b16 %v33
  %v206 = vunpack.c.h.b16 %v33
  %v207 = vunpack.c.l.b16 %v34
  %v208 = vunpack.c.h.b16 %v34
  %v209 = vunpack.c.l.b16 %v35
  %v210 = vunpack.c.h.b16 %v35
  %v211 = vunpack.c.l.b16 %v36
  %v212 = vunpack.c.h.b16 %v36
  %v213 = vunpack.c.l.b16 %v37
  %v214 = vunpack.c.h.b16 %v37
  %v215 = vunpack.c.l.b16 %v38
  %v216 = vunpack.c.h.b16 %v38
  %v217 = vunpack.c.l.b16 %v39
  %v218 = vunpack.c.h.b16 %v39
  %v219 = vunpack.c.l.b16 %v40
  %v220 = vunpack.c.h.b16 %v40
  %v221 = vunpack.c.l.b16 %v41
  %v222 = vunpack.c.h.b16 %v41
  %v223 = vunpack.c.l.b16 %v42
  %v224 = vunpack.c.h.b16 %v42
  %v225 = vunpack.c.l.b16 %v43
  %v226 = vunpack.c.h.b16 %v43
  %v227 = vunpack.c.l.b16 %v44
  %v228 = vunpack.c.h.b16 %v44
  %v229 = vunpack.c.l.b16 %v45
  %v230 = vunpack.c.h.b16 %v45
  %v231 = vunpack.c.l.b16 %v46
  %v232 = vunpack.c.h.b16 %v46
  %v233 = vunpack.c.l.b16 %v47
  %v234 = vunpack.c.h.b16 %v47
  %v235 = vunpack.c.l.b16 %v48
  %v236 = vunpack.c.h.b16 %v48
  %v237 = vunpack.c.l.b16 %v49
  %v238 = vunpack.c.h.b16 %v49
  %v239 = vunpack.c.l.b16 %v50
  %v240 = vunpack.c.h.b16 %v50
  %v241 = vunpack.c.l.b16 %v51
  %v242 = vunpack.c.h.b16 %v51
  %v243 = vunpack.c.l.b16 %v52
  %v244 = vunpack.c.h.b16 %v52
  %v245 = vunpack.c.l.b16 %v53
  %v246 = vunpack.c.h.b16 %v53
  %v247 = vunpack.c.l.b16 %v54
  %v248 = vunpack.c.h.b16 %v54
  %v249 = vunpack.c.l.b16 %v55
  %v250 = vunpack.c.h.b16 %v55
  %v251 = vunpack.c.l.b16 %v56
  %v252 = vunpack.c.h.b16 %v56
  %v253 = vunpack.c.l.b16 %v57
  %v254 = vunpack.c.h.b16 %v57
  %v255 = vunpack.c.l.b16 %v58
  %v256 = vunpack.c.h.b16 %v58
  %v257 = vunpack.c.l.b16 %v59
  %v258 = vunpack.c.h.b16 %v59
  %v259 = vunpack.c.l.b16 %v60
  %v260 = vunpack.c.h.b16 %v60
  %v261 = vunpack.c.l.b16 %v61
  %v262 = vunpack.c.h.b16 %v61
  %v263 = vunpack.c.l.b16 %v62
  %v264 = vunpack.c.h.b16 %v62
  %v265 = vunpack.c.l.b16 %v63
  %v266 = vunpack.c.h.b16 %v63
  %v267 = vunpack.c.l.b16 %v64
  %v268 = vunpack.c.h.b16 %v64
  %v269 = vunpack.c.l.b16 %v65
  %v270 = vunpack.c.h.b16 %v65
  %v271 = vunpack.c.l.b16 %v66
  %v272 = vunpack.c.h.b16 %v66
  %v273 = vunpack.c.l.b16 %v67
  %v274 = vunpack.c.h.b16 %v67
  %v275 = vunpack.c.l.b16 %v68
  %v276 = vunpack.c.h.b16 %v68
  %v277 = vunpack.c.l.b16 %v69
  %v278 = vunpack.c.h.b16 %v69
  %v279 = vunpack.c.l.b16 %v70
  %v280 = vunpack.c.h.b16 %v70
  %v281 = vunpack.c.l.b16 %v71
  %v282 = vunpack.c.h.b16 %v71
  %v283 = vunpack.c.l.b16 %v72
  %v284 = vunpack.c.h.b16 %v72
  %v285 = vunpack.c.l.b16 %v73
  %v286 = vunpack.c.h.b16 %v73
  %v287 = vunpack.c.l.b16 %v74
  %v288 = vunpack.c.h.b16 %v74
  %v289 = vunpack.c.l.b16 %v75
  %v290 = vunpack.c.h.b16 %v75
  %v291 = vunpack.c.l.b16 %v76
  %v292 = vunpack.c.h.b16 %v76
  %v293 = vunpack.c.l.b16 %v77
  %v294 = vunpack.c.h.b16 %v77
  %v295 = vunpack.c.l.b16 %v78
  %v296 = vunpack.c.h.b16 %v78
  %v297 = vpack.c.b16 %v171, %v169
  %v298 = vpack.c.b16 %v172, %v170
  %v299 = vpack.c.b16 %v175, %v173
  %v300 = vpack.c.b16 %v176, %v174
  %v301 = vpack.c.b16 %v179, %v177
  %v302 = vpack.c.b16 %v180, %v178
  %v303 = vpack.c.b16 %v183, %v181
  %v304 = vpack.c.b16 %v184, %v182
  %v305 = vpack.c.b16 %v187, %v185
  %v306 = vpack.c.b16 %v188, %v186
  %v307 = vpack.c.b16 %v191, %v189
  %v308 = vpack.c.b16 %v192, %v190
  %v309 = vpack.c.b16 %v195, %v193
  %v310 = vpack.c.b16 %v196, %v194
  %v311 = vpack.c.b16 %v199, %v197
  %v312 = vpack.c.b16 %v200, %v198
  %v313 = vpack.c.b16 %v203, %v201
  %v314 = vpack.c.b16 %v204, %v202
  %v315 = vpack.c.b16 %v207, %v205
  %v316 = vpack.c.b16 %v208, %v206
  %v317 = vpack.c.b16 %v211, %v209
  %v318 = vpack.c.b16 %v212, %v210
  %v319 = vpack.c.b16 %v215, %v213
  %v320 = vpack.c.b16 %v216, %v214
  %v321 = vpack.c.b16 %v219, %v217
  %v322 = vpack.c.b16 %v220, %v218
  %v323 = vpack.c.b16 %v223, %v221
  %v324 = vpack.c.b16 %v224, %v222
  %v325 = vpack.c.b16 %v227, %v225
  %v326 = vpack.c.b16 %v228, %v226
  %v327 = vpack.c.b16 %v231, %v229
  %v328 = vpack.c.b16 %v232, %v230
  %v329 = vpack.c.b16 %v235, %v233
  %v330 = vpack.c.b16 %v236, %v234
  %v331 = vpack.c.b16 %v239, %v237
  %v332 = vpack.c.b16 %v240, %v238
  %v333 = vpack.c.b16 %v243, %v241
  %v334 = vpack.c.b16 %v244, %v242
  %v335 = vpack.c.b16 %v247, %v245
  %v336 = vpack.c.b16 %v248, %v246
  %v337 = vpack.c.b16 %v251, %v249
  %v338 = vpack.c.b16 %v252, %v250
  %v339 = vpack.c.b16 %v255, %v253
  %v340 = vpack.c.b16 %v256, %v254
  %v341 = vpack.c.b16 %v259, %v257
  %v342 = vpack.c.b16 %v260, %v258
  %v343 = vpack.c.b16 %v263, %v261
  %v344 = vpack.c.b16 %v264, %v262
  %v345 = vpack.c.b16 %v267, %v265
  %v346 = vpack.c.b16 %v268, %v266
  %v347 = vpack.c.b16 %v271, %v269
  %v348 = vpack.c.b16 %v272, %v270
  %v349 = vpack.c.b16 %v275, %v273
  %v350 = vpack.c.b16 %v276, %v274
  %v351 = vpack.c.b16 %v279, %v277
  %v352 = vpack.c.b16 %v280, %v278
  %v353 = vpack.c.b16 %v283, %v281
  %v354 = vpack.c.b16 %v284, %v282
  %v355 = vpack.c.b16 %v287, %v285
  %v356 = vpack.c.b16 %v288, %v286
  %v357 = vpack.c.b16 %v291, %v289
  %v358 = vpack.c.b16 %v292, %v290
  %v359 = vpack.c.b16 %v295, %v293
  %v360 = vpack.c.b16 %v296, %v294
  %v412 = vunpack.c.l.b16 %v79
  %v413 = vunpack.c.l.b16 %v80
  %v414 = vunpack.c.l.b16 %v81
  %v415 = vunpack.c.l.b16 %v82
  %v416 = vunpack.c.l.b16 %v83
  %v417 = vunpack.c.l.b16 %v84
  %v418 = vunpack.c.l.b16 %v85
  %v419 = vunpack.c.l.b16 %v86
  %v420 = vunpack.c.l.b16 %v87
  %v421 = vunpack.c.l.b16 %v88
  %v422 = vunpack.c.l.b16 %v89
  %v423 = vunpack.c.l.b16 %v90
  %v424 = vunpack.c.l.b16 %v91
  %v425 = vunpack.c.l.b16 %v92
  %v426 = vunpack.c.l.b16 %v93
  %v427 = vunpack.c.l.b16 %v94
  %v428 = vunpack.c.l.b16 %v95
  %v429 = vunpack.c.l.b16 %v96
  %v430 = vunpack.c.l.b16 %v97
  %v431 = vpack.c.b16 %v413, %v412
  %v432 = vpack.c.b16 %v415, %v414
  %v433 = vpack.c.b16 %v417, %v416
  %v434 = vpack.c.b16 %v419, %v418
  %v435 = vpack.c.b16 %v421, %v420
  %v436 = vpack.c.b16 %v423, %v422
  %v437 = vpack.c.b16 %v425, %v424
  %v438 = vpack.c.b16 %v427, %v426
  %v439 = vpack.c.b16 %v429, %v428
  %v440 = vpack.c.b16 %v430, %v430
  %vm450 = vcmask 154624
  %v452 = vsel %vm450, %v298, 0
  %v455 = vsel %vm450, %v300, 0
  %v458 = vsel %vm450, %v302, 0
  %v461 = vsel %vm450, %v304, 0
  %v464 = vsel %vm450, %v306, 0
  %v467 = vsel %vm450, %v308, 0
  %v470 = vsel %vm450, %v310, 0
  %v473 = vsel %vm450, %v312, 0
  %v476 = vsel %vm450, %v314, 0
  %v479 = vsel %vm450, %v316, 0
  %v482 = vsel %vm450, %v318, 0
  %v485 = vsel %vm450, %v320, 0
  %v488 = vsel %vm450, %v322, 0
  %v491 = vsel %vm450, %v324, 0
  %v494 = vsel %vm450, %v326, 0
  %v497 = vsel %vm450, %v328, 0
  %v500 = vsel %vm450, %v330, 0
  %v503 = vsel %vm450, %v332, 0
  %v506 = vsel %vm450, %v334, 0
  %v509 = vsel %vm450, %v336, 0
  %v512 = vsel %vm450, %v338, 0
  %v515 = vsel %vm450, %v340, 0
  %v518 = vsel %vm450, %v342, 0
  %v521 = vsel %vm450, %v344, 0
  %v524 = vsel %vm450, %v346, 0
  %v527 = vsel %vm450, %v348, 0
  %v530 = vsel %vm450, %v350, 0
  %v533 = vsel %vm450, %v352, 0
  %v536 = vsel %vm450, %v354, 0
  %v539 = vsel %vm450, %v356, 0
  %v542 = vsel %vm450, %v358, 0
  %v545 = vsel %vm450, %v360, 0
  %vm547 = vcmask 1040384
  %vm548 = vcmask 1041408
  %v549 = vsel %vm547, 4294967295, 65535
  %v550 = vsel %vm548, %v549, 0
  %v552 = vand.u32 %v440, %v550
  %554 = vmatprep.subr.bf16.mxu0 0
  %555 = vmatpush1.bf16.msra.mxu0 %v438
  %556 = vmatprep.subr.bf16.mxu0 0
  %557 = vmatpush1.bf16.msra.mxu0 %v437
  %558 = vmatprep.subr.bf16.mxu0 0
  %559 = vmatpush1.bf16.msra.mxu0 %v436
  %560 = vmatprep.subr.bf16.mxu0 0
  %561 = vmatpush1.bf16.msra.mxu0 %v435
  %562 = vmatprep.subr.bf16.mxu0 0
  %563 = vmatpush1.bf16.msra.mxu0 %v434
  %564 = vmatprep.subr.bf16.mxu0 0
  %565 = vmatpush1.bf16.msra.mxu0 %v433
  %566 = vmatprep.subr.bf16.mxu0 0
  %567 = vmatpush1.bf16.msra.mxu0 %v432
  %568 = vmatprep.subr.bf16.mxu0 0
  %569 = vmatpush1.bf16.msra.mxu0 %v431
  %570 = vmatprep.subr.bf16.mxu0 0
  %571 = vmatpush2.bf16.msra.mxu0 0
  %572 = vmatprep.subr.bf16.mxu0 0
  %573 = vmatpush2.bf16.msra.mxu0 0
  %574 = vmatprep.subr.bf16.mxu0 0
  %575 = vmatpush2.bf16.msra.mxu0 0
  %576 = vmatprep.subr.bf16.mxu0 0
  %577 = vmatpush2.bf16.msra.mxu0 0
  %578 = vmatprep.subr.bf16.mxu0 0
  %579 = vmatpush2.bf16.msra.mxu0 0
  %580 = vmatprep.subr.bf16.mxu0 0
  %581 = vmatpush2.bf16.msra.mxu0 0
  %582 = vmatprep.subr.bf16.mxu0 0
  %583 = vmatpush2.bf16.msra.mxu0 %v552
  %584 = vmatprep.subr.bf16.mxu0 0
  %585 = vmatpush2.bf16.msra.mxu0 %v439
  %586 = vmatprep.mubr.bf16.mxu0 %v452
  %587 = vmatmul.mubr.bf16.gmra.mxu0 %v297
  %v588 = vpop.f32.mrf.mxu0
  %v589 = vadd.f32 %v103, %v588
  %v590 = vpop.f32.mrf.mxu0
  %v591 = vpop.f32.mrf.mxu0
  %v592 = vadd.f32 %v103, %v591
  %v593 = vpop.f32.mrf.mxu0
  %594 = vmatprep.mubr.bf16.mxu0 %v455
  %595 = vmatmul.mubr.bf16.gmra.mxu0 %v299
  %v596 = vpop.f32.mrf.mxu0
  %v597 = vadd.f32 %v103, %v596
  %v598 = vpop.f32.mrf.mxu0
  %v599 = vpop.f32.mrf.mxu0
  %v600 = vadd.f32 %v103, %v599
  %v601 = vpop.f32.mrf.mxu0
  %602 = vmatprep.mubr.bf16.mxu0 %v458
  %603 = vmatmul.mubr.bf16.gmra.mxu0 %v301
  %v604 = vpop.f32.mrf.mxu0
  %v605 = vadd.f32 %v103, %v604
  %v606 = vpop.f32.mrf.mxu0
  %v607 = vpop.f32.mrf.mxu0
  %v608 = vadd.f32 %v103, %v607
  %v609 = vpop.f32.mrf.mxu0
  %610 = vmatprep.mubr.bf16.mxu0 %v461
  %611 = vmatmul.mubr.bf16.gmra.mxu0 %v303
  %v612 = vpop.f32.mrf.mxu0
  %v613 = vadd.f32 %v103, %v612
  %v614 = vpop.f32.mrf.mxu0
  %v615 = vpop.f32.mrf.mxu0
  %v616 = vadd.f32 %v103, %v615
  %v617 = vpop.f32.mrf.mxu0
  %618 = vmatprep.mubr.bf16.mxu0 %v464
  %619 = vmatmul.mubr.bf16.gmra.mxu0 %v305
  %v620 = vpop.f32.mrf.mxu0
  %v621 = vadd.f32 %v103, %v620
  %v622 = vpop.f32.mrf.mxu0
  %v623 = vpop.f32.mrf.mxu0
  %v624 = vadd.f32 %v103, %v623
  %v625 = vpop.f32.mrf.mxu0
  %626 = vmatprep.mubr.bf16.mxu0 %v467
  %627 = vmatmul.mubr.bf16.gmra.mxu0 %v307
  %v628 = vpop.f32.mrf.mxu0
  %v629 = vadd.f32 %v103, %v628
  %v630 = vpop.f32.mrf.mxu0
  %v631 = vpop.f32.mrf.mxu0
  %v632 = vadd.f32 %v103, %v631
  %v633 = vpop.f32.mrf.mxu0
  %634 = vmatprep.mubr.bf16.mxu0 %v470
  %635 = vmatmul.mubr.bf16.gmra.mxu0 %v309
  %v636 = vpop.f32.mrf.mxu0
  %v637 = vadd.f32 %v103, %v636
  %v638 = vpop.f32.mrf.mxu0
  %v639 = vpop.f32.mrf.mxu0
  %v640 = vadd.f32 %v103, %v639
  %v641 = vpop.f32.mrf.mxu0
  %642 = vmatprep.mubr.bf16.mxu0 %v473
  %643 = vmatmul.mubr.bf16.gmra.mxu0 %v311
  %v644 = vpop.f32.mrf.mxu0
  %v645 = vadd.f32 %v103, %v644
  %v646 = vpop.f32.mrf.mxu0
  %v647 = vpop.f32.mrf.mxu0
  %v648 = vadd.f32 %v103, %v647
  %v649 = vpop.f32.mrf.mxu0
  %650 = vmatprep.mubr.bf16.mxu0 %v476
  %651 = vmatmul.mubr.bf16.gmra.mxu0 %v313
  %v652 = vpop.f32.mrf.mxu0
  %v653 = vadd.f32 %v103, %v652
  %v654 = vpop.f32.mrf.mxu0
  %v655 = vpop.f32.mrf.mxu0
  %v656 = vadd.f32 %v103, %v655
  %v657 = vpop.f32.mrf.mxu0
  %658 = vmatprep.mubr.bf16.mxu0 %v479
  %659 = vmatmul.mubr.bf16.gmra.mxu0 %v315
  %v660 = vpop.f32.mrf.mxu0
  %v661 = vadd.f32 %v103, %v660
  %v662 = vpop.f32.mrf.mxu0
  %v663 = vpop.f32.mrf.mxu0
  %v664 = vadd.f32 %v103, %v663
  %v665 = vpop.f32.mrf.mxu0
  %666 = vmatprep.mubr.bf16.mxu0 %v482
  %667 = vmatmul.mubr.bf16.gmra.mxu0 %v317
  %v668 = vpop.f32.mrf.mxu0
  %v669 = vadd.f32 %v103, %v668
  %v670 = vpop.f32.mrf.mxu0
  %v671 = vpop.f32.mrf.mxu0
  %v672 = vadd.f32 %v103, %v671
  %v673 = vpop.f32.mrf.mxu0
  %674 = vmatprep.mubr.bf16.mxu0 %v485
  %675 = vmatmul.mubr.bf16.gmra.mxu0 %v319
  %v676 = vpop.f32.mrf.mxu0
  %v677 = vadd.f32 %v103, %v676
  %v678 = vpop.f32.mrf.mxu0
  %v679 = vpop.f32.mrf.mxu0
  %v680 = vadd.f32 %v103, %v679
  %v681 = vpop.f32.mrf.mxu0
  %682 = vmatprep.mubr.bf16.mxu0 %v488
  %683 = vmatmul.mubr.bf16.gmra.mxu0 %v321
  %v684 = vpop.f32.mrf.mxu0
  %v685 = vadd.f32 %v103, %v684
  %v686 = vpop.f32.mrf.mxu0
  %v687 = vpop.f32.mrf.mxu0
  %v688 = vadd.f32 %v103, %v687
  %v689 = vpop.f32.mrf.mxu0
  %690 = vmatprep.mubr.bf16.mxu0 %v491
  %691 = vmatmul.mubr.bf16.gmra.mxu0 %v323
  %v692 = vpop.f32.mrf.mxu0
  %v693 = vadd.f32 %v103, %v692
  %v694 = vpop.f32.mrf.mxu0
  %v695 = vpop.f32.mrf.mxu0
  %v696 = vadd.f32 %v103, %v695
  %v697 = vpop.f32.mrf.mxu0
  %698 = vmatprep.mubr.bf16.mxu0 %v494
  %699 = vmatmul.mubr.bf16.gmra.mxu0 %v325
  %v700 = vpop.f32.mrf.mxu0
  %v701 = vadd.f32 %v103, %v700
  %v702 = vpop.f32.mrf.mxu0
  %v703 = vpop.f32.mrf.mxu0
  %v704 = vadd.f32 %v103, %v703
  %v705 = vpop.f32.mrf.mxu0
  %706 = vmatprep.mubr.bf16.mxu0 %v497
  %707 = vmatmul.mubr.bf16.gmra.mxu0 %v327
  %v708 = vpop.f32.mrf.mxu0
  %v709 = vadd.f32 %v103, %v708
  %v710 = vpop.f32.mrf.mxu0
  %v711 = vpop.f32.mrf.mxu0
  %v712 = vadd.f32 %v103, %v711
  %v713 = vpop.f32.mrf.mxu0
  %714 = vmatprep.mubr.bf16.mxu0 %v500
  %715 = vmatmul.mubr.bf16.gmra.mxu0 %v329
  %v716 = vpop.f32.mrf.mxu0
  %v717 = vadd.f32 %v103, %v716
  %v718 = vpop.f32.mrf.mxu0
  %v719 = vpop.f32.mrf.mxu0
  %v720 = vadd.f32 %v103, %v719
  %v721 = vpop.f32.mrf.mxu0
  %722 = vmatprep.mubr.bf16.mxu0 %v503
  %723 = vmatmul.mubr.bf16.gmra.mxu0 %v331
  %v724 = vpop.f32.mrf.mxu0
  %v725 = vadd.f32 %v103, %v724
  %v726 = vpop.f32.mrf.mxu0
  %v727 = vpop.f32.mrf.mxu0
  %v728 = vadd.f32 %v103, %v727
  %v729 = vpop.f32.mrf.mxu0
  %730 = vmatprep.mubr.bf16.mxu0 %v506
  %731 = vmatmul.mubr.bf16.gmra.mxu0 %v333
  %v732 = vpop.f32.mrf.mxu0
  %v733 = vadd.f32 %v103, %v732
  %v734 = vpop.f32.mrf.mxu0
  %v735 = vpop.f32.mrf.mxu0
  %v736 = vadd.f32 %v103, %v735
  %v737 = vpop.f32.mrf.mxu0
  %738 = vmatprep.mubr.bf16.mxu0 %v509
  %739 = vmatmul.mubr.bf16.gmra.mxu0 %v335
  %v740 = vpop.f32.mrf.mxu0
  %v741 = vadd.f32 %v103, %v740
  %v742 = vpop.f32.mrf.mxu0
  %v743 = vpop.f32.mrf.mxu0
  %v744 = vadd.f32 %v103, %v743
  %v745 = vpop.f32.mrf.mxu0
  %746 = vmatprep.mubr.bf16.mxu0 %v512
  %747 = vmatmul.mubr.bf16.gmra.mxu0 %v337
  %v748 = vpop.f32.mrf.mxu0
  %v749 = vadd.f32 %v103, %v748
  %v750 = vpop.f32.mrf.mxu0
  %v751 = vpop.f32.mrf.mxu0
  %v752 = vadd.f32 %v103, %v751
  %v753 = vpop.f32.mrf.mxu0
  %754 = vmatprep.mubr.bf16.mxu0 %v515
  %755 = vmatmul.mubr.bf16.gmra.mxu0 %v339
  %v756 = vpop.f32.mrf.mxu0
  %v757 = vadd.f32 %v103, %v756
  %v758 = vpop.f32.mrf.mxu0
  %v759 = vpop.f32.mrf.mxu0
  %v760 = vadd.f32 %v103, %v759
  %v761 = vpop.f32.mrf.mxu0
  %762 = vmatprep.mubr.bf16.mxu0 %v518
  %763 = vmatmul.mubr.bf16.gmra.mxu0 %v341
  %v764 = vpop.f32.mrf.mxu0
  %v765 = vadd.f32 %v103, %v764
  %v766 = vpop.f32.mrf.mxu0
  %v767 = vpop.f32.mrf.mxu0
  %v768 = vadd.f32 %v103, %v767
  %v769 = vpop.f32.mrf.mxu0
  %770 = vmatprep.mubr.bf16.mxu0 %v521
  %771 = vmatmul.mubr.bf16.gmra.mxu0 %v343
  %v772 = vpop.f32.mrf.mxu0
  %v773 = vadd.f32 %v103, %v772
  %v774 = vpop.f32.mrf.mxu0
  %v775 = vpop.f32.mrf.mxu0
  %v776 = vadd.f32 %v103, %v775
  %v777 = vpop.f32.mrf.mxu0
  %778 = vmatprep.mubr.bf16.mxu0 %v524
  %779 = vmatmul.mubr.bf16.gmra.mxu0 %v345
  %v780 = vpop.f32.mrf.mxu0
  %v781 = vadd.f32 %v103, %v780
  %v782 = vpop.f32.mrf.mxu0
  %v783 = vpop.f32.mrf.mxu0
  %v784 = vadd.f32 %v103, %v783
  %v785 = vpop.f32.mrf.mxu0
  %786 = vmatprep.mubr.bf16.mxu0 %v527
  %787 = vmatmul.mubr.bf16.gmra.mxu0 %v347
  %v788 = vpop.f32.mrf.mxu0
  %v789 = vadd.f32 %v103, %v788
  %v790 = vpop.f32.mrf.mxu0
  %v791 = vpop.f32.mrf.mxu0
  %v792 = vadd.f32 %v103, %v791
  %v793 = vpop.f32.mrf.mxu0
  %794 = vmatprep.mubr.bf16.mxu0 %v530
  %795 = vmatmul.mubr.bf16.gmra.mxu0 %v349
  %v796 = vpop.f32.mrf.mxu0
  %v797 = vadd.f32 %v103, %v796
  %v798 = vpop.f32.mrf.mxu0
  %v799 = vpop.f32.mrf.mxu0
  %v800 = vadd.f32 %v103, %v799
  %v801 = vpop.f32.mrf.mxu0
  %802 = vmatprep.mubr.bf16.mxu0 %v533
  %803 = vmatmul.mubr.bf16.gmra.mxu0 %v351
  %v804 = vpop.f32.mrf.mxu0
  %v805 = vadd.f32 %v103, %v804
  %v806 = vpop.f32.mrf.mxu0
  %v807 = vpop.f32.mrf.mxu0
  %v808 = vadd.f32 %v103, %v807
  %v809 = vpop.f32.mrf.mxu0
  %810 = vmatprep.mubr.bf16.mxu0 %v536
  %811 = vmatmul.mubr.bf16.gmra.mxu0 %v353
  %v812 = vpop.f32.mrf.mxu0
  %v813 = vadd.f32 %v103, %v812
  %v814 = vpop.f32.mrf.mxu0
  %v815 = vpop.f32.mrf.mxu0
  %v816 = vadd.f32 %v103, %v815
  %v817 = vpop.f32.mrf.mxu0
  %818 = vmatprep.mubr.bf16.mxu0 %v539
  %819 = vmatmul.mubr.bf16.gmra.mxu0 %v355
  %v820 = vpop.f32.mrf.mxu0
  %v821 = vadd.f32 %v103, %v820
  %v822 = vpop.f32.mrf.mxu0
  %v823 = vpop.f32.mrf.mxu0
  %v824 = vadd.f32 %v103, %v823
  %v825 = vpop.f32.mrf.mxu0
  %826 = vmatprep.mubr.bf16.mxu0 %v542
  %827 = vmatmul.mubr.bf16.gmra.mxu0 %v357
  %v828 = vpop.f32.mrf.mxu0
  %v829 = vadd.f32 %v103, %v828
  %v830 = vpop.f32.mrf.mxu0
  %v831 = vpop.f32.mrf.mxu0
  %v832 = vadd.f32 %v103, %v831
  %v833 = vpop.f32.mrf.mxu0
  %834 = vmatprep.mubr.bf16.mxu0 %v545
  %835 = vmatmul.mubr.bf16.gmra.mxu0 %v359
  %v836 = vpop.f32.mrf.mxu0
  %v837 = vadd.f32 %v103, %v836
  %v838 = vpop.f32.mrf.mxu0
  %v839 = vpop.f32.mrf.mxu0
  %v840 = vadd.f32 %v103, %v839
  %v841 = vpop.f32.mrf.mxu0
  %842 = vdwg.mxu0
  %v843 = vmax.f32 %v589, 0.0
  %v844 = vmax.f32 %v592, 0.0
  %v845 = vmax.f32 %v597, 0.0
  %v846 = vmax.f32 %v600, 0.0
  %v847 = vmax.f32 %v605, 0.0
  %v848 = vmax.f32 %v608, 0.0
  %v849 = vmax.f32 %v613, 0.0
  %v850 = vmax.f32 %v616, 0.0
  %v851 = vmax.f32 %v621, 0.0
  %v852 = vmax.f32 %v624, 0.0
  %v853 = vmax.f32 %v629, 0.0
  %v854 = vmax.f32 %v632, 0.0
  %v855 = vmax.f32 %v637, 0.0
  %v856 = vmax.f32 %v640, 0.0
  %v857 = vmax.f32 %v645, 0.0
  %v858 = vmax.f32 %v648, 0.0
  %v859 = vmax.f32 %v653, 0.0
  %v860 = vmax.f32 %v656, 0.0
  %v861 = vmax.f32 %v661, 0.0
  %v862 = vmax.f32 %v664, 0.0
  %v863 = vmax.f32 %v669, 0.0
  %v864 = vmax.f32 %v672, 0.0
  %v865 = vmax.f32 %v677, 0.0
  %v866 = vmax.f32 %v680, 0.0
  %v867 = vmax.f32 %v685, 0.0
  %v868 = vmax.f32 %v688, 0.0
  %v869 = vmax.f32 %v693, 0.0
  %v870 = vmax.f32 %v696, 0.0
  %v871 = vmax.f32 %v701, 0.0
  %v872 = vmax.f32 %v704, 0.0
  %v873 = vmax.f32 %v709, 0.0
  %v874 = vmax.f32 %v712, 0.0
  %v875 = vmax.f32 %v717, 0.0
  %v876 = vmax.f32 %v720, 0.0
  %v877 = vmax.f32 %v725, 0.0
  %v878 = vmax.f32 %v728, 0.0
  %v879 = vmax.f32 %v733, 0.0
  %v880 = vmax.f32 %v736, 0.0
  %v881 = vmax.f32 %v741, 0.0
  %v882 = vmax.f32 %v744, 0.0
  %v883 = vmax.f32 %v749, 0.0
  %v884 = vmax.f32 %v752, 0.0
  %v885 = vmax.f32 %v757, 0.0
  %v886 = vmax.f32 %v760, 0.0
  %v887 = vmax.f32 %v765, 0.0
  %v888 = vmax.f32 %v768, 0.0
  %v889 = vmax.f32 %v773, 0.0
  %v890 = vmax.f32 %v776, 0.0
  %v891 = vmax.f32 %v781, 0.0
  %v892 = vmax.f32 %v784, 0.0
  %v893 = vmax.f32 %v789, 0.0
  %v894 = vmax.f32 %v792, 0.0
  %v895 = vmax.f32 %v797, 0.0
  %v896 = vmax.f32 %v800, 0.0
  %v897 = vmax.f32 %v805, 0.0
  %v898 = vmax.f32 %v808, 0.0
  %v899 = vmax.f32 %v813, 0.0
  %v900 = vmax.f32 %v816, 0.0
  %v901 = vmax.f32 %v821, 0.0
  %v902 = vmax.f32 %v824, 0.0
  %v903 = vmax.f32 %v829, 0.0
  %v904 = vmax.f32 %v832, 0.0
  %v905 = vmax.f32 %v837, 0.0
  %v906 = vmax.f32 %v840, 0.0
  %v907 = vpack.c.bf16 %v844, %v843
  %v908 = vpack.c.bf16 %v846, %v845
  %v909 = vpack.c.bf16 %v848, %v847
  %v910 = vpack.c.bf16 %v850, %v849
  %v911 = vpack.c.bf16 %v852, %v851
  %v912 = vpack.c.bf16 %v854, %v853
  %v913 = vpack.c.bf16 %v856, %v855
  %v914 = vpack.c.bf16 %v858, %v857
  %v915 = vpack.c.bf16 %v860, %v859
  %v916 = vpack.c.bf16 %v862, %v861
  %v917 = vpack.c.bf16 %v864, %v863
  %v918 = vpack.c.bf16 %v866, %v865
  %v919 = vpack.c.bf16 %v868, %v867
  %v920 = vpack.c.bf16 %v870, %v869
  %v921 = vpack.c.bf16 %v872, %v871
  %v922 = vpack.c.bf16 %v874, %v873
  %v923 = vpack.c.bf16 %v876, %v875
  %v924 = vpack.c.bf16 %v878, %v877
  %v925 = vpack.c.bf16 %v880, %v879
  %v926 = vpack.c.bf16 %v882, %v881
  %v927 = vpack.c.bf16 %v884, %v883
  %v928 = vpack.c.bf16 %v886, %v885
  %v929 = vpack.c.bf16 %v888, %v887
  %v930 = vpack.c.bf16 %v890, %v889
  %v931 = vpack.c.bf16 %v892, %v891
  %v932 = vpack.c.bf16 %v894, %v893
  %v933 = vpack.c.bf16 %v896, %v895
  %v934 = vpack.c.bf16 %v898, %v897
  %v935 = vpack.c.bf16 %v900, %v899
  %v936 = vpack.c.bf16 %v902, %v901
  %v937 = vpack.c.bf16 %v904, %v903
  %v938 = vpack.c.bf16 %v906, %v905
  %v971 = vunpack.c.l.b16 %v907
  %v972 = vunpack.c.h.b16 %v907
  %v973 = vunpack.c.l.b16 %v908
  %v974 = vunpack.c.h.b16 %v908
  %v975 = vunpack.c.l.b16 %v909
  %v976 = vunpack.c.h.b16 %v909
  %v977 = vunpack.c.l.b16 %v910
  %v978 = vunpack.c.h.b16 %v910
  %v979 = vunpack.c.l.b16 %v911
  %v980 = vunpack.c.h.b16 %v911
  %v981 = vunpack.c.l.b16 %v912
  %v982 = vunpack.c.h.b16 %v912
  %v983 = vunpack.c.l.b16 %v913
  %v984 = vunpack.c.h.b16 %v913
  %v985 = vunpack.c.l.b16 %v914
  %v986 = vunpack.c.h.b16 %v914
  %v987 = vunpack.c.l.b16 %v915
  %v988 = vunpack.c.h.b16 %v915
  %v989 = vunpack.c.l.b16 %v916
  %v990 = vunpack.c.h.b16 %v916
  %v991 = vunpack.c.l.b16 %v917
  %v992 = vunpack.c.h.b16 %v917
  %v993 = vunpack.c.l.b16 %v918
  %v994 = vunpack.c.h.b16 %v918
  %v995 = vunpack.c.l.b16 %v919
  %v996 = vunpack.c.h.b16 %v919
  %v997 = vunpack.c.l.b16 %v920
  %v998 = vunpack.c.h.b16 %v920
  %v999 = vunpack.c.l.b16 %v921
  %v1000 = vunpack.c.h.b16 %v921
  %v1001 = vunpack.c.l.b16 %v922
  %v1002 = vunpack.c.h.b16 %v922
  %v1003 = vunpack.c.l.b16 %v923
  %v1004 = vunpack.c.h.b16 %v923
  %v1005 = vunpack.c.l.b16 %v924
  %v1006 = vunpack.c.h.b16 %v924
  %v1007 = vunpack.c.l.b16 %v925
  %v1008 = vunpack.c.h.b16 %v925
  %v1009 = vunpack.c.l.b16 %v926
  %v1010 = vunpack.c.h.b16 %v926
  %v1011 = vunpack.c.l.b16 %v927
  %v1012 = vunpack.c.h.b16 %v927
  %v1013 = vunpack.c.l.b16 %v928
  %v1014 = vunpack.c.h.b16 %v928
  %v1015 = vunpack.c.l.b16 %v929
  %v1016 = vunpack.c.h.b16 %v929
  %v1017 = vunpack.c.l.b16 %v930
  %v1018 = vunpack.c.h.b16 %v930
  %v1019 = vunpack.c.l.b16 %v931
  %v1020 = vunpack.c.h.b16 %v931
  %v1021 = vunpack.c.l.b16 %v932
  %v1022 = vunpack.c.h.b16 %v932
  %v1023 = vunpack.c.l.b16 %v933
  %v1024 = vunpack.c.h.b16 %v933
  %v1025 = vunpack.c.l.b16 %v934
  %v1026 = vunpack.c.h.b16 %v934
  %v1027 = vunpack.c.l.b16 %v935
  %v1028 = vunpack.c.h.b16 %v935
  %v1029 = vunpack.c.l.b16 %v936
  %v1030 = vunpack.c.h.b16 %v936
  %v1031 = vunpack.c.l.b16 %v937
  %v1032 = vunpack.c.h.b16 %v937
  %v1033 = vunpack.c.l.b16 %v938
  %v1034 = vunpack.c.h.b16 %v938
  %v1035 = vpack.c.b16 %v971, %v971
  %v1036 = vpack.c.b16 %v972, %v972
  %v1037 = vpack.c.b16 %v973, %v973
  %v1038 = vpack.c.b16 %v974, %v974
  %v1039 = vpack.c.b16 %v975, %v975
  %v1040 = vpack.c.b16 %v976, %v976
  %v1041 = vpack.c.b16 %v977, %v977
  %v1042 = vpack.c.b16 %v978, %v978
  %v1043 = vpack.c.b16 %v979, %v979
  %v1044 = vpack.c.b16 %v980, %v980
  %v1045 = vpack.c.b16 %v981, %v981
  %v1046 = vpack.c.b16 %v982, %v982
  %v1047 = vpack.c.b16 %v983, %v983
  %v1048 = vpack.c.b16 %v984, %v984
  %v1049 = vpack.c.b16 %v985, %v985
  %v1050 = vpack.c.b16 %v986, %v986
  %v1051 = vpack.c.b16 %v987, %v987
  %v1052 = vpack.c.b16 %v988, %v988
  %v1053 = vpack.c.b16 %v989, %v989
  %v1054 = vpack.c.b16 %v990, %v990
  %v1055 = vpack.c.b16 %v991, %v991
  %v1056 = vpack.c.b16 %v992, %v992
  %v1057 = vpack.c.b16 %v993, %v993
  %v1058 = vpack.c.b16 %v994, %v994
  %v1059 = vpack.c.b16 %v995, %v995
  %v1060 = vpack.c.b16 %v996, %v996
  %v1061 = vpack.c.b16 %v997, %v997
  %v1062 = vpack.c.b16 %v998, %v998
  %v1063 = vpack.c.b16 %v999, %v999
  %v1064 = vpack.c.b16 %v1000, %v1000
  %v1065 = vpack.c.b16 %v1001, %v1001
  %v1066 = vpack.c.b16 %v1002, %v1002
  %v1067 = vpack.c.b16 %v1003, %v1003
  %v1068 = vpack.c.b16 %v1004, %v1004
  %v1069 = vpack.c.b16 %v1005, %v1005
  %v1070 = vpack.c.b16 %v1006, %v1006
  %v1071 = vpack.c.b16 %v1007, %v1007
  %v1072 = vpack.c.b16 %v1008, %v1008
  %v1073 = vpack.c.b16 %v1009, %v1009
  %v1074 = vpack.c.b16 %v1010, %v1010
  %v1075 = vpack.c.b16 %v1011, %v1011
  %v1076 = vpack.c.b16 %v1012, %v1012
  %v1077 = vpack.c.b16 %v1013, %v1013
  %v1078 = vpack.c.b16 %v1014, %v1014
  %v1079 = vpack.c.b16 %v1015, %v1015
  %v1080 = vpack.c.b16 %v1016, %v1016
  %v1081 = vpack.c.b16 %v1017, %v1017
  %v1082 = vpack.c.b16 %v1018, %v1018
  %v1083 = vpack.c.b16 %v1019, %v1019
  %v1084 = vpack.c.b16 %v1020, %v1020
  %v1085 = vpack.c.b16 %v1021, %v1021
  %v1086 = vpack.c.b16 %v1022, %v1022
  %v1087 = vpack.c.b16 %v1023, %v1023
  %v1088 = vpack.c.b16 %v1024, %v1024
  %v1089 = vpack.c.b16 %v1025, %v1025
  %v1090 = vpack.c.b16 %v1026, %v1026
  %v1091 = vpack.c.b16 %v1027, %v1027
  %v1092 = vpack.c.b16 %v1028, %v1028
  %v1093 = vpack.c.b16 %v1029, %v1029
  %v1094 = vpack.c.b16 %v1030, %v1030
  %v1095 = vpack.c.b16 %v1031, %v1031
  %v1096 = vpack.c.b16 %v1032, %v1032
  %v1097 = vpack.c.b16 %v1033, %v1033
  %v1098 = vpack.c.b16 %v1034, %v1034
  %vm1163 = vcmask 519168
  %1164 = vst.msk [vmem:[%s3] sm:$0xf] %vm1163, %v1035
  %1165 = vst.msk [vmem:[%s3 + $0x4] sm:$0xf] %vm1163, %v1036
  %1166 = vst.msk [vmem:[%s3 + $0x8] sm:$0xf] %vm1163, %v1037
  %1167 = vst.msk [vmem:[%s3 + $0xc] sm:$0xf] %vm1163, %v1038
  %1168 = vst.msk [vmem:[%s3 + $0x10] sm:$0xf] %vm1163, %v1039
  %1169 = vst.msk [vmem:[%s3 + $0x14] sm:$0xf] %vm1163, %v1040
  %1170 = vst.msk [vmem:[%s3 + $0x18] sm:$0xf] %vm1163, %v1041
  %1171 = vst.msk [vmem:[%s3 + $0x1c] sm:$0xf] %vm1163, %v1042
  %1172 = vst.msk [vmem:[%s3 + $0x20] sm:$0xf] %vm1163, %v1043
  %1173 = vst.msk [vmem:[%s3 + $0x24] sm:$0xf] %vm1163, %v1044
  %1174 = vst.msk [vmem:[%s3 + $0x28] sm:$0xf] %vm1163, %v1045
  %1175 = vst.msk [vmem:[%s3 + $0x2c] sm:$0xf] %vm1163, %v1046
  %1176 = vst.msk [vmem:[%s3 + $0x30] sm:$0xf] %vm1163, %v1047
  %1177 = vst.msk [vmem:[%s3 + $0x34] sm:$0xf] %vm1163, %v1048
  %1178 = vst.msk [vmem:[%s3 + $0x38] sm:$0xf] %vm1163, %v1049
  %1179 = vst.msk [vmem:[%s3 + $0x3c] sm:$0xf] %vm1163, %v1050
  %1180 = vst.msk [vmem:[%s3 + $0x40] sm:$0xf] %vm1163, %v1051
  %1181 = vst.msk [vmem:[%s3 + $0x44] sm:$0xf] %vm1163, %v1052
  %1182 = vst.msk [vmem:[%s3 + $0x48] sm:$0xf] %vm1163, %v1053
  %1183 = vst.msk [vmem:[%s3 + $0x4c] sm:$0xf] %vm1163, %v1054
  %1184 = vst.msk [vmem:[%s3 + $0x50] sm:$0xf] %vm1163, %v1055
  %1185 = vst.msk [vmem:[%s3 + $0x54] sm:$0xf] %vm1163, %v1056
  %1186 = vst.msk [vmem:[%s3 + $0x58] sm:$0xf] %vm1163, %v1057
  %1187 = vst.msk [vmem:[%s3 + $0x5c] sm:$0xf] %vm1163, %v1058
  %1188 = vst.msk [vmem:[%s3 + $0x60] sm:$0xf] %vm1163, %v1059
  %1189 = vst.msk [vmem:[%s3 + $0x64] sm:$0xf] %vm1163, %v1060
  %1190 = vst.msk [vmem:[%s3 + $0x68] sm:$0xf] %vm1163, %v1061
  %1191 = vst.msk [vmem:[%s3 + $0x6c] sm:$0xf] %vm1163, %v1062
  %1192 = vst.msk [vmem:[%s3 + $0x70] sm:$0xf] %vm1163, %v1063
  %1193 = vst.msk [vmem:[%s3 + $0x74] sm:$0xf] %vm1163, %v1064
  %1194 = vst.msk [vmem:[%s3 + $0x78] sm:$0xf] %vm1163, %v1065
  %1195 = vst.msk [vmem:[%s3 + $0x7c] sm:$0xf] %vm1163, %v1066
  %1196 = vst.msk [vmem:[%s3 + $0x80] sm:$0xf] %vm1163, %v1067
  %1197 = vst.msk [vmem:[%s3 + $0x84] sm:$0xf] %vm1163, %v1068
  %1198 = vst.msk [vmem:[%s3 + $0x88] sm:$0xf] %vm1163, %v1069
  %1199 = vst.msk [vmem:[%s3 + $0x8c] sm:$0xf] %vm1163, %v1070
  %1200 = vst.msk [vmem:[%s3 + $0x90] sm:$0xf] %vm1163, %v1071
  %1201 = vst.msk [vmem:[%s3 + $0x94] sm:$0xf] %vm1163, %v1072
  %1202 = vst.msk [vmem:[%s3 + $0x98] sm:$0xf] %vm1163, %v1073
  %1203 = vst.msk [vmem:[%s3 + $0x9c] sm:$0xf] %vm1163, %v1074
  %1204 = vst.msk [vmem:[%s3 + $0xa0] sm:$0xf] %vm1163, %v1075
  %1205 = vst.msk [vmem:[%s3 + $0xa4] sm:$0xf] %vm1163, %v1076
  %1206 = vst.msk [vmem:[%s3 + $0xa8] sm:$0xf] %vm1163, %v1077
  %1207 = vst.msk [vmem:[%s3 + $0xac] sm:$0xf] %vm1163, %v1078
  %1208 = vst.msk [vmem:[%s3 + $0xb0] sm:$0xf] %vm1163, %v1079
  %1209 = vst.msk [vmem:[%s3 + $0xb4] sm:$0xf] %vm1163, %v1080
  %1210 = vst.msk [vmem:[%s3 + $0xb8] sm:$0xf] %vm1163, %v1081
  %1211 = vst.msk [vmem:[%s3 + $0xbc] sm:$0xf] %vm1163, %v1082
  %1212 = vst.msk [vmem:[%s3 + $0xc0] sm:$0xf] %vm1163, %v1083
  %1213 = vst.msk [vmem:[%s3 + $0xc4] sm:$0xf] %vm1163, %v1084
  %1214 = vst.msk [vmem:[%s3 + $0xc8] sm:$0xf] %vm1163, %v1085
  %1215 = vst.msk [vmem:[%s3 + $0xcc] sm:$0xf] %vm1163, %v1086
  %1216 = vst.msk [vmem:[%s3 + $0xd0] sm:$0xf] %vm1163, %v1087
  %1217 = vst.msk [vmem:[%s3 + $0xd4] sm:$0xf] %vm1163, %v1088
  %1218 = vst.msk [vmem:[%s3 + $0xd8] sm:$0xf] %vm1163, %v1089
  %1219 = vst.msk [vmem:[%s3 + $0xdc] sm:$0xf] %vm1163, %v1090
  %1220 = vst.msk [vmem:[%s3 + $0xe0] sm:$0xf] %vm1163, %v1091
  %1221 = vst.msk [vmem:[%s3 + $0xe4] sm:$0xf] %vm1163, %v1092
  %1222 = vst.msk [vmem:[%s3 + $0xe8] sm:$0xf] %vm1163, %v1093
  %1223 = vst.msk [vmem:[%s3 + $0xec] sm:$0xf] %vm1163, %v1094
  %1224 = vst.msk [vmem:[%s3 + $0xf0] sm:$0xf] %vm1163, %v1095
  %1225 = vst.msk [vmem:[%s3 + $0xf4] sm:$0xf] %vm1163, %v1096
  %1226 = vst.msk [vmem:[%s3 + $0xf8] sm:$0xf] %vm1163, %v1097
  %1227 = vst.msk [vmem:[%s3 + $0xfc] sm:$0xf] %vm1163, %v1098
  // Predicated region
  $region14: #{resnet_backbone_forward.10} parent=0 // pred_check
    _
  $region15: #{resnet_backbone_forward.10} parent=0 // pred_check_branch
    %1229 = sbr.rel (0) target = $region17
  $region16: #{resnet_backbone_forward.10} parent=0 // pred_region
    _
  $region17: #{resnet_backbone_forward.10} parent=0 // pred_fallthru
    _
  // Predicated region
  $region18: #{resnet_backbone_forward.10} parent=0 // pred_check
    _
  $region19: #{resnet_backbone_forward.10} parent=0 // pred_check_branch
    %1231 = sbr.rel (0) target = $region21
  $region20: #{resnet_backbone_forward.10} parent=0 // pred_region
    _
  $region21: #{resnet_backbone_forward.10} parent=0 // pred_fallthru
    _

// kernel: resnet_backbone_forward.11
$region0: #{resnet_backbone_forward.11}
  #allocation0 [shape = 'u32[]', space=smem, size = 0x4, offset = 0x4, fixed_abs, tag = 'smem constant byte address 0x4 - core index']
  #allocation1 [shape = 'u32[144,128]{1,0:T(1,128)}', space=vmem, size = 0x12000, scoped, tag = 'internal scratch']
  %s0 = inlined_call_operand.vmem [shape: bf16[9,128,64], index: 0, kind: input, shape index: {}]
  %s1 = inlined_call_operand.vmem [shape: bf16[128,64], index: 1, kind: output, shape index: {}]
  %s2 = sld [smem:[#allocation0]]
  $region14: #{resnet_backbone_forward.11} parent=0
    _
  %s4 = ssub.s32 1, %s2
  %s5 = scalar_select 0, %s4, %s2
  // Predicated region
  $region2: #{resnet_backbone_forward.11} parent=0 // pred_check
    _
  $region3: #{resnet_backbone_forward.11} parent=0 // pred_check_branch
    %7 = sbr.rel (0) target = $region5
  $region4: #{resnet_backbone_forward.11} parent=0 // pred_region
    _
  $region5: #{resnet_backbone_forward.11} parent=0 // pred_fallthru
    _
  %v8 = vld [vmem:[%s0] sm:$0xf]
  %v9 = vld [vmem:[%s0 + $0x4] sm:$0xf]
  %v10 = vld [vmem:[%s0 + $0x8] sm:$0xf]
  %v11 = vld [vmem:[%s0 + $0xc] sm:$0xf]
  %v12 = vld [vmem:[%s0 + $0x10] sm:$0xf]
  %v13 = vld [vmem:[%s0 + $0x14] sm:$0xf]
  %v14 = vld [vmem:[%s0 + $0x18] sm:$0xf]
  %v15 = vld [vmem:[%s0 + $0x1c] sm:$0xf]
  %v16 = vld [vmem:[%s0 + $0x20] sm:$0xf]
  %v17 = vld [vmem:[%s0 + $0x24] sm:$0xf]
  %v18 = vld [vmem:[%s0 + $0x28] sm:$0xf]
  %v19 = vld [vmem:[%s0 + $0x2c] sm:$0xf]
  %v20 = vld [vmem:[%s0 + $0x30] sm:$0xf]
  %v21 = vld [vmem:[%s0 + $0x34] sm:$0xf]
  %v22 = vld [vmem:[%s0 + $0x38] sm:$0xf]
  %v23 = vld [vmem:[%s0 + $0x3c] sm:$0xf]
  %s24 = scalar_lea.vmem %s0, 64
  %v25 = vld [vmem:[%s24] sm:$0xf]
  %v26 = vld [vmem:[%s24 + $0x4] sm:$0xf]
  %v27 = vld [vmem:[%s24 + $0x8] sm:$0xf]
  %v28 = vld [vmem:[%s24 + $0xc] sm:$0xf]
  %v29 = vld [vmem:[%s24 + $0x10] sm:$0xf]
  %v30 = vld [vmem:[%s24 + $0x14] sm:$0xf]
  %v31 = vld [vmem:[%s24 + $0x18] sm:$0xf]
  %v32 = vld [vmem:[%s24 + $0x1c] sm:$0xf]
  %v33 = vld [vmem:[%s24 + $0x20] sm:$0xf]
  %v34 = vld [vmem:[%s24 + $0x24] sm:$0xf]
  %v35 = vld [vmem:[%s24 + $0x28] sm:$0xf]
  %v36 = vld [vmem:[%s24 + $0x2c] sm:$0xf]
  %v37 = vld [vmem:[%s24 + $0x30] sm:$0xf]
  %v38 = vld [vmem:[%s24 + $0x34] sm:$0xf]
  %v39 = vld [vmem:[%s24 + $0x38] sm:$0xf]
  %v40 = vld [vmem:[%s24 + $0x3c] sm:$0xf]
  %v41 = vmax.bf16 %v8, %v25
  %v42 = vmax.bf16 %v9, %v26
  %v43 = vmax.bf16 %v10, %v27
  %v44 = vmax.bf16 %v11, %v28
  %v45 = vmax.bf16 %v12, %v29
  %v46 = vmax.bf16 %v13, %v30
  %v47 = vmax.bf16 %v14, %v31
  %v48 = vmax.bf16 %v15, %v32
  %v49 = vmax.bf16 %v16, %v33
  %v50 = vmax.bf16 %v17, %v34
  %v51 = vmax.bf16 %v18, %v35
  %v52 = vmax.bf16 %v19, %v36
  %v53 = vmax.bf16 %v20, %v37
  %v54 = vmax.bf16 %v21, %v38
  %v55 = vmax.bf16 %v22, %v39
  %v56 = vmax.bf16 %v23, %v40
  %s57 = scalar_lea.vmem %s0, 128
  %v58 = vld [vmem:[%s57] sm:$0xf]
  %v59 = vld [vmem:[%s57 + $0x4] sm:$0xf]
  %v60 = vld [vmem:[%s57 + $0x8] sm:$0xf]
  %v61 = vld [vmem:[%s57 + $0xc] sm:$0xf]
  %v62 = vld [vmem:[%s57 + $0x10] sm:$0xf]
  %v63 = vld [vmem:[%s57 + $0x14] sm:$0xf]
  %v64 = vld [vmem:[%s57 + $0x18] sm:$0xf]
  %v65 = vld [vmem:[%s57 + $0x1c] sm:$0xf]
  %v66 = vld [vmem:[%s57 + $0x20] sm:$0xf]
  %v67 = vld [vmem:[%s57 + $0x24] sm:$0xf]
  %v68 = vld [vmem:[%s57 + $0x28] sm:$0xf]
  %v69 = vld [vmem:[%s57 + $0x2c] sm:$0xf]
  %v70 = vld [vmem:[%s57 + $0x30] sm:$0xf]
  %v71 = vld [vmem:[%s57 + $0x34] sm:$0xf]
  %v72 = vld [vmem:[%s57 + $0x38] sm:$0xf]
  %v73 = vld [vmem:[%s57 + $0x3c] sm:$0xf]
  %v74 = vmax.bf16 %v41, %v58
  %v75 = vmax.bf16 %v42, %v59
  %v76 = vmax.bf16 %v43, %v60
  %v77 = vmax.bf16 %v44, %v61
  %v78 = vmax.bf16 %v45, %v62
  %v79 = vmax.bf16 %v46, %v63
  %v80 = vmax.bf16 %v47, %v64
  %v81 = vmax.bf16 %v48, %v65
  %v82 = vmax.bf16 %v49, %v66
  %v83 = vmax.bf16 %v50, %v67
  %v84 = vmax.bf16 %v51, %v68
  %v85 = vmax.bf16 %v52, %v69
  %v86 = vmax.bf16 %v53, %v70
  %v87 = vmax.bf16 %v54, %v71
  %v88 = vmax.bf16 %v55, %v72
  %v89 = vmax.bf16 %v56, %v73
  %s90 = scalar_lea.vmem %s0, 192
  %v91 = vld [vmem:[%s90] sm:$0xf]
  %v92 = vld [vmem:[%s90 + $0x4] sm:$0xf]
  %v93 = vld [vmem:[%s90 + $0x8] sm:$0xf]
  %v94 = vld [vmem:[%s90 + $0xc] sm:$0xf]
  %v95 = vld [vmem:[%s90 + $0x10] sm:$0xf]
  %v96 = vld [vmem:[%s90 + $0x14] sm:$0xf]
  %v97 = vld [vmem:[%s90 + $0x18] sm:$0xf]
  %v98 = vld [vmem:[%s90 + $0x1c] sm:$0xf]
  %v99 = vld [vmem:[%s90 + $0x20] sm:$0xf]
  %v100 = vld [vmem:[%s90 + $0x24] sm:$0xf]
  %v101 = vld [vmem:[%s90 + $0x28] sm:$0xf]
  %v102 = vld [vmem:[%s90 + $0x2c] sm:$0xf]
  %v103 = vld [vmem:[%s90 + $0x30] sm:$0xf]
  %v104 = vld [vmem:[%s90 + $0x34] sm:$0xf]
  %v105 = vld [vmem:[%s90 + $0x38] sm:$0xf]
  %v106 = vld [vmem:[%s90 + $0x3c] sm:$0xf]
  %v107 = vmax.bf16 %v74, %v91
  %v108 = vmax.bf16 %v75, %v92
  %v109 = vmax.bf16 %v76, %v93
  %v110 = vmax.bf16 %v77, %v94
  %v111 = vmax.bf16 %v78, %v95
  %v112 = vmax.bf16 %v79, %v96
  %v113 = vmax.bf16 %v80, %v97
  %v114 = vmax.bf16 %v81, %v98
  %v115 = vmax.bf16 %v82, %v99
  %v116 = vmax.bf16 %v83, %v100
  %v117 = vmax.bf16 %v84, %v101
  %v118 = vmax.bf16 %v85, %v102
  %v119 = vmax.bf16 %v86, %v103
  %v120 = vmax.bf16 %v87, %v104
  %v121 = vmax.bf16 %v88, %v105
  %v122 = vmax.bf16 %v89, %v106
  %s123 = scalar_lea.vmem %s0, 256
  %v124 = vld [vmem:[%s123] sm:$0xf]
  %v125 = vld [vmem:[%s123 + $0x4] sm:$0xf]
  %v126 = vld [vmem:[%s123 + $0x8] sm:$0xf]
  %v127 = vld [vmem:[%s123 + $0xc] sm:$0xf]
  %v128 = vld [vmem:[%s123 + $0x10] sm:$0xf]
  %v129 = vld [vmem:[%s123 + $0x14] sm:$0xf]
  %v130 = vld [vmem:[%s123 + $0x18] sm:$0xf]
  %v131 = vld [vmem:[%s123 + $0x1c] sm:$0xf]
  %v132 = vld [vmem:[%s123 + $0x20] sm:$0xf]
  %v133 = vld [vmem:[%s123 + $0x24] sm:$0xf]
  %v134 = vld [vmem:[%s123 + $0x28] sm:$0xf]
  %v135 = vld [vmem:[%s123 + $0x2c] sm:$0xf]
  %v136 = vld [vmem:[%s123 + $0x30] sm:$0xf]
  %v137 = vld [vmem:[%s123 + $0x34] sm:$0xf]
  %v138 = vld [vmem:[%s123 + $0x38] sm:$0xf]
  %v139 = vld [vmem:[%s123 + $0x3c] sm:$0xf]
  %v140 = vmax.bf16 %v107, %v124
  %v141 = vmax.bf16 %v108, %v125
  %v142 = vmax.bf16 %v109, %v126
  %v143 = vmax.bf16 %v110, %v127
  %v144 = vmax.bf16 %v111, %v128
  %v145 = vmax.bf16 %v112, %v129
  %v146 = vmax.bf16 %v113, %v130
  %v147 = vmax.bf16 %v114, %v131
  %v148 = vmax.bf16 %v115, %v132
  %v149 = vmax.bf16 %v116, %v133
  %v150 = vmax.bf16 %v117, %v134
  %v151 = vmax.bf16 %v118, %v135
  %v152 = vmax.bf16 %v119, %v136
  %v153 = vmax.bf16 %v120, %v137
  %v154 = vmax.bf16 %v121, %v138
  %v155 = vmax.bf16 %v122, %v139
  %s156 = scalar_lea.vmem %s0, 320
  %v157 = vld [vmem:[%s156] sm:$0xf]
  %v158 = vld [vmem:[%s156 + $0x4] sm:$0xf]
  %v159 = vld [vmem:[%s156 + $0x8] sm:$0xf]
  %v160 = vld [vmem:[%s156 + $0xc] sm:$0xf]
  %v161 = vld [vmem:[%s156 + $0x10] sm:$0xf]
  %v162 = vld [vmem:[%s156 + $0x14] sm:$0xf]
  %v163 = vld [vmem:[%s156 + $0x18] sm:$0xf]
  %v164 = vld [vmem:[%s156 + $0x1c] sm:$0xf]
  %v165 = vld [vmem:[%s156 + $0x20] sm:$0xf]
  %v166 = vld [vmem:[%s156 + $0x24] sm:$0xf]
  %v167 = vld [vmem:[%s156 + $0x28] sm:$0xf]
  %v168 = vld [vmem:[%s156 + $0x2c] sm:$0xf]
  %v169 = vld [vmem:[%s156 + $0x30] sm:$0xf]
  %v170 = vld [vmem:[%s156 + $0x34] sm:$0xf]
  %v171 = vld [vmem:[%s156 + $0x38] sm:$0xf]
  %v172 = vld [vmem:[%s156 + $0x3c] sm:$0xf]
  %v173 = vmax.bf16 %v140, %v157
  %v174 = vmax.bf16 %v141, %v158
  %v175 = vmax.bf16 %v142, %v159
  %v176 = vmax.bf16 %v143, %v160
  %v177 = vmax.bf16 %v144, %v161
  %v178 = vmax.bf16 %v145, %v162
  %v179 = vmax.bf16 %v146, %v163
  %v180 = vmax.bf16 %v147, %v164
  %v181 = vmax.bf16 %v148, %v165
  %v182 = vmax.bf16 %v149, %v166
  %v183 = vmax.bf16 %v150, %v167
  %v184 = vmax.bf16 %v151, %v168
  %v185 = vmax.bf16 %v152, %v169
  %v186 = vmax.bf16 %v153, %v170
  %v187 = vmax.bf16 %v154, %v171
  %v188 = vmax.bf16 %v155, %v172
  %s189 = scalar_lea.vmem %s0, 384
  %v190 = vld [vmem:[%s189] sm:$0xf]
  %v191 = vld [vmem:[%s189 + $0x4] sm:$0xf]
  %v192 = vld [vmem:[%s189 + $0x8] sm:$0xf]
  %v193 = vld [vmem:[%s189 + $0xc] sm:$0xf]
  %v194 = vld [vmem:[%s189 + $0x10] sm:$0xf]
  %v195 = vld [vmem:[%s189 + $0x14] sm:$0xf]
  %v196 = vld [vmem:[%s189 + $0x18] sm:$0xf]
  %v197 = vld [vmem:[%s189 + $0x1c] sm:$0xf]
  %v198 = vld [vmem:[%s189 + $0x20] sm:$0xf]
  %v199 = vld [vmem:[%s189 + $0x24] sm:$0xf]
  %v200 = vld [vmem:[%s189 + $0x28] sm:$0xf]
  %v201 = vld [vmem:[%s189 + $0x2c] sm:$0xf]
  %v202 = vld [vmem:[%s189 + $0x30] sm:$0xf]
  %v203 = vld [vmem:[%s189 + $0x34] sm:$0xf]
  %v204 = vld [vmem:[%s189 + $0x38] sm:$0xf]
  %v205 = vld [vmem:[%s189 + $0x3c] sm:$0xf]
  %v206 = vmax.bf16 %v173, %v190
  %v207 = vmax.bf16 %v174, %v191
  %v208 = vmax.bf16 %v175, %v192
  %v209 = vmax.bf16 %v176, %v193
  %v210 = vmax.bf16 %v177, %v194
  %v211 = vmax.bf16 %v178, %v195
  %v212 = vmax.bf16 %v179, %v196
  %v213 = vmax.bf16 %v180, %v197
  %v214 = vmax.bf16 %v181, %v198
  %v215 = vmax.bf16 %v182, %v199
  %v216 = vmax.bf16 %v183, %v200
  %v217 = vmax.bf16 %v184, %v201
  %v218 = vmax.bf16 %v185, %v202
  %v219 = vmax.bf16 %v186, %v203
  %v220 = vmax.bf16 %v187, %v204
  %v221 = vmax.bf16 %v188, %v205
  %s222 = scalar_lea.vmem %s0, 448
  %v223 = vld [vmem:[%s222] sm:$0xf]
  %v224 = vld [vmem:[%s222 + $0x4] sm:$0xf]
  %v225 = vld [vmem:[%s222 + $0x8] sm:$0xf]
  %v226 = vld [vmem:[%s222 + $0xc] sm:$0xf]
  %v227 = vld [vmem:[%s222 + $0x10] sm:$0xf]
  %v228 = vld [vmem:[%s222 + $0x14] sm:$0xf]
  %v229 = vld [vmem:[%s222 + $0x18] sm:$0xf]
  %v230 = vld [vmem:[%s222 + $0x1c] sm:$0xf]
  %v231 = vld [vmem:[%s222 + $0x20] sm:$0xf]
  %v232 = vld [vmem:[%s222 + $0x24] sm:$0xf]
  %v233 = vld [vmem:[%s222 + $0x28] sm:$0xf]
  %v234 = vld [vmem:[%s222 + $0x2c] sm:$0xf]
  %v235 = vld [vmem:[%s222 + $0x30] sm:$0xf]
  %v236 = vld [vmem:[%s222 + $0x34] sm:$0xf]
  %v237 = vld [vmem:[%s222 + $0x38] sm:$0xf]
  %v238 = vld [vmem:[%s222 + $0x3c] sm:$0xf]
  %v239 = vmax.bf16 %v206, %v223
  %v240 = vmax.bf16 %v207, %v224
  %v241 = vmax.bf16 %v208, %v225
  %v242 = vmax.bf16 %v209, %v226
  %v243 = vmax.bf16 %v210, %v227
  %v244 = vmax.bf16 %v211, %v228
  %v245 = vmax.bf16 %v212, %v229
  %v246 = vmax.bf16 %v213, %v230
  %v247 = vmax.bf16 %v214, %v231
  %v248 = vmax.bf16 %v215, %v232
  %v249 = vmax.bf16 %v216, %v233
  %v250 = vmax.bf16 %v217, %v234
  %v251 = vmax.bf16 %v218, %v235
  %v252 = vmax.bf16 %v219, %v236
  %v253 = vmax.bf16 %v220, %v237
  %v254 = vmax.bf16 %v221, %v238
  %s255 = scalar_lea.vmem %s0, 512
  %v256 = vld [vmem:[%s255] sm:$0xf]
  %v257 = vld [vmem:[%s255 + $0x4] sm:$0xf]
  %v258 = vld [vmem:[%s255 + $0x8] sm:$0xf]
  %v259 = vld [vmem:[%s255 + $0xc] sm:$0xf]
  %v260 = vld [vmem:[%s255 + $0x10] sm:$0xf]
  %v261 = vld [vmem:[%s255 + $0x14] sm:$0xf]
  %v262 = vld [vmem:[%s255 + $0x18] sm:$0xf]
  %v263 = vld [vmem:[%s255 + $0x1c] sm:$0xf]
  %v264 = vld [vmem:[%s255 + $0x20] sm:$0xf]
  %v265 = vld [vmem:[%s255 + $0x24] sm:$0xf]
  %v266 = vld [vmem:[%s255 + $0x28] sm:$0xf]
  %v267 = vld [vmem:[%s255 + $0x2c] sm:$0xf]
  %v268 = vld [vmem:[%s255 + $0x30] sm:$0xf]
  %v269 = vld [vmem:[%s255 + $0x34] sm:$0xf]
  %v270 = vld [vmem:[%s255 + $0x38] sm:$0xf]
  %v271 = vld [vmem:[%s255 + $0x3c] sm:$0xf]
  %v272 = vmax.bf16 %v239, %v256
  %v273 = vmax.bf16 %v240, %v257
  %v274 = vmax.bf16 %v241, %v258
  %v275 = vmax.bf16 %v242, %v259
  %v276 = vmax.bf16 %v243, %v260
  %v277 = vmax.bf16 %v244, %v261
  %v278 = vmax.bf16 %v245, %v262
  %v279 = vmax.bf16 %v246, %v263
  %v280 = vmax.bf16 %v247, %v264
  %v281 = vmax.bf16 %v248, %v265
  %v282 = vmax.bf16 %v249, %v266
  %v283 = vmax.bf16 %v250, %v267
  %v284 = vmax.bf16 %v251, %v268
  %v285 = vmax.bf16 %v252, %v269
  %v286 = vmax.bf16 %v253, %v270
  %v287 = vmax.bf16 %v254, %v271
  %vm288 = vcmask 519168
  %289 = vst.msk [vmem:[%s1] sm:$0xf] %vm288, %v272
  %290 = vst.msk [vmem:[%s1 + $0x4] sm:$0xf] %vm288, %v273
  %291 = vst.msk [vmem:[%s1 + $0x8] sm:$0xf] %vm288, %v274
  %292 = vst.msk [vmem:[%s1 + $0xc] sm:$0xf] %vm288, %v275
  %293 = vst.msk [vmem:[%s1 + $0x10] sm:$0xf] %vm288, %v276
  %294 = vst.msk [vmem:[%s1 + $0x14] sm:$0xf] %vm288, %v277
  %295 = vst.msk [vmem:[%s1 + $0x18] sm:$0xf] %vm288, %v278
  %296 = vst.msk [vmem:[%s1 + $0x1c] sm:$0xf] %vm288, %v279
  %297 = vst.msk [vmem:[%s1 + $0x20] sm:$0xf] %vm288, %v280
  %298 = vst.msk [vmem:[%s1 + $0x24] sm:$0xf] %vm288, %v281
  %299 = vst.msk [vmem:[%s1 + $0x28] sm:$0xf] %vm288, %v282
  %300 = vst.msk [vmem:[%s1 + $0x2c] sm:$0xf] %vm288, %v283
  %301 = vst.msk [vmem:[%s1 + $0x30] sm:$0xf] %vm288, %v284
  %302 = vst.msk [vmem:[%s1 + $0x34] sm:$0xf] %vm288, %v285
  %303 = vst.msk [vmem:[%s1 + $0x38] sm:$0xf] %vm288, %v286
  %304 = vst.msk [vmem:[%s1 + $0x3c] sm:$0xf] %vm288, %v287
  // Predicated region
  $region6: #{resnet_backbone_forward.11} parent=0 // pred_check
    _
  $region7: #{resnet_backbone_forward.11} parent=0 // pred_check_branch
    %306 = sbr.rel (0) target = $region9
  $region8: #{resnet_backbone_forward.11} parent=0 // pred_region
    _
  $region9: #{resnet_backbone_forward.11} parent=0 // pred_fallthru
    _
  // Predicated region
  $region10: #{resnet_backbone_forward.11} parent=0 // pred_check
    _
  $region11: #{resnet_backbone_forward.11} parent=0 // pred_check_branch
    %308 = sbr.rel (0) target = $region13
  $region12: #{resnet_backbone_forward.11} parent=0 // pred_region
    _
  $region13: #{resnet_backbone_forward.11} parent=0 // pred_fallthru
    _

// kernel: resnet_backbone_forward.12
$region0: #{resnet_backbone_forward.12}
  #allocation0 [shape = 'u32[]', space=smem, size = 0x4, offset = 0x4, fixed_abs, tag = 'smem constant byte address 0x4 - core index']
  #allocation1 [shape = 'u32[144,128]{1,0:T(1,128)}', space=vmem, size = 0x12000, scoped, tag = 'internal scratch']
  %s0 = inlined_call_operand.vmem [shape: bf16[128,576], index: 0, kind: input, shape index: {}]
  %s1 = inlined_call_operand.vmem [shape: bf16[576,64], index: 1, kind: input, shape index: {}]
  %s2 = inlined_call_operand.vmem [shape: f32[1,64], index: 2, kind: input, shape index: {}]
  %s3 = inlined_call_operand.vmem [shape: bf16[128,64], index: 3, kind: output, shape index: {}]
  %s4 = sld [smem:[#allocation0]]
  $region22: #{resnet_backbone_forward.12} parent=0
    _
  %s6 = ssub.s32 1, %s4
  %s7 = scalar_select 0, %s6, %s4
  // Predicated region
  $region2: #{resnet_backbone_forward.12} parent=0 // pred_check
    _
  $region3: #{resnet_backbone_forward.12} parent=0 // pred_check_branch
    %9 = sbr.rel (0) target = $region5
  $region4: #{resnet_backbone_forward.12} parent=0 // pred_region
    _
  $region5: #{resnet_backbone_forward.12} parent=0 // pred_fallthru
    _
  // Predicated region
  $region6: #{resnet_backbone_forward.12} parent=0 // pred_check
    _
  $region7: #{resnet_backbone_forward.12} parent=0 // pred_check_branch
    %11 = sbr.rel (0) target = $region9
  $region8: #{resnet_backbone_forward.12} parent=0 // pred_region
    _
  $region9: #{resnet_backbone_forward.12} parent=0 // pred_fallthru
    _
  // Predicated region
  $region10: #{resnet_backbone_forward.12} parent=0 // pred_check
    _
  $region11: #{resnet_backbone_forward.12} parent=0 // pred_check_branch
    %13 = sbr.rel (0) target = $region13
  $region12: #{resnet_backbone_forward.12} parent=0 // pred_region
    _
  $region13: #{resnet_backbone_forward.12} parent=0 // pred_fallthru
    _
  %v15 = vld [vmem:[%s0] sm:$0xff]
  %v16 = vld [vmem:[%s0 + $0x8] sm:$0xff]
  %v17 = vld [vmem:[%s0 + $0x10] sm:$0xf]
  %v18 = vld [vmem:[%s0 + $0x14] sm:$0xff]
  %v19 = vld [vmem:[%s0 + $0x1c] sm:$0xff]
  %v20 = vld [vmem:[%s0 + $0x24] sm:$0xf]
  %v21 = vld [vmem:[%s0 + $0x28] sm:$0xff]
  %v22 = vld [vmem:[%s0 + $0x30] sm:$0xff]
  %v23 = vld [vmem:[%s0 + $0x38] sm:$0xf]
  %v24 = vld [vmem:[%s0 + $0x3c] sm:$0xff]
  %v25 = vld [vmem:[%s0 + $0x44] sm:$0xff]
  %v26 = vld [vmem:[%s0 + $0x4c] sm:$0xf]
  %v27 = vld [vmem:[%s0 + $0x50] sm:$0xff]
  %v28 = vld [vmem:[%s0 + $0x58] sm:$0xff]
  %v29 = vld [vmem:[%s0 + $0x60] sm:$0xf]
  %v30 = vld [vmem:[%s0 + $0x64] sm:$0xff]
  %v31 = vld [vmem:[%s0 + $0x6c] sm:$0xff]
  %v32 = vld [vmem:[%s0 + $0x74] sm:$0xf]
  %v33 = vld [vmem:[%s0 + $0x78] sm:$0xff]
  %v34 = vld [vmem:[%s0 + $0x80] sm:$0xff]
  %v35 = vld [vmem:[%s0 + $0x88] sm:$0xf]
  %v36 = vld [vmem:[%s0 + $0x8c] sm:$0xff]
  %v37 = vld [vmem:[%s0 + $0x94] sm:$0xff]
  %v38 = vld [vmem:[%s0 + $0x9c] sm:$0xf]
  %v39 = vld [vmem:[%s0 + $0xa0] sm:$0xff]
  %v40 = vld [vmem:[%s0 + $0xa8] sm:$0xff]
  %v41 = vld [vmem:[%s0 + $0xb0] sm:$0xf]
  %v42 = vld [vmem:[%s0 + $0xb4] sm:$0xff]
  %v43 = vld [vmem:[%s0 + $0xbc] sm:$0xff]
  %v44 = vld [vmem:[%s0 + $0xc4] sm:$0xf]
  %v45 = vld [vmem:[%s0 + $0xc8] sm:$0xff]
  %v46 = vld [vmem:[%s0 + $0xd0] sm:$0xff]
  %v47 = vld [vmem:[%s0 + $0xd8] sm:$0xf]
  %v48 = vld [vmem:[%s0 + $0xdc] sm:$0xff]
  %v49 = vld [vmem:[%s0 + $0xe4] sm:$0xff]
  %v50 = vld [vmem:[%s0 + $0xec] sm:$0xf]
  %v51 = vld [vmem:[%s0 + $0xf0] sm:$0xff]
  %v52 = vld [vmem:[%s0 + $0xf8] sm:$0xff]
  %v53 = vld [vmem:[%s0 + $0x100] sm:$0xf]
  %v54 = vld [vmem:[%s0 + $0x104] sm:$0xff]
  %v55 = vld [vmem:[%s0 + $0x10c] sm:$0xff]
  %v56 = vld [vmem:[%s0 + $0x114] sm:$0xf]
  %v57 = vld [vmem:[%s0 + $0x118] sm:$0xff]
  %v58 = vld [vmem:[%s0 + $0x120] sm:$0xff]
  %v59 = vld [vmem:[%s0 + $0x128] sm:$0xf]
  %v60 = vld [vmem:[%s0 + $0x12c] sm:$0xff]
  %v61 = vld [vmem:[%s0 + $0x134] sm:$0xff]
  %v62 = vld [vmem:[%s0 + $0x13c] sm:$0xf]
  %v63 = vld [vmem:[%s1] sm:$0xf]
  %v64 = vld [vmem:[%s1 + $0x4] sm:$0xf]
  %v65 = vld [vmem:[%s1 + $0x8] sm:$0xf]
  %v66 = vld [vmem:[%s1 + $0xc] sm:$0xf]
  %v67 = vld [vmem:[%s1 + $0x10] sm:$0xf]
  %v68 = vld [vmem:[%s1 + $0x14] sm:$0xf]
  %v69 = vld [vmem:[%s1 + $0x18] sm:$0xf]
  %v70 = vld [vmem:[%s1 + $0x1c] sm:$0xf]
  %v71 = vld [vmem:[%s1 + $0x20] sm:$0xf]
  %v72 = vld [vmem:[%s1 + $0x24] sm:$0xf]
  %v73 = vld [vmem:[%s1 + $0x28] sm:$0xf]
  %v74 = vld [vmem:[%s1 + $0x2c] sm:$0xf]
  %v75 = vld [vmem:[%s1 + $0x30] sm:$0xf]
  %v76 = vld [vmem:[%s1 + $0x34] sm:$0xf]
  %v77 = vld [vmem:[%s1 + $0x38] sm:$0xf]
  %v78 = vld [vmem:[%s1 + $0x3c] sm:$0xf]
  %v79 = vld [vmem:[%s1 + $0x40] sm:$0xf]
  %v80 = vld [vmem:[%s1 + $0x44] sm:$0xf]
  %v81 = vld [vmem:[%s1 + $0x48] sm:$0xf]
  %v82 = vld [vmem:[%s1 + $0x4c] sm:$0xf]
  %v83 = vld [vmem:[%s1 + $0x50] sm:$0xf]
  %v84 = vld [vmem:[%s1 + $0x54] sm:$0xf]
  %v85 = vld [vmem:[%s1 + $0x58] sm:$0xf]
  %v86 = vld [vmem:[%s1 + $0x5c] sm:$0xf]
  %v87 = vld [vmem:[%s1 + $0x60] sm:$0xf]
  %v88 = vld [vmem:[%s1 + $0x64] sm:$0xf]
  %v89 = vld [vmem:[%s1 + $0x68] sm:$0xf]
  %v90 = vld [vmem:[%s1 + $0x6c] sm:$0xf]
  %v91 = vld [vmem:[%s1 + $0x70] sm:$0xf]
  %v92 = vld [vmem:[%s1 + $0x74] sm:$0xf]
  %v93 = vld [vmem:[%s1 + $0x78] sm:$0xf]
  %v94 = vld [vmem:[%s1 + $0x7c] sm:$0xf]
  %v95 = vld [vmem:[%s1 + $0x80] sm:$0xf]
  %v96 = vld [vmem:[%s1 + $0x84] sm:$0xf]
  %v97 = vld [vmem:[%s1 + $0x88] sm:$0xf]
  %v98 = vld [vmem:[%s1 + $0x8c] sm:$0xf]
  %v99 = vld [vmem:[%s1 + $0x90] sm:$0xf]
  %v100 = vld [vmem:[%s1 + $0x94] sm:$0xf]
  %v101 = vld [vmem:[%s1 + $0x98] sm:$0xf]
  %v102 = vld [vmem:[%s1 + $0x9c] sm:$0xf]
  %v103 = vld [vmem:[%s1 + $0xa0] sm:$0xf]
  %v104 = vld [vmem:[%s1 + $0xa4] sm:$0xf]
  %v105 = vld [vmem:[%s1 + $0xa8] sm:$0xf]
  %v106 = vld [vmem:[%s1 + $0xac] sm:$0xf]
  %v107 = vld [vmem:[%s1 + $0xb0] sm:$0xf]
  %v108 = vld [vmem:[%s1 + $0xb4] sm:$0xf]
  %v109 = vld [vmem:[%s1 + $0xb8] sm:$0xf]
  %v110 = vld [vmem:[%s1 + $0xbc] sm:$0xf]
  %v111 = vld [vmem:[%s1 + $0xc0] sm:$0xf]
  %v112 = vld [vmem:[%s1 + $0xc4] sm:$0xf]
  %v113 = vld [vmem:[%s1 + $0xc8] sm:$0xf]
  %v114 = vld [vmem:[%s1 + $0xcc] sm:$0xf]
  %v115 = vld [vmem:[%s1 + $0xd0] sm:$0xf]
  %v116 = vld [vmem:[%s1 + $0xd4] sm:$0xf]
  %v117 = vld [vmem:[%s1 + $0xd8] sm:$0xf]
  %v118 = vld [vmem:[%s1 + $0xdc] sm:$0xf]
  %v119 = vld [vmem:[%s1 + $0xe0] sm:$0xf]
  %v120 = vld [vmem:[%s1 + $0xe4] sm:$0xf]
  %v121 = vld [vmem:[%s1 + $0xe8] sm:$0xf]
  %v122 = vld [vmem:[%s1 + $0xec] sm:$0xf]
  %v123 = vld [vmem:[%s1 + $0xf0] sm:$0xf]
  %v124 = vld [vmem:[%s1 + $0xf4] sm:$0xf]
  %v125 = vld [vmem:[%s1 + $0xf8] sm:$0xf]
  %v126 = vld [vmem:[%s1 + $0xfc] sm:$0xf]
  %v127 = vld [vmem:[%s1 + $0x100] sm:$0xf]
  %v128 = vld [vmem:[%s1 + $0x104] sm:$0xf]
  %v129 = vld [vmem:[%s1 + $0x108] sm:$0xf]
  %v130 = vld [vmem:[%s1 + $0x10c] sm:$0xf]
  %v131 = vld [vmem:[%s1 + $0x110] sm:$0xf]
  %v132 = vld [vmem:[%s1 + $0x114] sm:$0xf]
  %v133 = vld [vmem:[%s1 + $0x118] sm:$0xf]
  %v134 = vld [vmem:[%s1 + $0x11c] sm:$0xf]
  %v135 = vld [vmem:[%s2] sm:$0x1]
  %v137 = vlaneseq
  %v138 = vshrl.u32 %v137, 7
  %v139 = vsub.s32 0, %v138
  %v140 = vrot.slane %v135, %v139
  %v190 = vunpack.c.l.b16 %v15
  %v191 = vunpack.c.h.b16 %v15
  %v192 = vunpack.c.l.b16 %v16
  %v193 = vunpack.c.h.b16 %v16
  %v194 = vunpack.c.l.b16 %v17
  %v195 = vunpack.c.l.b16 %v18
  %v196 = vunpack.c.h.b16 %v18
  %v197 = vunpack.c.l.b16 %v19
  %v198 = vunpack.c.h.b16 %v19
  %v199 = vunpack.c.l.b16 %v20
  %v200 = vunpack.c.l.b16 %v21
  %v201 = vunpack.c.h.b16 %v21
  %v202 = vunpack.c.l.b16 %v22
  %v203 = vunpack.c.h.b16 %v22
  %v204 = vunpack.c.l.b16 %v23
  %v205 = vunpack.c.l.b16 %v24
  %v206 = vunpack.c.h.b16 %v24
  %v207 = vunpack.c.l.b16 %v25
  %v208 = vunpack.c.h.b16 %v25
  %v209 = vunpack.c.l.b16 %v26
  %v210 = vunpack.c.l.b16 %v27
  %v211 = vunpack.c.h.b16 %v27
  %v212 = vunpack.c.l.b16 %v28
  %v213 = vunpack.c.h.b16 %v28
  %v214 = vunpack.c.l.b16 %v29
  %v215 = vunpack.c.l.b16 %v30
  %v216 = vunpack.c.h.b16 %v30
  %v217 = vunpack.c.l.b16 %v31
  %v218 = vunpack.c.h.b16 %v31
  %v219 = vunpack.c.l.b16 %v32
  %v220 = vunpack.c.l.b16 %v33
  %v221 = vunpack.c.h.b16 %v33
  %v222 = vunpack.c.l.b16 %v34
  %v223 = vunpack.c.h.b16 %v34
  %v224 = vunpack.c.l.b16 %v35
  %v225 = vunpack.c.l.b16 %v36
  %v226 = vunpack.c.h.b16 %v36
  %v227 = vunpack.c.l.b16 %v37
  %v228 = vunpack.c.h.b16 %v37
  %v229 = vunpack.c.l.b16 %v38
  %v230 = vunpack.c.l.b16 %v39
  %v231 = vunpack.c.h.b16 %v39
  %v232 = vunpack.c.l.b16 %v40
  %v233 = vunpack.c.h.b16 %v40
  %v234 = vunpack.c.l.b16 %v41
  %v235 = vunpack.c.l.b16 %v42
  %v236 = vunpack.c.h.b16 %v42
  %v237 = vunpack.c.l.b16 %v43
  %v238 = vunpack.c.h.b16 %v43
  %v239 = vunpack.c.l.b16 %v44
  %v240 = vunpack.c.l.b16 %v45
  %v241 = vunpack.c.h.b16 %v45
  %v242 = vunpack.c.l.b16 %v46
  %v243 = vunpack.c.h.b16 %v46
  %v244 = vunpack.c.l.b16 %v47
  %v245 = vunpack.c.l.b16 %v48
  %v246 = vunpack.c.h.b16 %v48
  %v247 = vunpack.c.l.b16 %v49
  %v248 = vunpack.c.h.b16 %v49
  %v249 = vunpack.c.l.b16 %v50
  %v250 = vunpack.c.l.b16 %v51
  %v251 = vunpack.c.h.b16 %v51
  %v252 = vunpack.c.l.b16 %v52
  %v253 = vunpack.c.h.b16 %v52
  %v254 = vunpack.c.l.b16 %v53
  %v255 = vunpack.c.l.b16 %v54
  %v256 = vunpack.c.h.b16 %v54
  %v257 = vunpack.c.l.b16 %v55
  %v258 = vunpack.c.h.b16 %v55
  %v259 = vunpack.c.l.b16 %v56
  %v260 = vunpack.c.l.b16 %v57
  %v261 = vunpack.c.h.b16 %v57
  %v262 = vunpack.c.l.b16 %v58
  %v263 = vunpack.c.h.b16 %v58
  %v264 = vunpack.c.l.b16 %v59
  %v265 = vunpack.c.l.b16 %v60
  %v266 = vunpack.c.h.b16 %v60
  %v267 = vunpack.c.l.b16 %v61
  %v268 = vunpack.c.h.b16 %v61
  %v269 = vunpack.c.l.b16 %v62
  %v270 = vpack.c.b16 %v195, %v190
  %v271 = vpack.c.b16 %v196, %v191
  %v272 = vpack.c.b16 %v197, %v192
  %v273 = vpack.c.b16 %v198, %v193
  %v274 = vpack.c.b16 %v199, %v194
  %v275 = vpack.c.b16 %v205, %v200
  %v276 = vpack.c.b16 %v206, %v201
  %v277 = vpack.c.b16 %v207, %v202
  %v278 = vpack.c.b16 %v208, %v203
  %v279 = vpack.c.b16 %v209, %v204
  %v280 = vpack.c.b16 %v215, %v210
  %v281 = vpack.c.b16 %v216, %v211
  %v282 = vpack.c.b16 %v217, %v212
  %v283 = vpack.c.b16 %v218, %v213
  %v284 = vpack.c.b16 %v219, %v214
  %v285 = vpack.c.b16 %v225, %v220
  %v286 = vpack.c.b16 %v226, %v221
  %v287 = vpack.c.b16 %v227, %v222
  %v288 = vpack.c.b16 %v228, %v223
  %v289 = vpack.c.b16 %v229, %v224
  %v290 = vpack.c.b16 %v235, %v230
  %v291 = vpack.c.b16 %v236, %v231
  %v292 = vpack.c.b16 %v237, %v232
  %v293 = vpack.c.b16 %v238, %v233
  %v294 = vpack.c.b16 %v239, %v234
  %v295 = vpack.c.b16 %v245, %v240
  %v296 = vpack.c.b16 %v246, %v241
  %v297 = vpack.c.b16 %v247, %v242
  %v298 = vpack.c.b16 %v248, %v243
  %v299 = vpack.c.b16 %v249, %v244
  %v300 = vpack.c.b16 %v255, %v250
  %v301 = vpack.c.b16 %v256, %v251
  %v302 = vpack.c.b16 %v257, %v252
  %v303 = vpack.c.b16 %v258, %v253
  %v304 = vpack.c.b16 %v259, %v254
  %v305 = vpack.c.b16 %v265, %v260
  %v306 = vpack.c.b16 %v266, %v261
  %v307 = vpack.c.b16 %v267, %v262
  %v308 = vpack.c.b16 %v268, %v263
  %v309 = vpack.c.b16 %v269, %v264
  %v414 = vunpack.c.l.b16 %v63
  %v415 = vunpack.c.l.b16 %v64
  %v416 = vunpack.c.l.b16 %v65
  %v417 = vunpack.c.l.b16 %v66
  %v418 = vunpack.c.l.b16 %v67
  %v419 = vunpack.c.l.b16 %v68
  %v420 = vunpack.c.l.b16 %v69
  %v421 = vunpack.c.l.b16 %v70
  %v422 = vunpack.c.l.b16 %v71
  %v423 = vunpack.c.l.b16 %v72
  %v424 = vunpack.c.l.b16 %v73
  %v425 = vunpack.c.l.b16 %v74
  %v426 = vunpack.c.l.b16 %v75
  %v427 = vunpack.c.l.b16 %v76
  %v428 = vunpack.c.l.b16 %v77
  %v429 = vunpack.c.l.b16 %v78
  %v430 = vunpack.c.l.b16 %v79
  %v431 = vunpack.c.l.b16 %v80
  %v432 = vunpack.c.l.b16 %v81
  %v433 = vunpack.c.l.b16 %v82
  %v434 = vunpack.c.l.b16 %v83
  %v435 = vunpack.c.l.b16 %v84
  %v436 = vunpack.c.l.b16 %v85
  %v437 = vunpack.c.l.b16 %v86
  %v438 = vunpack.c.l.b16 %v87
  %v439 = vunpack.c.l.b16 %v88
  %v440 = vunpack.c.l.b16 %v89
  %v441 = vunpack.c.l.b16 %v90
  %v442 = vunpack.c.l.b16 %v91
  %v443 = vunpack.c.l.b16 %v92
  %v444 = vunpack.c.l.b16 %v93
  %v445 = vunpack.c.l.b16 %v94
  %v446 = vunpack.c.l.b16 %v95
  %v447 = vunpack.c.l.b16 %v96
  %v448 = vunpack.c.l.b16 %v97
  %v449 = vunpack.c.l.b16 %v98
  %v450 = vunpack.c.l.b16 %v99
  %v451 = vunpack.c.l.b16 %v100
  %v452 = vunpack.c.l.b16 %v101
  %v453 = vunpack.c.l.b16 %v102
  %v454 = vunpack.c.l.b16 %v103
  %v455 = vunpack.c.l.b16 %v104
  %v456 = vunpack.c.l.b16 %v105
  %v457 = vunpack.c.l.b16 %v106
  %v458 = vunpack.c.l.b16 %v107
  %v459 = vunpack.c.l.b16 %v108
  %v460 = vunpack.c.l.b16 %v109
  %v461 = vunpack.c.l.b16 %v110
  %v462 = vunpack.c.l.b16 %v111
  %v463 = vunpack.c.l.b16 %v112
  %v464 = vunpack.c.l.b16 %v113
  %v465 = vunpack.c.l.b16 %v114
  %v466 = vunpack.c.l.b16 %v115
  %v467 = vunpack.c.l.b16 %v116
  %v468 = vunpack.c.l.b16 %v117
  %v469 = vunpack.c.l.b16 %v118
  %v470 = vunpack.c.l.b16 %v119
  %v471 = vunpack.c.l.b16 %v120
  %v472 = vunpack.c.l.b16 %v121
  %v473 = vunpack.c.l.b16 %v122
  %v474 = vunpack.c.l.b16 %v123
  %v475 = vunpack.c.l.b16 %v124
  %v476 = vunpack.c.l.b16 %v125
  %v477 = vunpack.c.l.b16 %v126
  %v478 = vunpack.c.l.b16 %v127
  %v479 = vunpack.c.l.b16 %v128
  %v480 = vunpack.c.l.b16 %v129
  %v481 = vunpack.c.l.b16 %v130
  %v482 = vunpack.c.l.b16 %v131
  %v483 = vunpack.c.l.b16 %v132
  %v484 = vunpack.c.l.b16 %v133
  %v485 = vunpack.c.l.b16 %v134
  %v486 = vpack.c.b16 %v415, %v414
  %v487 = vpack.c.b16 %v417, %v416
  %v488 = vpack.c.b16 %v419, %v418
  %v489 = vpack.c.b16 %v421, %v420
  %v490 = vpack.c.b16 %v423, %v422
  %v491 = vpack.c.b16 %v425, %v424
  %v492 = vpack.c.b16 %v427, %v426
  %v493 = vpack.c.b16 %v429, %v428
  %v494 = vpack.c.b16 %v431, %v430
  %v495 = vpack.c.b16 %v433, %v432
  %v496 = vpack.c.b16 %v435, %v434
  %v497 = vpack.c.b16 %v437, %v436
  %v498 = vpack.c.b16 %v439, %v438
  %v499 = vpack.c.b16 %v441, %v440
  %v500 = vpack.c.b16 %v443, %v442
  %v501 = vpack.c.b16 %v445, %v444
  %v502 = vpack.c.b16 %v447, %v446
  %v503 = vpack.c.b16 %v449, %v448
  %v504 = vpack.c.b16 %v451, %v450
  %v505 = vpack.c.b16 %v453, %v452
  %v506 = vpack.c.b16 %v455, %v454
  %v507 = vpack.c.b16 %v457, %v456
  %v508 = vpack.c.b16 %v459, %v458
  %v509 = vpack.c.b16 %v461, %v460
  %v510 = vpack.c.b16 %v463, %v462
  %v511 = vpack.c.b16 %v465, %v464
  %v512 = vpack.c.b16 %v467, %v466
  %v513 = vpack.c.b16 %v469, %v468
  %v514 = vpack.c.b16 %v471, %v470
  %v515 = vpack.c.b16 %v473, %v472
  %v516 = vpack.c.b16 %v475, %v474
  %v517 = vpack.c.b16 %v477, %v476
  %v518 = vpack.c.b16 %v479, %v478
  %v519 = vpack.c.b16 %v481, %v480
  %v520 = vpack.c.b16 %v483, %v482
  %v521 = vpack.c.b16 %v485, %v484
  %vm558 = vcmask 523264
  %v560 = vsel %vm558, %v274, 0
  %v563 = vsel %vm558, %v279, 0
  %v566 = vsel %vm558, %v284, 0
  %v569 = vsel %vm558, %v289, 0
  %v572 = vsel %vm558, %v294, 0
  %v575 = vsel %vm558, %v299, 0
  %v578 = vsel %vm558, %v304, 0
  %v581 = vsel %vm558, %v309, 0
  %583 = vmatprep.subr.bf16.mxu0 0
  %584 = vmatpush1.bf16.msra.mxu0 %v493
  %585 = vmatprep.subr.bf16.mxu0 0
  %586 = vmatpush1.bf16.msra.mxu0 %v492
  %587 = vmatprep.subr.bf16.mxu0 0
  %588 = vmatpush1.bf16.msra.mxu0 %v491
  %589 = vmatprep.subr.bf16.mxu0 0
  %590 = vmatpush1.bf16.msra.mxu0 %v490
  %591 = vmatprep.subr.bf16.mxu0 0
  %592 = vmatpush1.bf16.msra.mxu0 %v489
  %593 = vmatprep.subr.bf16.mxu0 0
  %594 = vmatpush1.bf16.msra.mxu0 %v488
  %595 = vmatprep.subr.bf16.mxu0 0
  %596 = vmatpush1.bf16.msra.mxu0 %v487
  %597 = vmatprep.subr.bf16.mxu0 0
  %598 = vmatpush1.bf16.msra.mxu0 %v486
  %599 = vmatprep.subr.bf16.mxu0 0
  %600 = vmatpush2.bf16.msra.mxu0 %v501
  %601 = vmatprep.subr.bf16.mxu0 0
  %602 = vmatpush2.bf16.msra.mxu0 %v500
  %603 = vmatprep.subr.bf16.mxu0 0
  %604 = vmatpush2.bf16.msra.mxu0 %v499
  %605 = vmatprep.subr.bf16.mxu0 0
  %606 = vmatpush2.bf16.msra.mxu0 %v498
  %607 = vmatprep.subr.bf16.mxu0 0
  %608 = vmatpush2.bf16.msra.mxu0 %v497
  %609 = vmatprep.subr.bf16.mxu0 0
  %610 = vmatpush2.bf16.msra.mxu0 %v496
  %611 = vmatprep.subr.bf16.mxu0 0
  %612 = vmatpush2.bf16.msra.mxu0 %v495
  %613 = vmatprep.subr.bf16.mxu0 0
  %614 = vmatpush2.bf16.msra.mxu0 %v494
  %615 = vmatprep.mubr.bf16.mxu0 %v271
  %616 = vmatmul.mubr.bf16.gmra.mxu0 %v270
  %v617 = vpop.f32.mrf.mxu0
  %v618 = vadd.f32 %v140, %v617
  %v619 = vpop.f32.mrf.mxu0
  %v620 = vpop.f32.mrf.mxu0
  %v621 = vadd.f32 %v140, %v620
  %v622 = vpop.f32.mrf.mxu0
  %623 = vmatprep.mubr.bf16.mxu0 %v276
  %624 = vmatmul.mubr.bf16.gmra.mxu0 %v275
  %v625 = vpop.f32.mrf.mxu0
  %v626 = vadd.f32 %v140, %v625
  %v627 = vpop.f32.mrf.mxu0
  %v628 = vpop.f32.mrf.mxu0
  %v629 = vadd.f32 %v140, %v628
  %v630 = vpop.f32.mrf.mxu0
  %631 = vmatprep.mubr.bf16.mxu0 %v281
  %632 = vmatmul.mubr.bf16.gmra.mxu0 %v280
  %v633 = vpop.f32.mrf.mxu0
  %v634 = vadd.f32 %v140, %v633
  %v635 = vpop.f32.mrf.mxu0
  %v636 = vpop.f32.mrf.mxu0
  %v637 = vadd.f32 %v140, %v636
  %v638 = vpop.f32.mrf.mxu0
  %639 = vmatprep.mubr.bf16.mxu0 %v286
  %640 = vmatmul.mubr.bf16.gmra.mxu0 %v285
  %v641 = vpop.f32.mrf.mxu0
  %v642 = vadd.f32 %v140, %v641
  %v643 = vpop.f32.mrf.mxu0
  %v644 = vpop.f32.mrf.mxu0
  %v645 = vadd.f32 %v140, %v644
  %v646 = vpop.f32.mrf.mxu0
  %647 = vmatprep.mubr.bf16.mxu0 %v291
  %648 = vmatmul.mubr.bf16.gmra.mxu0 %v290
  %v649 = vpop.f32.mrf.mxu0
  %v650 = vadd.f32 %v140, %v649
  %v651 = vpop.f32.mrf.mxu0
  %v652 = vpop.f32.mrf.mxu0
  %v653 = vadd.f32 %v140, %v652
  %v654 = vpop.f32.mrf.mxu0
  %655 = vmatprep.mubr.bf16.mxu0 %v296
  %656 = vmatmul.mubr.bf16.gmra.mxu0 %v295
  %v657 = vpop.f32.mrf.mxu0
  %v658 = vadd.f32 %v140, %v657
  %v659 = vpop.f32.mrf.mxu0
  %v660 = vpop.f32.mrf.mxu0
  %v661 = vadd.f32 %v140, %v660
  %v662 = vpop.f32.mrf.mxu0
  %663 = vmatprep.mubr.bf16.mxu0 %v301
  %664 = vmatmul.mubr.bf16.gmra.mxu0 %v300
  %v665 = vpop.f32.mrf.mxu0
  %v666 = vadd.f32 %v140, %v665
  %v667 = vpop.f32.mrf.mxu0
  %v668 = vpop.f32.mrf.mxu0
  %v669 = vadd.f32 %v140, %v668
  %v670 = vpop.f32.mrf.mxu0
  %671 = vmatprep.mubr.bf16.mxu0 %v306
  %672 = vmatmul.mubr.bf16.gmra.mxu0 %v305
  %v673 = vpop.f32.mrf.mxu0
  %v674 = vadd.f32 %v140, %v673
  %v675 = vpop.f32.mrf.mxu0
  %v676 = vpop.f32.mrf.mxu0
  %v677 = vadd.f32 %v140, %v676
  %v678 = vpop.f32.mrf.mxu0
  %679 = vdwg.mxu0
  %680 = vmatprep.subr.bf16.mxu0 0
  %681 = vmatpush1.bf16.msra.mxu0 %v509
  %682 = vmatprep.subr.bf16.mxu0 0
  %683 = vmatpush1.bf16.msra.mxu0 %v508
  %684 = vmatprep.subr.bf16.mxu0 0
  %685 = vmatpush1.bf16.msra.mxu0 %v507
  %686 = vmatprep.subr.bf16.mxu0 0
  %687 = vmatpush1.bf16.msra.mxu0 %v506
  %688 = vmatprep.subr.bf16.mxu0 0
  %689 = vmatpush1.bf16.msra.mxu0 %v505
  %690 = vmatprep.subr.bf16.mxu0 0
  %691 = vmatpush1.bf16.msra.mxu0 %v504
  %692 = vmatprep.subr.bf16.mxu0 0
  %693 = vmatpush1.bf16.msra.mxu0 %v503
  %694 = vmatprep.subr.bf16.mxu0 0
  %695 = vmatpush1.bf16.msra.mxu0 %v502
  %696 = vmatprep.subr.bf16.mxu0 0
  %697 = vmatpush2.bf16.msra.mxu0 %v517
  %698 = vmatprep.subr.bf16.mxu0 0
  %699 = vmatpush2.bf16.msra.mxu0 %v516
  %700 = vmatprep.subr.bf16.mxu0 0
  %701 = vmatpush2.bf16.msra.mxu0 %v515
  %702 = vmatprep.subr.bf16.mxu0 0
  %703 = vmatpush2.bf16.msra.mxu0 %v514
  %704 = vmatprep.subr.bf16.mxu0 0
  %705 = vmatpush2.bf16.msra.mxu0 %v513
  %706 = vmatprep.subr.bf16.mxu0 0
  %707 = vmatpush2.bf16.msra.mxu0 %v512
  %708 = vmatprep.subr.bf16.mxu0 0
  %709 = vmatpush2.bf16.msra.mxu0 %v511
  %710 = vmatprep.subr.bf16.mxu0 0
  %711 = vmatpush2.bf16.msra.mxu0 %v510
  %712 = vmatprep.mubr.bf16.mxu0 %v273
  %713 = vmatmul.mubr.bf16.gmra.mxu0 %v272
  %v714 = vpop.f32.mrf.mxu0
  %v715 = vadd.f32 %v618, %v714
  %v716 = vpop.f32.mrf.mxu0
  %v717 = vpop.f32.mrf.mxu0
  %v718 = vadd.f32 %v621, %v717
  %v719 = vpop.f32.mrf.mxu0
  %720 = vmatprep.mubr.bf16.mxu0 %v278
  %721 = vmatmul.mubr.bf16.gmra.mxu0 %v277
  %v722 = vpop.f32.mrf.mxu0
  %v723 = vadd.f32 %v626, %v722
  %v724 = vpop.f32.mrf.mxu0
  %v725 = vpop.f32.mrf.mxu0
  %v726 = vadd.f32 %v629, %v725
  %v727 = vpop.f32.mrf.mxu0
  %728 = vmatprep.mubr.bf16.mxu0 %v283
  %729 = vmatmul.mubr.bf16.gmra.mxu0 %v282
  %v730 = vpop.f32.mrf.mxu0
  %v731 = vadd.f32 %v634, %v730
  %v732 = vpop.f32.mrf.mxu0
  %v733 = vpop.f32.mrf.mxu0
  %v734 = vadd.f32 %v637, %v733
  %v735 = vpop.f32.mrf.mxu0
  %736 = vmatprep.mubr.bf16.mxu0 %v288
  %737 = vmatmul.mubr.bf16.gmra.mxu0 %v287
  %v738 = vpop.f32.mrf.mxu0
  %v739 = vadd.f32 %v642, %v738
  %v740 = vpop.f32.mrf.mxu0
  %v741 = vpop.f32.mrf.mxu0
  %v742 = vadd.f32 %v645, %v741
  %v743 = vpop.f32.mrf.mxu0
  %744 = vmatprep.mubr.bf16.mxu0 %v293
  %745 = vmatmul.mubr.bf16.gmra.mxu0 %v292
  %v746 = vpop.f32.mrf.mxu0
  %v747 = vadd.f32 %v650, %v746
  %v748 = vpop.f32.mrf.mxu0
  %v749 = vpop.f32.mrf.mxu0
  %v750 = vadd.f32 %v653, %v749
  %v751 = vpop.f32.mrf.mxu0
  %752 = vmatprep.mubr.bf16.mxu0 %v298
  %753 = vmatmul.mubr.bf16.gmra.mxu0 %v297
  %v754 = vpop.f32.mrf.mxu0
  %v755 = vadd.f32 %v658, %v754
  %v756 = vpop.f32.mrf.mxu0
  %v757 = vpop.f32.mrf.mxu0
  %v758 = vadd.f32 %v661, %v757
  %v759 = vpop.f32.mrf.mxu0
  %760 = vmatprep.mubr.bf16.mxu0 %v303
  %761 = vmatmul.mubr.bf16.gmra.mxu0 %v302
  %v762 = vpop.f32.mrf.mxu0
  %v763 = vadd.f32 %v666, %v762
  %v764 = vpop.f32.mrf.mxu0
  %v765 = vpop.f32.mrf.mxu0
  %v766 = vadd.f32 %v669, %v765
  %v767 = vpop.f32.mrf.mxu0
  %768 = vmatprep.mubr.bf16.mxu0 %v308
  %769 = vmatmul.mubr.bf16.gmra.mxu0 %v307
  %v770 = vpop.f32.mrf.mxu0
  %v771 = vadd.f32 %v674, %v770
  %v772 = vpop.f32.mrf.mxu0
  %v773 = vpop.f32.mrf.mxu0
  %v774 = vadd.f32 %v677, %v773
  %v775 = vpop.f32.mrf.mxu0
  %776 = vdwg.mxu0
  %777 = vmatprep.subr.bf16.mxu0 0
  %778 = vmatpush1.bf16.msra.mxu0 0
  %779 = vmatprep.subr.bf16.mxu0 0
  %780 = vmatpush1.bf16.msra.mxu0 0
  %781 = vmatprep.subr.bf16.mxu0 0
  %782 = vmatpush1.bf16.msra.mxu0 0
  %783 = vmatprep.subr.bf16.mxu0 0
  %784 = vmatpush1.bf16.msra.mxu0 0
  %785 = vmatprep.subr.bf16.mxu0 0
  %786 = vmatpush1.bf16.msra.mxu0 %v521
  %787 = vmatprep.subr.bf16.mxu0 0
  %788 = vmatpush1.bf16.msra.mxu0 %v520
  %789 = vmatprep.subr.bf16.mxu0 0
  %790 = vmatpush1.bf16.msra.mxu0 %v519
  %791 = vmatprep.subr.bf16.mxu0 0
  %792 = vmatpush1.bf16.msra.mxu0 %v518
  %793 = vmatprep.subr.bf16.mxu0 0
  %794 = vmatpush2.bf16.msra.mxu0 0
  %795 = vmatprep.subr.bf16.mxu0 0
  %796 = vmatpush2.bf16.msra.mxu0 0
  %797 = vmatprep.subr.bf16.mxu0 0
  %798 = vmatpush2.bf16.msra.mxu0 0
  %799 = vmatprep.subr.bf16.mxu0 0
  %800 = vmatpush2.bf16.msra.mxu0 0
  %801 = vmatprep.subr.bf16.mxu0 0
  %802 = vmatpush2.bf16.msra.mxu0 0
  %803 = vmatprep.subr.bf16.mxu0 0
  %804 = vmatpush2.bf16.msra.mxu0 0
  %805 = vmatprep.subr.bf16.mxu0 0
  %806 = vmatpush2.bf16.msra.mxu0 0
  %807 = vmatprep.subr.bf16.mxu0 0
  %808 = vmatpush2.bf16.msra.mxu0 0
  %809 = vmatprep.mubr.bf16.mxu0 0
  %810 = vmatmul.mubr.bf16.gmra.mxu0 %v560
  %v811 = vpop.f32.mrf.mxu0
  %v812 = vadd.f32 %v715, %v811
  %v813 = vpop.f32.mrf.mxu0
  %v814 = vpop.f32.mrf.mxu0
  %v815 = vadd.f32 %v718, %v814
  %v816 = vpop.f32.mrf.mxu0
  %817 = vmatprep.mubr.bf16.mxu0 0
  %818 = vmatmul.mubr.bf16.gmra.mxu0 %v563
  %v819 = vpop.f32.mrf.mxu0
  %v820 = vadd.f32 %v723, %v819
  %v821 = vpop.f32.mrf.mxu0
  %v822 = vpop.f32.mrf.mxu0
  %v823 = vadd.f32 %v726, %v822
  %v824 = vpop.f32.mrf.mxu0
  %825 = vmatprep.mubr.bf16.mxu0 0
  %826 = vmatmul.mubr.bf16.gmra.mxu0 %v566
  %v827 = vpop.f32.mrf.mxu0
  %v828 = vadd.f32 %v731, %v827
  %v829 = vpop.f32.mrf.mxu0
  %v830 = vpop.f32.mrf.mxu0
  %v831 = vadd.f32 %v734, %v830
  %v832 = vpop.f32.mrf.mxu0
  %833 = vmatprep.mubr.bf16.mxu0 0
  %834 = vmatmul.mubr.bf16.gmra.mxu0 %v569
  %v835 = vpop.f32.mrf.mxu0
  %v836 = vadd.f32 %v739, %v835
  %v837 = vpop.f32.mrf.mxu0
  %v838 = vpop.f32.mrf.mxu0
  %v839 = vadd.f32 %v742, %v838
  %v840 = vpop.f32.mrf.mxu0
  %841 = vmatprep.mubr.bf16.mxu0 0
  %842 = vmatmul.mubr.bf16.gmra.mxu0 %v572
  %v843 = vpop.f32.mrf.mxu0
  %v844 = vadd.f32 %v747, %v843
  %v845 = vpop.f32.mrf.mxu0
  %v846 = vpop.f32.mrf.mxu0
  %v847 = vadd.f32 %v750, %v846
  %v848 = vpop.f32.mrf.mxu0
  %849 = vmatprep.mubr.bf16.mxu0 0
  %850 = vmatmul.mubr.bf16.gmra.mxu0 %v575
  %v851 = vpop.f32.mrf.mxu0
  %v852 = vadd.f32 %v755, %v851
  %v853 = vpop.f32.mrf.mxu0
  %v854 = vpop.f32.mrf.mxu0
  %v855 = vadd.f32 %v758, %v854
  %v856 = vpop.f32.mrf.mxu0
  %857 = vmatprep.mubr.bf16.mxu0 0
  %858 = vmatmul.mubr.bf16.gmra.mxu0 %v578
  %v859 = vpop.f32.mrf.mxu0
  %v860 = vadd.f32 %v763, %v859
  %v861 = vpop.f32.mrf.mxu0
  %v862 = vpop.f32.mrf.mxu0
  %v863 = vadd.f32 %v766, %v862
  %v864 = vpop.f32.mrf.mxu0
  %865 = vmatprep.mubr.bf16.mxu0 0
  %866 = vmatmul.mubr.bf16.gmra.mxu0 %v581
  %v867 = vpop.f32.mrf.mxu0
  %v868 = vadd.f32 %v771, %v867
  %v869 = vpop.f32.mrf.mxu0
  %v870 = vpop.f32.mrf.mxu0
  %v871 = vadd.f32 %v774, %v870
  %v872 = vpop.f32.mrf.mxu0
  %873 = vdwg.mxu0
  %v874 = vmax.f32 %v812, 0.0
  %v875 = vmax.f32 %v815, 0.0
  %v876 = vmax.f32 %v820, 0.0
  %v877 = vmax.f32 %v823, 0.0
  %v878 = vmax.f32 %v828, 0.0
  %v879 = vmax.f32 %v831, 0.0
  %v880 = vmax.f32 %v836, 0.0
  %v881 = vmax.f32 %v839, 0.0
  %v882 = vmax.f32 %v844, 0.0
  %v883 = vmax.f32 %v847, 0.0
  %v884 = vmax.f32 %v852, 0.0
  %v885 = vmax.f32 %v855, 0.0
  %v886 = vmax.f32 %v860, 0.0
  %v887 = vmax.f32 %v863, 0.0
  %v888 = vmax.f32 %v868, 0.0
  %v889 = vmax.f32 %v871, 0.0
  %v890 = vpack.c.bf16 %v875, %v874
  %v891 = vpack.c.bf16 %v877, %v876
  %v892 = vpack.c.bf16 %v879, %v878
  %v893 = vpack.c.bf16 %v881, %v880
  %v894 = vpack.c.bf16 %v883, %v882
  %v895 = vpack.c.bf16 %v885, %v884
  %v896 = vpack.c.bf16 %v887, %v886
  %v897 = vpack.c.bf16 %v889, %v888
  %v906 = vunpack.c.l.b16 %v890
  %v907 = vunpack.c.h.b16 %v890
  %v908 = vunpack.c.l.b16 %v891
  %v909 = vunpack.c.h.b16 %v891
  %v910 = vunpack.c.l.b16 %v892
  %v911 = vunpack.c.h.b16 %v892
  %v912 = vunpack.c.l.b16 %v893
  %v913 = vunpack.c.h.b16 %v893
  %v914 = vunpack.c.l.b16 %v894
  %v915 = vunpack.c.h.b16 %v894
  %v916 = vunpack.c.l.b16 %v895
  %v917 = vunpack.c.h.b16 %v895
  %v918 = vunpack.c.l.b16 %v896
  %v919 = vunpack.c.h.b16 %v896
  %v920 = vunpack.c.l.b16 %v897
  %v921 = vunpack.c.h.b16 %v897
  %v922 = vpack.c.b16 %v906, %v906
  %v923 = vpack.c.b16 %v907, %v907
  %v924 = vpack.c.b16 %v908, %v908
  %v925 = vpack.c.b16 %v909, %v909
  %v926 = vpack.c.b16 %v910, %v910
  %v927 = vpack.c.b16 %v911, %v911
  %v928 = vpack.c.b16 %v912, %v912
  %v929 = vpack.c.b16 %v913, %v913
  %v930 = vpack.c.b16 %v914, %v914
  %v931 = vpack.c.b16 %v915, %v915
  %v932 = vpack.c.b16 %v916, %v916
  %v933 = vpack.c.b16 %v917, %v917
  %v934 = vpack.c.b16 %v918, %v918
  %v935 = vpack.c.b16 %v919, %v919
  %v936 = vpack.c.b16 %v920, %v920
  %v937 = vpack.c.b16 %v921, %v921
  %vm954 = vcmask 519168
  %955 = vst.msk [vmem:[%s3] sm:$0xf] %vm954, %v922
  %956 = vst.msk [vmem:[%s3 + $0x4] sm:$0xf] %vm954, %v923
  %957 = vst.msk [vmem:[%s3 + $0x8] sm:$0xf] %vm954, %v924
  %958 = vst.msk [vmem:[%s3 + $0xc] sm:$0xf] %vm954, %v925
  %959 = vst.msk [vmem:[%s3 + $0x10] sm:$0xf] %vm954, %v926
  %960 = vst.msk [vmem:[%s3 + $0x14] sm:$0xf] %vm954, %v927
  %961 = vst.msk [vmem:[%s3 + $0x18] sm:$0xf] %vm954, %v928
  %962 = vst.msk [vmem:[%s3 + $0x1c] sm:$0xf] %vm954, %v929
  %963 = vst.msk [vmem:[%s3 + $0x20] sm:$0xf] %vm954, %v930
  %964 = vst.msk [vmem:[%s3 + $0x24] sm:$0xf] %vm954, %v931
  %965 = vst.msk [vmem:[%s3 + $0x28] sm:$0xf] %vm954, %v932
  %966 = vst.msk [vmem:[%s3 + $0x2c] sm:$0xf] %vm954, %v933
  %967 = vst.msk [vmem:[%s3 + $0x30] sm:$0xf] %vm954, %v934
  %968 = vst.msk [vmem:[%s3 + $0x34] sm:$0xf] %vm954, %v935
  %969 = vst.msk [vmem:[%s3 + $0x38] sm:$0xf] %vm954, %v936
  %970 = vst.msk [vmem:[%s3 + $0x3c] sm:$0xf] %vm954, %v937
  // Predicated region
  $region14: #{resnet_backbone_forward.12} parent=0 // pred_check
    _
  $region15: #{resnet_backbone_forward.12} parent=0 // pred_check_branch
    %972 = sbr.rel (0) target = $region17
  $region16: #{resnet_backbone_forward.12} parent=0 // pred_region
    _
  $region17: #{resnet_backbone_forward.12} parent=0 // pred_fallthru
    _
  // Predicated region
  $region18: #{resnet_backbone_forward.12} parent=0 // pred_check
    _
  $region19: #{resnet_backbone_forward.12} parent=0 // pred_check_branch
    %974 = sbr.rel (0) target = $region21
  $region20: #{resnet_backbone_forward.12} parent=0 // pred_region
    _
  $region21: #{resnet_backbone_forward.12} parent=0 // pred_fallthru
    _

// kernel: resnet_backbone_forward.13
$region0: #{resnet_backbone_forward.13}
  #allocation0 [shape = 'u32[]', space=smem, size = 0x4, offset = 0x4, fixed_abs, tag = 'smem constant byte address 0x4 - core index']
  #allocation1 [shape = 'u32[144,128]{1,0:T(1,128)}', space=vmem, size = 0x12000, scoped, tag = 'internal scratch']
  %s0 = inlined_call_operand.vmem [shape: bf16[128,576], index: 0, kind: input, shape index: {}]
  %s1 = inlined_call_operand.vmem [shape: bf16[576,64], index: 1, kind: input, shape index: {}]
  %s2 = inlined_call_operand.vmem [shape: f32[1,64], index: 2, kind: input, shape index: {}]
  %s3 = inlined_call_operand.vmem [shape: bf16[128,64], index: 3, kind: input, shape index: {}]
  %s4 = inlined_call_operand.vmem [shape: bf16[128,64], index: 4, kind: output, shape index: {}]
  %s5 = sld [smem:[#allocation0]]
  $region26: #{resnet_backbone_forward.13} parent=0
    _
  %s7 = ssub.s32 1, %s5
  %s8 = scalar_select 0, %s7, %s5
  // Predicated region
  $region2: #{resnet_backbone_forward.13} parent=0 // pred_check
    _
  $region3: #{resnet_backbone_forward.13} parent=0 // pred_check_branch
    %10 = sbr.rel (0) target = $region5
  $region4: #{resnet_backbone_forward.13} parent=0 // pred_region
    _
  $region5: #{resnet_backbone_forward.13} parent=0 // pred_fallthru
    _
  // Predicated region
  $region6: #{resnet_backbone_forward.13} parent=0 // pred_check
    _
  $region7: #{resnet_backbone_forward.13} parent=0 // pred_check_branch
    %12 = sbr.rel (0) target = $region9
  $region8: #{resnet_backbone_forward.13} parent=0 // pred_region
    _
  $region9: #{resnet_backbone_forward.13} parent=0 // pred_fallthru
    _
  // Predicated region
  $region10: #{resnet_backbone_forward.13} parent=0 // pred_check
    _
  $region11: #{resnet_backbone_forward.13} parent=0 // pred_check_branch
    %14 = sbr.rel (0) target = $region13
  $region12: #{resnet_backbone_forward.13} parent=0 // pred_region
    _
  $region13: #{resnet_backbone_forward.13} parent=0 // pred_fallthru
    _
  // Predicated region
  $region14: #{resnet_backbone_forward.13} parent=0 // pred_check
    _
  $region15: #{resnet_backbone_forward.13} parent=0 // pred_check_branch
    %16 = sbr.rel (0) target = $region17
  $region16: #{resnet_backbone_forward.13} parent=0 // pred_region
    _
  $region17: #{resnet_backbone_forward.13} parent=0 // pred_fallthru
    _
  %v18 = vld [vmem:[%s3] sm:$0xf]
  %v19 = vld [vmem:[%s3 + $0x4] sm:$0xf]
  %v20 = vld [vmem:[%s3 + $0x8] sm:$0xf]
  %v21 = vld [vmem:[%s3 + $0xc] sm:$0xf]
  %v22 = vld [vmem:[%s3 + $0x10] sm:$0xf]
  %v23 = vld [vmem:[%s3 + $0x14] sm:$0xf]
  %v24 = vld [vmem:[%s3 + $0x18] sm:$0xf]
  %v25 = vld [vmem:[%s3 + $0x1c] sm:$0xf]
  %v26 = vld [vmem:[%s3 + $0x20] sm:$0xf]
  %v27 = vld [vmem:[%s3 + $0x24] sm:$0xf]
  %v28 = vld [vmem:[%s3 + $0x28] sm:$0xf]
  %v29 = vld [vmem:[%s3 + $0x2c] sm:$0xf]
  %v30 = vld [vmem:[%s3 + $0x30] sm:$0xf]
  %v31 = vld [vmem:[%s3 + $0x34] sm:$0xf]
  %v32 = vld [vmem:[%s3 + $0x38] sm:$0xf]
  %v33 = vld [vmem:[%s3 + $0x3c] sm:$0xf]
  %v34 = vunpack.c.l.bf16 %v18
  %v35 = vunpack.c.l.bf16 %v19
  %v36 = vunpack.c.l.bf16 %v20
  %v37 = vunpack.c.l.bf16 %v21
  %v38 = vunpack.c.l.bf16 %v22
  %v39 = vunpack.c.l.bf16 %v23
  %v40 = vunpack.c.l.bf16 %v24
  %v41 = vunpack.c.l.bf16 %v25
  %v42 = vunpack.c.l.bf16 %v26
  %v43 = vunpack.c.l.bf16 %v27
  %v44 = vunpack.c.l.bf16 %v28
  %v45 = vunpack.c.l.bf16 %v29
  %v46 = vunpack.c.l.bf16 %v30
  %v47 = vunpack.c.l.bf16 %v31
  %v48 = vunpack.c.l.bf16 %v32
  %v49 = vunpack.c.l.bf16 %v33
  %v50 = vld [vmem:[%s0] sm:$0xff]
  %v51 = vld [vmem:[%s0 + $0x8] sm:$0xff]
  %v52 = vld [vmem:[%s0 + $0x10] sm:$0xf]
  %v53 = vld [vmem:[%s0 + $0x14] sm:$0xff]
  %v54 = vld [vmem:[%s0 + $0x1c] sm:$0xff]
  %v55 = vld [vmem:[%s0 + $0x24] sm:$0xf]
  %v56 = vld [vmem:[%s0 + $0x28] sm:$0xff]
  %v57 = vld [vmem:[%s0 + $0x30] sm:$0xff]
  %v58 = vld [vmem:[%s0 + $0x38] sm:$0xf]
  %v59 = vld [vmem:[%s0 + $0x3c] sm:$0xff]
  %v60 = vld [vmem:[%s0 + $0x44] sm:$0xff]
  %v61 = vld [vmem:[%s0 + $0x4c] sm:$0xf]
  %v62 = vld [vmem:[%s0 + $0x50] sm:$0xff]
  %v63 = vld [vmem:[%s0 + $0x58] sm:$0xff]
  %v64 = vld [vmem:[%s0 + $0x60] sm:$0xf]
  %v65 = vld [vmem:[%s0 + $0x64] sm:$0xff]
  %v66 = vld [vmem:[%s0 + $0x6c] sm:$0xff]
  %v67 = vld [vmem:[%s0 + $0x74] sm:$0xf]
  %v68 = vld [vmem:[%s0 + $0x78] sm:$0xff]
  %v69 = vld [vmem:[%s0 + $0x80] sm:$0xff]
  %v70 = vld [vmem:[%s0 + $0x88] sm:$0xf]
  %v71 = vld [vmem:[%s0 + $0x8c] sm:$0xff]
  %v72 = vld [vmem:[%s0 + $0x94] sm:$0xff]
  %v73 = vld [vmem:[%s0 + $0x9c] sm:$0xf]
  %v74 = vld [vmem:[%s0 + $0xa0] sm:$0xff]
  %v75 = vld [vmem:[%s0 + $0xa8] sm:$0xff]
  %v76 = vld [vmem:[%s0 + $0xb0] sm:$0xf]
  %v77 = vld [vmem:[%s0 + $0xb4] sm:$0xff]
  %v78 = vld [vmem:[%s0 + $0xbc] sm:$0xff]
  %v79 = vld [vmem:[%s0 + $0xc4] sm:$0xf]
  %v80 = vld [vmem:[%s0 + $0xc8] sm:$0xff]
  %v81 = vld [vmem:[%s0 + $0xd0] sm:$0xff]
  %v82 = vld [vmem:[%s0 + $0xd8] sm:$0xf]
  %v83 = vld [vmem:[%s0 + $0xdc] sm:$0xff]
  %v84 = vld [vmem:[%s0 + $0xe4] sm:$0xff]
  %v85 = vld [vmem:[%s0 + $0xec] sm:$0xf]
  %v86 = vld [vmem:[%s0 + $0xf0] sm:$0xff]
  %v87 = vld [vmem:[%s0 + $0xf8] sm:$0xff]
  %v88 = vld [vmem:[%s0 + $0x100] sm:$0xf]
  %v89 = vld [vmem:[%s0 + $0x104] sm:$0xff]
  %v90 = vld [vmem:[%s0 + $0x10c] sm:$0xff]
  %v91 = vld [vmem:[%s0 + $0x114] sm:$0xf]
  %v92 = vld [vmem:[%s0 + $0x118] sm:$0xff]
  %v93 = vld [vmem:[%s0 + $0x120] sm:$0xff]
  %v94 = vld [vmem:[%s0 + $0x128] sm:$0xf]
  %v95 = vld [vmem:[%s0 + $0x12c] sm:$0xff]
  %v96 = vld [vmem:[%s0 + $0x134] sm:$0xff]
  %v97 = vld [vmem:[%s0 + $0x13c] sm:$0xf]
  %v98 = vld [vmem:[%s1] sm:$0xf]
  %v99 = vld [vmem:[%s1 + $0x4] sm:$0xf]
  %v100 = vld [vmem:[%s1 + $0x8] sm:$0xf]
  %v101 = vld [vmem:[%s1 + $0xc] sm:$0xf]
  %v102 = vld [vmem:[%s1 + $0x10] sm:$0xf]
  %v103 = vld [vmem:[%s1 + $0x14] sm:$0xf]
  %v104 = vld [vmem:[%s1 + $0x18] sm:$0xf]
  %v105 = vld [vmem:[%s1 + $0x1c] sm:$0xf]
  %v106 = vld [vmem:[%s1 + $0x20] sm:$0xf]
  %v107 = vld [vmem:[%s1 + $0x24] sm:$0xf]
  %v108 = vld [vmem:[%s1 + $0x28] sm:$0xf]
  %v109 = vld [vmem:[%s1 + $0x2c] sm:$0xf]
  %v110 = vld [vmem:[%s1 + $0x30] sm:$0xf]
  %v111 = vld [vmem:[%s1 + $0x34] sm:$0xf]
  %v112 = vld [vmem:[%s1 + $0x38] sm:$0xf]
  %v113 = vld [vmem:[%s1 + $0x3c] sm:$0xf]
  %v114 = vld [vmem:[%s1 + $0x40] sm:$0xf]
  %v115 = vld [vmem:[%s1 + $0x44] sm:$0xf]
  %v116 = vld [vmem:[%s1 + $0x48] sm:$0xf]
  %v117 = vld [vmem:[%s1 + $0x4c] sm:$0xf]
  %v118 = vld [vmem:[%s1 + $0x50] sm:$0xf]
  %v119 = vld [vmem:[%s1 + $0x54] sm:$0xf]
  %v120 = vld [vmem:[%s1 + $0x58] sm:$0xf]
  %v121 = vld [vmem:[%s1 + $0x5c] sm:$0xf]
  %v122 = vld [vmem:[%s1 + $0x60] sm:$0xf]
  %v123 = vld [vmem:[%s1 + $0x64] sm:$0xf]
  %v124 = vld [vmem:[%s1 + $0x68] sm:$0xf]
  %v125 = vld [vmem:[%s1 + $0x6c] sm:$0xf]
  %v126 = vld [vmem:[%s1 + $0x70] sm:$0xf]
  %v127 = vld [vmem:[%s1 + $0x74] sm:$0xf]
  %v128 = vld [vmem:[%s1 + $0x78] sm:$0xf]
  %v129 = vld [vmem:[%s1 + $0x7c] sm:$0xf]
  %v130 = vld [vmem:[%s1 + $0x80] sm:$0xf]
  %v131 = vld [vmem:[%s1 + $0x84] sm:$0xf]
  %v132 = vld [vmem:[%s1 + $0x88] sm:$0xf]
  %v133 = vld [vmem:[%s1 + $0x8c] sm:$0xf]
  %v134 = vld [vmem:[%s1 + $0x90] sm:$0xf]
  %v135 = vld [vmem:[%s1 + $0x94] sm:$0xf]
  %v136 = vld [vmem:[%s1 + $0x98] sm:$0xf]
  %v137 = vld [vmem:[%s1 + $0x9c] sm:$0xf]
  %v138 = vld [vmem:[%s1 + $0xa0] sm:$0xf]
  %v139 = vld [vmem:[%s1 + $0xa4] sm:$0xf]
  %v140 = vld [vmem:[%s1 + $0xa8] sm:$0xf]
  %v141 = vld [vmem:[%s1 + $0xac] sm:$0xf]
  %v142 = vld [vmem:[%s1 + $0xb0] sm:$0xf]
  %v143 = vld [vmem:[%s1 + $0xb4] sm:$0xf]
  %v144 = vld [vmem:[%s1 + $0xb8] sm:$0xf]
  %v145 = vld [vmem:[%s1 + $0xbc] sm:$0xf]
  %v146 = vld [vmem:[%s1 + $0xc0] sm:$0xf]
  %v147 = vld [vmem:[%s1 + $0xc4] sm:$0xf]
  %v148 = vld [vmem:[%s1 + $0xc8] sm:$0xf]
  %v149 = vld [vmem:[%s1 + $0xcc] sm:$0xf]
  %v150 = vld [vmem:[%s1 + $0xd0] sm:$0xf]
  %v151 = vld [vmem:[%s1 + $0xd4] sm:$0xf]
  %v152 = vld [vmem:[%s1 + $0xd8] sm:$0xf]
  %v153 = vld [vmem:[%s1 + $0xdc] sm:$0xf]
  %v154 = vld [vmem:[%s1 + $0xe0] sm:$0xf]
  %v155 = vld [vmem:[%s1 + $0xe4] sm:$0xf]
  %v156 = vld [vmem:[%s1 + $0xe8] sm:$0xf]
  %v157 = vld [vmem:[%s1 + $0xec] sm:$0xf]
  %v158 = vld [vmem:[%s1 + $0xf0] sm:$0xf]
  %v159 = vld [vmem:[%s1 + $0xf4] sm:$0xf]
  %v160 = vld [vmem:[%s1 + $0xf8] sm:$0xf]
  %v161 = vld [vmem:[%s1 + $0xfc] sm:$0xf]
  %v162 = vld [vmem:[%s1 + $0x100] sm:$0xf]
  %v163 = vld [vmem:[%s1 + $0x104] sm:$0xf]
  %v164 = vld [vmem:[%s1 + $0x108] sm:$0xf]
  %v165 = vld [vmem:[%s1 + $0x10c] sm:$0xf]
  %v166 = vld [vmem:[%s1 + $0x110] sm:$0xf]
  %v167 = vld [vmem:[%s1 + $0x114] sm:$0xf]
  %v168 = vld [vmem:[%s1 + $0x118] sm:$0xf]
  %v169 = vld [vmem:[%s1 + $0x11c] sm:$0xf]
  %v170 = vld [vmem:[%s2] sm:$0x1]
  %v172 = vlaneseq
  %v173 = vshrl.u32 %v172, 7
  %v174 = vsub.s32 0, %v173
  %v175 = vrot.slane %v170, %v174
  %v225 = vunpack.c.l.b16 %v50
  %v226 = vunpack.c.h.b16 %v50
  %v227 = vunpack.c.l.b16 %v51
  %v228 = vunpack.c.h.b16 %v51
  %v229 = vunpack.c.l.b16 %v52
  %v230 = vunpack.c.l.b16 %v53
  %v231 = vunpack.c.h.b16 %v53
  %v232 = vunpack.c.l.b16 %v54
  %v233 = vunpack.c.h.b16 %v54
  %v234 = vunpack.c.l.b16 %v55
  %v235 = vunpack.c.l.b16 %v56
  %v236 = vunpack.c.h.b16 %v56
  %v237 = vunpack.c.l.b16 %v57
  %v238 = vunpack.c.h.b16 %v57
  %v239 = vunpack.c.l.b16 %v58
  %v240 = vunpack.c.l.b16 %v59
  %v241 = vunpack.c.h.b16 %v59
  %v242 = vunpack.c.l.b16 %v60
  %v243 = vunpack.c.h.b16 %v60
  %v244 = vunpack.c.l.b16 %v61
  %v245 = vunpack.c.l.b16 %v62
  %v246 = vunpack.c.h.b16 %v62
  %v247 = vunpack.c.l.b16 %v63
  %v248 = vunpack.c.h.b16 %v63
  %v249 = vunpack.c.l.b16 %v64
  %v250 = vunpack.c.l.b16 %v65
  %v251 = vunpack.c.h.b16 %v65
  %v252 = vunpack.c.l.b16 %v66
  %v253 = vunpack.c.h.b16 %v66
  %v254 = vunpack.c.l.b16 %v67
  %v255 = vunpack.c.l.b16 %v68
  %v256 = vunpack.c.h.b16 %v68
  %v257 = vunpack.c.l.b16 %v69
  %v258 = vunpack.c.h.b16 %v69
  %v259 = vunpack.c.l.b16 %v70
  %v260 = vunpack.c.l.b16 %v71
  %v261 = vunpack.c.h.b16 %v71
  %v262 = vunpack.c.l.b16 %v72
  %v263 = vunpack.c.h.b16 %v72
  %v264 = vunpack.c.l.b16 %v73
  %v265 = vunpack.c.l.b16 %v74
  %v266 = vunpack.c.h.b16 %v74
  %v267 = vunpack.c.l.b16 %v75
  %v268 = vunpack.c.h.b16 %v75
  %v269 = vunpack.c.l.b16 %v76
  %v270 = vunpack.c.l.b16 %v77
  %v271 = vunpack.c.h.b16 %v77
  %v272 = vunpack.c.l.b16 %v78
  %v273 = vunpack.c.h.b16 %v78
  %v274 = vunpack.c.l.b16 %v79
  %v275 = vunpack.c.l.b16 %v80
  %v276 = vunpack.c.h.b16 %v80
  %v277 = vunpack.c.l.b16 %v81
  %v278 = vunpack.c.h.b16 %v81
  %v279 = vunpack.c.l.b16 %v82
  %v280 = vunpack.c.l.b16 %v83
  %v281 = vunpack.c.h.b16 %v83
  %v282 = vunpack.c.l.b16 %v84
  %v283 = vunpack.c.h.b16 %v84
  %v284 = vunpack.c.l.b16 %v85
  %v285 = vunpack.c.l.b16 %v86
  %v286 = vunpack.c.h.b16 %v86
  %v287 = vunpack.c.l.b16 %v87
  %v288 = vunpack.c.h.b16 %v87
  %v289 = vunpack.c.l.b16 %v88
  %v290 = vunpack.c.l.b16 %v89
  %v291 = vunpack.c.h.b16 %v89
  %v292 = vunpack.c.l.b16 %v90
  %v293 = vunpack.c.h.b16 %v90
  %v294 = vunpack.c.l.b16 %v91
  %v295 = vunpack.c.l.b16 %v92
  %v296 = vunpack.c.h.b16 %v92
  %v297 = vunpack.c.l.b16 %v93
  %v298 = vunpack.c.h.b16 %v93
  %v299 = vunpack.c.l.b16 %v94
  %v300 = vunpack.c.l.b16 %v95
  %v301 = vunpack.c.h.b16 %v95
  %v302 = vunpack.c.l.b16 %v96
  %v303 = vunpack.c.h.b16 %v96
  %v304 = vunpack.c.l.b16 %v97
  %v305 = vpack.c.b16 %v230, %v225
  %v306 = vpack.c.b16 %v231, %v226
  %v307 = vpack.c.b16 %v232, %v227
  %v308 = vpack.c.b16 %v233, %v228
  %v309 = vpack.c.b16 %v234, %v229
  %v310 = vpack.c.b16 %v240, %v235
  %v311 = vpack.c.b16 %v241, %v236
  %v312 = vpack.c.b16 %v242, %v237
  %v313 = vpack.c.b16 %v243, %v238
  %v314 = vpack.c.b16 %v244, %v239
  %v315 = vpack.c.b16 %v250, %v245
  %v316 = vpack.c.b16 %v251, %v246
  %v317 = vpack.c.b16 %v252, %v247
  %v318 = vpack.c.b16 %v253, %v248
  %v319 = vpack.c.b16 %v254, %v249
  %v320 = vpack.c.b16 %v260, %v255
  %v321 = vpack.c.b16 %v261, %v256
  %v322 = vpack.c.b16 %v262, %v257
  %v323 = vpack.c.b16 %v263, %v258
  %v324 = vpack.c.b16 %v264, %v259
  %v325 = vpack.c.b16 %v270, %v265
  %v326 = vpack.c.b16 %v271, %v266
  %v327 = vpack.c.b16 %v272, %v267
  %v328 = vpack.c.b16 %v273, %v268
  %v329 = vpack.c.b16 %v274, %v269
  %v330 = vpack.c.b16 %v280, %v275
  %v331 = vpack.c.b16 %v281, %v276
  %v332 = vpack.c.b16 %v282, %v277
  %v333 = vpack.c.b16 %v283, %v278
  %v334 = vpack.c.b16 %v284, %v279
  %v335 = vpack.c.b16 %v290, %v285
  %v336 = vpack.c.b16 %v291, %v286
  %v337 = vpack.c.b16 %v292, %v287
  %v338 = vpack.c.b16 %v293, %v288
  %v339 = vpack.c.b16 %v294, %v289
  %v340 = vpack.c.b16 %v300, %v295
  %v341 = vpack.c.b16 %v301, %v296
  %v342 = vpack.c.b16 %v302, %v297
  %v343 = vpack.c.b16 %v303, %v298
  %v344 = vpack.c.b16 %v304, %v299
  %v449 = vunpack.c.l.b16 %v98
  %v450 = vunpack.c.l.b16 %v99
  %v451 = vunpack.c.l.b16 %v100
  %v452 = vunpack.c.l.b16 %v101
  %v453 = vunpack.c.l.b16 %v102
  %v454 = vunpack.c.l.b16 %v103
  %v455 = vunpack.c.l.b16 %v104
  %v456 = vunpack.c.l.b16 %v105
  %v457 = vunpack.c.l.b16 %v106
  %v458 = vunpack.c.l.b16 %v107
  %v459 = vunpack.c.l.b16 %v108
  %v460 = vunpack.c.l.b16 %v109
  %v461 = vunpack.c.l.b16 %v110
  %v462 = vunpack.c.l.b16 %v111
  %v463 = vunpack.c.l.b16 %v112
  %v464 = vunpack.c.l.b16 %v113
  %v465 = vunpack.c.l.b16 %v114
  %v466 = vunpack.c.l.b16 %v115
  %v467 = vunpack.c.l.b16 %v116
  %v468 = vunpack.c.l.b16 %v117
  %v469 = vunpack.c.l.b16 %v118
  %v470 = vunpack.c.l.b16 %v119
  %v471 = vunpack.c.l.b16 %v120
  %v472 = vunpack.c.l.b16 %v121
  %v473 = vunpack.c.l.b16 %v122
  %v474 = vunpack.c.l.b16 %v123
  %v475 = vunpack.c.l.b16 %v124
  %v476 = vunpack.c.l.b16 %v125
  %v477 = vunpack.c.l.b16 %v126
  %v478 = vunpack.c.l.b16 %v127
  %v479 = vunpack.c.l.b16 %v128
  %v480 = vunpack.c.l.b16 %v129
  %v481 = vunpack.c.l.b16 %v130
  %v482 = vunpack.c.l.b16 %v131
  %v483 = vunpack.c.l.b16 %v132
  %v484 = vunpack.c.l.b16 %v133
  %v485 = vunpack.c.l.b16 %v134
  %v486 = vunpack.c.l.b16 %v135
  %v487 = vunpack.c.l.b16 %v136
  %v488 = vunpack.c.l.b16 %v137
  %v489 = vunpack.c.l.b16 %v138
  %v490 = vunpack.c.l.b16 %v139
  %v491 = vunpack.c.l.b16 %v140
  %v492 = vunpack.c.l.b16 %v141
  %v493 = vunpack.c.l.b16 %v142
  %v494 = vunpack.c.l.b16 %v143
  %v495 = vunpack.c.l.b16 %v144
  %v496 = vunpack.c.l.b16 %v145
  %v497 = vunpack.c.l.b16 %v146
  %v498 = vunpack.c.l.b16 %v147
  %v499 = vunpack.c.l.b16 %v148
  %v500 = vunpack.c.l.b16 %v149
  %v501 = vunpack.c.l.b16 %v150
  %v502 = vunpack.c.l.b16 %v151
  %v503 = vunpack.c.l.b16 %v152
  %v504 = vunpack.c.l.b16 %v153
  %v505 = vunpack.c.l.b16 %v154
  %v506 = vunpack.c.l.b16 %v155
  %v507 = vunpack.c.l.b16 %v156
  %v508 = vunpack.c.l.b16 %v157
  %v509 = vunpack.c.l.b16 %v158
  %v510 = vunpack.c.l.b16 %v159
  %v511 = vunpack.c.l.b16 %v160
  %v512 = vunpack.c.l.b16 %v161
  %v513 = vunpack.c.l.b16 %v162
  %v514 = vunpack.c.l.b16 %v163
  %v515 = vunpack.c.l.b16 %v164
  %v516 = vunpack.c.l.b16 %v165
  %v517 = vunpack.c.l.b16 %v166
  %v518 = vunpack.c.l.b16 %v167
  %v519 = vunpack.c.l.b16 %v168
  %v520 = vunpack.c.l.b16 %v169
  %v521 = vpack.c.b16 %v450, %v449
  %v522 = vpack.c.b16 %v452, %v451
  %v523 = vpack.c.b16 %v454, %v453
  %v524 = vpack.c.b16 %v456, %v455
  %v525 = vpack.c.b16 %v458, %v457
  %v526 = vpack.c.b16 %v460, %v459
  %v527 = vpack.c.b16 %v462, %v461
  %v528 = vpack.c.b16 %v464, %v463
  %v529 = vpack.c.b16 %v466, %v465
  %v530 = vpack.c.b16 %v468, %v467
  %v531 = vpack.c.b16 %v470, %v469
  %v532 = vpack.c.b16 %v472, %v471
  %v533 = vpack.c.b16 %v474, %v473
  %v534 = vpack.c.b16 %v476, %v475
  %v535 = vpack.c.b16 %v478, %v477
  %v536 = vpack.c.b16 %v480, %v479
  %v537 = vpack.c.b16 %v482, %v481
  %v538 = vpack.c.b16 %v484, %v483
  %v539 = vpack.c.b16 %v486, %v485
  %v540 = vpack.c.b16 %v488, %v487
  %v541 = vpack.c.b16 %v490, %v489
  %v542 = vpack.c.b16 %v492, %v491
  %v543 = vpack.c.b16 %v494, %v493
  %v544 = vpack.c.b16 %v496, %v495
  %v545 = vpack.c.b16 %v498, %v497
  %v546 = vpack.c.b16 %v500, %v499
  %v547 = vpack.c.b16 %v502, %v501
  %v548 = vpack.c.b16 %v504, %v503
  %v549 = vpack.c.b16 %v506, %v505
  %v550 = vpack.c.b16 %v508, %v507
  %v551 = vpack.c.b16 %v510, %v509
  %v552 = vpack.c.b16 %v512, %v511
  %v553 = vpack.c.b16 %v514, %v513
  %v554 = vpack.c.b16 %v516, %v515
  %v555 = vpack.c.b16 %v518, %v517
  %v556 = vpack.c.b16 %v520, %v519
  %vm593 = vcmask 523264
  %v595 = vsel %vm593, %v309, 0
  %v598 = vsel %vm593, %v314, 0
  %v601 = vsel %vm593, %v319, 0
  %v604 = vsel %vm593, %v324, 0
  %v607 = vsel %vm593, %v329, 0
  %v610 = vsel %vm593, %v334, 0
  %v613 = vsel %vm593, %v339, 0
  %v616 = vsel %vm593, %v344, 0
  %618 = vmatprep.subr.bf16.mxu0 0
  %619 = vmatpush1.bf16.msra.mxu0 %v528
  %620 = vmatprep.subr.bf16.mxu0 0
  %621 = vmatpush1.bf16.msra.mxu0 %v527
  %622 = vmatprep.subr.bf16.mxu0 0
  %623 = vmatpush1.bf16.msra.mxu0 %v526
  %624 = vmatprep.subr.bf16.mxu0 0
  %625 = vmatpush1.bf16.msra.mxu0 %v525
  %626 = vmatprep.subr.bf16.mxu0 0
  %627 = vmatpush1.bf16.msra.mxu0 %v524
  %628 = vmatprep.subr.bf16.mxu0 0
  %629 = vmatpush1.bf16.msra.mxu0 %v523
  %630 = vmatprep.subr.bf16.mxu0 0
  %631 = vmatpush1.bf16.msra.mxu0 %v522
  %632 = vmatprep.subr.bf16.mxu0 0
  %633 = vmatpush1.bf16.msra.mxu0 %v521
  %634 = vmatprep.subr.bf16.mxu0 0
  %635 = vmatpush2.bf16.msra.mxu0 %v536
  %636 = vmatprep.subr.bf16.mxu0 0
  %637 = vmatpush2.bf16.msra.mxu0 %v535
  %638 = vmatprep.subr.bf16.mxu0 0
  %639 = vmatpush2.bf16.msra.mxu0 %v534
  %640 = vmatprep.subr.bf16.mxu0 0
  %641 = vmatpush2.bf16.msra.mxu0 %v533
  %642 = vmatprep.subr.bf16.mxu0 0
  %643 = vmatpush2.bf16.msra.mxu0 %v532
  %644 = vmatprep.subr.bf16.mxu0 0
  %645 = vmatpush2.bf16.msra.mxu0 %v531
  %646 = vmatprep.subr.bf16.mxu0 0
  %647 = vmatpush2.bf16.msra.mxu0 %v530
  %648 = vmatprep.subr.bf16.mxu0 0
  %649 = vmatpush2.bf16.msra.mxu0 %v529
  %650 = vmatprep.mubr.bf16.mxu0 %v306
  %651 = vmatmul.mubr.bf16.gmra.mxu0 %v305
  %v652 = vpop.f32.mrf.mxu0
  %v653 = vadd.f32 %v175, %v652
  %v654 = vpop.f32.mrf.mxu0
  %v655 = vpop.f32.mrf.mxu0
  %v656 = vadd.f32 %v175, %v655
  %v657 = vpop.f32.mrf.mxu0
  %658 = vmatprep.mubr.bf16.mxu0 %v311
  %659 = vmatmul.mubr.bf16.gmra.mxu0 %v310
  %v660 = vpop.f32.mrf.mxu0
  %v661 = vadd.f32 %v175, %v660
  %v662 = vpop.f32.mrf.mxu0
  %v663 = vpop.f32.mrf.mxu0
  %v664 = vadd.f32 %v175, %v663
  %v665 = vpop.f32.mrf.mxu0
  %666 = vmatprep.mubr.bf16.mxu0 %v316
  %667 = vmatmul.mubr.bf16.gmra.mxu0 %v315
  %v668 = vpop.f32.mrf.mxu0
  %v669 = vadd.f32 %v175, %v668
  %v670 = vpop.f32.mrf.mxu0
  %v671 = vpop.f32.mrf.mxu0
  %v672 = vadd.f32 %v175, %v671
  %v673 = vpop.f32.mrf.mxu0
  %674 = vmatprep.mubr.bf16.mxu0 %v321
  %675 = vmatmul.mubr.bf16.gmra.mxu0 %v320
  %v676 = vpop.f32.mrf.mxu0
  %v677 = vadd.f32 %v175, %v676
  %v678 = vpop.f32.mrf.mxu0
  %v679 = vpop.f32.mrf.mxu0
  %v680 = vadd.f32 %v175, %v679
  %v681 = vpop.f32.mrf.mxu0
  %682 = vmatprep.mubr.bf16.mxu0 %v326
  %683 = vmatmul.mubr.bf16.gmra.mxu0 %v325
  %v684 = vpop.f32.mrf.mxu0
  %v685 = vadd.f32 %v175, %v684
  %v686 = vpop.f32.mrf.mxu0
  %v687 = vpop.f32.mrf.mxu0
  %v688 = vadd.f32 %v175, %v687
  %v689 = vpop.f32.mrf.mxu0
  %690 = vmatprep.mubr.bf16.mxu0 %v331
  %691 = vmatmul.mubr.bf16.gmra.mxu0 %v330
  %v692 = vpop.f32.mrf.mxu0
  %v693 = vadd.f32 %v175, %v692
  %v694 = vpop.f32.mrf.mxu0
  %v695 = vpop.f32.mrf.mxu0
  %v696 = vadd.f32 %v175, %v695
  %v697 = vpop.f32.mrf.mxu0
  %698 = vmatprep.mubr.bf16.mxu0 %v336
  %699 = vmatmul.mubr.bf16.gmra.mxu0 %v335
  %v700 = vpop.f32.mrf.mxu0
  %v701 = vadd.f32 %v175, %v700
  %v702 = vpop.f32.mrf.mxu0
  %v703 = vpop.f32.mrf.mxu0
  %v704 = vadd.f32 %v175, %v703
  %v705 = vpop.f32.mrf.mxu0
  %706 = vmatprep.mubr.bf16.mxu0 %v341
  %707 = vmatmul.mubr.bf16.gmra.mxu0 %v340
  %v708 = vpop.f32.mrf.mxu0
  %v709 = vadd.f32 %v175, %v708
  %v710 = vpop.f32.mrf.mxu0
  %v711 = vpop.f32.mrf.mxu0
  %v712 = vadd.f32 %v175, %v711
  %v713 = vpop.f32.mrf.mxu0
  %714 = vdwg.mxu0
  %715 = vmatprep.subr.bf16.mxu0 0
  %716 = vmatpush1.bf16.msra.mxu0 %v544
  %717 = vmatprep.subr.bf16.mxu0 0
  %718 = vmatpush1.bf16.msra.mxu0 %v543
  %719 = vmatprep.subr.bf16.mxu0 0
  %720 = vmatpush1.bf16.msra.mxu0 %v542
  %721 = vmatprep.subr.bf16.mxu0 0
  %722 = vmatpush1.bf16.msra.mxu0 %v541
  %723 = vmatprep.subr.bf16.mxu0 0
  %724 = vmatpush1.bf16.msra.mxu0 %v540
  %725 = vmatprep.subr.bf16.mxu0 0
  %726 = vmatpush1.bf16.msra.mxu0 %v539
  %727 = vmatprep.subr.bf16.mxu0 0
  %728 = vmatpush1.bf16.msra.mxu0 %v538
  %729 = vmatprep.subr.bf16.mxu0 0
  %730 = vmatpush1.bf16.msra.mxu0 %v537
  %731 = vmatprep.subr.bf16.mxu0 0
  %732 = vmatpush2.bf16.msra.mxu0 %v552
  %733 = vmatprep.subr.bf16.mxu0 0
  %734 = vmatpush2.bf16.msra.mxu0 %v551
  %735 = vmatprep.subr.bf16.mxu0 0
  %736 = vmatpush2.bf16.msra.mxu0 %v550
  %737 = vmatprep.subr.bf16.mxu0 0
  %738 = vmatpush2.bf16.msra.mxu0 %v549
  %739 = vmatprep.subr.bf16.mxu0 0
  %740 = vmatpush2.bf16.msra.mxu0 %v548
  %741 = vmatprep.subr.bf16.mxu0 0
  %742 = vmatpush2.bf16.msra.mxu0 %v547
  %743 = vmatprep.subr.bf16.mxu0 0
  %744 = vmatpush2.bf16.msra.mxu0 %v546
  %745 = vmatprep.subr.bf16.mxu0 0
  %746 = vmatpush2.bf16.msra.mxu0 %v545
  %747 = vmatprep.mubr.bf16.mxu0 %v308
  %748 = vmatmul.mubr.bf16.gmra.mxu0 %v307
  %v749 = vpop.f32.mrf.mxu0
  %v750 = vadd.f32 %v653, %v749
  %v751 = vpop.f32.mrf.mxu0
  %v752 = vpop.f32.mrf.mxu0
  %v753 = vadd.f32 %v656, %v752
  %v754 = vpop.f32.mrf.mxu0
  %755 = vmatprep.mubr.bf16.mxu0 %v313
  %756 = vmatmul.mubr.bf16.gmra.mxu0 %v312
  %v757 = vpop.f32.mrf.mxu0
  %v758 = vadd.f32 %v661, %v757
  %v759 = vpop.f32.mrf.mxu0
  %v760 = vpop.f32.mrf.mxu0
  %v761 = vadd.f32 %v664, %v760
  %v762 = vpop.f32.mrf.mxu0
  %763 = vmatprep.mubr.bf16.mxu0 %v318
  %764 = vmatmul.mubr.bf16.gmra.mxu0 %v317
  %v765 = vpop.f32.mrf.mxu0
  %v766 = vadd.f32 %v669, %v765
  %v767 = vpop.f32.mrf.mxu0
  %v768 = vpop.f32.mrf.mxu0
  %v769 = vadd.f32 %v672, %v768
  %v770 = vpop.f32.mrf.mxu0
  %771 = vmatprep.mubr.bf16.mxu0 %v323
  %772 = vmatmul.mubr.bf16.gmra.mxu0 %v322
  %v773 = vpop.f32.mrf.mxu0
  %v774 = vadd.f32 %v677, %v773
  %v775 = vpop.f32.mrf.mxu0
  %v776 = vpop.f32.mrf.mxu0
  %v777 = vadd.f32 %v680, %v776
  %v778 = vpop.f32.mrf.mxu0
  %779 = vmatprep.mubr.bf16.mxu0 %v328
  %780 = vmatmul.mubr.bf16.gmra.mxu0 %v327
  %v781 = vpop.f32.mrf.mxu0
  %v782 = vadd.f32 %v685, %v781
  %v783 = vpop.f32.mrf.mxu0
  %v784 = vpop.f32.mrf.mxu0
  %v785 = vadd.f32 %v688, %v784
  %v786 = vpop.f32.mrf.mxu0
  %787 = vmatprep.mubr.bf16.mxu0 %v333
  %788 = vmatmul.mubr.bf16.gmra.mxu0 %v332
  %v789 = vpop.f32.mrf.mxu0
  %v790 = vadd.f32 %v693, %v789
  %v791 = vpop.f32.mrf.mxu0
  %v792 = vpop.f32.mrf.mxu0
  %v793 = vadd.f32 %v696, %v792
  %v794 = vpop.f32.mrf.mxu0
  %795 = vmatprep.mubr.bf16.mxu0 %v338
  %796 = vmatmul.mubr.bf16.gmra.mxu0 %v337
  %v797 = vpop.f32.mrf.mxu0
  %v798 = vadd.f32 %v701, %v797
  %v799 = vpop.f32.mrf.mxu0
  %v800 = vpop.f32.mrf.mxu0
  %v801 = vadd.f32 %v704, %v800
  %v802 = vpop.f32.mrf.mxu0
  %803 = vmatprep.mubr.bf16.mxu0 %v343
  %804 = vmatmul.mubr.bf16.gmra.mxu0 %v342
  %v805 = vpop.f32.mrf.mxu0
  %v806 = vadd.f32 %v709, %v805
  %v807 = vpop.f32.mrf.mxu0
  %v808 = vpop.f32.mrf.mxu0
  %v809 = vadd.f32 %v712, %v808
  %v810 = vpop.f32.mrf.mxu0
  %811 = vdwg.mxu0
  %812 = vmatprep.subr.bf16.mxu0 0
  %813 = vmatpush1.bf16.msra.mxu0 0
  %814 = vmatprep.subr.bf16.mxu0 0
  %815 = vmatpush1.bf16.msra.mxu0 0
  %816 = vmatprep.subr.bf16.mxu0 0
  %817 = vmatpush1.bf16.msra.mxu0 0
  %818 = vmatprep.subr.bf16.mxu0 0
  %819 = vmatpush1.bf16.msra.mxu0 0
  %820 = vmatprep.subr.bf16.mxu0 0
  %821 = vmatpush1.bf16.msra.mxu0 %v556
  %822 = vmatprep.subr.bf16.mxu0 0
  %823 = vmatpush1.bf16.msra.mxu0 %v555
  %824 = vmatprep.subr.bf16.mxu0 0
  %825 = vmatpush1.bf16.msra.mxu0 %v554
  %826 = vmatprep.subr.bf16.mxu0 0
  %827 = vmatpush1.bf16.msra.mxu0 %v553
  %828 = vmatprep.subr.bf16.mxu0 0
  %829 = vmatpush2.bf16.msra.mxu0 0
  %830 = vmatprep.subr.bf16.mxu0 0
  %831 = vmatpush2.bf16.msra.mxu0 0
  %832 = vmatprep.subr.bf16.mxu0 0
  %833 = vmatpush2.bf16.msra.mxu0 0
  %834 = vmatprep.subr.bf16.mxu0 0
  %835 = vmatpush2.bf16.msra.mxu0 0
  %836 = vmatprep.subr.bf16.mxu0 0
  %837 = vmatpush2.bf16.msra.mxu0 0
  %838 = vmatprep.subr.bf16.mxu0 0
  %839 = vmatpush2.bf16.msra.mxu0 0
  %840 = vmatprep.subr.bf16.mxu0 0
  %841 = vmatpush2.bf16.msra.mxu0 0
  %842 = vmatprep.subr.bf16.mxu0 0
  %843 = vmatpush2.bf16.msra.mxu0 0
  %844 = vmatprep.mubr.bf16.mxu0 0
  %845 = vmatmul.mubr.bf16.gmra.mxu0 %v595
  %v846 = vpop.f32.mrf.mxu0
  %v847 = vadd.f32 %v750, %v846
  %v848 = vpop.f32.mrf.mxu0
  %v849 = vpop.f32.mrf.mxu0
  %v850 = vadd.f32 %v753, %v849
  %v851 = vpop.f32.mrf.mxu0
  %852 = vmatprep.mubr.bf16.mxu0 0
  %853 = vmatmul.mubr.bf16.gmra.mxu0 %v598
  %v854 = vpop.f32.mrf.mxu0
  %v855 = vadd.f32 %v758, %v854
  %v856 = vpop.f32.mrf.mxu0
  %v857 = vpop.f32.mrf.mxu0
  %v858 = vadd.f32 %v761, %v857
  %v859 = vpop.f32.mrf.mxu0
  %860 = vmatprep.mubr.bf16.mxu0 0
  %861 = vmatmul.mubr.bf16.gmra.mxu0 %v601
  %v862 = vpop.f32.mrf.mxu0
  %v863 = vadd.f32 %v766, %v862
  %v864 = vpop.f32.mrf.mxu0
  %v865 = vpop.f32.mrf.mxu0
  %v866 = vadd.f32 %v769, %v865
  %v867 = vpop.f32.mrf.mxu0
  %868 = vmatprep.mubr.bf16.mxu0 0
  %869 = vmatmul.mubr.bf16.gmra.mxu0 %v604
  %v870 = vpop.f32.mrf.mxu0
  %v871 = vadd.f32 %v774, %v870
  %v872 = vpop.f32.mrf.mxu0
  %v873 = vpop.f32.mrf.mxu0
  %v874 = vadd.f32 %v777, %v873
  %v875 = vpop.f32.mrf.mxu0
  %876 = vmatprep.mubr.bf16.mxu0 0
  %877 = vmatmul.mubr.bf16.gmra.mxu0 %v607
  %v878 = vpop.f32.mrf.mxu0
  %v879 = vadd.f32 %v782, %v878
  %v880 = vpop.f32.mrf.mxu0
  %v881 = vpop.f32.mrf.mxu0
  %v882 = vadd.f32 %v785, %v881
  %v883 = vpop.f32.mrf.mxu0
  %884 = vmatprep.mubr.bf16.mxu0 0
  %885 = vmatmul.mubr.bf16.gmra.mxu0 %v610
  %v886 = vpop.f32.mrf.mxu0
  %v887 = vadd.f32 %v790, %v886
  %v888 = vpop.f32.mrf.mxu0
  %v889 = vpop.f32.mrf.mxu0
  %v890 = vadd.f32 %v793, %v889
  %v891 = vpop.f32.mrf.mxu0
  %892 = vmatprep.mubr.bf16.mxu0 0
  %893 = vmatmul.mubr.bf16.gmra.mxu0 %v613
  %v894 = vpop.f32.mrf.mxu0
  %v895 = vadd.f32 %v798, %v894
  %v896 = vpop.f32.mrf.mxu0
  %v897 = vpop.f32.mrf.mxu0
  %v898 = vadd.f32 %v801, %v897
  %v899 = vpop.f32.mrf.mxu0
  %900 = vmatprep.mubr.bf16.mxu0 0
  %901 = vmatmul.mubr.bf16.gmra.mxu0 %v616
  %v902 = vpop.f32.mrf.mxu0
  %v903 = vadd.f32 %v806, %v902
  %v904 = vpop.f32.mrf.mxu0
  %v905 = vpop.f32.mrf.mxu0
  %v906 = vadd.f32 %v809, %v905
  %v907 = vpop.f32.mrf.mxu0
  %908 = vdwg.mxu0
  %v909 = vadd.f32 %v847, %v34
  %v910 = vadd.f32 %v850, %v35
  %v911 = vadd.f32 %v855, %v36
  %v912 = vadd.f32 %v858, %v37
  %v913 = vadd.f32 %v863, %v38
  %v914 = vadd.f32 %v866, %v39
  %v915 = vadd.f32 %v871, %v40
  %v916 = vadd.f32 %v874, %v41
  %v917 = vadd.f32 %v879, %v42
  %v918 = vadd.f32 %v882, %v43
  %v919 = vadd.f32 %v887, %v44
  %v920 = vadd.f32 %v890, %v45
  %v921 = vadd.f32 %v895, %v46
  %v922 = vadd.f32 %v898, %v47
  %v923 = vadd.f32 %v903, %v48
  %v924 = vadd.f32 %v906, %v49
  %v925 = vmax.f32 %v909, 0.0
  %v926 = vmax.f32 %v910, 0.0
  %v927 = vmax.f32 %v911, 0.0
  %v928 = vmax.f32 %v912, 0.0
  %v929 = vmax.f32 %v913, 0.0
  %v930 = vmax.f32 %v914, 0.0
  %v931 = vmax.f32 %v915, 0.0
  %v932 = vmax.f32 %v916, 0.0
  %v933 = vmax.f32 %v917, 0.0
  %v934 = vmax.f32 %v918, 0.0
  %v935 = vmax.f32 %v919, 0.0
  %v936 = vmax.f32 %v920, 0.0
  %v937 = vmax.f32 %v921, 0.0
  %v938 = vmax.f32 %v922, 0.0
  %v939 = vmax.f32 %v923, 0.0
  %v940 = vmax.f32 %v924, 0.0
  %v941 = vpack.c.bf16 %v926, %v925
  %v942 = vpack.c.bf16 %v928, %v927
  %v943 = vpack.c.bf16 %v930, %v929
  %v944 = vpack.c.bf16 %v932, %v931
  %v945 = vpack.c.bf16 %v934, %v933
  %v946 = vpack.c.bf16 %v936, %v935
  %v947 = vpack.c.bf16 %v938, %v937
  %v948 = vpack.c.bf16 %v940, %v939
  %v957 = vunpack.c.l.b16 %v941
  %v958 = vunpack.c.h.b16 %v941
  %v959 = vunpack.c.l.b16 %v942
  %v960 = vunpack.c.h.b16 %v942
  %v961 = vunpack.c.l.b16 %v943
  %v962 = vunpack.c.h.b16 %v943
  %v963 = vunpack.c.l.b16 %v944
  %v964 = vunpack.c.h.b16 %v944
  %v965 = vunpack.c.l.b16 %v945
  %v966 = vunpack.c.h.b16 %v945
  %v967 = vunpack.c.l.b16 %v946
  %v968 = vunpack.c.h.b16 %v946
  %v969 = vunpack.c.l.b16 %v947
  %v970 = vunpack.c.h.b16 %v947
  %v971 = vunpack.c.l.b16 %v948
  %v972 = vunpack.c.h.b16 %v948
  %v973 = vpack.c.b16 %v957, %v957
  %v974 = vpack.c.b16 %v958, %v958
  %v975 = vpack.c.b16 %v959, %v959
  %v976 = vpack.c.b16 %v960, %v960
  %v977 = vpack.c.b16 %v961, %v961
  %v978 = vpack.c.b16 %v962, %v962
  %v979 = vpack.c.b16 %v963, %v963
  %v980 = vpack.c.b16 %v964, %v964
  %v981 = vpack.c.b16 %v965, %v965
  %v982 = vpack.c.b16 %v966, %v966
  %v983 = vpack.c.b16 %v967, %v967
  %v984 = vpack.c.b16 %v968, %v968
  %v985 = vpack.c.b16 %v969, %v969
  %v986 = vpack.c.b16 %v970, %v970
  %v987 = vpack.c.b16 %v971, %v971
  %v988 = vpack.c.b16 %v972, %v972
  %vm1005 = vcmask 519168
  %1006 = vst.msk [vmem:[%s4] sm:$0xf] %vm1005, %v973
  %1007 = vst.msk [vmem:[%s4 + $0x4] sm:$0xf] %vm1005, %v974
  %1008 = vst.msk [vmem:[%s4 + $0x8] sm:$0xf] %vm1005, %v975
  %1009 = vst.msk [vmem:[%s4 + $0xc] sm:$0xf] %vm1005, %v976
  %1010 = vst.msk [vmem:[%s4 + $0x10] sm:$0xf] %vm1005, %v977
  %1011 = vst.msk [vmem:[%s4 + $0x14] sm:$0xf] %vm1005, %v978
  %1012 = vst.msk [vmem:[%s4 + $0x18] sm:$0xf] %vm1005, %v979
  %1013 = vst.msk [vmem:[%s4 + $0x1c] sm:$0xf] %vm1005, %v980
  %1014 = vst.msk [vmem:[%s4 + $0x20] sm:$0xf] %vm1005, %v981
  %1015 = vst.msk [vmem:[%s4 + $0x24] sm:$0xf] %vm1005, %v982
  %1016 = vst.msk [vmem:[%s4 + $0x28] sm:$0xf] %vm1005, %v983
  %1017 = vst.msk [vmem:[%s4 + $0x2c] sm:$0xf] %vm1005, %v984
  %1018 = vst.msk [vmem:[%s4 + $0x30] sm:$0xf] %vm1005, %v985
  %1019 = vst.msk [vmem:[%s4 + $0x34] sm:$0xf] %vm1005, %v986
  %1020 = vst.msk [vmem:[%s4 + $0x38] sm:$0xf] %vm1005, %v987
  %1021 = vst.msk [vmem:[%s4 + $0x3c] sm:$0xf] %vm1005, %v988
  // Predicated region
  $region18: #{resnet_backbone_forward.13} parent=0 // pred_check
    _
  $region19: #{resnet_backbone_forward.13} parent=0 // pred_check_branch
    %1023 = sbr.rel (0) target = $region21
  $region20: #{resnet_backbone_forward.13} parent=0 // pred_region
    _
  $region21: #{resnet_backbone_forward.13} parent=0 // pred_fallthru
    _
  // Predicated region
  $region22: #{resnet_backbone_forward.13} parent=0 // pred_check
    _
  $region23: #{resnet_backbone_forward.13} parent=0 // pred_check_branch
    %1025 = sbr.rel (0) target = $region25
  $region24: #{resnet_backbone_forward.13} parent=0 // pred_region
    _
  $region25: #{resnet_backbone_forward.13} parent=0 // pred_fallthru
    _

// kernel: resnet_backbone_forward.16
$region0: #{resnet_backbone_forward.16}
  #allocation0 [shape = 'u32[]', space=smem, size = 0x4, offset = 0x4, fixed_abs, tag = 'smem constant byte address 0x4 - core index']
  #allocation1 [shape = 'u32[144,128]{1,0:T(1,128)}', space=vmem, size = 0x12000, scoped, tag = 'internal scratch']
  %s0 = inlined_call_operand.vmem [shape: bf16[32,576], index: 0, kind: input, shape index: {}]
  %s1 = inlined_call_operand.vmem [shape: bf16[576,128], index: 1, kind: input, shape index: {}]
  %s2 = inlined_call_operand.vmem [shape: f32[1,128], index: 2, kind: input, shape index: {}]
  %s3 = inlined_call_operand.vmem [shape: bf16[32,128], index: 3, kind: output, shape index: {}]
  %s4 = sld [smem:[#allocation0]]
  $region22: #{resnet_backbone_forward.16} parent=0
    _
  %s6 = ssub.s32 1, %s4
  %s7 = scalar_select 0, %s6, %s4
  // Predicated region
  $region2: #{resnet_backbone_forward.16} parent=0 // pred_check
    _
  $region3: #{resnet_backbone_forward.16} parent=0 // pred_check_branch
    %9 = sbr.rel (0) target = $region5
  $region4: #{resnet_backbone_forward.16} parent=0 // pred_region
    _
  $region5: #{resnet_backbone_forward.16} parent=0 // pred_fallthru
    _
  // Predicated region
  $region6: #{resnet_backbone_forward.16} parent=0 // pred_check
    _
  $region7: #{resnet_backbone_forward.16} parent=0 // pred_check_branch
    %11 = sbr.rel (0) target = $region9
  $region8: #{resnet_backbone_forward.16} parent=0 // pred_region
    _
  $region9: #{resnet_backbone_forward.16} parent=0 // pred_fallthru
    _
  // Predicated region
  $region10: #{resnet_backbone_forward.16} parent=0 // pred_check
    _
  $region11: #{resnet_backbone_forward.16} parent=0 // pred_check_branch
    %13 = sbr.rel (0) target = $region13
  $region12: #{resnet_backbone_forward.16} parent=0 // pred_region
    _
  $region13: #{resnet_backbone_forward.16} parent=0 // pred_fallthru
    _
  %v15 = vld [vmem:[%s0] sm:$0xff]
  %v16 = vld [vmem:[%s0 + $0x8] sm:$0xff]
  %v17 = vld [vmem:[%s0 + $0x10] sm:$0xf]
  %v18 = vld [vmem:[%s0 + $0x14] sm:$0xff]
  %v19 = vld [vmem:[%s0 + $0x1c] sm:$0xff]
  %v20 = vld [vmem:[%s0 + $0x24] sm:$0xf]
  %v21 = vld [vmem:[%s0 + $0x28] sm:$0xff]
  %v22 = vld [vmem:[%s0 + $0x30] sm:$0xff]
  %v23 = vld [vmem:[%s0 + $0x38] sm:$0xf]
  %v24 = vld [vmem:[%s0 + $0x3c] sm:$0xff]
  %v25 = vld [vmem:[%s0 + $0x44] sm:$0xff]
  %v26 = vld [vmem:[%s0 + $0x4c] sm:$0xf]
  %v27 = vld [vmem:[%s1] sm:$0xf]
  %v28 = vld [vmem:[%s1 + $0x4] sm:$0xf]
  %v29 = vld [vmem:[%s1 + $0x8] sm:$0xf]
  %v30 = vld [vmem:[%s1 + $0xc] sm:$0xf]
  %v31 = vld [vmem:[%s1 + $0x10] sm:$0xf]
  %v32 = vld [vmem:[%s1 + $0x14] sm:$0xf]
  %v33 = vld [vmem:[%s1 + $0x18] sm:$0xf]
  %v34 = vld [vmem:[%s1 + $0x1c] sm:$0xf]
  %v35 = vld [vmem:[%s1 + $0x20] sm:$0xf]
  %v36 = vld [vmem:[%s1 + $0x24] sm:$0xf]
  %v37 = vld [vmem:[%s1 + $0x28] sm:$0xf]
  %v38 = vld [vmem:[%s1 + $0x2c] sm:$0xf]
  %v39 = vld [vmem:[%s1 + $0x30] sm:$0xf]
  %v40 = vld [vmem:[%s1 + $0x34] sm:$0xf]
  %v41 = vld [vmem:[%s1 + $0x38] sm:$0xf]
  %v42 = vld [vmem:[%s1 + $0x3c] sm:$0xf]
  %v43 = vld [vmem:[%s1 + $0x40] sm:$0xf]
  %v44 = vld [vmem:[%s1 + $0x44] sm:$0xf]
  %v45 = vld [vmem:[%s1 + $0x48] sm:$0xf]
  %v46 = vld [vmem:[%s1 + $0x4c] sm:$0xf]
  %v47 = vld [vmem:[%s1 + $0x50] sm:$0xf]
  %v48 = vld [vmem:[%s1 + $0x54] sm:$0xf]
  %v49 = vld [vmem:[%s1 + $0x58] sm:$0xf]
  %v50 = vld [vmem:[%s1 + $0x5c] sm:$0xf]
  %v51 = vld [vmem:[%s1 + $0x60] sm:$0xf]
  %v52 = vld [vmem:[%s1 + $0x64] sm:$0xf]
  %v53 = vld [vmem:[%s1 + $0x68] sm:$0xf]
  %v54 = vld [vmem:[%s1 + $0x6c] sm:$0xf]
  %v55 = vld [vmem:[%s1 + $0x70] sm:$0xf]
  %v56 = vld [vmem:[%s1 + $0x74] sm:$0xf]
  %v57 = vld [vmem:[%s1 + $0x78] sm:$0xf]
  %v58 = vld [vmem:[%s1 + $0x7c] sm:$0xf]
  %v59 = vld [vmem:[%s1 + $0x80] sm:$0xf]
  %v60 = vld [vmem:[%s1 + $0x84] sm:$0xf]
  %v61 = vld [vmem:[%s1 + $0x88] sm:$0xf]
  %v62 = vld [vmem:[%s1 + $0x8c] sm:$0xf]
  %v63 = vld [vmem:[%s1 + $0x90] sm:$0xf]
  %v64 = vld [vmem:[%s1 + $0x94] sm:$0xf]
  %v65 = vld [vmem:[%s1 + $0x98] sm:$0xf]
  %v66 = vld [vmem:[%s1 + $0x9c] sm:$0xf]
  %v67 = vld [vmem:[%s1 + $0xa0] sm:$0xf]
  %v68 = vld [vmem:[%s1 + $0xa4] sm:$0xf]
  %v69 = vld [vmem:[%s1 + $0xa8] sm:$0xf]
  %v70 = vld [vmem:[%s1 + $0xac] sm:$0xf]
  %v71 = vld [vmem:[%s1 + $0xb0] sm:$0xf]
  %v72 = vld [vmem:[%s1 + $0xb4] sm:$0xf]
  %v73 = vld [vmem:[%s1 + $0xb8] sm:$0xf]
  %v74 = vld [vmem:[%s1 + $0xbc] sm:$0xf]
  %v75 = vld [vmem:[%s1 + $0xc0] sm:$0xf]
  %v76 = vld [vmem:[%s1 + $0xc4] sm:$0xf]
  %v77 = vld [vmem:[%s1 + $0xc8] sm:$0xf]
  %v78 = vld [vmem:[%s1 + $0xcc] sm:$0xf]
  %v79 = vld [vmem:[%s1 + $0xd0] sm:$0xf]
  %v80 = vld [vmem:[%s1 + $0xd4] sm:$0xf]
  %v81 = vld [vmem:[%s1 + $0xd8] sm:$0xf]
  %v82 = vld [vmem:[%s1 + $0xdc] sm:$0xf]
  %v83 = vld [vmem:[%s1 + $0xe0] sm:$0xf]
  %v84 = vld [vmem:[%s1 + $0xe4] sm:$0xf]
  %v85 = vld [vmem:[%s1 + $0xe8] sm:$0xf]
  %v86 = vld [vmem:[%s1 + $0xec] sm:$0xf]
  %v87 = vld [vmem:[%s1 + $0xf0] sm:$0xf]
  %v88 = vld [vmem:[%s1 + $0xf4] sm:$0xf]
  %v89 = vld [vmem:[%s1 + $0xf8] sm:$0xf]
  %v90 = vld [vmem:[%s1 + $0xfc] sm:$0xf]
  %v91 = vld [vmem:[%s1 + $0x100] sm:$0xf]
  %v92 = vld [vmem:[%s1 + $0x104] sm:$0xf]
  %v93 = vld [vmem:[%s1 + $0x108] sm:$0xf]
  %v94 = vld [vmem:[%s1 + $0x10c] sm:$0xf]
  %v95 = vld [vmem:[%s1 + $0x110] sm:$0xf]
  %v96 = vld [vmem:[%s1 + $0x114] sm:$0xf]
  %v97 = vld [vmem:[%s1 + $0x118] sm:$0xf]
  %v98 = vld [vmem:[%s1 + $0x11c] sm:$0xf]
  %v99 = vld [vmem:[%s2] sm:$0x1]
  %v101 = vlaneseq
  %v102 = vshrl.u32 %v101, 7
  %v103 = vsub.s32 0, %v102
  %v104 = vrot.slane %v99, %v103
  %v118 = vunpack.c.l.b16 %v15
  %v119 = vunpack.c.h.b16 %v15
  %v120 = vunpack.c.l.b16 %v16
  %v121 = vunpack.c.h.b16 %v16
  %v122 = vunpack.c.l.b16 %v17
  %v123 = vunpack.c.l.b16 %v18
  %v124 = vunpack.c.h.b16 %v18
  %v125 = vunpack.c.l.b16 %v19
  %v126 = vunpack.c.h.b16 %v19
  %v127 = vunpack.c.l.b16 %v20
  %v128 = vunpack.c.l.b16 %v21
  %v129 = vunpack.c.h.b16 %v21
  %v130 = vunpack.c.l.b16 %v22
  %v131 = vunpack.c.h.b16 %v22
  %v132 = vunpack.c.l.b16 %v23
  %v133 = vunpack.c.l.b16 %v24
  %v134 = vunpack.c.h.b16 %v24
  %v135 = vunpack.c.l.b16 %v25
  %v136 = vunpack.c.h.b16 %v25
  %v137 = vunpack.c.l.b16 %v26
  %v138 = vpack.c.b16 %v123, %v118
  %v139 = vpack.c.b16 %v124, %v119
  %v140 = vpack.c.b16 %v125, %v120
  %v141 = vpack.c.b16 %v126, %v121
  %v142 = vpack.c.b16 %v127, %v122
  %v143 = vpack.c.b16 %v133, %v128
  %v144 = vpack.c.b16 %v134, %v129
  %v145 = vpack.c.b16 %v135, %v130
  %v146 = vpack.c.b16 %v136, %v131
  %v147 = vpack.c.b16 %v137, %v132
  %v228 = vunpack.c.l.b16 %v27
  %v229 = vunpack.c.l.b16 %v28
  %v230 = vunpack.c.l.b16 %v29
  %v231 = vunpack.c.l.b16 %v30
  %v232 = vunpack.c.l.b16 %v31
  %v233 = vunpack.c.l.b16 %v32
  %v234 = vunpack.c.l.b16 %v33
  %v235 = vunpack.c.l.b16 %v34
  %v236 = vunpack.c.l.b16 %v35
  %v237 = vunpack.c.l.b16 %v36
  %v238 = vunpack.c.l.b16 %v37
  %v239 = vunpack.c.l.b16 %v38
  %v240 = vunpack.c.l.b16 %v39
  %v241 = vunpack.c.l.b16 %v40
  %v242 = vunpack.c.l.b16 %v41
  %v243 = vunpack.c.l.b16 %v42
  %v244 = vunpack.c.l.b16 %v43
  %v245 = vunpack.c.l.b16 %v44
  %v246 = vunpack.c.l.b16 %v45
  %v247 = vunpack.c.l.b16 %v46
  %v248 = vunpack.c.l.b16 %v47
  %v249 = vunpack.c.l.b16 %v48
  %v250 = vunpack.c.l.b16 %v49
  %v251 = vunpack.c.l.b16 %v50
  %v252 = vunpack.c.l.b16 %v51
  %v253 = vunpack.c.l.b16 %v52
  %v254 = vunpack.c.l.b16 %v53
  %v255 = vunpack.c.l.b16 %v54
  %v256 = vunpack.c.l.b16 %v55
  %v257 = vunpack.c.l.b16 %v56
  %v258 = vunpack.c.l.b16 %v57
  %v259 = vunpack.c.l.b16 %v58
  %v260 = vunpack.c.l.b16 %v59
  %v261 = vunpack.c.l.b16 %v60
  %v262 = vunpack.c.l.b16 %v61
  %v263 = vunpack.c.l.b16 %v62
  %v264 = vunpack.c.l.b16 %v63
  %v265 = vunpack.c.l.b16 %v64
  %v266 = vunpack.c.l.b16 %v65
  %v267 = vunpack.c.l.b16 %v66
  %v268 = vunpack.c.l.b16 %v67
  %v269 = vunpack.c.l.b16 %v68
  %v270 = vunpack.c.l.b16 %v69
  %v271 = vunpack.c.l.b16 %v70
  %v272 = vunpack.c.l.b16 %v71
  %v273 = vunpack.c.l.b16 %v72
  %v274 = vunpack.c.l.b16 %v73
  %v275 = vunpack.c.l.b16 %v74
  %v276 = vunpack.c.l.b16 %v75
  %v277 = vunpack.c.l.b16 %v76
  %v278 = vunpack.c.l.b16 %v77
  %v279 = vunpack.c.l.b16 %v78
  %v280 = vunpack.c.l.b16 %v79
  %v281 = vunpack.c.l.b16 %v80
  %v282 = vunpack.c.l.b16 %v81
  %v283 = vunpack.c.l.b16 %v82
  %v284 = vunpack.c.l.b16 %v83
  %v285 = vunpack.c.l.b16 %v84
  %v286 = vunpack.c.l.b16 %v85
  %v287 = vunpack.c.l.b16 %v86
  %v288 = vunpack.c.l.b16 %v87
  %v289 = vunpack.c.l.b16 %v88
  %v290 = vunpack.c.l.b16 %v89
  %v291 = vunpack.c.l.b16 %v90
  %v292 = vunpack.c.l.b16 %v91
  %v293 = vunpack.c.l.b16 %v92
  %v294 = vunpack.c.l.b16 %v93
  %v295 = vunpack.c.l.b16 %v94
  %v296 = vunpack.c.l.b16 %v95
  %v297 = vunpack.c.l.b16 %v96
  %v298 = vunpack.c.l.b16 %v97
  %v299 = vunpack.c.l.b16 %v98
  %v300 = vpack.c.b16 %v229, %v228
  %v301 = vpack.c.b16 %v231, %v230
  %v302 = vpack.c.b16 %v233, %v232
  %v303 = vpack.c.b16 %v235, %v234
  %v304 = vpack.c.b16 %v237, %v236
  %v305 = vpack.c.b16 %v239, %v238
  %v306 = vpack.c.b16 %v241, %v240
  %v307 = vpack.c.b16 %v243, %v242
  %v308 = vpack.c.b16 %v245, %v244
  %v309 = vpack.c.b16 %v247, %v246
  %v310 = vpack.c.b16 %v249, %v248
  %v311 = vpack.c.b16 %v251, %v250
  %v312 = vpack.c.b16 %v253, %v252
  %v313 = vpack.c.b16 %v255, %v254
  %v314 = vpack.c.b16 %v257, %v256
  %v315 = vpack.c.b16 %v259, %v258
  %v316 = vpack.c.b16 %v261, %v260
  %v317 = vpack.c.b16 %v263, %v262
  %v318 = vpack.c.b16 %v265, %v264
  %v319 = vpack.c.b16 %v267, %v266
  %v320 = vpack.c.b16 %v269, %v268
  %v321 = vpack.c.b16 %v271, %v270
  %v322 = vpack.c.b16 %v273, %v272
  %v323 = vpack.c.b16 %v275, %v274
  %v324 = vpack.c.b16 %v277, %v276
  %v325 = vpack.c.b16 %v279, %v278
  %v326 = vpack.c.b16 %v281, %v280
  %v327 = vpack.c.b16 %v283, %v282
  %v328 = vpack.c.b16 %v285, %v284
  %v329 = vpack.c.b16 %v287, %v286
  %v330 = vpack.c.b16 %v289, %v288
  %v331 = vpack.c.b16 %v291, %v290
  %v332 = vpack.c.b16 %v293, %v292
  %v333 = vpack.c.b16 %v295, %v294
  %v334 = vpack.c.b16 %v297, %v296
  %v335 = vpack.c.b16 %v299, %v298
  %vm372 = vcmask 523264
  %v374 = vsel %vm372, %v142, 0
  %v377 = vsel %vm372, %v147, 0
  %379 = vmatprep.subr.bf16.mxu0 0
  %380 = vmatpush1.bf16.msra.mxu0 %v307
  %381 = vmatprep.subr.bf16.mxu0 0
  %382 = vmatpush1.bf16.msra.mxu0 %v306
  %383 = vmatprep.subr.bf16.mxu0 0
  %384 = vmatpush1.bf16.msra.mxu0 %v305
  %385 = vmatprep.subr.bf16.mxu0 0
  %386 = vmatpush1.bf16.msra.mxu0 %v304
  %387 = vmatprep.subr.bf16.mxu0 0
  %388 = vmatpush1.bf16.msra.mxu0 %v303
  %389 = vmatprep.subr.bf16.mxu0 0
  %390 = vmatpush1.bf16.msra.mxu0 %v302
  %391 = vmatprep.subr.bf16.mxu0 0
  %392 = vmatpush1.bf16.msra.mxu0 %v301
  %393 = vmatprep.subr.bf16.mxu0 0
  %394 = vmatpush1.bf16.msra.mxu0 %v300
  %395 = vmatprep.subr.bf16.mxu0 0
  %396 = vmatpush2.bf16.msra.mxu0 %v315
  %397 = vmatprep.subr.bf16.mxu0 0
  %398 = vmatpush2.bf16.msra.mxu0 %v314
  %399 = vmatprep.subr.bf16.mxu0 0
  %400 = vmatpush2.bf16.msra.mxu0 %v313
  %401 = vmatprep.subr.bf16.mxu0 0
  %402 = vmatpush2.bf16.msra.mxu0 %v312
  %403 = vmatprep.subr.bf16.mxu0 0
  %404 = vmatpush2.bf16.msra.mxu0 %v311
  %405 = vmatprep.subr.bf16.mxu0 0
  %406 = vmatpush2.bf16.msra.mxu0 %v310
  %407 = vmatprep.subr.bf16.mxu0 0
  %408 = vmatpush2.bf16.msra.mxu0 %v309
  %409 = vmatprep.subr.bf16.mxu0 0
  %410 = vmatpush2.bf16.msra.mxu0 %v308
  %411 = vmatprep.mubr.bf16.mxu0 %v139
  %412 = vmatmul.mubr.bf16.gmra.mxu0 %v138
  %v413 = vpop.f32.mrf.mxu0
  %v414 = vadd.f32 %v104, %v413
  %v415 = vpop.f32.mrf.mxu0
  %v416 = vpop.f32.mrf.mxu0
  %v417 = vadd.f32 %v104, %v416
  %v418 = vpop.f32.mrf.mxu0
  %419 = vmatprep.mubr.bf16.mxu0 %v144
  %420 = vmatmul.mubr.bf16.gmra.mxu0 %v143
  %v421 = vpop.f32.mrf.mxu0
  %v422 = vadd.f32 %v104, %v421
  %v423 = vpop.f32.mrf.mxu0
  %v424 = vpop.f32.mrf.mxu0
  %v425 = vadd.f32 %v104, %v424
  %v426 = vpop.f32.mrf.mxu0
  %427 = vdwg.mxu0
  %428 = vmatprep.subr.bf16.mxu0 0
  %429 = vmatpush1.bf16.msra.mxu0 %v323
  %430 = vmatprep.subr.bf16.mxu0 0
  %431 = vmatpush1.bf16.msra.mxu0 %v322
  %432 = vmatprep.subr.bf16.mxu0 0
  %433 = vmatpush1.bf16.msra.mxu0 %v321
  %434 = vmatprep.subr.bf16.mxu0 0
  %435 = vmatpush1.bf16.msra.mxu0 %v320
  %436 = vmatprep.subr.bf16.mxu0 0
  %437 = vmatpush1.bf16.msra.mxu0 %v319
  %438 = vmatprep.subr.bf16.mxu0 0
  %439 = vmatpush1.bf16.msra.mxu0 %v318
  %440 = vmatprep.subr.bf16.mxu0 0
  %441 = vmatpush1.bf16.msra.mxu0 %v317
  %442 = vmatprep.subr.bf16.mxu0 0
  %443 = vmatpush1.bf16.msra.mxu0 %v316
  %444 = vmatprep.subr.bf16.mxu0 0
  %445 = vmatpush2.bf16.msra.mxu0 %v331
  %446 = vmatprep.subr.bf16.mxu0 0
  %447 = vmatpush2.bf16.msra.mxu0 %v330
  %448 = vmatprep.subr.bf16.mxu0 0
  %449 = vmatpush2.bf16.msra.mxu0 %v329
  %450 = vmatprep.subr.bf16.mxu0 0
  %451 = vmatpush2.bf16.msra.mxu0 %v328
  %452 = vmatprep.subr.bf16.mxu0 0
  %453 = vmatpush2.bf16.msra.mxu0 %v327
  %454 = vmatprep.subr.bf16.mxu0 0
  %455 = vmatpush2.bf16.msra.mxu0 %v326
  %456 = vmatprep.subr.bf16.mxu0 0
  %457 = vmatpush2.bf16.msra.mxu0 %v325
  %458 = vmatprep.subr.bf16.mxu0 0
  %459 = vmatpush2.bf16.msra.mxu0 %v324
  %460 = vmatprep.mubr.bf16.mxu0 %v141
  %461 = vmatmul.mubr.bf16.gmra.mxu0 %v140
  %v462 = vpop.f32.mrf.mxu0
  %v463 = vadd.f32 %v414, %v462
  %v464 = vpop.f32.mrf.mxu0
  %v465 = vpop.f32.mrf.mxu0
  %v466 = vadd.f32 %v417, %v465
  %v467 = vpop.f32.mrf.mxu0
  %468 = vmatprep.mubr.bf16.mxu0 %v146
  %469 = vmatmul.mubr.bf16.gmra.mxu0 %v145
  %v470 = vpop.f32.mrf.mxu0
  %v471 = vadd.f32 %v422, %v470
  %v472 = vpop.f32.mrf.mxu0
  %v473 = vpop.f32.mrf.mxu0
  %v474 = vadd.f32 %v425, %v473
  %v475 = vpop.f32.mrf.mxu0
  %476 = vdwg.mxu0
  %477 = vmatprep.subr.bf16.mxu0 0
  %478 = vmatpush1.bf16.msra.mxu0 0
  %479 = vmatprep.subr.bf16.mxu0 0
  %480 = vmatpush1.bf16.msra.mxu0 0
  %481 = vmatprep.subr.bf16.mxu0 0
  %482 = vmatpush1.bf16.msra.mxu0 0
  %483 = vmatprep.subr.bf16.mxu0 0
  %484 = vmatpush1.bf16.msra.mxu0 0
  %485 = vmatprep.subr.bf16.mxu0 0
  %486 = vmatpush1.bf16.msra.mxu0 %v335
  %487 = vmatprep.subr.bf16.mxu0 0
  %488 = vmatpush1.bf16.msra.mxu0 %v334
  %489 = vmatprep.subr.bf16.mxu0 0
  %490 = vmatpush1.bf16.msra.mxu0 %v333
  %491 = vmatprep.subr.bf16.mxu0 0
  %492 = vmatpush1.bf16.msra.mxu0 %v332
  %493 = vmatprep.subr.bf16.mxu0 0
  %494 = vmatpush2.bf16.msra.mxu0 0
  %495 = vmatprep.subr.bf16.mxu0 0
  %496 = vmatpush2.bf16.msra.mxu0 0
  %497 = vmatprep.subr.bf16.mxu0 0
  %498 = vmatpush2.bf16.msra.mxu0 0
  %499 = vmatprep.subr.bf16.mxu0 0
  %500 = vmatpush2.bf16.msra.mxu0 0
  %501 = vmatprep.subr.bf16.mxu0 0
  %502 = vmatpush2.bf16.msra.mxu0 0
  %503 = vmatprep.subr.bf16.mxu0 0
  %504 = vmatpush2.bf16.msra.mxu0 0
  %505 = vmatprep.subr.bf16.mxu0 0
  %506 = vmatpush2.bf16.msra.mxu0 0
  %507 = vmatprep.subr.bf16.mxu0 0
  %508 = vmatpush2.bf16.msra.mxu0 0
  %509 = vmatprep.mubr.bf16.mxu0 0
  %510 = vmatmul.mubr.bf16.gmra.mxu0 %v374
  %v511 = vpop.f32.mrf.mxu0
  %v512 = vadd.f32 %v463, %v511
  %v513 = vpop.f32.mrf.mxu0
  %v514 = vpop.f32.mrf.mxu0
  %v515 = vadd.f32 %v466, %v514
  %v516 = vpop.f32.mrf.mxu0
  %517 = vmatprep.mubr.bf16.mxu0 0
  %518 = vmatmul.mubr.bf16.gmra.mxu0 %v377
  %v519 = vpop.f32.mrf.mxu0
  %v520 = vadd.f32 %v471, %v519
  %v521 = vpop.f32.mrf.mxu0
  %v522 = vpop.f32.mrf.mxu0
  %v523 = vadd.f32 %v474, %v522
  %v524 = vpop.f32.mrf.mxu0
  %525 = vdwg.mxu0
  %v526 = vmax.f32 %v512, 0.0
  %v527 = vmax.f32 %v515, 0.0
  %v528 = vmax.f32 %v520, 0.0
  %v529 = vmax.f32 %v523, 0.0
  %v530 = vpack.c.bf16 %v527, %v526
  %v531 = vpack.c.bf16 %v529, %v528
  %v534 = vunpack.c.l.b16 %v530
  %v535 = vunpack.c.h.b16 %v530
  %v536 = vunpack.c.l.b16 %v531
  %v537 = vunpack.c.h.b16 %v531
  %v538 = vpack.c.b16 %v534, %v534
  %v539 = vpack.c.b16 %v535, %v535
  %v540 = vpack.c.b16 %v536, %v536
  %v541 = vpack.c.b16 %v537, %v537
  %546 = vst [vmem:[%s3] sm:$0xf] %v538
  %547 = vst [vmem:[%s3 + $0x4] sm:$0xf] %v539
  %548 = vst [vmem:[%s3 + $0x8] sm:$0xf] %v540
  %549 = vst [vmem:[%s3 + $0xc] sm:$0xf] %v541
  // Predicated region
  $region14: #{resnet_backbone_forward.16} parent=0 // pred_check
    _
  $region15: #{resnet_backbone_forward.16} parent=0 // pred_check_branch
    %551 = sbr.rel (0) target = $region17
  $region16: #{resnet_backbone_forward.16} parent=0 // pred_region
    _
  $region17: #{resnet_backbone_forward.16} parent=0 // pred_fallthru
    _
  // Predicated region
  $region18: #{resnet_backbone_forward.16} parent=0 // pred_check
    _
  $region19: #{resnet_backbone_forward.16} parent=0 // pred_check_branch
    %553 = sbr.rel (0) target = $region21
  $region20: #{resnet_backbone_forward.16} parent=0 // pred_region
    _
  $region21: #{resnet_backbone_forward.16} parent=0 // pred_fallthru
    _

// kernel: resnet_backbone_forward.18
$region0: #{resnet_backbone_forward.18}
  #allocation0 [shape = 'u32[]', space=smem, size = 0x4, offset = 0x4, fixed_abs, tag = 'smem constant byte address 0x4 - core index']
  #allocation1 [shape = 'u32[144,128]{1,0:T(1,128)}', space=vmem, size = 0x12000, scoped, tag = 'internal scratch']
  %s0 = inlined_call_operand.vmem [shape: bf16[32,1152], index: 0, kind: input, shape index: {}]
  %s1 = inlined_call_operand.vmem [shape: bf16[1152,128], index: 1, kind: input, shape index: {}]
  %s2 = inlined_call_operand.vmem [shape: f32[1,128], index: 2, kind: input, shape index: {}]
  %s3 = inlined_call_operand.vmem [shape: bf16[32,128], index: 3, kind: output, shape index: {}]
  %s4 = sld [smem:[#allocation0]]
  $region22: #{resnet_backbone_forward.18} parent=0
    _
  %s6 = ssub.s32 1, %s4
  %s7 = scalar_select 0, %s6, %s4
  // Predicated region
  $region2: #{resnet_backbone_forward.18} parent=0 // pred_check
    _
  $region3: #{resnet_backbone_forward.18} parent=0 // pred_check_branch
    %9 = sbr.rel (0) target = $region5
  $region4: #{resnet_backbone_forward.18} parent=0 // pred_region
    _
  $region5: #{resnet_backbone_forward.18} parent=0 // pred_fallthru
    _
  // Predicated region
  $region6: #{resnet_backbone_forward.18} parent=0 // pred_check
    _
  $region7: #{resnet_backbone_forward.18} parent=0 // pred_check_branch
    %11 = sbr.rel (0) target = $region9
  $region8: #{resnet_backbone_forward.18} parent=0 // pred_region
    _
  $region9: #{resnet_backbone_forward.18} parent=0 // pred_fallthru
    _
  // Predicated region
  $region10: #{resnet_backbone_forward.18} parent=0 // pred_check
    _
  $region11: #{resnet_backbone_forward.18} parent=0 // pred_check_branch
    %13 = sbr.rel (0) target = $region13
  $region12: #{resnet_backbone_forward.18} parent=0 // pred_region
    _
  $region13: #{resnet_backbone_forward.18} parent=0 // pred_fallthru
    _
  %v15 = vld [vmem:[%s0] sm:$0xff]
  %v16 = vld [vmem:[%s0 + $0x8] sm:$0xff]
  %v17 = vld [vmem:[%s0 + $0x10] sm:$0xff]
  %v18 = vld [vmem:[%s0 + $0x18] sm:$0xff]
  %v19 = vld [vmem:[%s0 + $0x20] sm:$0xf]
  %v20 = vld [vmem:[%s0 + $0x24] sm:$0xff]
  %v21 = vld [vmem:[%s0 + $0x2c] sm:$0xff]
  %v22 = vld [vmem:[%s0 + $0x34] sm:$0xff]
  %v23 = vld [vmem:[%s0 + $0x3c] sm:$0xff]
  %v24 = vld [vmem:[%s0 + $0x44] sm:$0xf]
  %v25 = vld [vmem:[%s0 + $0x48] sm:$0xff]
  %v26 = vld [vmem:[%s0 + $0x50] sm:$0xff]
  %v27 = vld [vmem:[%s0 + $0x58] sm:$0xff]
  %v28 = vld [vmem:[%s0 + $0x60] sm:$0xff]
  %v29 = vld [vmem:[%s0 + $0x68] sm:$0xf]
  %v30 = vld [vmem:[%s0 + $0x6c] sm:$0xff]
  %v31 = vld [vmem:[%s0 + $0x74] sm:$0xff]
  %v32 = vld [vmem:[%s0 + $0x7c] sm:$0xff]
  %v33 = vld [vmem:[%s0 + $0x84] sm:$0xff]
  %v34 = vld [vmem:[%s0 + $0x8c] sm:$0xf]
  %v35 = vld [vmem:[%s1] sm:$0xf]
  %v36 = vld [vmem:[%s1 + $0x4] sm:$0xf]
  %v37 = vld [vmem:[%s1 + $0x8] sm:$0xf]
  %v38 = vld [vmem:[%s1 + $0xc] sm:$0xf]
  %v39 = vld [vmem:[%s1 + $0x10] sm:$0xf]
  %v40 = vld [vmem:[%s1 + $0x14] sm:$0xf]
  %v41 = vld [vmem:[%s1 + $0x18] sm:$0xf]
  %v42 = vld [vmem:[%s1 + $0x1c] sm:$0xf]
  %v43 = vld [vmem:[%s1 + $0x20] sm:$0xf]
  %v44 = vld [vmem:[%s1 + $0x24] sm:$0xf]
  %v45 = vld [vmem:[%s1 + $0x28] sm:$0xf]
  %v46 = vld [vmem:[%s1 + $0x2c] sm:$0xf]
  %v47 = vld [vmem:[%s1 + $0x30] sm:$0xf]
  %v48 = vld [vmem:[%s1 + $0x34] sm:$0xf]
  %v49 = vld [vmem:[%s1 + $0x38] sm:$0xf]
  %v50 = vld [vmem:[%s1 + $0x3c] sm:$0xf]
  %v51 = vld [vmem:[%s1 + $0x40] sm:$0xf]
  %v52 = vld [vmem:[%s1 + $0x44] sm:$0xf]
  %v53 = vld [vmem:[%s1 + $0x48] sm:$0xf]
  %v54 = vld [vmem:[%s1 + $0x4c] sm:$0xf]
  %v55 = vld [vmem:[%s1 + $0x50] sm:$0xf]
  %v56 = vld [vmem:[%s1 + $0x54] sm:$0xf]
  %v57 = vld [vmem:[%s1 + $0x58] sm:$0xf]
  %v58 = vld [vmem:[%s1 + $0x5c] sm:$0xf]
  %v59 = vld [vmem:[%s1 + $0x60] sm:$0xf]
  %v60 = vld [vmem:[%s1 + $0x64] sm:$0xf]
  %v61 = vld [vmem:[%s1 + $0x68] sm:$0xf]
  %v62 = vld [vmem:[%s1 + $0x6c] sm:$0xf]
  %v63 = vld [vmem:[%s1 + $0x70] sm:$0xf]
  %v64 = vld [vmem:[%s1 + $0x74] sm:$0xf]
  %v65 = vld [vmem:[%s1 + $0x78] sm:$0xf]
  %v66 = vld [vmem:[%s1 + $0x7c] sm:$0xf]
  %v67 = vld [vmem:[%s1 + $0x80] sm:$0xf]
  %v68 = vld [vmem:[%s1 + $0x84] sm:$0xf]
  %v69 = vld [vmem:[%s1 + $0x88] sm:$0xf]
  %v70 = vld [vmem:[%s1 + $0x8c] sm:$0xf]
  %v71 = vld [vmem:[%s1 + $0x90] sm:$0xf]
  %v72 = vld [vmem:[%s1 + $0x94] sm:$0xf]
  %v73 = vld [vmem:[%s1 + $0x98] sm:$0xf]
  %v74 = vld [vmem:[%s1 + $0x9c] sm:$0xf]
  %v75 = vld [vmem:[%s1 + $0xa0] sm:$0xf]
  %v76 = vld [vmem:[%s1 + $0xa4] sm:$0xf]
  %v77 = vld [vmem:[%s1 + $0xa8] sm:$0xf]
  %v78 = vld [vmem:[%s1 + $0xac] sm:$0xf]
  %v79 = vld [vmem:[%s1 + $0xb0] sm:$0xf]
  %v80 = vld [vmem:[%s1 + $0xb4] sm:$0xf]
  %v81 = vld [vmem:[%s1 + $0xb8] sm:$0xf]
  %v82 = vld [vmem:[%s1 + $0xbc] sm:$0xf]
  %v83 = vld [vmem:[%s1 + $0xc0] sm:$0xf]
  %v84 = vld [vmem:[%s1 + $0xc4] sm:$0xf]
  %v85 = vld [vmem:[%s1 + $0xc8] sm:$0xf]
  %v86 = vld [vmem:[%s1 + $0xcc] sm:$0xf]
  %v87 = vld [vmem:[%s1 + $0xd0] sm:$0xf]
  %v88 = vld [vmem:[%s1 + $0xd4] sm:$0xf]
  %v89 = vld [vmem:[%s1 + $0xd8] sm:$0xf]
  %v90 = vld [vmem:[%s1 + $0xdc] sm:$0xf]
  %v91 = vld [vmem:[%s1 + $0xe0] sm:$0xf]
  %v92 = vld [vmem:[%s1 + $0xe4] sm:$0xf]
  %v93 = vld [vmem:[%s1 + $0xe8] sm:$0xf]
  %v94 = vld [vmem:[%s1 + $0xec] sm:$0xf]
  %v95 = vld [vmem:[%s1 + $0xf0] sm:$0xf]
  %v96 = vld [vmem:[%s1 + $0xf4] sm:$0xf]
  %v97 = vld [vmem:[%s1 + $0xf8] sm:$0xf]
  %v98 = vld [vmem:[%s1 + $0xfc] sm:$0xf]
  %v99 = vld [vmem:[%s1 + $0x100] sm:$0xf]
  %v100 = vld [vmem:[%s1 + $0x104] sm:$0xf]
  %v101 = vld [vmem:[%s1 + $0x108] sm:$0xf]
  %v102 = vld [vmem:[%s1 + $0x10c] sm:$0xf]
  %v103 = vld [vmem:[%s1 + $0x110] sm:$0xf]
  %v104 = vld [vmem:[%s1 + $0x114] sm:$0xf]
  %v105 = vld [vmem:[%s1 + $0x118] sm:$0xf]
  %v106 = vld [vmem:[%s1 + $0x11c] sm:$0xf]
  %v107 = vld [vmem:[%s1 + $0x120] sm:$0xf]
  %v108 = vld [vmem:[%s1 + $0x124] sm:$0xf]
  %v109 = vld [vmem:[%s1 + $0x128] sm:$0xf]
  %v110 = vld [vmem:[%s1 + $0x12c] sm:$0xf]
  %v111 = vld [vmem:[%s1 + $0x130] sm:$0xf]
  %v112 = vld [vmem:[%s1 + $0x134] sm:$0xf]
  %v113 = vld [vmem:[%s1 + $0x138] sm:$0xf]
  %v114 = vld [vmem:[%s1 + $0x13c] sm:$0xf]
  %v115 = vld [vmem:[%s1 + $0x140] sm:$0xf]
  %v116 = vld [vmem:[%s1 + $0x144] sm:$0xf]
  %v117 = vld [vmem:[%s1 + $0x148] sm:$0xf]
  %v118 = vld [vmem:[%s1 + $0x14c] sm:$0xf]
  %v119 = vld [vmem:[%s1 + $0x150] sm:$0xf]
  %v120 = vld [vmem:[%s1 + $0x154] sm:$0xf]
  %v121 = vld [vmem:[%s1 + $0x158] sm:$0xf]
  %v122 = vld [vmem:[%s1 + $0x15c] sm:$0xf]
  %v123 = vld [vmem:[%s1 + $0x160] sm:$0xf]
  %v124 = vld [vmem:[%s1 + $0x164] sm:$0xf]
  %v125 = vld [vmem:[%s1 + $0x168] sm:$0xf]
  %v126 = vld [vmem:[%s1 + $0x16c] sm:$0xf]
  %v127 = vld [vmem:[%s1 + $0x170] sm:$0xf]
  %v128 = vld [vmem:[%s1 + $0x174] sm:$0xf]
  %v129 = vld [vmem:[%s1 + $0x178] sm:$0xf]
  %v130 = vld [vmem:[%s1 + $0x17c] sm:$0xf]
  %v131 = vld [vmem:[%s1 + $0x180] sm:$0xf]
  %v132 = vld [vmem:[%s1 + $0x184] sm:$0xf]
  %v133 = vld [vmem:[%s1 + $0x188] sm:$0xf]
  %v134 = vld [vmem:[%s1 + $0x18c] sm:$0xf]
  %v135 = vld [vmem:[%s1 + $0x190] sm:$0xf]
  %v136 = vld [vmem:[%s1 + $0x194] sm:$0xf]
  %v137 = vld [vmem:[%s1 + $0x198] sm:$0xf]
  %v138 = vld [vmem:[%s1 + $0x19c] sm:$0xf]
  %v139 = vld [vmem:[%s1 + $0x1a0] sm:$0xf]
  %v140 = vld [vmem:[%s1 + $0x1a4] sm:$0xf]
  %v141 = vld [vmem:[%s1 + $0x1a8] sm:$0xf]
  %v142 = vld [vmem:[%s1 + $0x1ac] sm:$0xf]
  %v143 = vld [vmem:[%s1 + $0x1b0] sm:$0xf]
  %v144 = vld [vmem:[%s1 + $0x1b4] sm:$0xf]
  %v145 = vld [vmem:[%s1 + $0x1b8] sm:$0xf]
  %v146 = vld [vmem:[%s1 + $0x1bc] sm:$0xf]
  %v147 = vld [vmem:[%s1 + $0x1c0] sm:$0xf]
  %v148 = vld [vmem:[%s1 + $0x1c4] sm:$0xf]
  %v149 = vld [vmem:[%s1 + $0x1c8] sm:$0xf]
  %v150 = vld [vmem:[%s1 + $0x1cc] sm:$0xf]
  %v151 = vld [vmem:[%s1 + $0x1d0] sm:$0xf]
  %v152 = vld [vmem:[%s1 + $0x1d4] sm:$0xf]
  %v153 = vld [vmem:[%s1 + $0x1d8] sm:$0xf]
  %v154 = vld [vmem:[%s1 + $0x1dc] sm:$0xf]
  %v155 = vld [vmem:[%s1 + $0x1e0] sm:$0xf]
  %v156 = vld [vmem:[%s1 + $0x1e4] sm:$0xf]
  %v157 = vld [vmem:[%s1 + $0x1e8] sm:$0xf]
  %v158 = vld [vmem:[%s1 + $0x1ec] sm:$0xf]
  %v159 = vld [vmem:[%s1 + $0x1f0] sm:$0xf]
  %v160 = vld [vmem:[%s1 + $0x1f4] sm:$0xf]
  %v161 = vld [vmem:[%s1 + $0x1f8] sm:$0xf]
  %v162 = vld [vmem:[%s1 + $0x1fc] sm:$0xf]
  %v163 = vld [vmem:[%s1 + $0x200] sm:$0xf]
  %v164 = vld [vmem:[%s1 + $0x204] sm:$0xf]
  %v165 = vld [vmem:[%s1 + $0x208] sm:$0xf]
  %v166 = vld [vmem:[%s1 + $0x20c] sm:$0xf]
  %v167 = vld [vmem:[%s1 + $0x210] sm:$0xf]
  %v168 = vld [vmem:[%s1 + $0x214] sm:$0xf]
  %v169 = vld [vmem:[%s1 + $0x218] sm:$0xf]
  %v170 = vld [vmem:[%s1 + $0x21c] sm:$0xf]
  %v171 = vld [vmem:[%s1 + $0x220] sm:$0xf]
  %v172 = vld [vmem:[%s1 + $0x224] sm:$0xf]
  %v173 = vld [vmem:[%s1 + $0x228] sm:$0xf]
  %v174 = vld [vmem:[%s1 + $0x22c] sm:$0xf]
  %v175 = vld [vmem:[%s1 + $0x230] sm:$0xf]
  %v176 = vld [vmem:[%s1 + $0x234] sm:$0xf]
  %v177 = vld [vmem:[%s1 + $0x238] sm:$0xf]
  %v178 = vld [vmem:[%s1 + $0x23c] sm:$0xf]
  %v179 = vld [vmem:[%s2] sm:$0x1]
  %v181 = vlaneseq
  %v182 = vshrl.u32 %v181, 7
  %v183 = vsub.s32 0, %v182
  %v184 = vrot.slane %v179, %v183
  %v206 = vunpack.c.l.b16 %v15
  %v207 = vunpack.c.h.b16 %v15
  %v208 = vunpack.c.l.b16 %v16
  %v209 = vunpack.c.h.b16 %v16
  %v210 = vunpack.c.l.b16 %v17
  %v211 = vunpack.c.h.b16 %v17
  %v212 = vunpack.c.l.b16 %v18
  %v213 = vunpack.c.h.b16 %v18
  %v214 = vunpack.c.l.b16 %v19
  %v215 = vunpack.c.l.b16 %v20
  %v216 = vunpack.c.h.b16 %v20
  %v217 = vunpack.c.l.b16 %v21
  %v218 = vunpack.c.h.b16 %v21
  %v219 = vunpack.c.l.b16 %v22
  %v220 = vunpack.c.h.b16 %v22
  %v221 = vunpack.c.l.b16 %v23
  %v222 = vunpack.c.h.b16 %v23
  %v223 = vunpack.c.l.b16 %v24
  %v224 = vunpack.c.l.b16 %v25
  %v225 = vunpack.c.h.b16 %v25
  %v226 = vunpack.c.l.b16 %v26
  %v227 = vunpack.c.h.b16 %v26
  %v228 = vunpack.c.l.b16 %v27
  %v229 = vunpack.c.h.b16 %v27
  %v230 = vunpack.c.l.b16 %v28
  %v231 = vunpack.c.h.b16 %v28
  %v232 = vunpack.c.l.b16 %v29
  %v233 = vunpack.c.l.b16 %v30
  %v234 = vunpack.c.h.b16 %v30
  %v235 = vunpack.c.l.b16 %v31
  %v236 = vunpack.c.h.b16 %v31
  %v237 = vunpack.c.l.b16 %v32
  %v238 = vunpack.c.h.b16 %v32
  %v239 = vunpack.c.l.b16 %v33
  %v240 = vunpack.c.h.b16 %v33
  %v241 = vunpack.c.l.b16 %v34
  %v242 = vpack.c.b16 %v215, %v206
  %v243 = vpack.c.b16 %v216, %v207
  %v244 = vpack.c.b16 %v217, %v208
  %v245 = vpack.c.b16 %v218, %v209
  %v246 = vpack.c.b16 %v219, %v210
  %v247 = vpack.c.b16 %v220, %v211
  %v248 = vpack.c.b16 %v221, %v212
  %v249 = vpack.c.b16 %v222, %v213
  %v250 = vpack.c.b16 %v223, %v214
  %v251 = vpack.c.b16 %v233, %v224
  %v252 = vpack.c.b16 %v234, %v225
  %v253 = vpack.c.b16 %v235, %v226
  %v254 = vpack.c.b16 %v236, %v227
  %v255 = vpack.c.b16 %v237, %v228
  %v256 = vpack.c.b16 %v238, %v229
  %v257 = vpack.c.b16 %v239, %v230
  %v258 = vpack.c.b16 %v240, %v231
  %v259 = vpack.c.b16 %v241, %v232
  %v422 = vunpack.c.l.b16 %v35
  %v423 = vunpack.c.l.b16 %v36
  %v424 = vunpack.c.l.b16 %v37
  %v425 = vunpack.c.l.b16 %v38
  %v426 = vunpack.c.l.b16 %v39
  %v427 = vunpack.c.l.b16 %v40
  %v428 = vunpack.c.l.b16 %v41
  %v429 = vunpack.c.l.b16 %v42
  %v430 = vunpack.c.l.b16 %v43
  %v431 = vunpack.c.l.b16 %v44
  %v432 = vunpack.c.l.b16 %v45
  %v433 = vunpack.c.l.b16 %v46
  %v434 = vunpack.c.l.b16 %v47
  %v435 = vunpack.c.l.b16 %v48
  %v436 = vunpack.c.l.b16 %v49
  %v437 = vunpack.c.l.b16 %v50
  %v438 = vunpack.c.l.b16 %v51
  %v439 = vunpack.c.l.b16 %v52
  %v440 = vunpack.c.l.b16 %v53
  %v441 = vunpack.c.l.b16 %v54
  %v442 = vunpack.c.l.b16 %v55
  %v443 = vunpack.c.l.b16 %v56
  %v444 = vunpack.c.l.b16 %v57
  %v445 = vunpack.c.l.b16 %v58
  %v446 = vunpack.c.l.b16 %v59
  %v447 = vunpack.c.l.b16 %v60
  %v448 = vunpack.c.l.b16 %v61
  %v449 = vunpack.c.l.b16 %v62
  %v450 = vunpack.c.l.b16 %v63
  %v451 = vunpack.c.l.b16 %v64
  %v452 = vunpack.c.l.b16 %v65
  %v453 = vunpack.c.l.b16 %v66
  %v454 = vunpack.c.l.b16 %v67
  %v455 = vunpack.c.l.b16 %v68
  %v456 = vunpack.c.l.b16 %v69
  %v457 = vunpack.c.l.b16 %v70
  %v458 = vunpack.c.l.b16 %v71
  %v459 = vunpack.c.l.b16 %v72
  %v460 = vunpack.c.l.b16 %v73
  %v461 = vunpack.c.l.b16 %v74
  %v462 = vunpack.c.l.b16 %v75
  %v463 = vunpack.c.l.b16 %v76
  %v464 = vunpack.c.l.b16 %v77
  %v465 = vunpack.c.l.b16 %v78
  %v466 = vunpack.c.l.b16 %v79
  %v467 = vunpack.c.l.b16 %v80
  %v468 = vunpack.c.l.b16 %v81
  %v469 = vunpack.c.l.b16 %v82
  %v470 = vunpack.c.l.b16 %v83
  %v471 = vunpack.c.l.b16 %v84
  %v472 = vunpack.c.l.b16 %v85
  %v473 = vunpack.c.l.b16 %v86
  %v474 = vunpack.c.l.b16 %v87
  %v475 = vunpack.c.l.b16 %v88
  %v476 = vunpack.c.l.b16 %v89
  %v477 = vunpack.c.l.b16 %v90
  %v478 = vunpack.c.l.b16 %v91
  %v479 = vunpack.c.l.b16 %v92
  %v480 = vunpack.c.l.b16 %v93
  %v481 = vunpack.c.l.b16 %v94
  %v482 = vunpack.c.l.b16 %v95
  %v483 = vunpack.c.l.b16 %v96
  %v484 = vunpack.c.l.b16 %v97
  %v485 = vunpack.c.l.b16 %v98
  %v486 = vunpack.c.l.b16 %v99
  %v487 = vunpack.c.l.b16 %v100
  %v488 = vunpack.c.l.b16 %v101
  %v489 = vunpack.c.l.b16 %v102
  %v490 = vunpack.c.l.b16 %v103
  %v491 = vunpack.c.l.b16 %v104
  %v492 = vunpack.c.l.b16 %v105
  %v493 = vunpack.c.l.b16 %v106
  %v494 = vunpack.c.l.b16 %v107
  %v495 = vunpack.c.l.b16 %v108
  %v496 = vunpack.c.l.b16 %v109
  %v497 = vunpack.c.l.b16 %v110
  %v498 = vunpack.c.l.b16 %v111
  %v499 = vunpack.c.l.b16 %v112
  %v500 = vunpack.c.l.b16 %v113
  %v501 = vunpack.c.l.b16 %v114
  %v502 = vunpack.c.l.b16 %v115
  %v503 = vunpack.c.l.b16 %v116
  %v504 = vunpack.c.l.b16 %v117
  %v505 = vunpack.c.l.b16 %v118
  %v506 = vunpack.c.l.b16 %v119
  %v507 = vunpack.c.l.b16 %v120
  %v508 = vunpack.c.l.b16 %v121
  %v509 = vunpack.c.l.b16 %v122
  %v510 = vunpack.c.l.b16 %v123
  %v511 = vunpack.c.l.b16 %v124
  %v512 = vunpack.c.l.b16 %v125
  %v513 = vunpack.c.l.b16 %v126
  %v514 = vunpack.c.l.b16 %v127
  %v515 = vunpack.c.l.b16 %v128
  %v516 = vunpack.c.l.b16 %v129
  %v517 = vunpack.c.l.b16 %v130
  %v518 = vunpack.c.l.b16 %v131
  %v519 = vunpack.c.l.b16 %v132
  %v520 = vunpack.c.l.b16 %v133
  %v521 = vunpack.c.l.b16 %v134
  %v522 = vunpack.c.l.b16 %v135
  %v523 = vunpack.c.l.b16 %v136
  %v524 = vunpack.c.l.b16 %v137
  %v525 = vunpack.c.l.b16 %v138
  %v526 = vunpack.c.l.b16 %v139
  %v527 = vunpack.c.l.b16 %v140
  %v528 = vunpack.c.l.b16 %v141
  %v529 = vunpack.c.l.b16 %v142
  %v530 = vunpack.c.l.b16 %v143
  %v531 = vunpack.c.l.b16 %v144
  %v532 = vunpack.c.l.b16 %v145
  %v533 = vunpack.c.l.b16 %v146
  %v534 = vunpack.c.l.b16 %v147
  %v535 = vunpack.c.l.b16 %v148
  %v536 = vunpack.c.l.b16 %v149
  %v537 = vunpack.c.l.b16 %v150
  %v538 = vunpack.c.l.b16 %v151
  %v539 = vunpack.c.l.b16 %v152
  %v540 = vunpack.c.l.b16 %v153
  %v541 = vunpack.c.l.b16 %v154
  %v542 = vunpack.c.l.b16 %v155
  %v543 = vunpack.c.l.b16 %v156
  %v544 = vunpack.c.l.b16 %v157
  %v545 = vunpack.c.l.b16 %v158
  %v546 = vunpack.c.l.b16 %v159
  %v547 = vunpack.c.l.b16 %v160
  %v548 = vunpack.c.l.b16 %v161
  %v549 = vunpack.c.l.b16 %v162
  %v550 = vunpack.c.l.b16 %v163
  %v551 = vunpack.c.l.b16 %v164
  %v552 = vunpack.c.l.b16 %v165
  %v553 = vunpack.c.l.b16 %v166
  %v554 = vunpack.c.l.b16 %v167
  %v555 = vunpack.c.l.b16 %v168
  %v556 = vunpack.c.l.b16 %v169
  %v557 = vunpack.c.l.b16 %v170
  %v558 = vunpack.c.l.b16 %v171
  %v559 = vunpack.c.l.b16 %v172
  %v560 = vunpack.c.l.b16 %v173
  %v561 = vunpack.c.l.b16 %v174
  %v562 = vunpack.c.l.b16 %v175
  %v563 = vunpack.c.l.b16 %v176
  %v564 = vunpack.c.l.b16 %v177
  %v565 = vunpack.c.l.b16 %v178
  %v566 = vpack.c.b16 %v423, %v422
  %v567 = vpack.c.b16 %v425, %v424
  %v568 = vpack.c.b16 %v427, %v426
  %v569 = vpack.c.b16 %v429, %v428
  %v570 = vpack.c.b16 %v431, %v430
  %v571 = vpack.c.b16 %v433, %v432
  %v572 = vpack.c.b16 %v435, %v434
  %v573 = vpack.c.b16 %v437, %v436
  %v574 = vpack.c.b16 %v439, %v438
  %v575 = vpack.c.b16 %v441, %v440
  %v576 = vpack.c.b16 %v443, %v442
  %v577 = vpack.c.b16 %v445, %v444
  %v578 = vpack.c.b16 %v447, %v446
  %v579 = vpack.c.b16 %v449, %v448
  %v580 = vpack.c.b16 %v451, %v450
  %v581 = vpack.c.b16 %v453, %v452
  %v582 = vpack.c.b16 %v455, %v454
  %v583 = vpack.c.b16 %v457, %v456
  %v584 = vpack.c.b16 %v459, %v458
  %v585 = vpack.c.b16 %v461, %v460
  %v586 = vpack.c.b16 %v463, %v462
  %v587 = vpack.c.b16 %v465, %v464
  %v588 = vpack.c.b16 %v467, %v466
  %v589 = vpack.c.b16 %v469, %v468
  %v590 = vpack.c.b16 %v471, %v470
  %v591 = vpack.c.b16 %v473, %v472
  %v592 = vpack.c.b16 %v475, %v474
  %v593 = vpack.c.b16 %v477, %v476
  %v594 = vpack.c.b16 %v479, %v478
  %v595 = vpack.c.b16 %v481, %v480
  %v596 = vpack.c.b16 %v483, %v482
  %v597 = vpack.c.b16 %v485, %v484
  %v598 = vpack.c.b16 %v487, %v486
  %v599 = vpack.c.b16 %v489, %v488
  %v600 = vpack.c.b16 %v491, %v490
  %v601 = vpack.c.b16 %v493, %v492
  %v602 = vpack.c.b16 %v495, %v494
  %v603 = vpack.c.b16 %v497, %v496
  %v604 = vpack.c.b16 %v499, %v498
  %v605 = vpack.c.b16 %v501, %v500
  %v606 = vpack.c.b16 %v503, %v502
  %v607 = vpack.c.b16 %v505, %v504
  %v608 = vpack.c.b16 %v507, %v506
  %v609 = vpack.c.b16 %v509, %v508
  %v610 = vpack.c.b16 %v511, %v510
  %v611 = vpack.c.b16 %v513, %v512
  %v612 = vpack.c.b16 %v515, %v514
  %v613 = vpack.c.b16 %v517, %v516
  %v614 = vpack.c.b16 %v519, %v518
  %v615 = vpack.c.b16 %v521, %v520
  %v616 = vpack.c.b16 %v523, %v522
  %v617 = vpack.c.b16 %v525, %v524
  %v618 = vpack.c.b16 %v527, %v526
  %v619 = vpack.c.b16 %v529, %v528
  %v620 = vpack.c.b16 %v531, %v530
  %v621 = vpack.c.b16 %v533, %v532
  %v622 = vpack.c.b16 %v535, %v534
  %v623 = vpack.c.b16 %v537, %v536
  %v624 = vpack.c.b16 %v539, %v538
  %v625 = vpack.c.b16 %v541, %v540
  %v626 = vpack.c.b16 %v543, %v542
  %v627 = vpack.c.b16 %v545, %v544
  %v628 = vpack.c.b16 %v547, %v546
  %v629 = vpack.c.b16 %v549, %v548
  %v630 = vpack.c.b16 %v551, %v550
  %v631 = vpack.c.b16 %v553, %v552
  %v632 = vpack.c.b16 %v555, %v554
  %v633 = vpack.c.b16 %v557, %v556
  %v634 = vpack.c.b16 %v559, %v558
  %v635 = vpack.c.b16 %v561, %v560
  %v636 = vpack.c.b16 %v563, %v562
  %v637 = vpack.c.b16 %v565, %v564
  %710 = vmatprep.subr.bf16.mxu0 0
  %711 = vmatpush1.bf16.msra.mxu0 %v573
  %712 = vmatprep.subr.bf16.mxu0 0
  %713 = vmatpush1.bf16.msra.mxu0 %v572
  %714 = vmatprep.subr.bf16.mxu0 0
  %715 = vmatpush1.bf16.msra.mxu0 %v571
  %716 = vmatprep.subr.bf16.mxu0 0
  %717 = vmatpush1.bf16.msra.mxu0 %v570
  %718 = vmatprep.subr.bf16.mxu0 0
  %719 = vmatpush1.bf16.msra.mxu0 %v569
  %720 = vmatprep.subr.bf16.mxu0 0
  %721 = vmatpush1.bf16.msra.mxu0 %v568
  %722 = vmatprep.subr.bf16.mxu0 0
  %723 = vmatpush1.bf16.msra.mxu0 %v567
  %724 = vmatprep.subr.bf16.mxu0 0
  %725 = vmatpush1.bf16.msra.mxu0 %v566
  %726 = vmatprep.subr.bf16.mxu0 0
  %727 = vmatpush2.bf16.msra.mxu0 %v581
  %728 = vmatprep.subr.bf16.mxu0 0
  %729 = vmatpush2.bf16.msra.mxu0 %v580
  %730 = vmatprep.subr.bf16.mxu0 0
  %731 = vmatpush2.bf16.msra.mxu0 %v579
  %732 = vmatprep.subr.bf16.mxu0 0
  %733 = vmatpush2.bf16.msra.mxu0 %v578
  %734 = vmatprep.subr.bf16.mxu0 0
  %735 = vmatpush2.bf16.msra.mxu0 %v577
  %736 = vmatprep.subr.bf16.mxu0 0
  %737 = vmatpush2.bf16.msra.mxu0 %v576
  %738 = vmatprep.subr.bf16.mxu0 0
  %739 = vmatpush2.bf16.msra.mxu0 %v575
  %740 = vmatprep.subr.bf16.mxu0 0
  %741 = vmatpush2.bf16.msra.mxu0 %v574
  %742 = vmatprep.mubr.bf16.mxu0 %v243
  %743 = vmatmul.mubr.bf16.gmra.mxu0 %v242
  %v744 = vpop.f32.mrf.mxu0
  %v745 = vadd.f32 %v184, %v744
  %v746 = vpop.f32.mrf.mxu0
  %v747 = vpop.f32.mrf.mxu0
  %v748 = vadd.f32 %v184, %v747
  %v749 = vpop.f32.mrf.mxu0
  %750 = vmatprep.mubr.bf16.mxu0 %v252
  %751 = vmatmul.mubr.bf16.gmra.mxu0 %v251
  %v752 = vpop.f32.mrf.mxu0
  %v753 = vadd.f32 %v184, %v752
  %v754 = vpop.f32.mrf.mxu0
  %v755 = vpop.f32.mrf.mxu0
  %v756 = vadd.f32 %v184, %v755
  %v757 = vpop.f32.mrf.mxu0
  %758 = vdwg.mxu0
  %759 = vmatprep.subr.bf16.mxu0 0
  %760 = vmatpush1.bf16.msra.mxu0 %v589
  %761 = vmatprep.subr.bf16.mxu0 0
  %762 = vmatpush1.bf16.msra.mxu0 %v588
  %763 = vmatprep.subr.bf16.mxu0 0
  %764 = vmatpush1.bf16.msra.mxu0 %v587
  %765 = vmatprep.subr.bf16.mxu0 0
  %766 = vmatpush1.bf16.msra.mxu0 %v586
  %767 = vmatprep.subr.bf16.mxu0 0
  %768 = vmatpush1.bf16.msra.mxu0 %v585
  %769 = vmatprep.subr.bf16.mxu0 0
  %770 = vmatpush1.bf16.msra.mxu0 %v584
  %771 = vmatprep.subr.bf16.mxu0 0
  %772 = vmatpush1.bf16.msra.mxu0 %v583
  %773 = vmatprep.subr.bf16.mxu0 0
  %774 = vmatpush1.bf16.msra.mxu0 %v582
  %775 = vmatprep.subr.bf16.mxu0 0
  %776 = vmatpush2.bf16.msra.mxu0 %v597
  %777 = vmatprep.subr.bf16.mxu0 0
  %778 = vmatpush2.bf16.msra.mxu0 %v596
  %779 = vmatprep.subr.bf16.mxu0 0
  %780 = vmatpush2.bf16.msra.mxu0 %v595
  %781 = vmatprep.subr.bf16.mxu0 0
  %782 = vmatpush2.bf16.msra.mxu0 %v594
  %783 = vmatprep.subr.bf16.mxu0 0
  %784 = vmatpush2.bf16.msra.mxu0 %v593
  %785 = vmatprep.subr.bf16.mxu0 0
  %786 = vmatpush2.bf16.msra.mxu0 %v592
  %787 = vmatprep.subr.bf16.mxu0 0
  %788 = vmatpush2.bf16.msra.mxu0 %v591
  %789 = vmatprep.subr.bf16.mxu0 0
  %790 = vmatpush2.bf16.msra.mxu0 %v590
  %791 = vmatprep.mubr.bf16.mxu0 %v245
  %792 = vmatmul.mubr.bf16.gmra.mxu0 %v244
  %v793 = vpop.f32.mrf.mxu0
  %v794 = vadd.f32 %v745, %v793
  %v795 = vpop.f32.mrf.mxu0
  %v796 = vpop.f32.mrf.mxu0
  %v797 = vadd.f32 %v748, %v796
  %v798 = vpop.f32.mrf.mxu0
  %799 = vmatprep.mubr.bf16.mxu0 %v254
  %800 = vmatmul.mubr.bf16.gmra.mxu0 %v253
  %v801 = vpop.f32.mrf.mxu0
  %v802 = vadd.f32 %v753, %v801
  %v803 = vpop.f32.mrf.mxu0
  %v804 = vpop.f32.mrf.mxu0
  %v805 = vadd.f32 %v756, %v804
  %v806 = vpop.f32.mrf.mxu0
  %807 = vdwg.mxu0
  %808 = vmatprep.subr.bf16.mxu0 0
  %809 = vmatpush1.bf16.msra.mxu0 %v605
  %810 = vmatprep.subr.bf16.mxu0 0
  %811 = vmatpush1.bf16.msra.mxu0 %v604
  %812 = vmatprep.subr.bf16.mxu0 0
  %813 = vmatpush1.bf16.msra.mxu0 %v603
  %814 = vmatprep.subr.bf16.mxu0 0
  %815 = vmatpush1.bf16.msra.mxu0 %v602
  %816 = vmatprep.subr.bf16.mxu0 0
  %817 = vmatpush1.bf16.msra.mxu0 %v601
  %818 = vmatprep.subr.bf16.mxu0 0
  %819 = vmatpush1.bf16.msra.mxu0 %v600
  %820 = vmatprep.subr.bf16.mxu0 0
  %821 = vmatpush1.bf16.msra.mxu0 %v599
  %822 = vmatprep.subr.bf16.mxu0 0
  %823 = vmatpush1.bf16.msra.mxu0 %v598
  %824 = vmatprep.subr.bf16.mxu0 0
  %825 = vmatpush2.bf16.msra.mxu0 %v613
  %826 = vmatprep.subr.bf16.mxu0 0
  %827 = vmatpush2.bf16.msra.mxu0 %v612
  %828 = vmatprep.subr.bf16.mxu0 0
  %829 = vmatpush2.bf16.msra.mxu0 %v611
  %830 = vmatprep.subr.bf16.mxu0 0
  %831 = vmatpush2.bf16.msra.mxu0 %v610
  %832 = vmatprep.subr.bf16.mxu0 0
  %833 = vmatpush2.bf16.msra.mxu0 %v609
  %834 = vmatprep.subr.bf16.mxu0 0
  %835 = vmatpush2.bf16.msra.mxu0 %v608
  %836 = vmatprep.subr.bf16.mxu0 0
  %837 = vmatpush2.bf16.msra.mxu0 %v607
  %838 = vmatprep.subr.bf16.mxu0 0
  %839 = vmatpush2.bf16.msra.mxu0 %v606
  %840 = vmatprep.mubr.bf16.mxu0 %v247
  %841 = vmatmul.mubr.bf16.gmra.mxu0 %v246
  %v842 = vpop.f32.mrf.mxu0
  %v843 = vadd.f32 %v794, %v842
  %v844 = vpop.f32.mrf.mxu0
  %v845 = vpop.f32.mrf.mxu0
  %v846 = vadd.f32 %v797, %v845
  %v847 = vpop.f32.mrf.mxu0
  %848 = vmatprep.mubr.bf16.mxu0 %v256
  %849 = vmatmul.mubr.bf16.gmra.mxu0 %v255
  %v850 = vpop.f32.mrf.mxu0
  %v851 = vadd.f32 %v802, %v850
  %v852 = vpop.f32.mrf.mxu0
  %v853 = vpop.f32.mrf.mxu0
  %v854 = vadd.f32 %v805, %v853
  %v855 = vpop.f32.mrf.mxu0
  %856 = vdwg.mxu0
  %857 = vmatprep.subr.bf16.mxu0 0
  %858 = vmatpush1.bf16.msra.mxu0 %v621
  %859 = vmatprep.subr.bf16.mxu0 0
  %860 = vmatpush1.bf16.msra.mxu0 %v620
  %861 = vmatprep.subr.bf16.mxu0 0
  %862 = vmatpush1.bf16.msra.mxu0 %v619
  %863 = vmatprep.subr.bf16.mxu0 0
  %864 = vmatpush1.bf16.msra.mxu0 %v618
  %865 = vmatprep.subr.bf16.mxu0 0
  %866 = vmatpush1.bf16.msra.mxu0 %v617
  %867 = vmatprep.subr.bf16.mxu0 0
  %868 = vmatpush1.bf16.msra.mxu0 %v616
  %869 = vmatprep.subr.bf16.mxu0 0
  %870 = vmatpush1.bf16.msra.mxu0 %v615
  %871 = vmatprep.subr.bf16.mxu0 0
  %872 = vmatpush1.bf16.msra.mxu0 %v614
  %873 = vmatprep.subr.bf16.mxu0 0
  %874 = vmatpush2.bf16.msra.mxu0 %v629
  %875 = vmatprep.subr.bf16.mxu0 0
  %876 = vmatpush2.bf16.msra.mxu0 %v628
  %877 = vmatprep.subr.bf16.mxu0 0
  %878 = vmatpush2.bf16.msra.mxu0 %v627
  %879 = vmatprep.subr.bf16.mxu0 0
  %880 = vmatpush2.bf16.msra.mxu0 %v626
  %881 = vmatprep.subr.bf16.mxu0 0
  %882 = vmatpush2.bf16.msra.mxu0 %v625
  %883 = vmatprep.subr.bf16.mxu0 0
  %884 = vmatpush2.bf16.msra.mxu0 %v624
  %885 = vmatprep.subr.bf16.mxu0 0
  %886 = vmatpush2.bf16.msra.mxu0 %v623
  %887 = vmatprep.subr.bf16.mxu0 0
  %888 = vmatpush2.bf16.msra.mxu0 %v622
  %889 = vmatprep.mubr.bf16.mxu0 %v249
  %890 = vmatmul.mubr.bf16.gmra.mxu0 %v248
  %v891 = vpop.f32.mrf.mxu0
  %v892 = vadd.f32 %v843, %v891
  %v893 = vpop.f32.mrf.mxu0
  %v894 = vpop.f32.mrf.mxu0
  %v895 = vadd.f32 %v846, %v894
  %v896 = vpop.f32.mrf.mxu0
  %897 = vmatprep.mubr.bf16.mxu0 %v258
  %898 = vmatmul.mubr.bf16.gmra.mxu0 %v257
  %v899 = vpop.f32.mrf.mxu0
  %v900 = vadd.f32 %v851, %v899
  %v901 = vpop.f32.mrf.mxu0
  %v902 = vpop.f32.mrf.mxu0
  %v903 = vadd.f32 %v854, %v902
  %v904 = vpop.f32.mrf.mxu0
  %905 = vdwg.mxu0
  %906 = vmatprep.subr.bf16.mxu0 0
  %907 = vmatpush1.bf16.msra.mxu0 %v637
  %908 = vmatprep.subr.bf16.mxu0 0
  %909 = vmatpush1.bf16.msra.mxu0 %v636
  %910 = vmatprep.subr.bf16.mxu0 0
  %911 = vmatpush1.bf16.msra.mxu0 %v635
  %912 = vmatprep.subr.bf16.mxu0 0
  %913 = vmatpush1.bf16.msra.mxu0 %v634
  %914 = vmatprep.subr.bf16.mxu0 0
  %915 = vmatpush1.bf16.msra.mxu0 %v633
  %916 = vmatprep.subr.bf16.mxu0 0
  %917 = vmatpush1.bf16.msra.mxu0 %v632
  %918 = vmatprep.subr.bf16.mxu0 0
  %919 = vmatpush1.bf16.msra.mxu0 %v631
  %920 = vmatprep.subr.bf16.mxu0 0
  %921 = vmatpush1.bf16.msra.mxu0 %v630
  %922 = vmatprep.subr.bf16.mxu0 0
  %923 = vmatpush2.bf16.msra.mxu0 0
  %924 = vmatprep.subr.bf16.mxu0 0
  %925 = vmatpush2.bf16.msra.mxu0 0
  %926 = vmatprep.subr.bf16.mxu0 0
  %927 = vmatpush2.bf16.msra.mxu0 0
  %928 = vmatprep.subr.bf16.mxu0 0
  %929 = vmatpush2.bf16.msra.mxu0 0
  %930 = vmatprep.subr.bf16.mxu0 0
  %931 = vmatpush2.bf16.msra.mxu0 0
  %932 = vmatprep.subr.bf16.mxu0 0
  %933 = vmatpush2.bf16.msra.mxu0 0
  %934 = vmatprep.subr.bf16.mxu0 0
  %935 = vmatpush2.bf16.msra.mxu0 0
  %936 = vmatprep.subr.bf16.mxu0 0
  %937 = vmatpush2.bf16.msra.mxu0 0
  %938 = vmatprep.mubr.bf16.mxu0 0
  %939 = vmatmul.mubr.bf16.gmra.mxu0 %v250
  %v940 = vpop.f32.mrf.mxu0
  %v941 = vadd.f32 %v892, %v940
  %v942 = vpop.f32.mrf.mxu0
  %v943 = vpop.f32.mrf.mxu0
  %v944 = vadd.f32 %v895, %v943
  %v945 = vpop.f32.mrf.mxu0
  %946 = vmatprep.mubr.bf16.mxu0 0
  %947 = vmatmul.mubr.bf16.gmra.mxu0 %v259
  %v948 = vpop.f32.mrf.mxu0
  %v949 = vadd.f32 %v900, %v948
  %v950 = vpop.f32.mrf.mxu0
  %v951 = vpop.f32.mrf.mxu0
  %v952 = vadd.f32 %v903, %v951
  %v953 = vpop.f32.mrf.mxu0
  %954 = vdwg.mxu0
  %v955 = vmax.f32 %v941, 0.0
  %v956 = vmax.f32 %v944, 0.0
  %v957 = vmax.f32 %v949, 0.0
  %v958 = vmax.f32 %v952, 0.0
  %v959 = vpack.c.bf16 %v956, %v955
  %v960 = vpack.c.bf16 %v958, %v957
  %v963 = vunpack.c.l.b16 %v959
  %v964 = vunpack.c.h.b16 %v959
  %v965 = vunpack.c.l.b16 %v960
  %v966 = vunpack.c.h.b16 %v960
  %v967 = vpack.c.b16 %v963, %v963
  %v968 = vpack.c.b16 %v964, %v964
  %v969 = vpack.c.b16 %v965, %v965
  %v970 = vpack.c.b16 %v966, %v966
  %975 = vst [vmem:[%s3] sm:$0xf] %v967
  %976 = vst [vmem:[%s3 + $0x4] sm:$0xf] %v968
  %977 = vst [vmem:[%s3 + $0x8] sm:$0xf] %v969
  %978 = vst [vmem:[%s3 + $0xc] sm:$0xf] %v970
  // Predicated region
  $region14: #{resnet_backbone_forward.18} parent=0 // pred_check
    _
  $region15: #{resnet_backbone_forward.18} parent=0 // pred_check_branch
    %980 = sbr.rel (0) target = $region17
  $region16: #{resnet_backbone_forward.18} parent=0 // pred_region
    _
  $region17: #{resnet_backbone_forward.18} parent=0 // pred_fallthru
    _
  // Predicated region
  $region18: #{resnet_backbone_forward.18} parent=0 // pred_check
    _
  $region19: #{resnet_backbone_forward.18} parent=0 // pred_check_branch
    %982 = sbr.rel (0) target = $region21
  $region20: #{resnet_backbone_forward.18} parent=0 // pred_region
    _
  $region21: #{resnet_backbone_forward.18} parent=0 // pred_fallthru
    _

// kernel: resnet_backbone_forward.17
$region0: #{resnet_backbone_forward.17}
  #allocation0 [shape = 'u32[]', space=smem, size = 0x4, offset = 0x4, fixed_abs, tag = 'smem constant byte address 0x4 - core index']
  #allocation1 [shape = 'u32[144,128]{1,0:T(1,128)}', space=vmem, size = 0x12000, scoped, tag = 'internal scratch']
  %s0 = inlined_call_operand.vmem [shape: bf16[32,1152], index: 0, kind: input, shape index: {}]
  %s1 = inlined_call_operand.vmem [shape: bf16[1152,128], index: 1, kind: input, shape index: {}]
  %s2 = inlined_call_operand.vmem [shape: f32[1,128], index: 2, kind: input, shape index: {}]
  %s3 = inlined_call_operand.vmem [shape: bf16[32,64], index: 3, kind: input, shape index: {}]
  %s4 = inlined_call_operand.vmem [shape: bf16[64,128], index: 4, kind: input, shape index: {}]
  %s5 = inlined_call_operand.vmem [shape: f32[1,128], index: 5, kind: input, shape index: {}]
  %s6 = inlined_call_operand.vmem [shape: bf16[32,128], index: 6, kind: output, shape index: {}]
  %s7 = sld [smem:[#allocation0]]
  $region34: #{resnet_backbone_forward.17} parent=0
    _
  %s9 = ssub.s32 1, %s7
  %s10 = scalar_select 0, %s9, %s7
  // Predicated region
  $region2: #{resnet_backbone_forward.17} parent=0 // pred_check
    _
  $region3: #{resnet_backbone_forward.17} parent=0 // pred_check_branch
    %12 = sbr.rel (0) target = $region5
  $region4: #{resnet_backbone_forward.17} parent=0 // pred_region
    _
  $region5: #{resnet_backbone_forward.17} parent=0 // pred_fallthru
    _
  // Predicated region
  $region6: #{resnet_backbone_forward.17} parent=0 // pred_check
    _
  $region7: #{resnet_backbone_forward.17} parent=0 // pred_check_branch
    %14 = sbr.rel (0) target = $region9
  $region8: #{resnet_backbone_forward.17} parent=0 // pred_region
    _
  $region9: #{resnet_backbone_forward.17} parent=0 // pred_fallthru
    _
  // Predicated region
  $region10: #{resnet_backbone_forward.17} parent=0 // pred_check
    _
  $region11: #{resnet_backbone_forward.17} parent=0 // pred_check_branch
    %16 = sbr.rel (0) target = $region13
  $region12: #{resnet_backbone_forward.17} parent=0 // pred_region
    _
  $region13: #{resnet_backbone_forward.17} parent=0 // pred_fallthru
    _
  // Predicated region
  $region14: #{resnet_backbone_forward.17} parent=0 // pred_check
    _
  $region15: #{resnet_backbone_forward.17} parent=0 // pred_check_branch
    %18 = sbr.rel (0) target = $region17
  $region16: #{resnet_backbone_forward.17} parent=0 // pred_region
    _
  $region17: #{resnet_backbone_forward.17} parent=0 // pred_fallthru
    _
  // Predicated region
  $region18: #{resnet_backbone_forward.17} parent=0 // pred_check
    _
  $region19: #{resnet_backbone_forward.17} parent=0 // pred_check_branch
    %20 = sbr.rel (0) target = $region21
  $region20: #{resnet_backbone_forward.17} parent=0 // pred_region
    _
  $region21: #{resnet_backbone_forward.17} parent=0 // pred_fallthru
    _
  // Predicated region
  $region22: #{resnet_backbone_forward.17} parent=0 // pred_check
    _
  $region23: #{resnet_backbone_forward.17} parent=0 // pred_check_branch
    %22 = sbr.rel (0) target = $region25
  $region24: #{resnet_backbone_forward.17} parent=0 // pred_region
    _
  $region25: #{resnet_backbone_forward.17} parent=0 // pred_fallthru
    _
  %v24 = vld [vmem:[%s3] sm:$0xf]
  %v25 = vld [vmem:[%s3 + $0x4] sm:$0xf]
  %v26 = vld [vmem:[%s3 + $0x8] sm:$0xf]
  %v27 = vld [vmem:[%s3 + $0xc] sm:$0xf]
  %v28 = vld [vmem:[%s4] sm:$0xf]
  %v29 = vld [vmem:[%s4 + $0x4] sm:$0xf]
  %v30 = vld [vmem:[%s4 + $0x8] sm:$0xf]
  %v31 = vld [vmem:[%s4 + $0xc] sm:$0xf]
  %v32 = vld [vmem:[%s4 + $0x10] sm:$0xf]
  %v33 = vld [vmem:[%s4 + $0x14] sm:$0xf]
  %v34 = vld [vmem:[%s4 + $0x18] sm:$0xf]
  %v35 = vld [vmem:[%s4 + $0x1c] sm:$0xf]
  %v36 = vld [vmem:[%s5] sm:$0x1]
  %v38 = vlaneseq
  %v39 = vshrl.u32 %v38, 7
  %v40 = vsub.s32 0, %v39
  %v41 = vrot.slane %v36, %v40
  %v47 = vunpack.c.l.b16 %v24
  %v48 = vunpack.c.l.b16 %v25
  %v49 = vunpack.c.l.b16 %v26
  %v50 = vunpack.c.l.b16 %v27
  %v51 = vpack.c.b16 %v48, %v47
  %v52 = vpack.c.b16 %v50, %v49
  %v61 = vunpack.c.l.b16 %v28
  %v62 = vunpack.c.l.b16 %v29
  %v63 = vunpack.c.l.b16 %v30
  %v64 = vunpack.c.l.b16 %v31
  %v65 = vunpack.c.l.b16 %v32
  %v66 = vunpack.c.l.b16 %v33
  %v67 = vunpack.c.l.b16 %v34
  %v68 = vunpack.c.l.b16 %v35
  %v69 = vpack.c.b16 %v62, %v61
  %v70 = vpack.c.b16 %v64, %v63
  %v71 = vpack.c.b16 %v66, %v65
  %v72 = vpack.c.b16 %v68, %v67
  %vm77 = vcmask 523264
  %v79 = vsel %vm77, %v51, 0
  %v82 = vsel %vm77, %v52, 0
  %84 = vmatprep.subr.bf16.mxu0 0
  %85 = vmatpush1.bf16.msra.mxu0 0
  %86 = vmatprep.subr.bf16.mxu0 0
  %87 = vmatpush1.bf16.msra.mxu0 0
  %88 = vmatprep.subr.bf16.mxu0 0
  %89 = vmatpush1.bf16.msra.mxu0 0
  %90 = vmatprep.subr.bf16.mxu0 0
  %91 = vmatpush1.bf16.msra.mxu0 0
  %92 = vmatprep.subr.bf16.mxu0 0
  %93 = vmatpush1.bf16.msra.mxu0 %v72
  %94 = vmatprep.subr.bf16.mxu0 0
  %95 = vmatpush1.bf16.msra.mxu0 %v71
  %96 = vmatprep.subr.bf16.mxu0 0
  %97 = vmatpush1.bf16.msra.mxu0 %v70
  %98 = vmatprep.subr.bf16.mxu0 0
  %99 = vmatpush1.bf16.msra.mxu0 %v69
  %100 = vmatprep.subr.bf16.mxu0 0
  %101 = vmatpush2.bf16.msra.mxu0 0
  %102 = vmatprep.subr.bf16.mxu0 0
  %103 = vmatpush2.bf16.msra.mxu0 0
  %104 = vmatprep.subr.bf16.mxu0 0
  %105 = vmatpush2.bf16.msra.mxu0 0
  %106 = vmatprep.subr.bf16.mxu0 0
  %107 = vmatpush2.bf16.msra.mxu0 0
  %108 = vmatprep.subr.bf16.mxu0 0
  %109 = vmatpush2.bf16.msra.mxu0 0
  %110 = vmatprep.subr.bf16.mxu0 0
  %111 = vmatpush2.bf16.msra.mxu0 0
  %112 = vmatprep.subr.bf16.mxu0 0
  %113 = vmatpush2.bf16.msra.mxu0 0
  %114 = vmatprep.subr.bf16.mxu0 0
  %115 = vmatpush2.bf16.msra.mxu0 0
  %116 = vmatprep.mubr.bf16.mxu0 0
  %117 = vmatmul.mubr.bf16.gmra.mxu0 %v79
  %v118 = vpop.f32.mrf.mxu0
  %v119 = vadd.f32 %v41, %v118
  %v120 = vpop.f32.mrf.mxu0
  %v121 = vpop.f32.mrf.mxu0
  %v122 = vadd.f32 %v41, %v121
  %v123 = vpop.f32.mrf.mxu0
  %124 = vmatprep.mubr.bf16.mxu0 0
  %125 = vmatmul.mubr.bf16.gmra.mxu0 %v82
  %v126 = vpop.f32.mrf.mxu0
  %v127 = vadd.f32 %v41, %v126
  %v128 = vpop.f32.mrf.mxu0
  %v129 = vpop.f32.mrf.mxu0
  %v130 = vadd.f32 %v41, %v129
  %v131 = vpop.f32.mrf.mxu0
  %132 = vdwg.mxu0
  %v133 = vld [vmem:[%s0] sm:$0xff]
  %v134 = vld [vmem:[%s0 + $0x8] sm:$0xff]
  %v135 = vld [vmem:[%s0 + $0x10] sm:$0xff]
  %v136 = vld [vmem:[%s0 + $0x18] sm:$0xff]
  %v137 = vld [vmem:[%s0 + $0x20] sm:$0xf]
  %v138 = vld [vmem:[%s0 + $0x24] sm:$0xff]
  %v139 = vld [vmem:[%s0 + $0x2c] sm:$0xff]
  %v140 = vld [vmem:[%s0 + $0x34] sm:$0xff]
  %v141 = vld [vmem:[%s0 + $0x3c] sm:$0xff]
  %v142 = vld [vmem:[%s0 + $0x44] sm:$0xf]
  %v143 = vld [vmem:[%s0 + $0x48] sm:$0xff]
  %v144 = vld [vmem:[%s0 + $0x50] sm:$0xff]
  %v145 = vld [vmem:[%s0 + $0x58] sm:$0xff]
  %v146 = vld [vmem:[%s0 + $0x60] sm:$0xff]
  %v147 = vld [vmem:[%s0 + $0x68] sm:$0xf]
  %v148 = vld [vmem:[%s0 + $0x6c] sm:$0xff]
  %v149 = vld [vmem:[%s0 + $0x74] sm:$0xff]
  %v150 = vld [vmem:[%s0 + $0x7c] sm:$0xff]
  %v151 = vld [vmem:[%s0 + $0x84] sm:$0xff]
  %v152 = vld [vmem:[%s0 + $0x8c] sm:$0xf]
  %v153 = vld [vmem:[%s1] sm:$0xf]
  %v154 = vld [vmem:[%s1 + $0x4] sm:$0xf]
  %v155 = vld [vmem:[%s1 + $0x8] sm:$0xf]
  %v156 = vld [vmem:[%s1 + $0xc] sm:$0xf]
  %v157 = vld [vmem:[%s1 + $0x10] sm:$0xf]
  %v158 = vld [vmem:[%s1 + $0x14] sm:$0xf]
  %v159 = vld [vmem:[%s1 + $0x18] sm:$0xf]
  %v160 = vld [vmem:[%s1 + $0x1c] sm:$0xf]
  %v161 = vld [vmem:[%s1 + $0x20] sm:$0xf]
  %v162 = vld [vmem:[%s1 + $0x24] sm:$0xf]
  %v163 = vld [vmem:[%s1 + $0x28] sm:$0xf]
  %v164 = vld [vmem:[%s1 + $0x2c] sm:$0xf]
  %v165 = vld [vmem:[%s1 + $0x30] sm:$0xf]
  %v166 = vld [vmem:[%s1 + $0x34] sm:$0xf]
  %v167 = vld [vmem:[%s1 + $0x38] sm:$0xf]
  %v168 = vld [vmem:[%s1 + $0x3c] sm:$0xf]
  %v169 = vld [vmem:[%s1 + $0x40] sm:$0xf]
  %v170 = vld [vmem:[%s1 + $0x44] sm:$0xf]
  %v171 = vld [vmem:[%s1 + $0x48] sm:$0xf]
  %v172 = vld [vmem:[%s1 + $0x4c] sm:$0xf]
  %v173 = vld [vmem:[%s1 + $0x50] sm:$0xf]
  %v174 = vld [vmem:[%s1 + $0x54] sm:$0xf]
  %v175 = vld [vmem:[%s1 + $0x58] sm:$0xf]
  %v176 = vld [vmem:[%s1 + $0x5c] sm:$0xf]
  %v177 = vld [vmem:[%s1 + $0x60] sm:$0xf]
  %v178 = vld [vmem:[%s1 + $0x64] sm:$0xf]
  %v179 = vld [vmem:[%s1 + $0x68] sm:$0xf]
  %v180 = vld [vmem:[%s1 + $0x6c] sm:$0xf]
  %v181 = vld [vmem:[%s1 + $0x70] sm:$0xf]
  %v182 = vld [vmem:[%s1 + $0x74] sm:$0xf]
  %v183 = vld [vmem:[%s1 + $0x78] sm:$0xf]
  %v184 = vld [vmem:[%s1 + $0x7c] sm:$0xf]
  %v185 = vld [vmem:[%s1 + $0x80] sm:$0xf]
  %v186 = vld [vmem:[%s1 + $0x84] sm:$0xf]
  %v187 = vld [vmem:[%s1 + $0x88] sm:$0xf]
  %v188 = vld [vmem:[%s1 + $0x8c] sm:$0xf]
  %v189 = vld [vmem:[%s1 + $0x90] sm:$0xf]
  %v190 = vld [vmem:[%s1 + $0x94] sm:$0xf]
  %v191 = vld [vmem:[%s1 + $0x98] sm:$0xf]
  %v192 = vld [vmem:[%s1 + $0x9c] sm:$0xf]
  %v193 = vld [vmem:[%s1 + $0xa0] sm:$0xf]
  %v194 = vld [vmem:[%s1 + $0xa4] sm:$0xf]
  %v195 = vld [vmem:[%s1 + $0xa8] sm:$0xf]
  %v196 = vld [vmem:[%s1 + $0xac] sm:$0xf]
  %v197 = vld [vmem:[%s1 + $0xb0] sm:$0xf]
  %v198 = vld [vmem:[%s1 + $0xb4] sm:$0xf]
  %v199 = vld [vmem:[%s1 + $0xb8] sm:$0xf]
  %v200 = vld [vmem:[%s1 + $0xbc] sm:$0xf]
  %v201 = vld [vmem:[%s1 + $0xc0] sm:$0xf]
  %v202 = vld [vmem:[%s1 + $0xc4] sm:$0xf]
  %v203 = vld [vmem:[%s1 + $0xc8] sm:$0xf]
  %v204 = vld [vmem:[%s1 + $0xcc] sm:$0xf]
  %v205 = vld [vmem:[%s1 + $0xd0] sm:$0xf]
  %v206 = vld [vmem:[%s1 + $0xd4] sm:$0xf]
  %v207 = vld [vmem:[%s1 + $0xd8] sm:$0xf]
  %v208 = vld [vmem:[%s1 + $0xdc] sm:$0xf]
  %v209 = vld [vmem:[%s1 + $0xe0] sm:$0xf]
  %v210 = vld [vmem:[%s1 + $0xe4] sm:$0xf]
  %v211 = vld [vmem:[%s1 + $0xe8] sm:$0xf]
  %v212 = vld [vmem:[%s1 + $0xec] sm:$0xf]
  %v213 = vld [vmem:[%s1 + $0xf0] sm:$0xf]
  %v214 = vld [vmem:[%s1 + $0xf4] sm:$0xf]
  %v215 = vld [vmem:[%s1 + $0xf8] sm:$0xf]
  %v216 = vld [vmem:[%s1 + $0xfc] sm:$0xf]
  %v217 = vld [vmem:[%s1 + $0x100] sm:$0xf]
  %v218 = vld [vmem:[%s1 + $0x104] sm:$0xf]
  %v219 = vld [vmem:[%s1 + $0x108] sm:$0xf]
  %v220 = vld [vmem:[%s1 + $0x10c] sm:$0xf]
  %v221 = vld [vmem:[%s1 + $0x110] sm:$0xf]
  %v222 = vld [vmem:[%s1 + $0x114] sm:$0xf]
  %v223 = vld [vmem:[%s1 + $0x118] sm:$0xf]
  %v224 = vld [vmem:[%s1 + $0x11c] sm:$0xf]
  %v225 = vld [vmem:[%s1 + $0x120] sm:$0xf]
  %v226 = vld [vmem:[%s1 + $0x124] sm:$0xf]
  %v227 = vld [vmem:[%s1 + $0x128] sm:$0xf]
  %v228 = vld [vmem:[%s1 + $0x12c] sm:$0xf]
  %v229 = vld [vmem:[%s1 + $0x130] sm:$0xf]
  %v230 = vld [vmem:[%s1 + $0x134] sm:$0xf]
  %v231 = vld [vmem:[%s1 + $0x138] sm:$0xf]
  %v232 = vld [vmem:[%s1 + $0x13c] sm:$0xf]
  %v233 = vld [vmem:[%s1 + $0x140] sm:$0xf]
  %v234 = vld [vmem:[%s1 + $0x144] sm:$0xf]
  %v235 = vld [vmem:[%s1 + $0x148] sm:$0xf]
  %v236 = vld [vmem:[%s1 + $0x14c] sm:$0xf]
  %v237 = vld [vmem:[%s1 + $0x150] sm:$0xf]
  %v238 = vld [vmem:[%s1 + $0x154] sm:$0xf]
  %v239 = vld [vmem:[%s1 + $0x158] sm:$0xf]
  %v240 = vld [vmem:[%s1 + $0x15c] sm:$0xf]
  %v241 = vld [vmem:[%s1 + $0x160] sm:$0xf]
  %v242 = vld [vmem:[%s1 + $0x164] sm:$0xf]
  %v243 = vld [vmem:[%s1 + $0x168] sm:$0xf]
  %v244 = vld [vmem:[%s1 + $0x16c] sm:$0xf]
  %v245 = vld [vmem:[%s1 + $0x170] sm:$0xf]
  %v246 = vld [vmem:[%s1 + $0x174] sm:$0xf]
  %v247 = vld [vmem:[%s1 + $0x178] sm:$0xf]
  %v248 = vld [vmem:[%s1 + $0x17c] sm:$0xf]
  %v249 = vld [vmem:[%s1 + $0x180] sm:$0xf]
  %v250 = vld [vmem:[%s1 + $0x184] sm:$0xf]
  %v251 = vld [vmem:[%s1 + $0x188] sm:$0xf]
  %v252 = vld [vmem:[%s1 + $0x18c] sm:$0xf]
  %v253 = vld [vmem:[%s1 + $0x190] sm:$0xf]
  %v254 = vld [vmem:[%s1 + $0x194] sm:$0xf]
  %v255 = vld [vmem:[%s1 + $0x198] sm:$0xf]
  %v256 = vld [vmem:[%s1 + $0x19c] sm:$0xf]
  %v257 = vld [vmem:[%s1 + $0x1a0] sm:$0xf]
  %v258 = vld [vmem:[%s1 + $0x1a4] sm:$0xf]
  %v259 = vld [vmem:[%s1 + $0x1a8] sm:$0xf]
  %v260 = vld [vmem:[%s1 + $0x1ac] sm:$0xf]
  %v261 = vld [vmem:[%s1 + $0x1b0] sm:$0xf]
  %v262 = vld [vmem:[%s1 + $0x1b4] sm:$0xf]
  %v263 = vld [vmem:[%s1 + $0x1b8] sm:$0xf]
  %v264 = vld [vmem:[%s1 + $0x1bc] sm:$0xf]
  %v265 = vld [vmem:[%s1 + $0x1c0] sm:$0xf]
  %v266 = vld [vmem:[%s1 + $0x1c4] sm:$0xf]
  %v267 = vld [vmem:[%s1 + $0x1c8] sm:$0xf]
  %v268 = vld [vmem:[%s1 + $0x1cc] sm:$0xf]
  %v269 = vld [vmem:[%s1 + $0x1d0] sm:$0xf]
  %v270 = vld [vmem:[%s1 + $0x1d4] sm:$0xf]
  %v271 = vld [vmem:[%s1 + $0x1d8] sm:$0xf]
  %v272 = vld [vmem:[%s1 + $0x1dc] sm:$0xf]
  %v273 = vld [vmem:[%s1 + $0x1e0] sm:$0xf]
  %v274 = vld [vmem:[%s1 + $0x1e4] sm:$0xf]
  %v275 = vld [vmem:[%s1 + $0x1e8] sm:$0xf]
  %v276 = vld [vmem:[%s1 + $0x1ec] sm:$0xf]
  %v277 = vld [vmem:[%s1 + $0x1f0] sm:$0xf]
  %v278 = vld [vmem:[%s1 + $0x1f4] sm:$0xf]
  %v279 = vld [vmem:[%s1 + $0x1f8] sm:$0xf]
  %v280 = vld [vmem:[%s1 + $0x1fc] sm:$0xf]
  %v281 = vld [vmem:[%s1 + $0x200] sm:$0xf]
  %v282 = vld [vmem:[%s1 + $0x204] sm:$0xf]
  %v283 = vld [vmem:[%s1 + $0x208] sm:$0xf]
  %v284 = vld [vmem:[%s1 + $0x20c] sm:$0xf]
  %v285 = vld [vmem:[%s1 + $0x210] sm:$0xf]
  %v286 = vld [vmem:[%s1 + $0x214] sm:$0xf]
  %v287 = vld [vmem:[%s1 + $0x218] sm:$0xf]
  %v288 = vld [vmem:[%s1 + $0x21c] sm:$0xf]
  %v289 = vld [vmem:[%s1 + $0x220] sm:$0xf]
  %v290 = vld [vmem:[%s1 + $0x224] sm:$0xf]
  %v291 = vld [vmem:[%s1 + $0x228] sm:$0xf]
  %v292 = vld [vmem:[%s1 + $0x22c] sm:$0xf]
  %v293 = vld [vmem:[%s1 + $0x230] sm:$0xf]
  %v294 = vld [vmem:[%s1 + $0x234] sm:$0xf]
  %v295 = vld [vmem:[%s1 + $0x238] sm:$0xf]
  %v296 = vld [vmem:[%s1 + $0x23c] sm:$0xf]
  %v297 = vld [vmem:[%s2] sm:$0x1]
  %v299 = vlaneseq
  %v300 = vshrl.u32 %v299, 7
  %v301 = vsub.s32 0, %v300
  %v302 = vrot.slane %v297, %v301
  %v324 = vunpack.c.l.b16 %v133
  %v325 = vunpack.c.h.b16 %v133
  %v326 = vunpack.c.l.b16 %v134
  %v327 = vunpack.c.h.b16 %v134
  %v328 = vunpack.c.l.b16 %v135
  %v329 = vunpack.c.h.b16 %v135
  %v330 = vunpack.c.l.b16 %v136
  %v331 = vunpack.c.h.b16 %v136
  %v332 = vunpack.c.l.b16 %v137
  %v333 = vunpack.c.l.b16 %v138
  %v334 = vunpack.c.h.b16 %v138
  %v335 = vunpack.c.l.b16 %v139
  %v336 = vunpack.c.h.b16 %v139
  %v337 = vunpack.c.l.b16 %v140
  %v338 = vunpack.c.h.b16 %v140
  %v339 = vunpack.c.l.b16 %v141
  %v340 = vunpack.c.h.b16 %v141
  %v341 = vunpack.c.l.b16 %v142
  %v342 = vunpack.c.l.b16 %v143
  %v343 = vunpack.c.h.b16 %v143
  %v344 = vunpack.c.l.b16 %v144
  %v345 = vunpack.c.h.b16 %v144
  %v346 = vunpack.c.l.b16 %v145
  %v347 = vunpack.c.h.b16 %v145
  %v348 = vunpack.c.l.b16 %v146
  %v349 = vunpack.c.h.b16 %v146
  %v350 = vunpack.c.l.b16 %v147
  %v351 = vunpack.c.l.b16 %v148
  %v352 = vunpack.c.h.b16 %v148
  %v353 = vunpack.c.l.b16 %v149
  %v354 = vunpack.c.h.b16 %v149
  %v355 = vunpack.c.l.b16 %v150
  %v356 = vunpack.c.h.b16 %v150
  %v357 = vunpack.c.l.b16 %v151
  %v358 = vunpack.c.h.b16 %v151
  %v359 = vunpack.c.l.b16 %v152
  %v360 = vpack.c.b16 %v333, %v324
  %v361 = vpack.c.b16 %v334, %v325
  %v362 = vpack.c.b16 %v335, %v326
  %v363 = vpack.c.b16 %v336, %v327
  %v364 = vpack.c.b16 %v337, %v328
  %v365 = vpack.c.b16 %v338, %v329
  %v366 = vpack.c.b16 %v339, %v330
  %v367 = vpack.c.b16 %v340, %v331
  %v368 = vpack.c.b16 %v341, %v332
  %v369 = vpack.c.b16 %v351, %v342
  %v370 = vpack.c.b16 %v352, %v343
  %v371 = vpack.c.b16 %v353, %v344
  %v372 = vpack.c.b16 %v354, %v345
  %v373 = vpack.c.b16 %v355, %v346
  %v374 = vpack.c.b16 %v356, %v347
  %v375 = vpack.c.b16 %v357, %v348
  %v376 = vpack.c.b16 %v358, %v349
  %v377 = vpack.c.b16 %v359, %v350
  %v540 = vunpack.c.l.b16 %v153
  %v541 = vunpack.c.l.b16 %v154
  %v542 = vunpack.c.l.b16 %v155
  %v543 = vunpack.c.l.b16 %v156
  %v544 = vunpack.c.l.b16 %v157
  %v545 = vunpack.c.l.b16 %v158
  %v546 = vunpack.c.l.b16 %v159
  %v547 = vunpack.c.l.b16 %v160
  %v548 = vunpack.c.l.b16 %v161
  %v549 = vunpack.c.l.b16 %v162
  %v550 = vunpack.c.l.b16 %v163
  %v551 = vunpack.c.l.b16 %v164
  %v552 = vunpack.c.l.b16 %v165
  %v553 = vunpack.c.l.b16 %v166
  %v554 = vunpack.c.l.b16 %v167
  %v555 = vunpack.c.l.b16 %v168
  %v556 = vunpack.c.l.b16 %v169
  %v557 = vunpack.c.l.b16 %v170
  %v558 = vunpack.c.l.b16 %v171
  %v559 = vunpack.c.l.b16 %v172
  %v560 = vunpack.c.l.b16 %v173
  %v561 = vunpack.c.l.b16 %v174
  %v562 = vunpack.c.l.b16 %v175
  %v563 = vunpack.c.l.b16 %v176
  %v564 = vunpack.c.l.b16 %v177
  %v565 = vunpack.c.l.b16 %v178
  %v566 = vunpack.c.l.b16 %v179
  %v567 = vunpack.c.l.b16 %v180
  %v568 = vunpack.c.l.b16 %v181
  %v569 = vunpack.c.l.b16 %v182
  %v570 = vunpack.c.l.b16 %v183
  %v571 = vunpack.c.l.b16 %v184
  %v572 = vunpack.c.l.b16 %v185
  %v573 = vunpack.c.l.b16 %v186
  %v574 = vunpack.c.l.b16 %v187
  %v575 = vunpack.c.l.b16 %v188
  %v576 = vunpack.c.l.b16 %v189
  %v577 = vunpack.c.l.b16 %v190
  %v578 = vunpack.c.l.b16 %v191
  %v579 = vunpack.c.l.b16 %v192
  %v580 = vunpack.c.l.b16 %v193
  %v581 = vunpack.c.l.b16 %v194
  %v582 = vunpack.c.l.b16 %v195
  %v583 = vunpack.c.l.b16 %v196
  %v584 = vunpack.c.l.b16 %v197
  %v585 = vunpack.c.l.b16 %v198
  %v586 = vunpack.c.l.b16 %v199
  %v587 = vunpack.c.l.b16 %v200
  %v588 = vunpack.c.l.b16 %v201
  %v589 = vunpack.c.l.b16 %v202
  %v590 = vunpack.c.l.b16 %v203
  %v591 = vunpack.c.l.b16 %v204
  %v592 = vunpack.c.l.b16 %v205
  %v593 = vunpack.c.l.b16 %v206
  %v594 = vunpack.c.l.b16 %v207
  %v595 = vunpack.c.l.b16 %v208
  %v596 = vunpack.c.l.b16 %v209
  %v597 = vunpack.c.l.b16 %v210
  %v598 = vunpack.c.l.b16 %v211
  %v599 = vunpack.c.l.b16 %v212
  %v600 = vunpack.c.l.b16 %v213
  %v601 = vunpack.c.l.b16 %v214
  %v602 = vunpack.c.l.b16 %v215
  %v603 = vunpack.c.l.b16 %v216
  %v604 = vunpack.c.l.b16 %v217
  %v605 = vunpack.c.l.b16 %v218
  %v606 = vunpack.c.l.b16 %v219
  %v607 = vunpack.c.l.b16 %v220
  %v608 = vunpack.c.l.b16 %v221
  %v609 = vunpack.c.l.b16 %v222
  %v610 = vunpack.c.l.b16 %v223
  %v611 = vunpack.c.l.b16 %v224
  %v612 = vunpack.c.l.b16 %v225
  %v613 = vunpack.c.l.b16 %v226
  %v614 = vunpack.c.l.b16 %v227
  %v615 = vunpack.c.l.b16 %v228
  %v616 = vunpack.c.l.b16 %v229
  %v617 = vunpack.c.l.b16 %v230
  %v618 = vunpack.c.l.b16 %v231
  %v619 = vunpack.c.l.b16 %v232
  %v620 = vunpack.c.l.b16 %v233
  %v621 = vunpack.c.l.b16 %v234
  %v622 = vunpack.c.l.b16 %v235
  %v623 = vunpack.c.l.b16 %v236
  %v624 = vunpack.c.l.b16 %v237
  %v625 = vunpack.c.l.b16 %v238
  %v626 = vunpack.c.l.b16 %v239
  %v627 = vunpack.c.l.b16 %v240
  %v628 = vunpack.c.l.b16 %v241
  %v629 = vunpack.c.l.b16 %v242
  %v630 = vunpack.c.l.b16 %v243
  %v631 = vunpack.c.l.b16 %v244
  %v632 = vunpack.c.l.b16 %v245
  %v633 = vunpack.c.l.b16 %v246
  %v634 = vunpack.c.l.b16 %v247
  %v635 = vunpack.c.l.b16 %v248
  %v636 = vunpack.c.l.b16 %v249
  %v637 = vunpack.c.l.b16 %v250
  %v638 = vunpack.c.l.b16 %v251
  %v639 = vunpack.c.l.b16 %v252
  %v640 = vunpack.c.l.b16 %v253
  %v641 = vunpack.c.l.b16 %v254
  %v642 = vunpack.c.l.b16 %v255
  %v643 = vunpack.c.l.b16 %v256
  %v644 = vunpack.c.l.b16 %v257
  %v645 = vunpack.c.l.b16 %v258
  %v646 = vunpack.c.l.b16 %v259
  %v647 = vunpack.c.l.b16 %v260
  %v648 = vunpack.c.l.b16 %v261
  %v649 = vunpack.c.l.b16 %v262
  %v650 = vunpack.c.l.b16 %v263
  %v651 = vunpack.c.l.b16 %v264
  %v652 = vunpack.c.l.b16 %v265
  %v653 = vunpack.c.l.b16 %v266
  %v654 = vunpack.c.l.b16 %v267
  %v655 = vunpack.c.l.b16 %v268
  %v656 = vunpack.c.l.b16 %v269
  %v657 = vunpack.c.l.b16 %v270
  %v658 = vunpack.c.l.b16 %v271
  %v659 = vunpack.c.l.b16 %v272
  %v660 = vunpack.c.l.b16 %v273
  %v661 = vunpack.c.l.b16 %v274
  %v662 = vunpack.c.l.b16 %v275
  %v663 = vunpack.c.l.b16 %v276
  %v664 = vunpack.c.l.b16 %v277
  %v665 = vunpack.c.l.b16 %v278
  %v666 = vunpack.c.l.b16 %v279
  %v667 = vunpack.c.l.b16 %v280
  %v668 = vunpack.c.l.b16 %v281
  %v669 = vunpack.c.l.b16 %v282
  %v670 = vunpack.c.l.b16 %v283
  %v671 = vunpack.c.l.b16 %v284
  %v672 = vunpack.c.l.b16 %v285
  %v673 = vunpack.c.l.b16 %v286
  %v674 = vunpack.c.l.b16 %v287
  %v675 = vunpack.c.l.b16 %v288
  %v676 = vunpack.c.l.b16 %v289
  %v677 = vunpack.c.l.b16 %v290
  %v678 = vunpack.c.l.b16 %v291
  %v679 = vunpack.c.l.b16 %v292
  %v680 = vunpack.c.l.b16 %v293
  %v681 = vunpack.c.l.b16 %v294
  %v682 = vunpack.c.l.b16 %v295
  %v683 = vunpack.c.l.b16 %v296
  %v684 = vpack.c.b16 %v541, %v540
  %v685 = vpack.c.b16 %v543, %v542
  %v686 = vpack.c.b16 %v545, %v544
  %v687 = vpack.c.b16 %v547, %v546
  %v688 = vpack.c.b16 %v549, %v548
  %v689 = vpack.c.b16 %v551, %v550
  %v690 = vpack.c.b16 %v553, %v552
  %v691 = vpack.c.b16 %v555, %v554
  %v692 = vpack.c.b16 %v557, %v556
  %v693 = vpack.c.b16 %v559, %v558
  %v694 = vpack.c.b16 %v561, %v560
  %v695 = vpack.c.b16 %v563, %v562
  %v696 = vpack.c.b16 %v565, %v564
  %v697 = vpack.c.b16 %v567, %v566
  %v698 = vpack.c.b16 %v569, %v568
  %v699 = vpack.c.b16 %v571, %v570
  %v700 = vpack.c.b16 %v573, %v572
  %v701 = vpack.c.b16 %v575, %v574
  %v702 = vpack.c.b16 %v577, %v576
  %v703 = vpack.c.b16 %v579, %v578
  %v704 = vpack.c.b16 %v581, %v580
  %v705 = vpack.c.b16 %v583, %v582
  %v706 = vpack.c.b16 %v585, %v584
  %v707 = vpack.c.b16 %v587, %v586
  %v708 = vpack.c.b16 %v589, %v588
  %v709 = vpack.c.b16 %v591, %v590
  %v710 = vpack.c.b16 %v593, %v592
  %v711 = vpack.c.b16 %v595, %v594
  %v712 = vpack.c.b16 %v597, %v596
  %v713 = vpack.c.b16 %v599, %v598
  %v714 = vpack.c.b16 %v601, %v600
  %v715 = vpack.c.b16 %v603, %v602
  %v716 = vpack.c.b16 %v605, %v604
  %v717 = vpack.c.b16 %v607, %v606
  %v718 = vpack.c.b16 %v609, %v608
  %v719 = vpack.c.b16 %v611, %v610
  %v720 = vpack.c.b16 %v613, %v612
  %v721 = vpack.c.b16 %v615, %v614
  %v722 = vpack.c.b16 %v617, %v616
  %v723 = vpack.c.b16 %v619, %v618
  %v724 = vpack.c.b16 %v621, %v620
  %v725 = vpack.c.b16 %v623, %v622
  %v726 = vpack.c.b16 %v625, %v624
  %v727 = vpack.c.b16 %v627, %v626
  %v728 = vpack.c.b16 %v629, %v628
  %v729 = vpack.c.b16 %v631, %v630
  %v730 = vpack.c.b16 %v633, %v632
  %v731 = vpack.c.b16 %v635, %v634
  %v732 = vpack.c.b16 %v637, %v636
  %v733 = vpack.c.b16 %v639, %v638
  %v734 = vpack.c.b16 %v641, %v640
  %v735 = vpack.c.b16 %v643, %v642
  %v736 = vpack.c.b16 %v645, %v644
  %v737 = vpack.c.b16 %v647, %v646
  %v738 = vpack.c.b16 %v649, %v648
  %v739 = vpack.c.b16 %v651, %v650
  %v740 = vpack.c.b16 %v653, %v652
  %v741 = vpack.c.b16 %v655, %v654
  %v742 = vpack.c.b16 %v657, %v656
  %v743 = vpack.c.b16 %v659, %v658
  %v744 = vpack.c.b16 %v661, %v660
  %v745 = vpack.c.b16 %v663, %v662
  %v746 = vpack.c.b16 %v665, %v664
  %v747 = vpack.c.b16 %v667, %v666
  %v748 = vpack.c.b16 %v669, %v668
  %v749 = vpack.c.b16 %v671, %v670
  %v750 = vpack.c.b16 %v673, %v672
  %v751 = vpack.c.b16 %v675, %v674
  %v752 = vpack.c.b16 %v677, %v676
  %v753 = vpack.c.b16 %v679, %v678
  %v754 = vpack.c.b16 %v681, %v680
  %v755 = vpack.c.b16 %v683, %v682
  %828 = vmatprep.subr.bf16.mxu0 0
  %829 = vmatpush1.bf16.msra.mxu0 %v691
  %830 = vmatprep.subr.bf16.mxu0 0
  %831 = vmatpush1.bf16.msra.mxu0 %v690
  %832 = vmatprep.subr.bf16.mxu0 0
  %833 = vmatpush1.bf16.msra.mxu0 %v689
  %834 = vmatprep.subr.bf16.mxu0 0
  %835 = vmatpush1.bf16.msra.mxu0 %v688
  %836 = vmatprep.subr.bf16.mxu0 0
  %837 = vmatpush1.bf16.msra.mxu0 %v687
  %838 = vmatprep.subr.bf16.mxu0 0
  %839 = vmatpush1.bf16.msra.mxu0 %v686
  %840 = vmatprep.subr.bf16.mxu0 0
  %841 = vmatpush1.bf16.msra.mxu0 %v685
  %842 = vmatprep.subr.bf16.mxu0 0
  %843 = vmatpush1.bf16.msra.mxu0 %v684
  %844 = vmatprep.subr.bf16.mxu0 0
  %845 = vmatpush2.bf16.msra.mxu0 %v699
  %846 = vmatprep.subr.bf16.mxu0 0
  %847 = vmatpush2.bf16.msra.mxu0 %v698
  %848 = vmatprep.subr.bf16.mxu0 0
  %849 = vmatpush2.bf16.msra.mxu0 %v697
  %850 = vmatprep.subr.bf16.mxu0 0
  %851 = vmatpush2.bf16.msra.mxu0 %v696
  %852 = vmatprep.subr.bf16.mxu0 0
  %853 = vmatpush2.bf16.msra.mxu0 %v695
  %854 = vmatprep.subr.bf16.mxu0 0
  %855 = vmatpush2.bf16.msra.mxu0 %v694
  %856 = vmatprep.subr.bf16.mxu0 0
  %857 = vmatpush2.bf16.msra.mxu0 %v693
  %858 = vmatprep.subr.bf16.mxu0 0
  %859 = vmatpush2.bf16.msra.mxu0 %v692
  %860 = vmatprep.mubr.bf16.mxu0 %v361
  %861 = vmatmul.mubr.bf16.gmra.mxu0 %v360
  %v862 = vpop.f32.mrf.mxu0
  %v863 = vadd.f32 %v302, %v862
  %v864 = vpop.f32.mrf.mxu0
  %v865 = vpop.f32.mrf.mxu0
  %v866 = vadd.f32 %v302, %v865
  %v867 = vpop.f32.mrf.mxu0
  %868 = vmatprep.mubr.bf16.mxu0 %v370
  %869 = vmatmul.mubr.bf16.gmra.mxu0 %v369
  %v870 = vpop.f32.mrf.mxu0
  %v871 = vadd.f32 %v302, %v870
  %v872 = vpop.f32.mrf.mxu0
  %v873 = vpop.f32.mrf.mxu0
  %v874 = vadd.f32 %v302, %v873
  %v875 = vpop.f32.mrf.mxu0
  %876 = vdwg.mxu0
  %877 = vmatprep.subr.bf16.mxu0 0
  %878 = vmatpush1.bf16.msra.mxu0 %v707
  %879 = vmatprep.subr.bf16.mxu0 0
  %880 = vmatpush1.bf16.msra.mxu0 %v706
  %881 = vmatprep.subr.bf16.mxu0 0
  %882 = vmatpush1.bf16.msra.mxu0 %v705
  %883 = vmatprep.subr.bf16.mxu0 0
  %884 = vmatpush1.bf16.msra.mxu0 %v704
  %885 = vmatprep.subr.bf16.mxu0 0
  %886 = vmatpush1.bf16.msra.mxu0 %v703
  %887 = vmatprep.subr.bf16.mxu0 0
  %888 = vmatpush1.bf16.msra.mxu0 %v702
  %889 = vmatprep.subr.bf16.mxu0 0
  %890 = vmatpush1.bf16.msra.mxu0 %v701
  %891 = vmatprep.subr.bf16.mxu0 0
  %892 = vmatpush1.bf16.msra.mxu0 %v700
  %893 = vmatprep.subr.bf16.mxu0 0
  %894 = vmatpush2.bf16.msra.mxu0 %v715
  %895 = vmatprep.subr.bf16.mxu0 0
  %896 = vmatpush2.bf16.msra.mxu0 %v714
  %897 = vmatprep.subr.bf16.mxu0 0
  %898 = vmatpush2.bf16.msra.mxu0 %v713
  %899 = vmatprep.subr.bf16.mxu0 0
  %900 = vmatpush2.bf16.msra.mxu0 %v712
  %901 = vmatprep.subr.bf16.mxu0 0
  %902 = vmatpush2.bf16.msra.mxu0 %v711
  %903 = vmatprep.subr.bf16.mxu0 0
  %904 = vmatpush2.bf16.msra.mxu0 %v710
  %905 = vmatprep.subr.bf16.mxu0 0
  %906 = vmatpush2.bf16.msra.mxu0 %v709
  %907 = vmatprep.subr.bf16.mxu0 0
  %908 = vmatpush2.bf16.msra.mxu0 %v708
  %909 = vmatprep.mubr.bf16.mxu0 %v363
  %910 = vmatmul.mubr.bf16.gmra.mxu0 %v362
  %v911 = vpop.f32.mrf.mxu0
  %v912 = vadd.f32 %v863, %v911
  %v913 = vpop.f32.mrf.mxu0
  %v914 = vpop.f32.mrf.mxu0
  %v915 = vadd.f32 %v866, %v914
  %v916 = vpop.f32.mrf.mxu0
  %917 = vmatprep.mubr.bf16.mxu0 %v372
  %918 = vmatmul.mubr.bf16.gmra.mxu0 %v371
  %v919 = vpop.f32.mrf.mxu0
  %v920 = vadd.f32 %v871, %v919
  %v921 = vpop.f32.mrf.mxu0
  %v922 = vpop.f32.mrf.mxu0
  %v923 = vadd.f32 %v874, %v922
  %v924 = vpop.f32.mrf.mxu0
  %925 = vdwg.mxu0
  %926 = vmatprep.subr.bf16.mxu0 0
  %927 = vmatpush1.bf16.msra.mxu0 %v723
  %928 = vmatprep.subr.bf16.mxu0 0
  %929 = vmatpush1.bf16.msra.mxu0 %v722
  %930 = vmatprep.subr.bf16.mxu0 0
  %931 = vmatpush1.bf16.msra.mxu0 %v721
  %932 = vmatprep.subr.bf16.mxu0 0
  %933 = vmatpush1.bf16.msra.mxu0 %v720
  %934 = vmatprep.subr.bf16.mxu0 0
  %935 = vmatpush1.bf16.msra.mxu0 %v719
  %936 = vmatprep.subr.bf16.mxu0 0
  %937 = vmatpush1.bf16.msra.mxu0 %v718
  %938 = vmatprep.subr.bf16.mxu0 0
  %939 = vmatpush1.bf16.msra.mxu0 %v717
  %940 = vmatprep.subr.bf16.mxu0 0
  %941 = vmatpush1.bf16.msra.mxu0 %v716
  %942 = vmatprep.subr.bf16.mxu0 0
  %943 = vmatpush2.bf16.msra.mxu0 %v731
  %944 = vmatprep.subr.bf16.mxu0 0
  %945 = vmatpush2.bf16.msra.mxu0 %v730
  %946 = vmatprep.subr.bf16.mxu0 0
  %947 = vmatpush2.bf16.msra.mxu0 %v729
  %948 = vmatprep.subr.bf16.mxu0 0
  %949 = vmatpush2.bf16.msra.mxu0 %v728
  %950 = vmatprep.subr.bf16.mxu0 0
  %951 = vmatpush2.bf16.msra.mxu0 %v727
  %952 = vmatprep.subr.bf16.mxu0 0
  %953 = vmatpush2.bf16.msra.mxu0 %v726
  %954 = vmatprep.subr.bf16.mxu0 0
  %955 = vmatpush2.bf16.msra.mxu0 %v725
  %956 = vmatprep.subr.bf16.mxu0 0
  %957 = vmatpush2.bf16.msra.mxu0 %v724
  %958 = vmatprep.mubr.bf16.mxu0 %v365
  %959 = vmatmul.mubr.bf16.gmra.mxu0 %v364
  %v960 = vpop.f32.mrf.mxu0
  %v961 = vadd.f32 %v912, %v960
  %v962 = vpop.f32.mrf.mxu0
  %v963 = vpop.f32.mrf.mxu0
  %v964 = vadd.f32 %v915, %v963
  %v965 = vpop.f32.mrf.mxu0
  %966 = vmatprep.mubr.bf16.mxu0 %v374
  %967 = vmatmul.mubr.bf16.gmra.mxu0 %v373
  %v968 = vpop.f32.mrf.mxu0
  %v969 = vadd.f32 %v920, %v968
  %v970 = vpop.f32.mrf.mxu0
  %v971 = vpop.f32.mrf.mxu0
  %v972 = vadd.f32 %v923, %v971
  %v973 = vpop.f32.mrf.mxu0
  %974 = vdwg.mxu0
  %975 = vmatprep.subr.bf16.mxu0 0
  %976 = vmatpush1.bf16.msra.mxu0 %v739
  %977 = vmatprep.subr.bf16.mxu0 0
  %978 = vmatpush1.bf16.msra.mxu0 %v738
  %979 = vmatprep.subr.bf16.mxu0 0
  %980 = vmatpush1.bf16.msra.mxu0 %v737
  %981 = vmatprep.subr.bf16.mxu0 0
  %982 = vmatpush1.bf16.msra.mxu0 %v736
  %983 = vmatprep.subr.bf16.mxu0 0
  %984 = vmatpush1.bf16.msra.mxu0 %v735
  %985 = vmatprep.subr.bf16.mxu0 0
  %986 = vmatpush1.bf16.msra.mxu0 %v734
  %987 = vmatprep.subr.bf16.mxu0 0
  %988 = vmatpush1.bf16.msra.mxu0 %v733
  %989 = vmatprep.subr.bf16.mxu0 0
  %990 = vmatpush1.bf16.msra.mxu0 %v732
  %991 = vmatprep.subr.bf16.mxu0 0
  %992 = vmatpush2.bf16.msra.mxu0 %v747
  %993 = vmatprep.subr.bf16.mxu0 0
  %994 = vmatpush2.bf16.msra.mxu0 %v746
  %995 = vmatprep.subr.bf16.mxu0 0
  %996 = vmatpush2.bf16.msra.mxu0 %v745
  %997 = vmatprep.subr.bf16.mxu0 0
  %998 = vmatpush2.bf16.msra.mxu0 %v744
  %999 = vmatprep.subr.bf16.mxu0 0
  %1000 = vmatpush2.bf16.msra.mxu0 %v743
  %1001 = vmatprep.subr.bf16.mxu0 0
  %1002 = vmatpush2.bf16.msra.mxu0 %v742
  %1003 = vmatprep.subr.bf16.mxu0 0
  %1004 = vmatpush2.bf16.msra.mxu0 %v741
  %1005 = vmatprep.subr.bf16.mxu0 0
  %1006 = vmatpush2.bf16.msra.mxu0 %v740
  %1007 = vmatprep.mubr.bf16.mxu0 %v367
  %1008 = vmatmul.mubr.bf16.gmra.mxu0 %v366
  %v1009 = vpop.f32.mrf.mxu0
  %v1010 = vadd.f32 %v961, %v1009
  %v1011 = vpop.f32.mrf.mxu0
  %v1012 = vpop.f32.mrf.mxu0
  %v1013 = vadd.f32 %v964, %v1012
  %v1014 = vpop.f32.mrf.mxu0
  %1015 = vmatprep.mubr.bf16.mxu0 %v376
  %1016 = vmatmul.mubr.bf16.gmra.mxu0 %v375
  %v1017 = vpop.f32.mrf.mxu0
  %v1018 = vadd.f32 %v969, %v1017
  %v1019 = vpop.f32.mrf.mxu0
  %v1020 = vpop.f32.mrf.mxu0
  %v1021 = vadd.f32 %v972, %v1020
  %v1022 = vpop.f32.mrf.mxu0
  %1023 = vdwg.mxu0
  %1024 = vmatprep.subr.bf16.mxu0 0
  %1025 = vmatpush1.bf16.msra.mxu0 %v755
  %1026 = vmatprep.subr.bf16.mxu0 0
  %1027 = vmatpush1.bf16.msra.mxu0 %v754
  %1028 = vmatprep.subr.bf16.mxu0 0
  %1029 = vmatpush1.bf16.msra.mxu0 %v753
  %1030 = vmatprep.subr.bf16.mxu0 0
  %1031 = vmatpush1.bf16.msra.mxu0 %v752
  %1032 = vmatprep.subr.bf16.mxu0 0
  %1033 = vmatpush1.bf16.msra.mxu0 %v751
  %1034 = vmatprep.subr.bf16.mxu0 0
  %1035 = vmatpush1.bf16.msra.mxu0 %v750
  %1036 = vmatprep.subr.bf16.mxu0 0
  %1037 = vmatpush1.bf16.msra.mxu0 %v749
  %1038 = vmatprep.subr.bf16.mxu0 0
  %1039 = vmatpush1.bf16.msra.mxu0 %v748
  %1040 = vmatprep.subr.bf16.mxu0 0
  %1041 = vmatpush2.bf16.msra.mxu0 0
  %1042 = vmatprep.subr.bf16.mxu0 0
  %1043 = vmatpush2.bf16.msra.mxu0 0
  %1044 = vmatprep.subr.bf16.mxu0 0
  %1045 = vmatpush2.bf16.msra.mxu0 0
  %1046 = vmatprep.subr.bf16.mxu0 0
  %1047 = vmatpush2.bf16.msra.mxu0 0
  %1048 = vmatprep.subr.bf16.mxu0 0
  %1049 = vmatpush2.bf16.msra.mxu0 0
  %1050 = vmatprep.subr.bf16.mxu0 0
  %1051 = vmatpush2.bf16.msra.mxu0 0
  %1052 = vmatprep.subr.bf16.mxu0 0
  %1053 = vmatpush2.bf16.msra.mxu0 0
  %1054 = vmatprep.subr.bf16.mxu0 0
  %1055 = vmatpush2.bf16.msra.mxu0 0
  %1056 = vmatprep.mubr.bf16.mxu0 0
  %1057 = vmatmul.mubr.bf16.gmra.mxu0 %v368
  %v1058 = vpop.f32.mrf.mxu0
  %v1059 = vadd.f32 %v1010, %v1058
  %v1060 = vpop.f32.mrf.mxu0
  %v1061 = vpop.f32.mrf.mxu0
  %v1062 = vadd.f32 %v1013, %v1061
  %v1063 = vpop.f32.mrf.mxu0
  %1064 = vmatprep.mubr.bf16.mxu0 0
  %1065 = vmatmul.mubr.bf16.gmra.mxu0 %v377
  %v1066 = vpop.f32.mrf.mxu0
  %v1067 = vadd.f32 %v1018, %v1066
  %v1068 = vpop.f32.mrf.mxu0
  %v1069 = vpop.f32.mrf.mxu0
  %v1070 = vadd.f32 %v1021, %v1069
  %v1071 = vpop.f32.mrf.mxu0
  %1072 = vdwg.mxu0
  %v1073 = vadd.f32 %v1059, %v119
  %v1074 = vadd.f32 %v1062, %v122
  %v1075 = vadd.f32 %v1067, %v127
  %v1076 = vadd.f32 %v1070, %v130
  %v1077 = vmax.f32 %v1073, 0.0
  %v1078 = vmax.f32 %v1074, 0.0
  %v1079 = vmax.f32 %v1075, 0.0
  %v1080 = vmax.f32 %v1076, 0.0
  %v1081 = vpack.c.bf16 %v1078, %v1077
  %v1082 = vpack.c.bf16 %v1080, %v1079
  %v1085 = vunpack.c.l.b16 %v1081
  %v1086 = vunpack.c.h.b16 %v1081
  %v1087 = vunpack.c.l.b16 %v1082
  %v1088 = vunpack.c.h.b16 %v1082
  %v1089 = vpack.c.b16 %v1085, %v1085
  %v1090 = vpack.c.b16 %v1086, %v1086
  %v1091 = vpack.c.b16 %v1087, %v1087
  %v1092 = vpack.c.b16 %v1088, %v1088
  %1097 = vst [vmem:[%s6] sm:$0xf] %v1089
  %1098 = vst [vmem:[%s6 + $0x4] sm:$0xf] %v1090
  %1099 = vst [vmem:[%s6 + $0x8] sm:$0xf] %v1091
  %1100 = vst [vmem:[%s6 + $0xc] sm:$0xf] %v1092
  // Predicated region
  $region26: #{resnet_backbone_forward.17} parent=0 // pred_check
    _
  $region27: #{resnet_backbone_forward.17} parent=0 // pred_check_branch
    %1102 = sbr.rel (0) target = $region29
  $region28: #{resnet_backbone_forward.17} parent=0 // pred_region
    _
  $region29: #{resnet_backbone_forward.17} parent=0 // pred_fallthru
    _
  // Predicated region
  $region30: #{resnet_backbone_forward.17} parent=0 // pred_check
    _
  $region31: #{resnet_backbone_forward.17} parent=0 // pred_check_branch
    %1104 = sbr.rel (0) target = $region33
  $region32: #{resnet_backbone_forward.17} parent=0 // pred_region
    _
  $region33: #{resnet_backbone_forward.17} parent=0 // pred_fallthru
    _

// kernel: resnet_backbone_forward.19
$region0: #{resnet_backbone_forward.19}
  #allocation0 [shape = 'u32[]', space=smem, size = 0x4, offset = 0x4, fixed_abs, tag = 'smem constant byte address 0x4 - core index']
  #allocation1 [shape = 'u32[144,128]{1,0:T(1,128)}', space=vmem, size = 0x12000, scoped, tag = 'internal scratch']
  %s0 = inlined_call_operand.vmem [shape: bf16[32,1152], index: 0, kind: input, shape index: {}]
  %s1 = inlined_call_operand.vmem [shape: bf16[1152,128], index: 1, kind: input, shape index: {}]
  %s2 = inlined_call_operand.vmem [shape: f32[1,128], index: 2, kind: input, shape index: {}]
  %s3 = inlined_call_operand.vmem [shape: bf16[32,128], index: 3, kind: input, shape index: {}]
  %s4 = inlined_call_operand.hbm [shape: f32[2,128], index: 4, kind: output, shape index: {}]
  %s5 = sld [smem:[#allocation0]]
  $region26: #{resnet_backbone_forward.19} parent=0
    _
  %s7 = ssub.s32 1, %s5
  %s8 = scalar_select 0, %s7, %s5
  $region1: #{resnet_backbone_forward.19} parent=0
    #allocation2 [shape = 'u8[1024]{0}', space=vmem, size = 0x400, scoped, tag = 'output window, operand 0, single buffered']
    #allocation3 [shape = 's32[1]{0}', space=sflag, size = 0x4, scoped, tag = 'scoped memory for resnet_backbone_forward.19']
    %9 = vsyncpa [#allocation3], 0
    // Predicated region
    $region2: #{resnet_backbone_forward.19} parent=1 // pred_check
      _
    $region3: #{resnet_backbone_forward.19} parent=1 // pred_check_branch
      %11 = sbr.rel (0) target = $region5
    $region4: #{resnet_backbone_forward.19} parent=1 // pred_region
      _
    $region5: #{resnet_backbone_forward.19} parent=1 // pred_fallthru
      _
    // Predicated region
    $region6: #{resnet_backbone_forward.19} parent=1 // pred_check
      _
    $region7: #{resnet_backbone_forward.19} parent=1 // pred_check_branch
      %13 = sbr.rel (0) target = $region9
    $region8: #{resnet_backbone_forward.19} parent=1 // pred_region
      _
    $region9: #{resnet_backbone_forward.19} parent=1 // pred_fallthru
      _
    // Predicated region
    $region10: #{resnet_backbone_forward.19} parent=1 // pred_check
      _
    $region11: #{resnet_backbone_forward.19} parent=1 // pred_check_branch
      %15 = sbr.rel (0) target = $region13
    $region12: #{resnet_backbone_forward.19} parent=1 // pred_region
      _
    $region13: #{resnet_backbone_forward.19} parent=1 // pred_fallthru
      _
    // Predicated region
    $region14: #{resnet_backbone_forward.19} parent=1 // pred_check
      _
    $region15: #{resnet_backbone_forward.19} parent=1 // pred_check_branch
      %17 = sbr.rel (0) target = $region17
    $region16: #{resnet_backbone_forward.19} parent=1 // pred_region
      _
    $region17: #{resnet_backbone_forward.19} parent=1 // pred_fallthru
      _
    %v19 = vld [vmem:[%s3] sm:$0xf]
    %v20 = vld [vmem:[%s3 + $0x4] sm:$0xf]
    %v21 = vld [vmem:[%s3 + $0x8] sm:$0xf]
    %v22 = vld [vmem:[%s3 + $0xc] sm:$0xf]
    %v23 = vunpack.c.l.bf16 %v19
    %v24 = vunpack.c.l.bf16 %v20
    %v25 = vunpack.c.l.bf16 %v21
    %v26 = vunpack.c.l.bf16 %v22
    %v27 = vld [vmem:[%s0] sm:$0xff]
    %v28 = vld [vmem:[%s0 + $0x8] sm:$0xff]
    %v29 = vld [vmem:[%s0 + $0x10] sm:$0xff]
    %v30 = vld [vmem:[%s0 + $0x18] sm:$0xff]
    %v31 = vld [vmem:[%s0 + $0x20] sm:$0xf]
    %v32 = vld [vmem:[%s0 + $0x24] sm:$0xff]
    %v33 = vld [vmem:[%s0 + $0x2c] sm:$0xff]
    %v34 = vld [vmem:[%s0 + $0x34] sm:$0xff]
    %v35 = vld [vmem:[%s0 + $0x3c] sm:$0xff]
    %v36 = vld [vmem:[%s0 + $0x44] sm:$0xf]
    %v37 = vld [vmem:[%s0 + $0x48] sm:$0xff]
    %v38 = vld [vmem:[%s0 + $0x50] sm:$0xff]
    %v39 = vld [vmem:[%s0 + $0x58] sm:$0xff]
    %v40 = vld [vmem:[%s0 + $0x60] sm:$0xff]
    %v41 = vld [vmem:[%s0 + $0x68] sm:$0xf]
    %v42 = vld [vmem:[%s0 + $0x6c] sm:$0xff]
    %v43 = vld [vmem:[%s0 + $0x74] sm:$0xff]
    %v44 = vld [vmem:[%s0 + $0x7c] sm:$0xff]
    %v45 = vld [vmem:[%s0 + $0x84] sm:$0xff]
    %v46 = vld [vmem:[%s0 + $0x8c] sm:$0xf]
    %v47 = vld [vmem:[%s1] sm:$0xf]
    %v48 = vld [vmem:[%s1 + $0x4] sm:$0xf]
    %v49 = vld [vmem:[%s1 + $0x8] sm:$0xf]
    %v50 = vld [vmem:[%s1 + $0xc] sm:$0xf]
    %v51 = vld [vmem:[%s1 + $0x10] sm:$0xf]
    %v52 = vld [vmem:[%s1 + $0x14] sm:$0xf]
    %v53 = vld [vmem:[%s1 + $0x18] sm:$0xf]
    %v54 = vld [vmem:[%s1 + $0x1c] sm:$0xf]
    %v55 = vld [vmem:[%s1 + $0x20] sm:$0xf]
    %v56 = vld [vmem:[%s1 + $0x24] sm:$0xf]
    %v57 = vld [vmem:[%s1 + $0x28] sm:$0xf]
    %v58 = vld [vmem:[%s1 + $0x2c] sm:$0xf]
    %v59 = vld [vmem:[%s1 + $0x30] sm:$0xf]
    %v60 = vld [vmem:[%s1 + $0x34] sm:$0xf]
    %v61 = vld [vmem:[%s1 + $0x38] sm:$0xf]
    %v62 = vld [vmem:[%s1 + $0x3c] sm:$0xf]
    %v63 = vld [vmem:[%s1 + $0x40] sm:$0xf]
    %v64 = vld [vmem:[%s1 + $0x44] sm:$0xf]
    %v65 = vld [vmem:[%s1 + $0x48] sm:$0xf]
    %v66 = vld [vmem:[%s1 + $0x4c] sm:$0xf]
    %v67 = vld [vmem:[%s1 + $0x50] sm:$0xf]
    %v68 = vld [vmem:[%s1 + $0x54] sm:$0xf]
    %v69 = vld [vmem:[%s1 + $0x58] sm:$0xf]
    %v70 = vld [vmem:[%s1 + $0x5c] sm:$0xf]
    %v71 = vld [vmem:[%s1 + $0x60] sm:$0xf]
    %v72 = vld [vmem:[%s1 + $0x64] sm:$0xf]
    %v73 = vld [vmem:[%s1 + $0x68] sm:$0xf]
    %v74 = vld [vmem:[%s1 + $0x6c] sm:$0xf]
    %v75 = vld [vmem:[%s1 + $0x70] sm:$0xf]
    %v76 = vld [vmem:[%s1 + $0x74] sm:$0xf]
    %v77 = vld [vmem:[%s1 + $0x78] sm:$0xf]
    %v78 = vld [vmem:[%s1 + $0x7c] sm:$0xf]
    %v79 = vld [vmem:[%s1 + $0x80] sm:$0xf]
    %v80 = vld [vmem:[%s1 + $0x84] sm:$0xf]
    %v81 = vld [vmem:[%s1 + $0x88] sm:$0xf]
    %v82 = vld [vmem:[%s1 + $0x8c] sm:$0xf]
    %v83 = vld [vmem:[%s1 + $0x90] sm:$0xf]
    %v84 = vld [vmem:[%s1 + $0x94] sm:$0xf]
    %v85 = vld [vmem:[%s1 + $0x98] sm:$0xf]
    %v86 = vld [vmem:[%s1 + $0x9c] sm:$0xf]
    %v87 = vld [vmem:[%s1 + $0xa0] sm:$0xf]
    %v88 = vld [vmem:[%s1 + $0xa4] sm:$0xf]
    %v89 = vld [vmem:[%s1 + $0xa8] sm:$0xf]
    %v90 = vld [vmem:[%s1 + $0xac] sm:$0xf]
    %v91 = vld [vmem:[%s1 + $0xb0] sm:$0xf]
    %v92 = vld [vmem:[%s1 + $0xb4] sm:$0xf]
    %v93 = vld [vmem:[%s1 + $0xb8] sm:$0xf]
    %v94 = vld [vmem:[%s1 + $0xbc] sm:$0xf]
    %v95 = vld [vmem:[%s1 + $0xc0] sm:$0xf]
    %v96 = vld [vmem:[%s1 + $0xc4] sm:$0xf]
    %v97 = vld [vmem:[%s1 + $0xc8] sm:$0xf]
    %v98 = vld [vmem:[%s1 + $0xcc] sm:$0xf]
    %v99 = vld [vmem:[%s1 + $0xd0] sm:$0xf]
    %v100 = vld [vmem:[%s1 + $0xd4] sm:$0xf]
    %v101 = vld [vmem:[%s1 + $0xd8] sm:$0xf]
    %v102 = vld [vmem:[%s1 + $0xdc] sm:$0xf]
    %v103 = vld [vmem:[%s1 + $0xe0] sm:$0xf]
    %v104 = vld [vmem:[%s1 + $0xe4] sm:$0xf]
    %v105 = vld [vmem:[%s1 + $0xe8] sm:$0xf]
    %v106 = vld [vmem:[%s1 + $0xec] sm:$0xf]
    %v107 = vld [vmem:[%s1 + $0xf0] sm:$0xf]
    %v108 = vld [vmem:[%s1 + $0xf4] sm:$0xf]
    %v109 = vld [vmem:[%s1 + $0xf8] sm:$0xf]
    %v110 = vld [vmem:[%s1 + $0xfc] sm:$0xf]
    %v111 = vld [vmem:[%s1 + $0x100] sm:$0xf]
    %v112 = vld [vmem:[%s1 + $0x104] sm:$0xf]
    %v113 = vld [vmem:[%s1 + $0x108] sm:$0xf]
    %v114 = vld [vmem:[%s1 + $0x10c] sm:$0xf]
    %v115 = vld [vmem:[%s1 + $0x110] sm:$0xf]
    %v116 = vld [vmem:[%s1 + $0x114] sm:$0xf]
    %v117 = vld [vmem:[%s1 + $0x118] sm:$0xf]
    %v118 = vld [vmem:[%s1 + $0x11c] sm:$0xf]
    %v119 = vld [vmem:[%s1 + $0x120] sm:$0xf]
    %v120 = vld [vmem:[%s1 + $0x124] sm:$0xf]
    %v121 = vld [vmem:[%s1 + $0x128] sm:$0xf]
    %v122 = vld [vmem:[%s1 + $0x12c] sm:$0xf]
    %v123 = vld [vmem:[%s1 + $0x130] sm:$0xf]
    %v124 = vld [vmem:[%s1 + $0x134] sm:$0xf]
    %v125 = vld [vmem:[%s1 + $0x138] sm:$0xf]
    %v126 = vld [vmem:[%s1 + $0x13c] sm:$0xf]
    %v127 = vld [vmem:[%s1 + $0x140] sm:$0xf]
    %v128 = vld [vmem:[%s1 + $0x144] sm:$0xf]
    %v129 = vld [vmem:[%s1 + $0x148] sm:$0xf]
    %v130 = vld [vmem:[%s1 + $0x14c] sm:$0xf]
    %v131 = vld [vmem:[%s1 + $0x150] sm:$0xf]
    %v132 = vld [vmem:[%s1 + $0x154] sm:$0xf]
    %v133 = vld [vmem:[%s1 + $0x158] sm:$0xf]
    %v134 = vld [vmem:[%s1 + $0x15c] sm:$0xf]
    %v135 = vld [vmem:[%s1 + $0x160] sm:$0xf]
    %v136 = vld [vmem:[%s1 + $0x164] sm:$0xf]
    %v137 = vld [vmem:[%s1 + $0x168] sm:$0xf]
    %v138 = vld [vmem:[%s1 + $0x16c] sm:$0xf]
    %v139 = vld [vmem:[%s1 + $0x170] sm:$0xf]
    %v140 = vld [vmem:[%s1 + $0x174] sm:$0xf]
    %v141 = vld [vmem:[%s1 + $0x178] sm:$0xf]
    %v142 = vld [vmem:[%s1 + $0x17c] sm:$0xf]
    %v143 = vld [vmem:[%s1 + $0x180] sm:$0xf]
    %v144 = vld [vmem:[%s1 + $0x184] sm:$0xf]
    %v145 = vld [vmem:[%s1 + $0x188] sm:$0xf]
    %v146 = vld [vmem:[%s1 + $0x18c] sm:$0xf]
    %v147 = vld [vmem:[%s1 + $0x190] sm:$0xf]
    %v148 = vld [vmem:[%s1 + $0x194] sm:$0xf]
    %v149 = vld [vmem:[%s1 + $0x198] sm:$0xf]
    %v150 = vld [vmem:[%s1 + $0x19c] sm:$0xf]
    %v151 = vld [vmem:[%s1 + $0x1a0] sm:$0xf]
    %v152 = vld [vmem:[%s1 + $0x1a4] sm:$0xf]
    %v153 = vld [vmem:[%s1 + $0x1a8] sm:$0xf]
    %v154 = vld [vmem:[%s1 + $0x1ac] sm:$0xf]
    %v155 = vld [vmem:[%s1 + $0x1b0] sm:$0xf]
    %v156 = vld [vmem:[%s1 + $0x1b4] sm:$0xf]
    %v157 = vld [vmem:[%s1 + $0x1b8] sm:$0xf]
    %v158 = vld [vmem:[%s1 + $0x1bc] sm:$0xf]
    %v159 = vld [vmem:[%s1 + $0x1c0] sm:$0xf]
    %v160 = vld [vmem:[%s1 + $0x1c4] sm:$0xf]
    %v161 = vld [vmem:[%s1 + $0x1c8] sm:$0xf]
    %v162 = vld [vmem:[%s1 + $0x1cc] sm:$0xf]
    %v163 = vld [vmem:[%s1 + $0x1d0] sm:$0xf]
    %v164 = vld [vmem:[%s1 + $0x1d4] sm:$0xf]
    %v165 = vld [vmem:[%s1 + $0x1d8] sm:$0xf]
    %v166 = vld [vmem:[%s1 + $0x1dc] sm:$0xf]
    %v167 = vld [vmem:[%s1 + $0x1e0] sm:$0xf]
    %v168 = vld [vmem:[%s1 + $0x1e4] sm:$0xf]
    %v169 = vld [vmem:[%s1 + $0x1e8] sm:$0xf]
    %v170 = vld [vmem:[%s1 + $0x1ec] sm:$0xf]
    %v171 = vld [vmem:[%s1 + $0x1f0] sm:$0xf]
    %v172 = vld [vmem:[%s1 + $0x1f4] sm:$0xf]
    %v173 = vld [vmem:[%s1 + $0x1f8] sm:$0xf]
    %v174 = vld [vmem:[%s1 + $0x1fc] sm:$0xf]
    %v175 = vld [vmem:[%s1 + $0x200] sm:$0xf]
    %v176 = vld [vmem:[%s1 + $0x204] sm:$0xf]
    %v177 = vld [vmem:[%s1 + $0x208] sm:$0xf]
    %v178 = vld [vmem:[%s1 + $0x20c] sm:$0xf]
    %v179 = vld [vmem:[%s1 + $0x210] sm:$0xf]
    %v180 = vld [vmem:[%s1 + $0x214] sm:$0xf]
    %v181 = vld [vmem:[%s1 + $0x218] sm:$0xf]
    %v182 = vld [vmem:[%s1 + $0x21c] sm:$0xf]
    %v183 = vld [vmem:[%s1 + $0x220] sm:$0xf]
    %v184 = vld [vmem:[%s1 + $0x224] sm:$0xf]
    %v185 = vld [vmem:[%s1 + $0x228] sm:$0xf]
    %v186 = vld [vmem:[%s1 + $0x22c] sm:$0xf]
    %v187 = vld [vmem:[%s1 + $0x230] sm:$0xf]
    %v188 = vld [vmem:[%s1 + $0x234] sm:$0xf]
    %v189 = vld [vmem:[%s1 + $0x238] sm:$0xf]
    %v190 = vld [vmem:[%s1 + $0x23c] sm:$0xf]
    %v191 = vld [vmem:[%s2] sm:$0x1]
    %v193 = vlaneseq
    %v194 = vshrl.u32 %v193, 7
    %v195 = vsub.s32 0, %v194
    %v196 = vrot.slane %v191, %v195
    %v218 = vunpack.c.l.b16 %v27
    %v219 = vunpack.c.h.b16 %v27
    %v220 = vunpack.c.l.b16 %v28
    %v221 = vunpack.c.h.b16 %v28
    %v222 = vunpack.c.l.b16 %v29
    %v223 = vunpack.c.h.b16 %v29
    %v224 = vunpack.c.l.b16 %v30
    %v225 = vunpack.c.h.b16 %v30
    %v226 = vunpack.c.l.b16 %v31
    %v227 = vunpack.c.l.b16 %v32
    %v228 = vunpack.c.h.b16 %v32
    %v229 = vunpack.c.l.b16 %v33
    %v230 = vunpack.c.h.b16 %v33
    %v231 = vunpack.c.l.b16 %v34
    %v232 = vunpack.c.h.b16 %v34
    %v233 = vunpack.c.l.b16 %v35
    %v234 = vunpack.c.h.b16 %v35
    %v235 = vunpack.c.l.b16 %v36
    %v236 = vunpack.c.l.b16 %v37
    %v237 = vunpack.c.h.b16 %v37
    %v238 = vunpack.c.l.b16 %v38
    %v239 = vunpack.c.h.b16 %v38
    %v240 = vunpack.c.l.b16 %v39
    %v241 = vunpack.c.h.b16 %v39
    %v242 = vunpack.c.l.b16 %v40
    %v243 = vunpack.c.h.b16 %v40
    %v244 = vunpack.c.l.b16 %v41
    %v245 = vunpack.c.l.b16 %v42
    %v246 = vunpack.c.h.b16 %v42
    %v247 = vunpack.c.l.b16 %v43
    %v248 = vunpack.c.h.b16 %v43
    %v249 = vunpack.c.l.b16 %v44
    %v250 = vunpack.c.h.b16 %v44
    %v251 = vunpack.c.l.b16 %v45
    %v252 = vunpack.c.h.b16 %v45
    %v253 = vunpack.c.l.b16 %v46
    %v254 = vpack.c.b16 %v227, %v218
    %v255 = vpack.c.b16 %v228, %v219
    %v256 = vpack.c.b16 %v229, %v220
    %v257 = vpack.c.b16 %v230, %v221
    %v258 = vpack.c.b16 %v231, %v222
    %v259 = vpack.c.b16 %v232, %v223
    %v260 = vpack.c.b16 %v233, %v224
    %v261 = vpack.c.b16 %v234, %v225
    %v262 = vpack.c.b16 %v235, %v226
    %v263 = vpack.c.b16 %v245, %v236
    %v264 = vpack.c.b16 %v246, %v237
    %v265 = vpack.c.b16 %v247, %v238
    %v266 = vpack.c.b16 %v248, %v239
    %v267 = vpack.c.b16 %v249, %v240
    %v268 = vpack.c.b16 %v250, %v241
    %v269 = vpack.c.b16 %v251, %v242
    %v270 = vpack.c.b16 %v252, %v243
    %v271 = vpack.c.b16 %v253, %v244
    %v434 = vunpack.c.l.b16 %v47
    %v435 = vunpack.c.l.b16 %v48
    %v436 = vunpack.c.l.b16 %v49
    %v437 = vunpack.c.l.b16 %v50
    %v438 = vunpack.c.l.b16 %v51
    %v439 = vunpack.c.l.b16 %v52
    %v440 = vunpack.c.l.b16 %v53
    %v441 = vunpack.c.l.b16 %v54
    %v442 = vunpack.c.l.b16 %v55
    %v443 = vunpack.c.l.b16 %v56
    %v444 = vunpack.c.l.b16 %v57
    %v445 = vunpack.c.l.b16 %v58
    %v446 = vunpack.c.l.b16 %v59
    %v447 = vunpack.c.l.b16 %v60
    %v448 = vunpack.c.l.b16 %v61
    %v449 = vunpack.c.l.b16 %v62
    %v450 = vunpack.c.l.b16 %v63
    %v451 = vunpack.c.l.b16 %v64
    %v452 = vunpack.c.l.b16 %v65
    %v453 = vunpack.c.l.b16 %v66
    %v454 = vunpack.c.l.b16 %v67
    %v455 = vunpack.c.l.b16 %v68
    %v456 = vunpack.c.l.b16 %v69
    %v457 = vunpack.c.l.b16 %v70
    %v458 = vunpack.c.l.b16 %v71
    %v459 = vunpack.c.l.b16 %v72
    %v460 = vunpack.c.l.b16 %v73
    %v461 = vunpack.c.l.b16 %v74
    %v462 = vunpack.c.l.b16 %v75
    %v463 = vunpack.c.l.b16 %v76
    %v464 = vunpack.c.l.b16 %v77
    %v465 = vunpack.c.l.b16 %v78
    %v466 = vunpack.c.l.b16 %v79
    %v467 = vunpack.c.l.b16 %v80
    %v468 = vunpack.c.l.b16 %v81
    %v469 = vunpack.c.l.b16 %v82
    %v470 = vunpack.c.l.b16 %v83
    %v471 = vunpack.c.l.b16 %v84
    %v472 = vunpack.c.l.b16 %v85
    %v473 = vunpack.c.l.b16 %v86
    %v474 = vunpack.c.l.b16 %v87
    %v475 = vunpack.c.l.b16 %v88
    %v476 = vunpack.c.l.b16 %v89
    %v477 = vunpack.c.l.b16 %v90
    %v478 = vunpack.c.l.b16 %v91
    %v479 = vunpack.c.l.b16 %v92
    %v480 = vunpack.c.l.b16 %v93
    %v481 = vunpack.c.l.b16 %v94
    %v482 = vunpack.c.l.b16 %v95
    %v483 = vunpack.c.l.b16 %v96
    %v484 = vunpack.c.l.b16 %v97
    %v485 = vunpack.c.l.b16 %v98
    %v486 = vunpack.c.l.b16 %v99
    %v487 = vunpack.c.l.b16 %v100
    %v488 = vunpack.c.l.b16 %v101
    %v489 = vunpack.c.l.b16 %v102
    %v490 = vunpack.c.l.b16 %v103
    %v491 = vunpack.c.l.b16 %v104
    %v492 = vunpack.c.l.b16 %v105
    %v493 = vunpack.c.l.b16 %v106
    %v494 = vunpack.c.l.b16 %v107
    %v495 = vunpack.c.l.b16 %v108
    %v496 = vunpack.c.l.b16 %v109
    %v497 = vunpack.c.l.b16 %v110
    %v498 = vunpack.c.l.b16 %v111
    %v499 = vunpack.c.l.b16 %v112
    %v500 = vunpack.c.l.b16 %v113
    %v501 = vunpack.c.l.b16 %v114
    %v502 = vunpack.c.l.b16 %v115
    %v503 = vunpack.c.l.b16 %v116
    %v504 = vunpack.c.l.b16 %v117
    %v505 = vunpack.c.l.b16 %v118
    %v506 = vunpack.c.l.b16 %v119
    %v507 = vunpack.c.l.b16 %v120
    %v508 = vunpack.c.l.b16 %v121
    %v509 = vunpack.c.l.b16 %v122
    %v510 = vunpack.c.l.b16 %v123
    %v511 = vunpack.c.l.b16 %v124
    %v512 = vunpack.c.l.b16 %v125
    %v513 = vunpack.c.l.b16 %v126
    %v514 = vunpack.c.l.b16 %v127
    %v515 = vunpack.c.l.b16 %v128
    %v516 = vunpack.c.l.b16 %v129
    %v517 = vunpack.c.l.b16 %v130
    %v518 = vunpack.c.l.b16 %v131
    %v519 = vunpack.c.l.b16 %v132
    %v520 = vunpack.c.l.b16 %v133
    %v521 = vunpack.c.l.b16 %v134
    %v522 = vunpack.c.l.b16 %v135
    %v523 = vunpack.c.l.b16 %v136
    %v524 = vunpack.c.l.b16 %v137
    %v525 = vunpack.c.l.b16 %v138
    %v526 = vunpack.c.l.b16 %v139
    %v527 = vunpack.c.l.b16 %v140
    %v528 = vunpack.c.l.b16 %v141
    %v529 = vunpack.c.l.b16 %v142
    %v530 = vunpack.c.l.b16 %v143
    %v531 = vunpack.c.l.b16 %v144
    %v532 = vunpack.c.l.b16 %v145
    %v533 = vunpack.c.l.b16 %v146
    %v534 = vunpack.c.l.b16 %v147
    %v535 = vunpack.c.l.b16 %v148
    %v536 = vunpack.c.l.b16 %v149
    %v537 = vunpack.c.l.b16 %v150
    %v538 = vunpack.c.l.b16 %v151
    %v539 = vunpack.c.l.b16 %v152
    %v540 = vunpack.c.l.b16 %v153
    %v541 = vunpack.c.l.b16 %v154
    %v542 = vunpack.c.l.b16 %v155
    %v543 = vunpack.c.l.b16 %v156
    %v544 = vunpack.c.l.b16 %v157
    %v545 = vunpack.c.l.b16 %v158
    %v546 = vunpack.c.l.b16 %v159
    %v547 = vunpack.c.l.b16 %v160
    %v548 = vunpack.c.l.b16 %v161
    %v549 = vunpack.c.l.b16 %v162
    %v550 = vunpack.c.l.b16 %v163
    %v551 = vunpack.c.l.b16 %v164
    %v552 = vunpack.c.l.b16 %v165
    %v553 = vunpack.c.l.b16 %v166
    %v554 = vunpack.c.l.b16 %v167
    %v555 = vunpack.c.l.b16 %v168
    %v556 = vunpack.c.l.b16 %v169
    %v557 = vunpack.c.l.b16 %v170
    %v558 = vunpack.c.l.b16 %v171
    %v559 = vunpack.c.l.b16 %v172
    %v560 = vunpack.c.l.b16 %v173
    %v561 = vunpack.c.l.b16 %v174
    %v562 = vunpack.c.l.b16 %v175
    %v563 = vunpack.c.l.b16 %v176
    %v564 = vunpack.c.l.b16 %v177
    %v565 = vunpack.c.l.b16 %v178
    %v566 = vunpack.c.l.b16 %v179
    %v567 = vunpack.c.l.b16 %v180
    %v568 = vunpack.c.l.b16 %v181
    %v569 = vunpack.c.l.b16 %v182
    %v570 = vunpack.c.l.b16 %v183
    %v571 = vunpack.c.l.b16 %v184
    %v572 = vunpack.c.l.b16 %v185
    %v573 = vunpack.c.l.b16 %v186
    %v574 = vunpack.c.l.b16 %v187
    %v575 = vunpack.c.l.b16 %v188
    %v576 = vunpack.c.l.b16 %v189
    %v577 = vunpack.c.l.b16 %v190
    %v578 = vpack.c.b16 %v435, %v434
    %v579 = vpack.c.b16 %v437, %v436
    %v580 = vpack.c.b16 %v439, %v438
    %v581 = vpack.c.b16 %v441, %v440
    %v582 = vpack.c.b16 %v443, %v442
    %v583 = vpack.c.b16 %v445, %v444
    %v584 = vpack.c.b16 %v447, %v446
    %v585 = vpack.c.b16 %v449, %v448
    %v586 = vpack.c.b16 %v451, %v450
    %v587 = vpack.c.b16 %v453, %v452
    %v588 = vpack.c.b16 %v455, %v454
    %v589 = vpack.c.b16 %v457, %v456
    %v590 = vpack.c.b16 %v459, %v458
    %v591 = vpack.c.b16 %v461, %v460
    %v592 = vpack.c.b16 %v463, %v462
    %v593 = vpack.c.b16 %v465, %v464
    %v594 = vpack.c.b16 %v467, %v466
    %v595 = vpack.c.b16 %v469, %v468
    %v596 = vpack.c.b16 %v471, %v470
    %v597 = vpack.c.b16 %v473, %v472
    %v598 = vpack.c.b16 %v475, %v474
    %v599 = vpack.c.b16 %v477, %v476
    %v600 = vpack.c.b16 %v479, %v478
    %v601 = vpack.c.b16 %v481, %v480
    %v602 = vpack.c.b16 %v483, %v482
    %v603 = vpack.c.b16 %v485, %v484
    %v604 = vpack.c.b16 %v487, %v486
    %v605 = vpack.c.b16 %v489, %v488
    %v606 = vpack.c.b16 %v491, %v490
    %v607 = vpack.c.b16 %v493, %v492
    %v608 = vpack.c.b16 %v495, %v494
    %v609 = vpack.c.b16 %v497, %v496
    %v610 = vpack.c.b16 %v499, %v498
    %v611 = vpack.c.b16 %v501, %v500
    %v612 = vpack.c.b16 %v503, %v502
    %v613 = vpack.c.b16 %v505, %v504
    %v614 = vpack.c.b16 %v507, %v506
    %v615 = vpack.c.b16 %v509, %v508
    %v616 = vpack.c.b16 %v511, %v510
    %v617 = vpack.c.b16 %v513, %v512
    %v618 = vpack.c.b16 %v515, %v514
    %v619 = vpack.c.b16 %v517, %v516
    %v620 = vpack.c.b16 %v519, %v518
    %v621 = vpack.c.b16 %v521, %v520
    %v622 = vpack.c.b16 %v523, %v522
    %v623 = vpack.c.b16 %v525, %v524
    %v624 = vpack.c.b16 %v527, %v526
    %v625 = vpack.c.b16 %v529, %v528
    %v626 = vpack.c.b16 %v531, %v530
    %v627 = vpack.c.b16 %v533, %v532
    %v628 = vpack.c.b16 %v535, %v534
    %v629 = vpack.c.b16 %v537, %v536
    %v630 = vpack.c.b16 %v539, %v538
    %v631 = vpack.c.b16 %v541, %v540
    %v632 = vpack.c.b16 %v543, %v542
    %v633 = vpack.c.b16 %v545, %v544
    %v634 = vpack.c.b16 %v547, %v546
    %v635 = vpack.c.b16 %v549, %v548
    %v636 = vpack.c.b16 %v551, %v550
    %v637 = vpack.c.b16 %v553, %v552
    %v638 = vpack.c.b16 %v555, %v554
    %v639 = vpack.c.b16 %v557, %v556
    %v640 = vpack.c.b16 %v559, %v558
    %v641 = vpack.c.b16 %v561, %v560
    %v642 = vpack.c.b16 %v563, %v562
    %v643 = vpack.c.b16 %v565, %v564
    %v644 = vpack.c.b16 %v567, %v566
    %v645 = vpack.c.b16 %v569, %v568
    %v646 = vpack.c.b16 %v571, %v570
    %v647 = vpack.c.b16 %v573, %v572
    %v648 = vpack.c.b16 %v575, %v574
    %v649 = vpack.c.b16 %v577, %v576
    %722 = vmatprep.subr.bf16.mxu0 0
    %723 = vmatpush1.bf16.msra.mxu0 %v585
    %724 = vmatprep.subr.bf16.mxu0 0
    %725 = vmatpush1.bf16.msra.mxu0 %v584
    %726 = vmatprep.subr.bf16.mxu0 0
    %727 = vmatpush1.bf16.msra.mxu0 %v583
    %728 = vmatprep.subr.bf16.mxu0 0
    %729 = vmatpush1.bf16.msra.mxu0 %v582
    %730 = vmatprep.subr.bf16.mxu0 0
    %731 = vmatpush1.bf16.msra.mxu0 %v581
    %732 = vmatprep.subr.bf16.mxu0 0
    %733 = vmatpush1.bf16.msra.mxu0 %v580
    %734 = vmatprep.subr.bf16.mxu0 0
    %735 = vmatpush1.bf16.msra.mxu0 %v579
    %736 = vmatprep.subr.bf16.mxu0 0
    %737 = vmatpush1.bf16.msra.mxu0 %v578
    %738 = vmatprep.subr.bf16.mxu0 0
    %739 = vmatpush2.bf16.msra.mxu0 %v593
    %740 = vmatprep.subr.bf16.mxu0 0
    %741 = vmatpush2.bf16.msra.mxu0 %v592
    %742 = vmatprep.subr.bf16.mxu0 0
    %743 = vmatpush2.bf16.msra.mxu0 %v591
    %744 = vmatprep.subr.bf16.mxu0 0
    %745 = vmatpush2.bf16.msra.mxu0 %v590
    %746 = vmatprep.subr.bf16.mxu0 0
    %747 = vmatpush2.bf16.msra.mxu0 %v589
    %748 = vmatprep.subr.bf16.mxu0 0
    %749 = vmatpush2.bf16.msra.mxu0 %v588
    %750 = vmatprep.subr.bf16.mxu0 0
    %751 = vmatpush2.bf16.msra.mxu0 %v587
    %752 = vmatprep.subr.bf16.mxu0 0
    %753 = vmatpush2.bf16.msra.mxu0 %v586
    %754 = vmatprep.mubr.bf16.mxu0 %v255
    %755 = vmatmul.mubr.bf16.gmra.mxu0 %v254
    %v756 = vpop.f32.mrf.mxu0
    %v757 = vadd.f32 %v196, %v756
    %v758 = vpop.f32.mrf.mxu0
    %v759 = vpop.f32.mrf.mxu0
    %v760 = vadd.f32 %v196, %v759
    %v761 = vpop.f32.mrf.mxu0
    %762 = vmatprep.mubr.bf16.mxu0 %v264
    %763 = vmatmul.mubr.bf16.gmra.mxu0 %v263
    %v764 = vpop.f32.mrf.mxu0
    %v765 = vadd.f32 %v196, %v764
    %v766 = vpop.f32.mrf.mxu0
    %v767 = vpop.f32.mrf.mxu0
    %v768 = vadd.f32 %v196, %v767
    %v769 = vpop.f32.mrf.mxu0
    %770 = vdwg.mxu0
    %771 = vmatprep.subr.bf16.mxu0 0
    %772 = vmatpush1.bf16.msra.mxu0 %v601
    %773 = vmatprep.subr.bf16.mxu0 0
    %774 = vmatpush1.bf16.msra.mxu0 %v600
    %775 = vmatprep.subr.bf16.mxu0 0
    %776 = vmatpush1.bf16.msra.mxu0 %v599
    %777 = vmatprep.subr.bf16.mxu0 0
    %778 = vmatpush1.bf16.msra.mxu0 %v598
    %779 = vmatprep.subr.bf16.mxu0 0
    %780 = vmatpush1.bf16.msra.mxu0 %v597
    %781 = vmatprep.subr.bf16.mxu0 0
    %782 = vmatpush1.bf16.msra.mxu0 %v596
    %783 = vmatprep.subr.bf16.mxu0 0
    %784 = vmatpush1.bf16.msra.mxu0 %v595
    %785 = vmatprep.subr.bf16.mxu0 0
    %786 = vmatpush1.bf16.msra.mxu0 %v594
    %787 = vmatprep.subr.bf16.mxu0 0
    %788 = vmatpush2.bf16.msra.mxu0 %v609
    %789 = vmatprep.subr.bf16.mxu0 0
    %790 = vmatpush2.bf16.msra.mxu0 %v608
    %791 = vmatprep.subr.bf16.mxu0 0
    %792 = vmatpush2.bf16.msra.mxu0 %v607
    %793 = vmatprep.subr.bf16.mxu0 0
    %794 = vmatpush2.bf16.msra.mxu0 %v606
    %795 = vmatprep.subr.bf16.mxu0 0
    %796 = vmatpush2.bf16.msra.mxu0 %v605
    %797 = vmatprep.subr.bf16.mxu0 0
    %798 = vmatpush2.bf16.msra.mxu0 %v604
    %799 = vmatprep.subr.bf16.mxu0 0
    %800 = vmatpush2.bf16.msra.mxu0 %v603
    %801 = vmatprep.subr.bf16.mxu0 0
    %802 = vmatpush2.bf16.msra.mxu0 %v602
    %803 = vmatprep.mubr.bf16.mxu0 %v257
    %804 = vmatmul.mubr.bf16.gmra.mxu0 %v256
    %v805 = vpop.f32.mrf.mxu0
    %v806 = vadd.f32 %v757, %v805
    %v807 = vpop.f32.mrf.mxu0
    %v808 = vpop.f32.mrf.mxu0
    %v809 = vadd.f32 %v760, %v808
    %v810 = vpop.f32.mrf.mxu0
    %811 = vmatprep.mubr.bf16.mxu0 %v266
    %812 = vmatmul.mubr.bf16.gmra.mxu0 %v265
    %v813 = vpop.f32.mrf.mxu0
    %v814 = vadd.f32 %v765, %v813
    %v815 = vpop.f32.mrf.mxu0
    %v816 = vpop.f32.mrf.mxu0
    %v817 = vadd.f32 %v768, %v816
    %v818 = vpop.f32.mrf.mxu0
    %819 = vdwg.mxu0
    %820 = vmatprep.subr.bf16.mxu0 0
    %821 = vmatpush1.bf16.msra.mxu0 %v617
    %822 = vmatprep.subr.bf16.mxu0 0
    %823 = vmatpush1.bf16.msra.mxu0 %v616
    %824 = vmatprep.subr.bf16.mxu0 0
    %825 = vmatpush1.bf16.msra.mxu0 %v615
    %826 = vmatprep.subr.bf16.mxu0 0
    %827 = vmatpush1.bf16.msra.mxu0 %v614
    %828 = vmatprep.subr.bf16.mxu0 0
    %829 = vmatpush1.bf16.msra.mxu0 %v613
    %830 = vmatprep.subr.bf16.mxu0 0
    %831 = vmatpush1.bf16.msra.mxu0 %v612
    %832 = vmatprep.subr.bf16.mxu0 0
    %833 = vmatpush1.bf16.msra.mxu0 %v611
    %834 = vmatprep.subr.bf16.mxu0 0
    %835 = vmatpush1.bf16.msra.mxu0 %v610
    %836 = vmatprep.subr.bf16.mxu0 0
    %837 = vmatpush2.bf16.msra.mxu0 %v625
    %838 = vmatprep.subr.bf16.mxu0 0
    %839 = vmatpush2.bf16.msra.mxu0 %v624
    %840 = vmatprep.subr.bf16.mxu0 0
    %841 = vmatpush2.bf16.msra.mxu0 %v623
    %842 = vmatprep.subr.bf16.mxu0 0
    %843 = vmatpush2.bf16.msra.mxu0 %v622
    %844 = vmatprep.subr.bf16.mxu0 0
    %845 = vmatpush2.bf16.msra.mxu0 %v621
    %846 = vmatprep.subr.bf16.mxu0 0
    %847 = vmatpush2.bf16.msra.mxu0 %v620
    %848 = vmatprep.subr.bf16.mxu0 0
    %849 = vmatpush2.bf16.msra.mxu0 %v619
    %850 = vmatprep.subr.bf16.mxu0 0
    %851 = vmatpush2.bf16.msra.mxu0 %v618
    %852 = vmatprep.mubr.bf16.mxu0 %v259
    %853 = vmatmul.mubr.bf16.gmra.mxu0 %v258
    %v854 = vpop.f32.mrf.mxu0
    %v855 = vadd.f32 %v806, %v854
    %v856 = vpop.f32.mrf.mxu0
    %v857 = vpop.f32.mrf.mxu0
    %v858 = vadd.f32 %v809, %v857
    %v859 = vpop.f32.mrf.mxu0
    %860 = vmatprep.mubr.bf16.mxu0 %v268
    %861 = vmatmul.mubr.bf16.gmra.mxu0 %v267
    %v862 = vpop.f32.mrf.mxu0
    %v863 = vadd.f32 %v814, %v862
    %v864 = vpop.f32.mrf.mxu0
    %v865 = vpop.f32.mrf.mxu0
    %v866 = vadd.f32 %v817, %v865
    %v867 = vpop.f32.mrf.mxu0
    %868 = vdwg.mxu0
    %869 = vmatprep.subr.bf16.mxu0 0
    %870 = vmatpush1.bf16.msra.mxu0 %v633
    %871 = vmatprep.subr.bf16.mxu0 0
    %872 = vmatpush1.bf16.msra.mxu0 %v632
    %873 = vmatprep.subr.bf16.mxu0 0
    %874 = vmatpush1.bf16.msra.mxu0 %v631
    %875 = vmatprep.subr.bf16.mxu0 0
    %876 = vmatpush1.bf16.msra.mxu0 %v630
    %877 = vmatprep.subr.bf16.mxu0 0
    %878 = vmatpush1.bf16.msra.mxu0 %v629
    %879 = vmatprep.subr.bf16.mxu0 0
    %880 = vmatpush1.bf16.msra.mxu0 %v628
    %881 = vmatprep.subr.bf16.mxu0 0
    %882 = vmatpush1.bf16.msra.mxu0 %v627
    %883 = vmatprep.subr.bf16.mxu0 0
    %884 = vmatpush1.bf16.msra.mxu0 %v626
    %885 = vmatprep.subr.bf16.mxu0 0
    %886 = vmatpush2.bf16.msra.mxu0 %v641
    %887 = vmatprep.subr.bf16.mxu0 0
    %888 = vmatpush2.bf16.msra.mxu0 %v640
    %889 = vmatprep.subr.bf16.mxu0 0
    %890 = vmatpush2.bf16.msra.mxu0 %v639
    %891 = vmatprep.subr.bf16.mxu0 0
    %892 = vmatpush2.bf16.msra.mxu0 %v638
    %893 = vmatprep.subr.bf16.mxu0 0
    %894 = vmatpush2.bf16.msra.mxu0 %v637
    %895 = vmatprep.subr.bf16.mxu0 0
    %896 = vmatpush2.bf16.msra.mxu0 %v636
    %897 = vmatprep.subr.bf16.mxu0 0
    %898 = vmatpush2.bf16.msra.mxu0 %v635
    %899 = vmatprep.subr.bf16.mxu0 0
    %900 = vmatpush2.bf16.msra.mxu0 %v634
    %901 = vmatprep.mubr.bf16.mxu0 %v261
    %902 = vmatmul.mubr.bf16.gmra.mxu0 %v260
    %v903 = vpop.f32.mrf.mxu0
    %v904 = vadd.f32 %v855, %v903
    %v905 = vpop.f32.mrf.mxu0
    %v906 = vpop.f32.mrf.mxu0
    %v907 = vadd.f32 %v858, %v906
    %v908 = vpop.f32.mrf.mxu0
    %909 = vmatprep.mubr.bf16.mxu0 %v270
    %910 = vmatmul.mubr.bf16.gmra.mxu0 %v269
    %v911 = vpop.f32.mrf.mxu0
    %v912 = vadd.f32 %v863, %v911
    %v913 = vpop.f32.mrf.mxu0
    %v914 = vpop.f32.mrf.mxu0
    %v915 = vadd.f32 %v866, %v914
    %v916 = vpop.f32.mrf.mxu0
    %917 = vdwg.mxu0
    %918 = vmatprep.subr.bf16.mxu0 0
    %919 = vmatpush1.bf16.msra.mxu0 %v649
    %920 = vmatprep.subr.bf16.mxu0 0
    %921 = vmatpush1.bf16.msra.mxu0 %v648
    %922 = vmatprep.subr.bf16.mxu0 0
    %923 = vmatpush1.bf16.msra.mxu0 %v647
    %924 = vmatprep.subr.bf16.mxu0 0
    %925 = vmatpush1.bf16.msra.mxu0 %v646
    %926 = vmatprep.subr.bf16.mxu0 0
    %927 = vmatpush1.bf16.msra.mxu0 %v645
    %928 = vmatprep.subr.bf16.mxu0 0
    %929 = vmatpush1.bf16.msra.mxu0 %v644
    %930 = vmatprep.subr.bf16.mxu0 0
    %931 = vmatpush1.bf16.msra.mxu0 %v643
    %932 = vmatprep.subr.bf16.mxu0 0
    %933 = vmatpush1.bf16.msra.mxu0 %v642
    %934 = vmatprep.subr.bf16.mxu0 0
    %935 = vmatpush2.bf16.msra.mxu0 0
    %936 = vmatprep.subr.bf16.mxu0 0
    %937 = vmatpush2.bf16.msra.mxu0 0
    %938 = vmatprep.subr.bf16.mxu0 0
    %939 = vmatpush2.bf16.msra.mxu0 0
    %940 = vmatprep.subr.bf16.mxu0 0
    %941 = vmatpush2.bf16.msra.mxu0 0
    %942 = vmatprep.subr.bf16.mxu0 0
    %943 = vmatpush2.bf16.msra.mxu0 0
    %944 = vmatprep.subr.bf16.mxu0 0
    %945 = vmatpush2.bf16.msra.mxu0 0
    %946 = vmatprep.subr.bf16.mxu0 0
    %947 = vmatpush2.bf16.msra.mxu0 0
    %948 = vmatprep.subr.bf16.mxu0 0
    %949 = vmatpush2.bf16.msra.mxu0 0
    %950 = vmatprep.mubr.bf16.mxu0 0
    %951 = vmatmul.mubr.bf16.gmra.mxu0 %v262
    %v952 = vpop.f32.mrf.mxu0
    %v953 = vadd.f32 %v904, %v952
    %v954 = vpop.f32.mrf.mxu0
    %v955 = vpop.f32.mrf.mxu0
    %v956 = vadd.f32 %v907, %v955
    %v957 = vpop.f32.mrf.mxu0
    %958 = vmatprep.mubr.bf16.mxu0 0
    %959 = vmatmul.mubr.bf16.gmra.mxu0 %v271
    %v960 = vpop.f32.mrf.mxu0
    %v961 = vadd.f32 %v912, %v960
    %v962 = vpop.f32.mrf.mxu0
    %v963 = vpop.f32.mrf.mxu0
    %v964 = vadd.f32 %v915, %v963
    %v965 = vpop.f32.mrf.mxu0
    %966 = vdwg.mxu0
    %v967 = vadd.f32 %v953, %v23
    %v968 = vadd.f32 %v956, %v24
    %v969 = vadd.f32 %v961, %v25
    %v970 = vadd.f32 %v964, %v26
    %v971 = vmax.f32 %v967, 0.0
    %v972 = vmax.f32 %v968, 0.0
    %v973 = vmax.f32 %v969, 0.0
    %v974 = vmax.f32 %v970, 0.0
    %v975 = vadd.f32 %v971, %v972
    %v976 = vrot.slane %v975, 4
    %v977 = vadd.f32 %v975, %v976
    %v978 = vrot.slane %v977, 2
    %v979 = vadd.f32 %v977, %v978
    %v980 = vrot.slane %v979, 1
    %v981 = vadd.f32 %v979, %v980
    %v982 = vrcp.pop 16.0
    %v983 = vmul.f32 %v981, %v982
    %984 = vst [vmem:[#allocation2] sm:$0x1] %v983
    %v985 = vadd.f32 %v973, %v974
    %v986 = vrot.slane %v985, 4
    %v987 = vadd.f32 %v985, %v986
    %v988 = vrot.slane %v987, 2
    %v989 = vadd.f32 %v987, %v988
    %v990 = vrot.slane %v989, 1
    %v991 = vadd.f32 %v989, %v990
    %v992 = vmul.f32 %v991, %v982
    %993 = vst [vmem:[#allocation2 + $0x1] sm:$0x1] %v992
    // Predicated region
    $region18: #{resnet_backbone_forward.19} parent=1 // pred_check
      _
    $region19: #{resnet_backbone_forward.19} parent=1 // pred_check_branch
      %995 = sbr.rel (0) target = $region21
    $region20: #{resnet_backbone_forward.19} parent=1 // pred_region
      %s997 = ssub.s32 32, 32
      %998 = vsyncadd [#allocation3], %s997
      %s1000 = sshll.u32 [#allocation2], 4
      %s1001 = int_to_ptr.vmem [resolvable:$true] %s1000
      %1003 = dma.vmem_to_hbm [thread:$0]  %s1001, 32, %s4, [#allocation3]
    $region21: #{resnet_backbone_forward.19} parent=1 // pred_fallthru
      _
    // Predicated region
    $region22: #{resnet_backbone_forward.19} parent=1 // pred_check
      _
    $region23: #{resnet_backbone_forward.19} parent=1 // pred_check_branch
      %1005 = sbr.rel (0) target = $region25
    $region24: #{resnet_backbone_forward.19} parent=1 // pred_region
      %1006 = dma.done [#allocation3], 32
    $region25: #{resnet_backbone_forward.19} parent=1 // pred_fallthru
      _
    %1007 = vsyncpa [#allocation3], 1

</llo_original>
